<compile_context>
chip_gen: v5e
topology: v5e:2x2
jax: 0.10.0
libtpu: 0.0.40
codegen_flags: <defaults>
</compile_context>

<pallas_src>
import math

import jax
import jax.numpy as jnp
from jax.experimental import pallas as pl
from jax.experimental.pallas import tpu as pltpu


# ---------------------------------------------------------------------------
# Small helpers
# ---------------------------------------------------------------------------
def _conv_out_size(s, stride):
    # 3x3 conv, padding 1
    return (s + 2 - 3) // stride + 1


def _vmem_limit(est_bytes):
    # Size the scoped-VMEM limit to the live set with headroom; cap at 64 MiB
    # so the value stays within v7x physical VMEM.
    return int(min(max(2 * est_bytes + (4 << 20), 16 << 20), 64 << 20))


def _zero_border(pad_ref, h, w, c, dtype):
    """Zero only the 1-wide halo of a (h+2, w+2, c) scratch.

    The interior is fully overwritten on every use, so only the border needs
    clearing.  This is done every grid step (not once per pallas_call) because
    under megacore "parallel" sharding each core has its own scratch and would
    never execute a program_id==0 guard.
    """
    zrow = jnp.zeros((1, w + 2, c), dtype)
    zcol = jnp.zeros((h + 2, 1, c), dtype)
    pad_ref[0:1, :, :] = zrow
    pad_ref[h + 1:h + 2, :, :] = zrow
    pad_ref[:, 0:1, :] = zcol
    pad_ref[:, w + 1:w + 2, :] = zcol


# ---------------------------------------------------------------------------
# Fused conv0: 3x3/s2 conv + PReLU -> 3x3/s2 conv + PReLU, one pallas_call.
# The half-resolution intermediate stays in VMEM.
# ---------------------------------------------------------------------------
def _make_conv0_kernel(H, W, Cin, C2, C, H1, W1, H2, W2):
    def kernel(x_ref, w0_ref, b0_ref, a0_ref, w1_ref, b1_ref, a1_ref,
               o_ref, pad0, pad1):
        # ---- layer 0: Cin -> C2, stride 2 --------------------------------
        _zero_border(pad0, H, W, Cin, jnp.float32)
        pad0[1:H + 1, 1:W + 1, :] = x_ref[0]
        taps = [pad0[pl.ds(kh, H1, stride=2), pl.ds(kw, W1, stride=2), :]
                for kh in range(3) for kw in range(3)]
        patches = jnp.concatenate(taps, axis=-1)            # (H1, W1, 9*Cin)
        patches = patches.reshape(H1 * W1, 9 * Cin).astype(jnp.bfloat16)
        acc = jnp.dot(patches, w0_ref[...],
                      preferred_element_type=jnp.float32)   # (H1*W1, C2)
        acc = acc + b0_ref[...]
        acc = jnp.where(acc >= 0.0, acc, acc * a0_ref[...])  # PReLU
        f1 = acc.reshape(H1, W1, C2)

        # ---- layer 1: C2 -> C, stride 2 (no HBM round trip) ---------------
        _zero_border(pad1, H1, W1, C2, jnp.float32)
        pad1[1:H1 + 1, 1:W1 + 1, :] = f1
        taps = [pad1[pl.ds(kh, H2, stride=2), pl.ds(kw, W2, stride=2), :]
                for kh in range(3) for kw in range(3)]
        patches = jnp.concatenate(taps, axis=-1)            # (H2, W2, 9*C2)
        patches = patches.reshape(H2 * W2, 9 * C2).astype(jnp.bfloat16)
        acc = jnp.dot(patches, w1_ref[...],
                      preferred_element_type=jnp.float32)   # (H2*W2, C)
        acc = acc + b1_ref[...]
        acc = jnp.where(acc >= 0.0, acc, acc * a1_ref[...])
        o_ref[0] = acc.reshape(H2, W2, C).astype(jnp.bfloat16)
    return kernel


def conv0_fused(x, prep):
    """x: (N, H, W, Cin) f32 -> (N, H//4, W//4, c) bf16."""
    N, H, W, Cin = x.shape
    w0, b0, a0 = prep["w0"], prep["b0"], prep["a0"]
    w1, b1, a1 = prep["w1"], prep["b1"], prep["a1"]
    C2, C = w0.shape[-1], w1.shape[-1]
    assert w0.shape[0] == 9 * Cin, (w0.shape, Cin)
    H1, W1 = _conv_out_size(H, 2), _conv_out_size(W, 2)
    H2, W2 = _conv_out_size(H1, 2), _conv_out_size(W1, 2)

    est = (2 * H * W * Cin * 4 + 2 * H2 * W2 * C * 2
           + (H + 2) * (W + 2) * Cin * 4 + (H1 + 2) * (W1 + 2) * C2 * 4
           + 2 * H1 * W1 * 9 * Cin * 2 + 2 * H2 * W2 * 9 * C2 * 2
           + 2 * (w0.size + w1.size))
    return pl.pallas_call(
        _make_conv0_kernel(H, W, Cin, C2, C, H1, W1, H2, W2),
        out_shape=jax.ShapeDtypeStruct((N, H2, W2, C), jnp.bfloat16),
        grid=(N,),
        in_specs=[
            pl.BlockSpec((1, H, W, Cin), lambda n: (n, 0, 0, 0)),
            pl.BlockSpec((9 * Cin, C2), lambda n: (0, 0)),
            pl.BlockSpec((1, C2), lambda n: (0, 0)),
            pl.BlockSpec((1, C2), lambda n: (0, 0)),
            pl.BlockSpec((9 * C2, C), lambda n: (0, 0)),
            pl.BlockSpec((1, C), lambda n: (0, 0)),
            pl.BlockSpec((1, C), lambda n: (0, 0)),
        ],
        out_specs=pl.BlockSpec((1, H2, W2, C), lambda n: (n, 0, 0, 0)),
        scratch_shapes=[pltpu.VMEM((H + 2, W + 2, Cin), jnp.float32),
                        pltpu.VMEM((H1 + 2, W1 + 2, C2), jnp.float32)],
        compiler_params=pltpu.CompilerParams(
            dimension_semantics=("parallel",),
            vmem_limit_bytes=_vmem_limit(est)),
    )(x, w0, b0, a0, w1, b1, a1)


# ---------------------------------------------------------------------------
# Fused convblock (8x conv3x3 + PReLU) + residual + ConvTranspose2d epilogue.
# Feature map is VMEM-resident for all 9 matmuls; one (H, W, 20) output.
# ---------------------------------------------------------------------------
def _make_convblock_deconv_kernel(H, W, C, n_layers, Cout4):
    def kernel(x_ref, wcb_ref, bcb_ref, acb_ref, wd_ref, bd_ref, o_ref, pad):
        # x_ref: (1, H, W, C) bf16, wcb_ref: (L, 9C, C) bf16,
        # bcb/acb: (L, 1, C) f32, wd_ref: (9C, 20) bf16, bd_ref: (1, 20) f32,
        # o_ref: (1, H, W, 20) f32, pad: (H+2, W+2, C) f32 scratch.
        _zero_border(pad, H, W, C, jnp.float32)
        feat0 = x_ref[0].astype(jnp.float32)                 # (H, W, C)
        cur = feat0
        for l in range(n_layers):
            pad[1:H + 1, 1:W + 1, :] = cur
            taps = [pad[kh:kh + H, kw:kw + W, :]
                    for kh in range(3) for kw in range(3)]
            patches = jnp.concatenate(taps, axis=-1)         # (H, W, 9*C)
            patches = patches.reshape(H * W, 9 * C).astype(jnp.bfloat16)
            acc = jnp.dot(patches, wcb_ref[l],
                          preferred_element_type=jnp.float32)
            acc = acc + bcb_ref[l]
            acc = jnp.where(acc >= 0.0, acc, acc * acb_ref[l])
            cur = acc.reshape(H, W, C)
        feat = cur + feat0                                   # fused residual

        # ConvTranspose2d(C, 5, 4, stride=2, pad=1) epilogue: one 3x3-tap
        # im2col matmul against a zero-padded (9C, 4*5) parity weight gives
        # all 4 output parities in one shot.
        pad[1:H + 1, 1:W + 1, :] = feat
        taps = [pad[kh:kh + H, kw:kw + W, :]
                for kh in range(3) for kw in range(3)]
        patches = jnp.concatenate(taps, axis=-1)
        patches = patches.reshape(H * W, 9 * C).astype(jnp.bfloat16)
        acc = jnp.dot(patches, wd_ref[...],
                      preferred_element_type=jnp.float32)    # (H*W, 20)
        acc = acc + bd_ref[...]
        o_ref[0] = acc.reshape(H, W, Cout4)
    return kernel


def convblock_deconv_fused(feat, prep):
    """feat: (N, H, W, C) bf16 -> parity-packed deconv output (N, H, W, 20)."""
    N, H, W, C = feat.shape
    wcb, bcb, acb = prep["wcb"], prep["bcb"], prep["acb"]
    wd, bd = prep["wdec"], prep["bdec"]
    L = wcb.shape[0]
    Cout4 = wd.shape[-1]

    est = (2 * H * W * C * 2 + 2 * H * W * Cout4 * 4
           + (H + 2) * (W + 2) * C * 4 + 2 * H * W * 9 * C * 2
           + 2 * H * W * C * 4 + 2 * (wcb.size + wd.size))
    return pl.pallas_call(
        _make_convblock_deconv_kernel(H, W, C, L, Cout4),
        out_shape=jax.ShapeDtypeStruct((N, H, W, Cout4), jnp.float32),
        grid=(N,),
        in_specs=[
            pl.BlockSpec((1, H, W, C), lambda n: (n, 0, 0, 0)),
            pl.BlockSpec((L, 9 * C, C), lambda n: (0, 0, 0)),
            pl.BlockSpec((L, 1, C), lambda n: (0, 0, 0)),
            pl.BlockSpec((L, 1, C), lambda n: (0, 0, 0)),
            pl.BlockSpec((9 * C, Cout4), lambda n: (0, 0)),
            pl.BlockSpec((1, Cout4), lambda n: (0, 0)),
        ],
        out_specs=pl.BlockSpec((1, H, W, Cout4), lambda n: (n, 0, 0, 0)),
        scratch_shapes=[pltpu.VMEM((H + 2, W + 2, C), jnp.float32)],
        compiler_params=pltpu.CompilerParams(
            dimension_semantics=("parallel",),
            vmem_limit_bytes=_vmem_limit(est)),
    )(feat, wcb, bcb, acb, wd, bd)


# ---------------------------------------------------------------------------
# One-time weight packing (hoisted off the per-frame critical path).
# ---------------------------------------------------------------------------
def _deconv_parity_weight(w_pt):
    """ConvTranspose2d(C, Cout, 4, stride=2, pad=1) as ONE 3x3-tap matmul.

    Output pixel (2m+pa, 2n+pb) = sum_{di,dj in {0,1}}
        P[m+pa+di, n+pb+dj] @ w_pt[:, :, (3-pa,1-pa)[di], (3-pb,1-pb)[dj]],
    with P the zero-padded (pad=1) input.  Tap offsets (pa+di, pb+dj) span a
    3x3 window, so a zero-padded (9*C, 4*Cout) weight computes all four
    parities from a single im2col patch matrix.
    """
    C, Cout = w_pt.shape[0], w_pt.shape[1]
    wd = jnp.zeros((9, C, 4, Cout), jnp.float32)
    for pa in range(2):
        for pb in range(2):
            g = 2 * pa + pb
            rows, cols = (3 - pa, 1 - pa), (3 - pb, 1 - pb)
            for di in range(2):
                for dj in range(2):
                    tap = (pa + di) * 3 + (pb + dj)
                    wd = wd.at[tap, :, g, :].set(w_pt[:, :, rows[di], cols[dj]])
    return wd.reshape(9 * C, 4 * Cout)


def prepare_ifblock_weights(params):
    w0, b0, a0 = params["conv0_0"]
    w1, b1, a1 = params["conv0_1"]
    c2, c = w0.shape[-1], w1.shape[-1]
    return {
        "w0": w0.reshape(-1, c2).astype(jnp.bfloat16),
        "b0": b0.reshape(1, c2).astype(jnp.float32),
        "a0": a0.reshape(1, c2).astype(jnp.float32),
        "w1": w1.reshape(-1, c).astype(jnp.bfloat16),
        "b1": b1.reshape(1, c).astype(jnp.float32),
        "a1": a1.reshape(1, c).astype(jnp.float32),
        "wcb": jnp.stack([w.reshape(9 * c, c)
                          for (w, _, _) in params["convblock"]],
                         axis=0).astype(jnp.bfloat16),
        "bcb": jnp.stack([b.reshape(1, c)
                          for (_, b, _) in params["convblock"]],
                         axis=0).astype(jnp.float32),
        "acb": jnp.stack([a.reshape(1, c)
                          for (_, _, a) in params["convblock"]],
                         axis=0).astype(jnp.float32),
        "wdec": _deconv_parity_weight(params["last_w"]).astype(jnp.bfloat16),
        "bdec": jnp.tile(params["last_b"].astype(jnp.float32), 4).reshape(1, -1),
    }


# ---------------------------------------------------------------------------
# Bilinear interpolation, PyTorch F.interpolate(mode='bilinear',
# align_corners=False) semantics.  Plain-JAX glue.
# ---------------------------------------------------------------------------
def bilinear_resize_nhwc(x, out_h, out_w):
    N, H, W, C = x.shape
    if out_h == H and out_w == W:
        return x

    def coords(out_size, in_size):
        d = jnp.arange(out_size, dtype=jnp.float32)
        src = (d + 0.5) * (in_size / out_size) - 0.5
        src = jnp.maximum(src, 0.0)
        lo = jnp.minimum(jnp.floor(src).astype(jnp.int32), in_size - 1)
        hi = jnp.minimum(lo + 1, in_size - 1)
        frac = src - lo.astype(jnp.float32)
        return lo, hi, frac

    lo_h, hi_h, fh = coords(out_h, H)
    lo_w, hi_w, fw = coords(out_w, W)
    xr = (jnp.take(x, lo_h, axis=1) * (1.0 - fh)[None, :, None, None]
          + jnp.take(x, hi_h, axis=1) * fh[None, :, None, None])
    out = (jnp.take(xr, lo_w, axis=2) * (1.0 - fw)[None, None, :, None]
           + jnp.take(xr, hi_w, axis=2) * fw[None, None, :, None])
    return out


# ---------------------------------------------------------------------------
# Parameters (deterministic synthetic init; PReLU alpha = 0.25 like PyTorch).
# ---------------------------------------------------------------------------
def init_ifblock_params(key, in_planes, c):
    def conv_p(k, cin, cout, ksize):
        k1, k2 = jax.random.split(k)
        w = jax.random.normal(k1, (ksize, ksize, cin, cout), jnp.float32) * 0.1
        b = jax.random.normal(k2, (cout,), jnp.float32) * 0.01
        alpha = jnp.full((cout,), 0.25, jnp.float32)
        return (w, b, alpha)

    keys = jax.random.split(key, 11)
    params = {
        "conv0_0": conv_p(keys[0], in_planes, c // 2, 3),
        "conv0_1": conv_p(keys[1], c // 2, c, 3),
        "convblock": [conv_p(keys[2 + i], c, c, 3) for i in range(8)],
    }
    k1, k2 = jax.random.split(keys[10])
    params["last_w"] = jax.random.normal(k1, (c, 5, 4, 4), jnp.float32) * 0.1
    params["last_b"] = jax.random.normal(k2, (5,), jnp.float32) * 0.01
    return params


# ---------------------------------------------------------------------------
# IFBlock.forward  (Pallas version; takes pre-packed weights)
# ---------------------------------------------------------------------------
def ifblock_forward(prep, x_nchw, flow_nchw=None, scale=1):
    x = jnp.transpose(x_nchw, (0, 2, 3, 1)).astype(jnp.float32)   # NCHW->NHWC
    _, H, W, _ = x.shape
    hs = int(math.floor(H * (1.0 / scale)))
    ws = int(math.floor(W * (1.0 / scale)))
    x = bilinear_resize_nhwc(x, hs, ws)
    if flow_nchw is not None:
        fl = jnp.transpose(flow_nchw, (0, 2, 3, 1)).astype(jnp.float32)
        fl = bilinear_resize_nhwc(fl, hs, ws) * (1.0 / scale)
        x = jnp.concatenate([x, fl], axis=-1)

    feat = conv0_fused(x, prep)                     # (N, H/4, W/4, c) bf16
    tmp20 = convblock_deconv_fused(feat, prep)      # (N, H/4, W/4, 20) f32

    # Interleave the 4 deconv output parities -> (N, H/2, W/2, 5). Tiny glue.
    N, Hq, Wq, c4 = tmp20.shape
    Cout = c4 // 4
    tmp = tmp20.reshape(N, Hq, Wq, 2, 2, Cout)
    tmp = jnp.transpose(tmp, (0, 1, 3, 2, 4, 5)).reshape(N, 2 * Hq, 2 * Wq, Cout)

    oh = int(math.floor(tmp.shape[1] * scale * 2))
    ow = int(math.floor(tmp.shape[2] * scale * 2))
    tmp = bilinear_resize_nhwc(tmp, oh, ow)
    flow = tmp[..., :4] * (scale * 2.0)
    mask = tmp[..., 4:5]
    return (jnp.transpose(flow, (0, 3, 1, 2)),                    # back to NCHW
            jnp.transpose(mask, (0, 3, 1, 2)))


# ---------------------------------------------------------------------------
# Pure-XLA reference (for numerical validation of the Pallas kernels).
# ---------------------------------------------------------------------------
def ifblock_forward_ref(params, x_nchw, flow_nchw=None, scale=1):
    x = jnp.transpose(x_nchw, (0, 2, 3, 1)).astype(jnp.float32)
    _, H, W, _ = x.shape
    hs = int(math.floor(H * (1.0 / scale)))
    ws = int(math.floor(W * (1.0 / scale)))
    x = bilinear_resize_nhwc(x, hs, ws)
    if flow_nchw is not None:
        fl = jnp.transpose(flow_nchw, (0, 2, 3, 1)).astype(jnp.float32)
        fl = bilinear_resize_nhwc(fl, hs, ws) * (1.0 / scale)
        x = jnp.concatenate([x, fl], axis=-1)

    def conv_prelu(inp, p, stride):
        w, b, a = p
        y = jax.lax.conv_general_dilated(
            inp, w, window_strides=(stride, stride), padding=[(1, 1), (1, 1)],
            dimension_numbers=('NHWC', 'HWIO', 'NHWC'))
        y = y + b.reshape(1, 1, 1, -1)
        return jnp.where(y >= 0, y, y * a.reshape(1, 1, 1, -1))

    f = conv_prelu(x, params["conv0_0"], 2)
    f = conv_prelu(f, params["conv0_1"], 2)
    feat0 = f
    for p in params["convblock"]:
        f = conv_prelu(f, p, 1)
    feat = f + feat0

    w_pt, b = params["last_w"], params["last_b"]
    w_fl = jnp.transpose(jnp.flip(w_pt, axis=(2, 3)), (2, 3, 0, 1))
    tmp = jax.lax.conv_general_dilated(
        feat, w_fl, window_strides=(1, 1), padding=[(2, 2), (2, 2)],
        lhs_dilation=(2, 2), dimension_numbers=('NHWC', 'HWIO', 'NHWC'))
    tmp = tmp + b.reshape(1, 1, 1, -1)

    oh = int(math.floor(tmp.shape[1] * scale * 2))
    ow = int(math.floor(tmp.shape[2] * scale * 2))
    tmp = bilinear_resize_nhwc(tmp, oh, ow)
    flow = tmp[..., :4] * (scale * 2.0)
    mask = tmp[..., 4:5]
    return (jnp.transpose(flow, (0, 3, 1, 2)),
            jnp.transpose(mask, (0, 3, 1, 2)))


if __name__ == "__main__":
    key = jax.random.PRNGKey(0)
    kp, kx = jax.random.split(key)
    in_planes, c = 7, 16          # IFBlock(7, c) style, small c for the demo
    N, H, W = 2, 32, 32
    params = init_ifblock_params(kp, in_planes, c)
    prep = prepare_ifblock_weights(params)      # one-time weight packing
    x = jax.random.normal(kx, (N, in_planes, H, W), jnp.float32)

    fwd = jax.jit(ifblock_forward, static_argnums=(3,))
    flow, mask = fwd(prep, x, None, 1)
    flow, mask = jax.block_until_ready((flow, mask))
    assert flow.shape == (N, 4, H, W), flow.shape
    assert mask.shape == (N, 1, H, W), mask.shape
    assert bool(jnp.all(jnp.isfinite(flow))) and bool(jnp.all(jnp.isfinite(mask)))

    # numerical check against the plain-XLA reference (bf16 MXU operands and
    # bf16 inter-kernel activations => loose relative-norm tolerance).
    flow_r, mask_r = ifblock_forward_ref(params, x, None, 1)

    def relerr(a, b):
        return float(jnp.linalg.norm(a - b) / (jnp.linalg.norm(b) + 1e-8))

    assert relerr(flow, flow_r) < 0.05, ("flow mismatch", relerr(flow, flow_r))
    assert relerr(mask, mask_r) < 0.05, ("mask mismatch", relerr(mask, mask_r))

    print("KERNEL_OK")
</pallas_src>

<mosaic_0001>
module attributes {stable_mosaic.version = 11 : i64} {
  func.func @kernel(%arg0: i32, %arg1: memref<1x32x32x7xf32, #tpu.memory_space<vmem>>, %arg2: memref<63x8xbf16, #tpu.memory_space<vmem>>, %arg3: memref<1x8xf32, #tpu.memory_space<vmem>>, %arg4: memref<1x8xf32, #tpu.memory_space<vmem>>, %arg5: memref<72x16xbf16, #tpu.memory_space<vmem>>, %arg6: memref<1x16xf32, #tpu.memory_space<vmem>>, %arg7: memref<1x16xf32, #tpu.memory_space<vmem>>, %arg8: memref<1x8x8x16xbf16, #tpu.memory_space<vmem>>, %arg9: memref<34x34x7xf32, #tpu.memory_space<vmem>>, %arg10: memref<18x18x8xf32, #tpu.memory_space<vmem>>) attributes {dimension_semantics = [#tpu.dimension_semantics<parallel>], iteration_bounds = array<i64: 2>, scalar_prefetch = 0 : i64, scratch_operands = 2 : i64, tpu.core_type = #tpu.core_type<tc>, window_params = [{transform_indices = @transform_0, window_bounds = array<i64: 1, 32, 32, 7>}, {pipeline_mode = #tpu.pipeline_mode<synchronous>, transform_indices = @transform_1, window_bounds = array<i64: 63, 8>}, {pipeline_mode = #tpu.pipeline_mode<synchronous>, transform_indices = @transform_2, window_bounds = array<i64: 1, 8>}, {pipeline_mode = #tpu.pipeline_mode<synchronous>, transform_indices = @transform_3, window_bounds = array<i64: 1, 8>}, {pipeline_mode = #tpu.pipeline_mode<synchronous>, transform_indices = @transform_4, window_bounds = array<i64: 72, 16>}, {pipeline_mode = #tpu.pipeline_mode<synchronous>, transform_indices = @transform_5, window_bounds = array<i64: 1, 16>}, {pipeline_mode = #tpu.pipeline_mode<synchronous>, transform_indices = @transform_6, window_bounds = array<i64: 1, 16>}, {transform_indices = @transform_7, window_bounds = array<i64: 1, 8, 8, 16>}]} {
    %cst = arith.constant 0.000000e+00 : f32
    %0 = vector.broadcast %cst : f32 to vector<1x34x7xf32>
    %cst_0 = arith.constant 0.000000e+00 : f32
    %1 = vector.broadcast %cst_0 : f32 to vector<34x1x7xf32>
    %c0 = arith.constant 0 : index
    %c0_1 = arith.constant 0 : index
    %c0_2 = arith.constant 0 : index
    %2 = vector.load %arg9[%c0, %c0_1, %c0_2] : memref<34x34x7xf32, #tpu.memory_space<vmem>>, vector<1x34x7xf32>
    tpu.vector_store %arg9[%c0, %c0_1, %c0_2], %0 {strides = array<i32>} : memref<34x34x7xf32, #tpu.memory_space<vmem>>, vector<1x34x7xf32>,
    %c33 = arith.constant 33 : index
    %c0_3 = arith.constant 0 : index
    %c0_4 = arith.constant 0 : index
    %3 = vector.load %arg9[%c33, %c0_3, %c0_4] : memref<34x34x7xf32, #tpu.memory_space<vmem>>, vector<1x34x7xf32>
    tpu.vector_store %arg9[%c33, %c0_3, %c0_4], %0 {strides = array<i32>} : memref<34x34x7xf32, #tpu.memory_space<vmem>>, vector<1x34x7xf32>,
    %c0_5 = arith.constant 0 : index
    %c0_6 = arith.constant 0 : index
    %c0_7 = arith.constant 0 : index
    %4 = vector.load %arg9[%c0_5, %c0_6, %c0_7] : memref<34x34x7xf32, #tpu.memory_space<vmem>>, vector<34x1x7xf32>
    tpu.vector_store %arg9[%c0_5, %c0_6, %c0_7], %1 {strides = array<i32>} : memref<34x34x7xf32, #tpu.memory_space<vmem>>, vector<34x1x7xf32>,
    %c0_8 = arith.constant 0 : index
    %c33_9 = arith.constant 33 : index
    %c0_10 = arith.constant 0 : index
    %5 = vector.load %arg9[%c0_8, %c33_9, %c0_10] : memref<34x34x7xf32, #tpu.memory_space<vmem>>, vector<34x1x7xf32>
    tpu.vector_store %arg9[%c0_8, %c33_9, %c0_10], %1 {strides = array<i32>} : memref<34x34x7xf32, #tpu.memory_space<vmem>>, vector<34x1x7xf32>,
    %c0_11 = arith.constant 0 : index
    %c0_12 = arith.constant 0 : index
    %c0_13 = arith.constant 0 : index
    %c0_14 = arith.constant 0 : index
    %6 = vector.load %arg1[%c0_11, %c0_12, %c0_13, %c0_14] : memref<1x32x32x7xf32, #tpu.memory_space<vmem>>, vector<1x32x32x7xf32>
    %7 = vector.shape_cast %6 : vector<1x32x32x7xf32> to vector<32x32x7xf32>
    %c1 = arith.constant 1 : index
    %c1_15 = arith.constant 1 : index
    %c0_16 = arith.constant 0 : index
    %8 = vector.load %arg9[%c1, %c1_15, %c0_16] : memref<34x34x7xf32, #tpu.memory_space<vmem>>, vector<32x32x7xf32>
    tpu.vector_store %arg9[%c1, %c1_15, %c0_16], %7 {strides = array<i32>} : memref<34x34x7xf32, #tpu.memory_space<vmem>>, vector<32x32x7xf32>,
    %c0_17 = arith.constant 0 : index
    %c0_18 = arith.constant 0 : index
    %c0_19 = arith.constant 0 : index
    %9 = tpu.strided_load %arg9[%c0_17, %c0_18, %c0_19] {strides = array<i32: 2, 2, 1>} : memref<34x34x7xf32, #tpu.memory_space<vmem>>, vector<16x16x7xf32>
    %c0_20 = arith.constant 0 : index
    %c1_21 = arith.constant 1 : index
    %c0_22 = arith.constant 0 : index
    %10 = tpu.strided_load %arg9[%c0_20, %c1_21, %c0_22] {strides = array<i32: 2, 2, 1>} : memref<34x34x7xf32, #tpu.memory_space<vmem>>, vector<16x16x7xf32>
    %c0_23 = arith.constant 0 : index
    %c2 = arith.constant 2 : index
    %c0_24 = arith.constant 0 : index
    %11 = tpu.strided_load %arg9[%c0_23, %c2, %c0_24] {strides = array<i32: 2, 2, 1>} : memref<34x34x7xf32, #tpu.memory_space<vmem>>, vector<16x16x7xf32>
    %c1_25 = arith.constant 1 : index
    %c0_26 = arith.constant 0 : index
    %c0_27 = arith.constant 0 : index
    %12 = tpu.strided_load %arg9[%c1_25, %c0_26, %c0_27] {strides = array<i32: 2, 2, 1>} : memref<34x34x7xf32, #tpu.memory_space<vmem>>, vector<16x16x7xf32>
    %c1_28 = arith.constant 1 : index
    %c1_29 = arith.constant 1 : index
    %c0_30 = arith.constant 0 : index
    %13 = tpu.strided_load %arg9[%c1_28, %c1_29, %c0_30] {strides = array<i32: 2, 2, 1>} : memref<34x34x7xf32, #tpu.memory_space<vmem>>, vector<16x16x7xf32>
    %c1_31 = arith.constant 1 : index
    %c2_32 = arith.constant 2 : index
    %c0_33 = arith.constant 0 : index
    %14 = tpu.strided_load %arg9[%c1_31, %c2_32, %c0_33] {strides = array<i32: 2, 2, 1>} : memref<34x34x7xf32, #tpu.memory_space<vmem>>, vector<16x16x7xf32>
    %c2_34 = arith.constant 2 : index
    %c0_35 = arith.constant 0 : index
    %c0_36 = arith.constant 0 : index
    %15 = tpu.strided_load %arg9[%c2_34, %c0_35, %c0_36] {strides = array<i32: 2, 2, 1>} : memref<34x34x7xf32, #tpu.memory_space<vmem>>, vector<16x16x7xf32>
    %c2_37 = arith.constant 2 : index
    %c1_38 = arith.constant 1 : index
    %c0_39 = arith.constant 0 : index
    %16 = tpu.strided_load %arg9[%c2_37, %c1_38, %c0_39] {strides = array<i32: 2, 2, 1>} : memref<34x34x7xf32, #tpu.memory_space<vmem>>, vector<16x16x7xf32>
    %c2_40 = arith.constant 2 : index
    %c2_41 = arith.constant 2 : index
    %c0_42 = arith.constant 0 : index
    %17 = tpu.strided_load %arg9[%c2_40, %c2_41, %c0_42] {strides = array<i32: 2, 2, 1>} : memref<34x34x7xf32, #tpu.memory_space<vmem>>, vector<16x16x7xf32>
    %18 = tpu.concatenate %9, %10, %11, %12, %13, %14, %15, %16, %17 in 2 : vector<16x16x7xf32>, vector<16x16x7xf32>, vector<16x16x7xf32>, vector<16x16x7xf32>, vector<16x16x7xf32>, vector<16x16x7xf32>, vector<16x16x7xf32>, vector<16x16x7xf32>, vector<16x16x7xf32> -> vector<16x16x63xf32>
    %19 = vector.shape_cast %18 : vector<16x16x63xf32> to vector<256x63xf32>
    %20 = arith.truncf %19 : vector<256x63xf32> to vector<256x63xbf16>
    %c0_43 = arith.constant 0 : index
    %c0_44 = arith.constant 0 : index
    %21 = vector.load %arg2[%c0_43, %c0_44] : memref<63x8xbf16, #tpu.memory_space<vmem>>, vector<63x8xbf16>
    %cst_45 = arith.constant dense<0.000000e+00> : vector<256x8xf32>
    %22 = tpu.matmul %20, %21, %cst_45 {dimension_numbers = #tpu.dot_dimension_numbers<[1], [0], [0], [1], [0, 0, 1, 1], [], []>} : vector<256x63xbf16>, vector<63x8xbf16>, vector<256x8xf32> -> vector<256x8xf32>
    %c0_46 = arith.constant 0 : index
    %c0_47 = arith.constant 0 : index
    %23 = vector.load %arg3[%c0_46, %c0_47] : memref<1x8xf32, #tpu.memory_space<vmem>>, vector<1x8xf32>
    %24 = vector.broadcast %23 : vector<1x8xf32> to vector<256x8xf32>
    %25 = arith.addf %22, %24 : vector<256x8xf32>
    %cst_48 = arith.constant 0.000000e+00 : f32
    %26 = vector.broadcast %cst_48 : f32 to vector<256x8xf32>
    %27 = arith.cmpf oge, %25, %26 : vector<256x8xf32>
    %c0_49 = arith.constant 0 : index
    %c0_50 = arith.constant 0 : index
    %28 = vector.load %arg4[%c0_49, %c0_50] : memref<1x8xf32, #tpu.memory_space<vmem>>, vector<1x8xf32>
    %29 = vector.broadcast %28 : vector<1x8xf32> to vector<256x8xf32>
    %30 = arith.mulf %25, %29 : vector<256x8xf32>
    %31 = arith.select %27, %25, %30 : vector<256x8xi1>, vector<256x8xf32>
    %32 = vector.shape_cast %31 : vector<256x8xf32> to vector<16x16x8xf32>
    %cst_51 = arith.constant 0.000000e+00 : f32
    %33 = vector.broadcast %cst_51 : f32 to vector<1x18x8xf32>
    %cst_52 = arith.constant 0.000000e+00 : f32
    %34 = vector.broadcast %cst_52 : f32 to vector<18x1x8xf32>
    %c0_53 = arith.constant 0 : index
    %c0_54 = arith.constant 0 : index
    %c0_55 = arith.constant 0 : index
    %35 = vector.load %arg10[%c0_53, %c0_54, %c0_55] : memref<18x18x8xf32, #tpu.memory_space<vmem>>, vector<1x18x8xf32>
    tpu.vector_store %arg10[%c0_53, %c0_54, %c0_55], %33 {strides = array<i32>} : memref<18x18x8xf32, #tpu.memory_space<vmem>>, vector<1x18x8xf32>,
    %c17 = arith.constant 17 : index
    %c0_56 = arith.constant 0 : index
    %c0_57 = arith.constant 0 : index
    %36 = vector.load %arg10[%c17, %c0_56, %c0_57] : memref<18x18x8xf32, #tpu.memory_space<vmem>>, vector<1x18x8xf32>
    tpu.vector_store %arg10[%c17, %c0_56, %c0_57], %33 {strides = array<i32>} : memref<18x18x8xf32, #tpu.memory_space<vmem>>, vector<1x18x8xf32>,
    %c0_58 = arith.constant 0 : index
    %c0_59 = arith.constant 0 : index
    %c0_60 = arith.constant 0 : index
    %37 = vector.load %arg10[%c0_58, %c0_59, %c0_60] : memref<18x18x8xf32, #tpu.memory_space<vmem>>, vector<18x1x8xf32>
    tpu.vector_store %arg10[%c0_58, %c0_59, %c0_60], %34 {strides = array<i32>} : memref<18x18x8xf32, #tpu.memory_space<vmem>>, vector<18x1x8xf32>,
    %c0_61 = arith.constant 0 : index
    %c17_62 = arith.constant 17 : index
    %c0_63 = arith.constant 0 : index
    %38 = vector.load %arg10[%c0_61, %c17_62, %c0_63] : memref<18x18x8xf32, #tpu.memory_space<vmem>>, vector<18x1x8xf32>
    tpu.vector_store %arg10[%c0_61, %c17_62, %c0_63], %34 {strides = array<i32>} : memref<18x18x8xf32, #tpu.memory_space<vmem>>, vector<18x1x8xf32>,
    %c1_64 = arith.constant 1 : index
    %c1_65 = arith.constant 1 : index
    %c0_66 = arith.constant 0 : index
    %39 = vector.load %arg10[%c1_64, %c1_65, %c0_66] : memref<18x18x8xf32, #tpu.memory_space<vmem>>, vector<16x16x8xf32>
    tpu.vector_store %arg10[%c1_64, %c1_65, %c0_66], %32 {strides = array<i32>} : memref<18x18x8xf32, #tpu.memory_space<vmem>>, vector<16x16x8xf32>,
    %c0_67 = arith.constant 0 : index
    %c0_68 = arith.constant 0 : index
    %c0_69 = arith.constant 0 : index
    %40 = tpu.strided_load %arg10[%c0_67, %c0_68, %c0_69] {strides = array<i32: 2, 2, 1>} : memref<18x18x8xf32, #tpu.memory_space<vmem>>, vector<8x8x8xf32>
    %c0_70 = arith.constant 0 : index
    %c1_71 = arith.constant 1 : index
    %c0_72 = arith.constant 0 : index
    %41 = tpu.strided_load %arg10[%c0_70, %c1_71, %c0_72] {strides = array<i32: 2, 2, 1>} : memref<18x18x8xf32, #tpu.memory_space<vmem>>, vector<8x8x8xf32>
    %c0_73 = arith.constant 0 : index
    %c2_74 = arith.constant 2 : index
    %c0_75 = arith.constant 0 : index
    %42 = tpu.strided_load %arg10[%c0_73, %c2_74, %c0_75] {strides = array<i32: 2, 2, 1>} : memref<18x18x8xf32, #tpu.memory_space<vmem>>, vector<8x8x8xf32>
    %c1_76 = arith.constant 1 : index
    %c0_77 = arith.constant 0 : index
    %c0_78 = arith.constant 0 : index
    %43 = tpu.strided_load %arg10[%c1_76, %c0_77, %c0_78] {strides = array<i32: 2, 2, 1>} : memref<18x18x8xf32, #tpu.memory_space<vmem>>, vector<8x8x8xf32>
    %c1_79 = arith.constant 1 : index
    %c1_80 = arith.constant 1 : index
    %c0_81 = arith.constant 0 : index
    %44 = tpu.strided_load %arg10[%c1_79, %c1_80, %c0_81] {strides = array<i32: 2, 2, 1>} : memref<18x18x8xf32, #tpu.memory_space<vmem>>, vector<8x8x8xf32>
    %c1_82 = arith.constant 1 : index
    %c2_83 = arith.constant 2 : index
    %c0_84 = arith.constant 0 : index
    %45 = tpu.strided_load %arg10[%c1_82, %c2_83, %c0_84] {strides = array<i32: 2, 2, 1>} : memref<18x18x8xf32, #tpu.memory_space<vmem>>, vector<8x8x8xf32>
    %c2_85 = arith.constant 2 : index
    %c0_86 = arith.constant 0 : index
    %c0_87 = arith.constant 0 : index
    %46 = tpu.strided_load %arg10[%c2_85, %c0_86, %c0_87] {strides = array<i32: 2, 2, 1>} : memref<18x18x8xf32, #tpu.memory_space<vmem>>, vector<8x8x8xf32>
    %c2_88 = arith.constant 2 : index
    %c1_89 = arith.constant 1 : index
    %c0_90 = arith.constant 0 : index
    %47 = tpu.strided_load %arg10[%c2_88, %c1_89, %c0_90] {strides = array<i32: 2, 2, 1>} : memref<18x18x8xf32, #tpu.memory_space<vmem>>, vector<8x8x8xf32>
    %c2_91 = arith.constant 2 : index
    %c2_92 = arith.constant 2 : index
    %c0_93 = arith.constant 0 : index
    %48 = tpu.strided_load %arg10[%c2_91, %c2_92, %c0_93] {strides = array<i32: 2, 2, 1>} : memref<18x18x8xf32, #tpu.memory_space<vmem>>, vector<8x8x8xf32>
    %49 = tpu.concatenate %40, %41, %42, %43, %44, %45, %46, %47, %48 in 2 : vector<8x8x8xf32>, vector<8x8x8xf32>, vector<8x8x8xf32>, vector<8x8x8xf32>, vector<8x8x8xf32>, vector<8x8x8xf32>, vector<8x8x8xf32>, vector<8x8x8xf32>, vector<8x8x8xf32> -> vector<8x8x72xf32>
    %50 = vector.shape_cast %49 : vector<8x8x72xf32> to vector<64x72xf32>
    %51 = arith.truncf %50 : vector<64x72xf32> to vector<64x72xbf16>
    %c0_94 = arith.constant 0 : index
    %c0_95 = arith.constant 0 : index
    %52 = vector.load %arg5[%c0_94, %c0_95] : memref<72x16xbf16, #tpu.memory_space<vmem>>, vector<72x16xbf16>
    %cst_96 = arith.constant dense<0.000000e+00> : vector<64x16xf32>
    %53 = tpu.matmul %51, %52, %cst_96 {dimension_numbers = #tpu.dot_dimension_numbers<[1], [0], [0], [1], [0, 0, 1, 1], [], []>} : vector<64x72xbf16>, vector<72x16xbf16>, vector<64x16xf32> -> vector<64x16xf32>
    %c0_97 = arith.constant 0 : index
    %c0_98 = arith.constant 0 : index
    %54 = vector.load %arg6[%c0_97, %c0_98] : memref<1x16xf32, #tpu.memory_space<vmem>>, vector<1x16xf32>
    %55 = vector.broadcast %54 : vector<1x16xf32> to vector<64x16xf32>
    %56 = arith.addf %53, %55 : vector<64x16xf32>
    %cst_99 = arith.constant 0.000000e+00 : f32
    %57 = vector.broadcast %cst_99 : f32 to vector<64x16xf32>
    %58 = arith.cmpf oge, %56, %57 : vector<64x16xf32>
    %c0_100 = arith.constant 0 : index
    %c0_101 = arith.constant 0 : index
    %59 = vector.load %arg7[%c0_100, %c0_101] : memref<1x16xf32, #tpu.memory_space<vmem>>, vector<1x16xf32>
    %60 = vector.broadcast %59 : vector<1x16xf32> to vector<64x16xf32>
    %61 = arith.mulf %56, %60 : vector<64x16xf32>
    %62 = arith.select %58, %56, %61 : vector<64x16xi1>, vector<64x16xf32>
    %63 = vector.shape_cast %62 : vector<64x16xf32> to vector<8x8x16xf32>
    %64 = arith.truncf %63 : vector<8x8x16xf32> to vector<8x8x16xbf16>
    %c0_102 = arith.constant 0 : index
    %c0_103 = arith.constant 0 : index
    %c0_104 = arith.constant 0 : index
    %c0_105 = arith.constant 0 : index
    %65 = vector.load %arg8[%c0_102, %c0_103, %c0_104, %c0_105] : memref<1x8x8x16xbf16, #tpu.memory_space<vmem>>, vector<1x8x8x16xbf16>
    %66 = vector.shape_cast %65 : vector<1x8x8x16xbf16> to vector<8x8x16xbf16>
    %67 = vector.shape_cast %64 : vector<8x8x16xbf16> to vector<1x8x8x16xbf16>
    tpu.vector_store %arg8[%c0_102, %c0_103, %c0_104, %c0_105], %67 {strides = array<i32>} : memref<1x8x8x16xbf16, #tpu.memory_space<vmem>>, vector<1x8x8x16xbf16>,
    return
  }
  func.func @transform_0(%arg0: i32) -> (i32, i32, i32, i32) {
    %c0_i32 = arith.constant 0 : i32
    %c0_i32_0 = arith.constant 0 : i32
    %c0_i32_1 = arith.constant 0 : i32
    %c0_i32_2 = arith.constant 0 : i32
    return %arg0, %c0_i32, %c0_i32_0, %c0_i32_1 : i32, i32, i32, i32
  }
  func.func @transform_1(%arg0: i32) -> (i32, i32) {
    %c0_i32 = arith.constant 0 : i32
    %c0_i32_0 = arith.constant 0 : i32
    %c0_i32_1 = arith.constant 0 : i32
    return %c0_i32, %c0_i32_0 : i32, i32
  }
  func.func @transform_2(%arg0: i32) -> (i32, i32) {
    %c0_i32 = arith.constant 0 : i32
    %c0_i32_0 = arith.constant 0 : i32
    %c0_i32_1 = arith.constant 0 : i32
    return %c0_i32, %c0_i32_0 : i32, i32
  }
  func.func @transform_3(%arg0: i32) -> (i32, i32) {
    %c0_i32 = arith.constant 0 : i32
    %c0_i32_0 = arith.constant 0 : i32
    %c0_i32_1 = arith.constant 0 : i32
    return %c0_i32, %c0_i32_0 : i32, i32
  }
  func.func @transform_4(%arg0: i32) -> (i32, i32) {
    %c0_i32 = arith.constant 0 : i32
    %c0_i32_0 = arith.constant 0 : i32
    %c0_i32_1 = arith.constant 0 : i32
    return %c0_i32, %c0_i32_0 : i32, i32
  }
  func.func @transform_5(%arg0: i32) -> (i32, i32) {
    %c0_i32 = arith.constant 0 : i32
    %c0_i32_0 = arith.constant 0 : i32
    %c0_i32_1 = arith.constant 0 : i32
    return %c0_i32, %c0_i32_0 : i32, i32
  }
  func.func @transform_6(%arg0: i32) -> (i32, i32) {
    %c0_i32 = arith.constant 0 : i32
    %c0_i32_0 = arith.constant 0 : i32
    %c0_i32_1 = arith.constant 0 : i32
    return %c0_i32, %c0_i32_0 : i32, i32
  }
  func.func @transform_7(%arg0: i32) -> (i32, i32, i32, i32) {
    %c0_i32 = arith.constant 0 : i32
    %c0_i32_0 = arith.constant 0 : i32
    %c0_i32_1 = arith.constant 0 : i32
    %c0_i32_2 = arith.constant 0 : i32
    return %arg0, %c0_i32, %c0_i32_0, %c0_i32_1 : i32, i32, i32, i32
  }
}

module attributes {stable_mosaic.version = 11 : i64} {
  func.func @kernel(%arg0: i32, %arg1: memref<1x8x8x16xbf16, #tpu.memory_space<vmem>>, %arg2: memref<8x144x16xbf16, #tpu.memory_space<vmem>>, %arg3: memref<8x1x16xf32, #tpu.memory_space<vmem>>, %arg4: memref<8x1x16xf32, #tpu.memory_space<vmem>>, %arg5: memref<144x20xbf16, #tpu.memory_space<vmem>>, %arg6: memref<1x20xf32, #tpu.memory_space<vmem>>, %arg7: memref<1x8x8x20xf32, #tpu.memory_space<vmem>>, %arg8: memref<10x10x16xf32, #tpu.memory_space<vmem>>) attributes {dimension_semantics = [#tpu.dimension_semantics<parallel>], iteration_bounds = array<i64: 2>, scalar_prefetch = 0 : i64, scratch_operands = 1 : i64, tpu.core_type = #tpu.core_type<tc>, window_params = [{transform_indices = @transform_0, window_bounds = array<i64: 1, 8, 8, 16>}, {pipeline_mode = #tpu.pipeline_mode<synchronous>, transform_indices = @transform_1, window_bounds = array<i64: 8, 144, 16>}, {pipeline_mode = #tpu.pipeline_mode<synchronous>, transform_indices = @transform_2, window_bounds = array<i64: 8, 1, 16>}, {pipeline_mode = #tpu.pipeline_mode<synchronous>, transform_indices = @transform_3, window_bounds = array<i64: 8, 1, 16>}, {pipeline_mode = #tpu.pipeline_mode<synchronous>, transform_indices = @transform_4, window_bounds = array<i64: 144, 20>}, {pipeline_mode = #tpu.pipeline_mode<synchronous>, transform_indices = @transform_5, window_bounds = array<i64: 1, 20>}, {transform_indices = @transform_6, window_bounds = array<i64: 1, 8, 8, 20>}]} {
    %cst = arith.constant 0.000000e+00 : f32
    %0 = vector.broadcast %cst : f32 to vector<1x10x16xf32>
    %cst_0 = arith.constant 0.000000e+00 : f32
    %1 = vector.broadcast %cst_0 : f32 to vector<10x1x16xf32>
    %c0 = arith.constant 0 : index
    %c0_1 = arith.constant 0 : index
    %c0_2 = arith.constant 0 : index
    %2 = vector.load %arg8[%c0, %c0_1, %c0_2] : memref<10x10x16xf32, #tpu.memory_space<vmem>>, vector<1x10x16xf32>
    tpu.vector_store %arg8[%c0, %c0_1, %c0_2], %0 {strides = array<i32>} : memref<10x10x16xf32, #tpu.memory_space<vmem>>, vector<1x10x16xf32>,
    %c9 = arith.constant 9 : index
    %c0_3 = arith.constant 0 : index
    %c0_4 = arith.constant 0 : index
    %3 = vector.load %arg8[%c9, %c0_3, %c0_4] : memref<10x10x16xf32, #tpu.memory_space<vmem>>, vector<1x10x16xf32>
    tpu.vector_store %arg8[%c9, %c0_3, %c0_4], %0 {strides = array<i32>} : memref<10x10x16xf32, #tpu.memory_space<vmem>>, vector<1x10x16xf32>,
    %c0_5 = arith.constant 0 : index
    %c0_6 = arith.constant 0 : index
    %c0_7 = arith.constant 0 : index
    %4 = vector.load %arg8[%c0_5, %c0_6, %c0_7] : memref<10x10x16xf32, #tpu.memory_space<vmem>>, vector<10x1x16xf32>
    tpu.vector_store %arg8[%c0_5, %c0_6, %c0_7], %1 {strides = array<i32>} : memref<10x10x16xf32, #tpu.memory_space<vmem>>, vector<10x1x16xf32>,
    %c0_8 = arith.constant 0 : index
    %c9_9 = arith.constant 9 : index
    %c0_10 = arith.constant 0 : index
    %5 = vector.load %arg8[%c0_8, %c9_9, %c0_10] : memref<10x10x16xf32, #tpu.memory_space<vmem>>, vector<10x1x16xf32>
    tpu.vector_store %arg8[%c0_8, %c9_9, %c0_10], %1 {strides = array<i32>} : memref<10x10x16xf32, #tpu.memory_space<vmem>>, vector<10x1x16xf32>,
    %c0_11 = arith.constant 0 : index
    %c0_12 = arith.constant 0 : index
    %c0_13 = arith.constant 0 : index
    %c0_14 = arith.constant 0 : index
    %6 = vector.load %arg1[%c0_11, %c0_12, %c0_13, %c0_14] : memref<1x8x8x16xbf16, #tpu.memory_space<vmem>>, vector<1x8x8x16xbf16>
    %7 = vector.shape_cast %6 : vector<1x8x8x16xbf16> to vector<8x8x16xbf16>
    %8 = arith.extf %7 : vector<8x8x16xbf16> to vector<8x8x16xf32>
    %c1 = arith.constant 1 : index
    %c1_15 = arith.constant 1 : index
    %c0_16 = arith.constant 0 : index
    %9 = vector.load %arg8[%c1, %c1_15, %c0_16] : memref<10x10x16xf32, #tpu.memory_space<vmem>>, vector<8x8x16xf32>
    tpu.vector_store %arg8[%c1, %c1_15, %c0_16], %8 {strides = array<i32>} : memref<10x10x16xf32, #tpu.memory_space<vmem>>, vector<8x8x16xf32>,
    %c0_17 = arith.constant 0 : index
    %c0_18 = arith.constant 0 : index
    %c0_19 = arith.constant 0 : index
    %10 = vector.load %arg8[%c0_17, %c0_18, %c0_19] : memref<10x10x16xf32, #tpu.memory_space<vmem>>, vector<8x8x16xf32>
    %c0_20 = arith.constant 0 : index
    %c1_21 = arith.constant 1 : index
    %c0_22 = arith.constant 0 : index
    %11 = vector.load %arg8[%c0_20, %c1_21, %c0_22] : memref<10x10x16xf32, #tpu.memory_space<vmem>>, vector<8x8x16xf32>
    %c0_23 = arith.constant 0 : index
    %c2 = arith.constant 2 : index
    %c0_24 = arith.constant 0 : index
    %12 = vector.load %arg8[%c0_23, %c2, %c0_24] : memref<10x10x16xf32, #tpu.memory_space<vmem>>, vector<8x8x16xf32>
    %c1_25 = arith.constant 1 : index
    %c0_26 = arith.constant 0 : index
    %c0_27 = arith.constant 0 : index
    %13 = vector.load %arg8[%c1_25, %c0_26, %c0_27] : memref<10x10x16xf32, #tpu.memory_space<vmem>>, vector<8x8x16xf32>
    %c1_28 = arith.constant 1 : index
    %c1_29 = arith.constant 1 : index
    %c0_30 = arith.constant 0 : index
    %14 = vector.load %arg8[%c1_28, %c1_29, %c0_30] : memref<10x10x16xf32, #tpu.memory_space<vmem>>, vector<8x8x16xf32>
    %c1_31 = arith.constant 1 : index
    %c2_32 = arith.constant 2 : index
    %c0_33 = arith.constant 0 : index
    %15 = vector.load %arg8[%c1_31, %c2_32, %c0_33] : memref<10x10x16xf32, #tpu.memory_space<vmem>>, vector<8x8x16xf32>
    %c2_34 = arith.constant 2 : index
    %c0_35 = arith.constant 0 : index
    %c0_36 = arith.constant 0 : index
    %16 = vector.load %arg8[%c2_34, %c0_35, %c0_36] : memref<10x10x16xf32, #tpu.memory_space<vmem>>, vector<8x8x16xf32>
    %c2_37 = arith.constant 2 : index
    %c1_38 = arith.constant 1 : index
    %c0_39 = arith.constant 0 : index
    %17 = vector.load %arg8[%c2_37, %c1_38, %c0_39] : memref<10x10x16xf32, #tpu.memory_space<vmem>>, vector<8x8x16xf32>
    %c2_40 = arith.constant 2 : index
    %c2_41 = arith.constant 2 : index
    %c0_42 = arith.constant 0 : index
    %18 = vector.load %arg8[%c2_40, %c2_41, %c0_42] : memref<10x10x16xf32, #tpu.memory_space<vmem>>, vector<8x8x16xf32>
    %19 = tpu.concatenate %10, %11, %12, %13, %14, %15, %16, %17, %18 in 2 : vector<8x8x16xf32>, vector<8x8x16xf32>, vector<8x8x16xf32>, vector<8x8x16xf32>, vector<8x8x16xf32>, vector<8x8x16xf32>, vector<8x8x16xf32>, vector<8x8x16xf32>, vector<8x8x16xf32> -> vector<8x8x144xf32>
    %20 = vector.shape_cast %19 : vector<8x8x144xf32> to vector<64x144xf32>
    %21 = arith.truncf %20 : vector<64x144xf32> to vector<64x144xbf16>
    %c0_43 = arith.constant 0 : index
    %c0_44 = arith.constant 0 : index
    %c0_45 = arith.constant 0 : index
    %22 = vector.load %arg2[%c0_43, %c0_44, %c0_45] : memref<8x144x16xbf16, #tpu.memory_space<vmem>>, vector<1x144x16xbf16>
    %23 = vector.shape_cast %22 : vector<1x144x16xbf16> to vector<144x16xbf16>
    %cst_46 = arith.constant dense<0.000000e+00> : vector<64x16xf32>
    %24 = tpu.matmul %21, %23, %cst_46 {dimension_numbers = #tpu.dot_dimension_numbers<[1], [0], [0], [1], [0, 0, 1, 1], [], []>} : vector<64x144xbf16>, vector<144x16xbf16>, vector<64x16xf32> -> vector<64x16xf32>
    %c0_47 = arith.constant 0 : index
    %c0_48 = arith.constant 0 : index
    %c0_49 = arith.constant 0 : index
    %25 = vector.load %arg3[%c0_47, %c0_48, %c0_49] : memref<8x1x16xf32, #tpu.memory_space<vmem>>, vector<1x1x16xf32>
    %26 = vector.shape_cast %25 : vector<1x1x16xf32> to vector<1x16xf32>
    %27 = vector.broadcast %26 : vector<1x16xf32> to vector<64x16xf32>
    %28 = arith.addf %24, %27 : vector<64x16xf32>
    %cst_50 = arith.constant 0.000000e+00 : f32
    %29 = vector.broadcast %cst_50 : f32 to vector<64x16xf32>
    %30 = arith.cmpf oge, %28, %29 : vector<64x16xf32>
    %c0_51 = arith.constant 0 : index
    %c0_52 = arith.constant 0 : index
    %c0_53 = arith.constant 0 : index
    %31 = vector.load %arg4[%c0_51, %c0_52, %c0_53] : memref<8x1x16xf32, #tpu.memory_space<vmem>>, vector<1x1x16xf32>
    %32 = vector.shape_cast %31 : vector<1x1x16xf32> to vector<1x16xf32>
    %33 = vector.broadcast %32 : vector<1x16xf32> to vector<64x16xf32>
    %34 = arith.mulf %28, %33 : vector<64x16xf32>
    %35 = arith.select %30, %28, %34 : vector<64x16xi1>, vector<64x16xf32>
    %36 = vector.shape_cast %35 : vector<64x16xf32> to vector<8x8x16xf32>
    %c1_54 = arith.constant 1 : index
    %c1_55 = arith.constant 1 : index
    %c0_56 = arith.constant 0 : index
    %37 = vector.load %arg8[%c1_54, %c1_55, %c0_56] : memref<10x10x16xf32, #tpu.memory_space<vmem>>, vector<8x8x16xf32>
    tpu.vector_store %arg8[%c1_54, %c1_55, %c0_56], %36 {strides = array<i32>} : memref<10x10x16xf32, #tpu.memory_space<vmem>>, vector<8x8x16xf32>,
    %c0_57 = arith.constant 0 : index
    %c0_58 = arith.constant 0 : index
    %c0_59 = arith.constant 0 : index
    %38 = vector.load %arg8[%c0_57, %c0_58, %c0_59] : memref<10x10x16xf32, #tpu.memory_space<vmem>>, vector<8x8x16xf32>
    %c0_60 = arith.constant 0 : index
    %c1_61 = arith.constant 1 : index
    %c0_62 = arith.constant 0 : index
    %39 = vector.load %arg8[%c0_60, %c1_61, %c0_62] : memref<10x10x16xf32, #tpu.memory_space<vmem>>, vector<8x8x16xf32>
    %c0_63 = arith.constant 0 : index
    %c2_64 = arith.constant 2 : index
    %c0_65 = arith.constant 0 : index
    %40 = vector.load %arg8[%c0_63, %c2_64, %c0_65] : memref<10x10x16xf32, #tpu.memory_space<vmem>>, vector<8x8x16xf32>
    %c1_66 = arith.constant 1 : index
    %c0_67 = arith.constant 0 : index
    %c0_68 = arith.constant 0 : index
    %41 = vector.load %arg8[%c1_66, %c0_67, %c0_68] : memref<10x10x16xf32, #tpu.memory_space<vmem>>, vector<8x8x16xf32>
    %c1_69 = arith.constant 1 : index
    %c1_70 = arith.constant 1 : index
    %c0_71 = arith.constant 0 : index
    %42 = vector.load %arg8[%c1_69, %c1_70, %c0_71] : memref<10x10x16xf32, #tpu.memory_space<vmem>>, vector<8x8x16xf32>
    %c1_72 = arith.constant 1 : index
    %c2_73 = arith.constant 2 : index
    %c0_74 = arith.constant 0 : index
    %43 = vector.load %arg8[%c1_72, %c2_73, %c0_74] : memref<10x10x16xf32, #tpu.memory_space<vmem>>, vector<8x8x16xf32>
    %c2_75 = arith.constant 2 : index
    %c0_76 = arith.constant 0 : index
    %c0_77 = arith.constant 0 : index
    %44 = vector.load %arg8[%c2_75, %c0_76, %c0_77] : memref<10x10x16xf32, #tpu.memory_space<vmem>>, vector<8x8x16xf32>
    %c2_78 = arith.constant 2 : index
    %c1_79 = arith.constant 1 : index
    %c0_80 = arith.constant 0 : index
    %45 = vector.load %arg8[%c2_78, %c1_79, %c0_80] : memref<10x10x16xf32, #tpu.memory_space<vmem>>, vector<8x8x16xf32>
    %c2_81 = arith.constant 2 : index
    %c2_82 = arith.constant 2 : index
    %c0_83 = arith.constant 0 : index
    %46 = vector.load %arg8[%c2_81, %c2_82, %c0_83] : memref<10x10x16xf32, #tpu.memory_space<vmem>>, vector<8x8x16xf32>
    %47 = tpu.concatenate %38, %39, %40, %41, %42, %43, %44, %45, %46 in 2 : vector<8x8x16xf32>, vector<8x8x16xf32>, vector<8x8x16xf32>, vector<8x8x16xf32>, vector<8x8x16xf32>, vector<8x8x16xf32>, vector<8x8x16xf32>, vector<8x8x16xf32>, vector<8x8x16xf32> -> vector<8x8x144xf32>
    %48 = vector.shape_cast %47 : vector<8x8x144xf32> to vector<64x144xf32>
    %49 = arith.truncf %48 : vector<64x144xf32> to vector<64x144xbf16>
    %c1_84 = arith.constant 1 : index
    %c0_85 = arith.constant 0 : index
    %c0_86 = arith.constant 0 : index
    %50 = vector.load %arg2[%c1_84, %c0_85, %c0_86] : memref<8x144x16xbf16, #tpu.memory_space<vmem>>, vector<1x144x16xbf16>
    %51 = vector.shape_cast %50 : vector<1x144x16xbf16> to vector<144x16xbf16>
    %cst_87 = arith.constant dense<0.000000e+00> : vector<64x16xf32>
    %52 = tpu.matmul %49, %51, %cst_87 {dimension_numbers = #tpu.dot_dimension_numbers<[1], [0], [0], [1], [0, 0, 1, 1], [], []>} : vector<64x144xbf16>, vector<144x16xbf16>, vector<64x16xf32> -> vector<64x16xf32>
    %c1_88 = arith.constant 1 : index
    %c0_89 = arith.constant 0 : index
    %c0_90 = arith.constant 0 : index
    %53 = vector.load %arg3[%c1_88, %c0_89, %c0_90] : memref<8x1x16xf32, #tpu.memory_space<vmem>>, vector<1x1x16xf32>
    %54 = vector.shape_cast %53 : vector<1x1x16xf32> to vector<1x16xf32>
    %55 = vector.broadcast %54 : vector<1x16xf32> to vector<64x16xf32>
    %56 = arith.addf %52, %55 : vector<64x16xf32>
    %cst_91 = arith.constant 0.000000e+00 : f32
    %57 = vector.broadcast %cst_91 : f32 to vector<64x16xf32>
    %58 = arith.cmpf oge, %56, %57 : vector<64x16xf32>
    %c1_92 = arith.constant 1 : index
    %c0_93 = arith.constant 0 : index
    %c0_94 = arith.constant 0 : index
    %59 = vector.load %arg4[%c1_92, %c0_93, %c0_94] : memref<8x1x16xf32, #tpu.memory_space<vmem>>, vector<1x1x16xf32>
    %60 = vector.shape_cast %59 : vector<1x1x16xf32> to vector<1x16xf32>
    %61 = vector.broadcast %60 : vector<1x16xf32> to vector<64x16xf32>
    %62 = arith.mulf %56, %61 : vector<64x16xf32>
    %63 = arith.select %58, %56, %62 : vector<64x16xi1>, vector<64x16xf32>
    %64 = vector.shape_cast %63 : vector<64x16xf32> to vector<8x8x16xf32>
    %c1_95 = arith.constant 1 : index
    %c1_96 = arith.constant 1 : index
    %c0_97 = arith.constant 0 : index
    %65 = vector.load %arg8[%c1_95, %c1_96, %c0_97] : memref<10x10x16xf32, #tpu.memory_space<vmem>>, vector<8x8x16xf32>
    tpu.vector_store %arg8[%c1_95, %c1_96, %c0_97], %64 {strides = array<i32>} : memref<10x10x16xf32, #tpu.memory_space<vmem>>, vector<8x8x16xf32>,
    %c0_98 = arith.constant 0 : index
    %c0_99 = arith.constant 0 : index
    %c0_100 = arith.constant 0 : index
    %66 = vector.load %arg8[%c0_98, %c0_99, %c0_100] : memref<10x10x16xf32, #tpu.memory_space<vmem>>, vector<8x8x16xf32>
    %c0_101 = arith.constant 0 : index
    %c1_102 = arith.constant 1 : index
    %c0_103 = arith.constant 0 : index
    %67 = vector.load %arg8[%c0_101, %c1_102, %c0_103] : memref<10x10x16xf32, #tpu.memory_space<vmem>>, vector<8x8x16xf32>
    %c0_104 = arith.constant 0 : index
    %c2_105 = arith.constant 2 : index
    %c0_106 = arith.constant 0 : index
    %68 = vector.load %arg8[%c0_104, %c2_105, %c0_106] : memref<10x10x16xf32, #tpu.memory_space<vmem>>, vector<8x8x16xf32>
    %c1_107 = arith.constant 1 : index
    %c0_108 = arith.constant 0 : index
    %c0_109 = arith.constant 0 : index
    %69 = vector.load %arg8[%c1_107, %c0_108, %c0_109] : memref<10x10x16xf32, #tpu.memory_space<vmem>>, vector<8x8x16xf32>
    %c1_110 = arith.constant 1 : index
    %c1_111 = arith.constant 1 : index
    %c0_112 = arith.constant 0 : index
    %70 = vector.load %arg8[%c1_110, %c1_111, %c0_112] : memref<10x10x16xf32, #tpu.memory_space<vmem>>, vector<8x8x16xf32>
    %c1_113 = arith.constant 1 : index
    %c2_114 = arith.constant 2 : index
    %c0_115 = arith.constant 0 : index
    %71 = vector.load %arg8[%c1_113, %c2_114, %c0_115] : memref<10x10x16xf32, #tpu.memory_space<vmem>>, vector<8x8x16xf32>
    %c2_116 = arith.constant 2 : index
    %c0_117 = arith.constant 0 : index
    %c0_118 = arith.constant 0 : index
    %72 = vector.load %arg8[%c2_116, %c0_117, %c0_118] : memref<10x10x16xf32, #tpu.memory_space<vmem>>, vector<8x8x16xf32>
    %c2_119 = arith.constant 2 : index
    %c1_120 = arith.constant 1 : index
    %c0_121 = arith.constant 0 : index
    %73 = vector.load %arg8[%c2_119, %c1_120, %c0_121] : memref<10x10x16xf32, #tpu.memory_space<vmem>>, vector<8x8x16xf32>
    %c2_122 = arith.constant 2 : index
    %c2_123 = arith.constant 2 : index
    %c0_124 = arith.constant 0 : index
    %74 = vector.load %arg8[%c2_122, %c2_123, %c0_124] : memref<10x10x16xf32, #tpu.memory_space<vmem>>, vector<8x8x16xf32>
    %75 = tpu.concatenate %66, %67, %68, %69, %70, %71, %72, %73, %74 in 2 : vector<8x8x16xf32>, vector<8x8x16xf32>, vector<8x8x16xf32>, vector<8x8x16xf32>, vector<8x8x16xf32>, vector<8x8x16xf32>, vector<8x8x16xf32>, vector<8x8x16xf32>, vector<8x8x16xf32> -> vector<8x8x144xf32>
    %76 = vector.shape_cast %75 : vector<8x8x144xf32> to vector<64x144xf32>
    %77 = arith.truncf %76 : vector<64x144xf32> to vector<64x144xbf16>
    %c2_125 = arith.constant 2 : index
    %c0_126 = arith.constant 0 : index
    %c0_127 = arith.constant 0 : index
    %78 = vector.load %arg2[%c2_125, %c0_126, %c0_127] : memref<8x144x16xbf16, #tpu.memory_space<vmem>>, vector<1x144x16xbf16>
    %79 = vector.shape_cast %78 : vector<1x144x16xbf16> to vector<144x16xbf16>
    %cst_128 = arith.constant dense<0.000000e+00> : vector<64x16xf32>
    %80 = tpu.matmul %77, %79, %cst_128 {dimension_numbers = #tpu.dot_dimension_numbers<[1], [0], [0], [1], [0, 0, 1, 1], [], []>} : vector<64x144xbf16>, vector<144x16xbf16>, vector<64x16xf32> -> vector<64x16xf32>
    %c2_129 = arith.constant 2 : index
    %c0_130 = arith.constant 0 : index
    %c0_131 = arith.constant 0 : index
    %81 = vector.load %arg3[%c2_129, %c0_130, %c0_131] : memref<8x1x16xf32, #tpu.memory_space<vmem>>, vector<1x1x16xf32>
    %82 = vector.shape_cast %81 : vector<1x1x16xf32> to vector<1x16xf32>
    %83 = vector.broadcast %82 : vector<1x16xf32> to vector<64x16xf32>
    %84 = arith.addf %80, %83 : vector<64x16xf32>
    %cst_132 = arith.constant 0.000000e+00 : f32
    %85 = vector.broadcast %cst_132 : f32 to vector<64x16xf32>
    %86 = arith.cmpf oge, %84, %85 : vector<64x16xf32>
    %c2_133 = arith.constant 2 : index
    %c0_134 = arith.constant 0 : index
    %c0_135 = arith.constant 0 : index
    %87 = vector.load %arg4[%c2_133, %c0_134, %c0_135] : memref<8x1x16xf32, #tpu.memory_space<vmem>>, vector<1x1x16xf32>
    %88 = vector.shape_cast %87 : vector<1x1x16xf32> to vector<1x16xf32>
    %89 = vector.broadcast %88 : vector<1x16xf32> to vector<64x16xf32>
    %90 = arith.mulf %84, %89 : vector<64x16xf32>
    %91 = arith.select %86, %84, %90 : vector<64x16xi1>, vector<64x16xf32>
    %92 = vector.shape_cast %91 : vector<64x16xf32> to vector<8x8x16xf32>
    %c1_136 = arith.constant 1 : index
    %c1_137 = arith.constant 1 : index
    %c0_138 = arith.constant 0 : index
    %93 = vector.load %arg8[%c1_136, %c1_137, %c0_138] : memref<10x10x16xf32, #tpu.memory_space<vmem>>, vector<8x8x16xf32>
    tpu.vector_store %arg8[%c1_136, %c1_137, %c0_138], %92 {strides = array<i32>} : memref<10x10x16xf32, #tpu.memory_space<vmem>>, vector<8x8x16xf32>,
    %c0_139 = arith.constant 0 : index
    %c0_140 = arith.constant 0 : index
    %c0_141 = arith.constant 0 : index
    %94 = vector.load %arg8[%c0_139, %c0_140, %c0_141] : memref<10x10x16xf32, #tpu.memory_space<vmem>>, vector<8x8x16xf32>
    %c0_142 = arith.constant 0 : index
    %c1_143 = arith.constant 1 : index
    %c0_144 = arith.constant 0 : index
    %95 = vector.load %arg8[%c0_142, %c1_143, %c0_144] : memref<10x10x16xf32, #tpu.memory_space<vmem>>, vector<8x8x16xf32>
    %c0_145 = arith.constant 0 : index
    %c2_146 = arith.constant 2 : index
    %c0_147 = arith.constant 0 : index
    %96 = vector.load %arg8[%c0_145, %c2_146, %c0_147] : memref<10x10x16xf32, #tpu.memory_space<vmem>>, vector<8x8x16xf32>
    %c1_148 = arith.constant 1 : index
    %c0_149 = arith.constant 0 : index
    %c0_150 = arith.constant 0 : index
    %97 = vector.load %arg8[%c1_148, %c0_149, %c0_150] : memref<10x10x16xf32, #tpu.memory_space<vmem>>, vector<8x8x16xf32>
    %c1_151 = arith.constant 1 : index
    %c1_152 = arith.constant 1 : index
    %c0_153 = arith.constant 0 : index
    %98 = vector.load %arg8[%c1_151, %c1_152, %c0_153] : memref<10x10x16xf32, #tpu.memory_space<vmem>>, vector<8x8x16xf32>
    %c1_154 = arith.constant 1 : index
    %c2_155 = arith.constant 2 : index
    %c0_156 = arith.constant 0 : index
    %99 = vector.load %arg8[%c1_154, %c2_155, %c0_156] : memref<10x10x16xf32, #tpu.memory_space<vmem>>, vector<8x8x16xf32>
    %c2_157 = arith.constant 2 : index
    %c0_158 = arith.constant 0 : index
    %c0_159 = arith.constant 0 : index
    %100 = vector.load %arg8[%c2_157, %c0_158, %c0_159] : memref<10x10x16xf32, #tpu.memory_space<vmem>>, vector<8x8x16xf32>
    %c2_160 = arith.constant 2 : index
    %c1_161 = arith.constant 1 : index
    %c0_162 = arith.constant 0 : index
    %101 = vector.load %arg8[%c2_160, %c1_161, %c0_162] : memref<10x10x16xf32, #tpu.memory_space<vmem>>, vector<8x8x16xf32>
    %c2_163 = arith.constant 2 : index
    %c2_164 = arith.constant 2 : index
    %c0_165 = arith.constant 0 : index
    %102 = vector.load %arg8[%c2_163, %c2_164, %c0_165] : memref<10x10x16xf32, #tpu.memory_space<vmem>>, vector<8x8x16xf32>
    %103 = tpu.concatenate %94, %95, %96, %97, %98, %99, %100, %101, %102 in 2 : vector<8x8x16xf32>, vector<8x8x16xf32>, vector<8x8x16xf32>, vector<8x8x16xf32>, vector<8x8x16xf32>, vector<8x8x16xf32>, vector<8x8x16xf32>, vector<8x8x16xf32>, vector<8x8x16xf32> -> vector<8x8x144xf32>
    %104 = vector.shape_cast %103 : vector<8x8x144xf32> to vector<64x144xf32>
    %105 = arith.truncf %104 : vector<64x144xf32> to vector<64x144xbf16>
    %c3 = arith.constant 3 : index
    %c0_166 = arith.constant 0 : index
    %c0_167 = arith.constant 0 : index
    %106 = vector.load %arg2[%c3, %c0_166, %c0_167] : memref<8x144x16xbf16, #tpu.memory_space<vmem>>, vector<1x144x16xbf16>
    %107 = vector.shape_cast %106 : vector<1x144x16xbf16> to vector<144x16xbf16>
    %cst_168 = arith.constant dense<0.000000e+00> : vector<64x16xf32>
    %108 = tpu.matmul %105, %107, %cst_168 {dimension_numbers = #tpu.dot_dimension_numbers<[1], [0], [0], [1], [0, 0, 1, 1], [], []>} : vector<64x144xbf16>, vector<144x16xbf16>, vector<64x16xf32> -> vector<64x16xf32>
    %c3_169 = arith.constant 3 : index
    %c0_170 = arith.constant 0 : index
    %c0_171 = arith.constant 0 : index
    %109 = vector.load %arg3[%c3_169, %c0_170, %c0_171] : memref<8x1x16xf32, #tpu.memory_space<vmem>>, vector<1x1x16xf32>
    %110 = vector.shape_cast %109 : vector<1x1x16xf32> to vector<1x16xf32>
    %111 = vector.broadcast %110 : vector<1x16xf32> to vector<64x16xf32>
    %112 = arith.addf %108, %111 : vector<64x16xf32>
    %cst_172 = arith.constant 0.000000e+00 : f32
    %113 = vector.broadcast %cst_172 : f32 to vector<64x16xf32>
    %114 = arith.cmpf oge, %112, %113 : vector<64x16xf32>
    %c3_173 = arith.constant 3 : index
    %c0_174 = arith.constant 0 : index
    %c0_175 = arith.constant 0 : index
    %115 = vector.load %arg4[%c3_173, %c0_174, %c0_175] : memref<8x1x16xf32, #tpu.memory_space<vmem>>, vector<1x1x16xf32>
    %116 = vector.shape_cast %115 : vector<1x1x16xf32> to vector<1x16xf32>
    %117 = vector.broadcast %116 : vector<1x16xf32> to vector<64x16xf32>
    %118 = arith.mulf %112, %117 : vector<64x16xf32>
    %119 = arith.select %114, %112, %118 : vector<64x16xi1>, vector<64x16xf32>
    %120 = vector.shape_cast %119 : vector<64x16xf32> to vector<8x8x16xf32>
    %c1_176 = arith.constant 1 : index
    %c1_177 = arith.constant 1 : index
    %c0_178 = arith.constant 0 : index
    %121 = vector.load %arg8[%c1_176, %c1_177, %c0_178] : memref<10x10x16xf32, #tpu.memory_space<vmem>>, vector<8x8x16xf32>
    tpu.vector_store %arg8[%c1_176, %c1_177, %c0_178], %120 {strides = array<i32>} : memref<10x10x16xf32, #tpu.memory_space<vmem>>, vector<8x8x16xf32>,
    %c0_179 = arith.constant 0 : index
    %c0_180 = arith.constant 0 : index
    %c0_181 = arith.constant 0 : index
    %122 = vector.load %arg8[%c0_179, %c0_180, %c0_181] : memref<10x10x16xf32, #tpu.memory_space<vmem>>, vector<8x8x16xf32>
    %c0_182 = arith.constant 0 : index
    %c1_183 = arith.constant 1 : index
    %c0_184 = arith.constant 0 : index
    %123 = vector.load %arg8[%c0_182, %c1_183, %c0_184] : memref<10x10x16xf32, #tpu.memory_space<vmem>>, vector<8x8x16xf32>
    %c0_185 = arith.constant 0 : index
    %c2_186 = arith.constant 2 : index
    %c0_187 = arith.constant 0 : index
    %124 = vector.load %arg8[%c0_185, %c2_186, %c0_187] : memref<10x10x16xf32, #tpu.memory_space<vmem>>, vector<8x8x16xf32>
    %c1_188 = arith.constant 1 : index
    %c0_189 = arith.constant 0 : index
    %c0_190 = arith.constant 0 : index
    %125 = vector.load %arg8[%c1_188, %c0_189, %c0_190] : memref<10x10x16xf32, #tpu.memory_space<vmem>>, vector<8x8x16xf32>
    %c1_191 = arith.constant 1 : index
    %c1_192 = arith.constant 1 : index
    %c0_193 = arith.constant 0 : index
    %126 = vector.load %arg8[%c1_191, %c1_192, %c0_193] : memref<10x10x16xf32, #tpu.memory_space<vmem>>, vector<8x8x16xf32>
    %c1_194 = arith.constant 1 : index
    %c2_195 = arith.constant 2 : index
    %c0_196 = arith.constant 0 : index
    %127 = vector.load %arg8[%c1_194, %c2_195, %c0_196] : memref<10x10x16xf32, #tpu.memory_space<vmem>>, vector<8x8x16xf32>
    %c2_197 = arith.constant 2 : index
    %c0_198 = arith.constant 0 : index
    %c0_199 = arith.constant 0 : index
    %128 = vector.load %arg8[%c2_197, %c0_198, %c0_199] : memref<10x10x16xf32, #tpu.memory_space<vmem>>, vector<8x8x16xf32>
    %c2_200 = arith.constant 2 : index
    %c1_201 = arith.constant 1 : index
    %c0_202 = arith.constant 0 : index
    %129 = vector.load %arg8[%c2_200, %c1_201, %c0_202] : memref<10x10x16xf32, #tpu.memory_space<vmem>>, vector<8x8x16xf32>
    %c2_203 = arith.constant 2 : index
    %c2_204 = arith.constant 2 : index
    %c0_205 = arith.constant 0 : index
    %130 = vector.load %arg8[%c2_203, %c2_204, %c0_205] : memref<10x10x16xf32, #tpu.memory_space<vmem>>, vector<8x8x16xf32>
    %131 = tpu.concatenate %122, %123, %124, %125, %126, %127, %128, %129, %130 in 2 : vector<8x8x16xf32>, vector<8x8x16xf32>, vector<8x8x16xf32>, vector<8x8x16xf32>, vector<8x8x16xf32>, vector<8x8x16xf32>, vector<8x8x16xf32>, vector<8x8x16xf32>, vector<8x8x16xf32> -> vector<8x8x144xf32>
    %132 = vector.shape_cast %131 : vector<8x8x144xf32> to vector<64x144xf32>
    %133 = arith.truncf %132 : vector<64x144xf32> to vector<64x144xbf16>
    %c4 = arith.constant 4 : index
    %c0_206 = arith.constant 0 : index
    %c0_207 = arith.constant 0 : index
    %134 = vector.load %arg2[%c4, %c0_206, %c0_207] : memref<8x144x16xbf16, #tpu.memory_space<vmem>>, vector<1x144x16xbf16>
    %135 = vector.shape_cast %134 : vector<1x144x16xbf16> to vector<144x16xbf16>
    %cst_208 = arith.constant dense<0.000000e+00> : vector<64x16xf32>
    %136 = tpu.matmul %133, %135, %cst_208 {dimension_numbers = #tpu.dot_dimension_numbers<[1], [0], [0], [1], [0, 0, 1, 1], [], []>} : vector<64x144xbf16>, vector<144x16xbf16>, vector<64x16xf32> -> vector<64x16xf32>
    %c4_209 = arith.constant 4 : index
    %c0_210 = arith.constant 0 : index
    %c0_211 = arith.constant 0 : index
    %137 = vector.load %arg3[%c4_209, %c0_210, %c0_211] : memref<8x1x16xf32, #tpu.memory_space<vmem>>, vector<1x1x16xf32>
    %138 = vector.shape_cast %137 : vector<1x1x16xf32> to vector<1x16xf32>
    %139 = vector.broadcast %138 : vector<1x16xf32> to vector<64x16xf32>
    %140 = arith.addf %136, %139 : vector<64x16xf32>
    %cst_212 = arith.constant 0.000000e+00 : f32
    %141 = vector.broadcast %cst_212 : f32 to vector<64x16xf32>
    %142 = arith.cmpf oge, %140, %141 : vector<64x16xf32>
    %c4_213 = arith.constant 4 : index
    %c0_214 = arith.constant 0 : index
    %c0_215 = arith.constant 0 : index
    %143 = vector.load %arg4[%c4_213, %c0_214, %c0_215] : memref<8x1x16xf32, #tpu.memory_space<vmem>>, vector<1x1x16xf32>
    %144 = vector.shape_cast %143 : vector<1x1x16xf32> to vector<1x16xf32>
    %145 = vector.broadcast %144 : vector<1x16xf32> to vector<64x16xf32>
    %146 = arith.mulf %140, %145 : vector<64x16xf32>
    %147 = arith.select %142, %140, %146 : vector<64x16xi1>, vector<64x16xf32>
    %148 = vector.shape_cast %147 : vector<64x16xf32> to vector<8x8x16xf32>
    %c1_216 = arith.constant 1 : index
    %c1_217 = arith.constant 1 : index
    %c0_218 = arith.constant 0 : index
    %149 = vector.load %arg8[%c1_216, %c1_217, %c0_218] : memref<10x10x16xf32, #tpu.memory_space<vmem>>, vector<8x8x16xf32>
    tpu.vector_store %arg8[%c1_216, %c1_217, %c0_218], %148 {strides = array<i32>} : memref<10x10x16xf32, #tpu.memory_space<vmem>>, vector<8x8x16xf32>,
    %c0_219 = arith.constant 0 : index
    %c0_220 = arith.constant 0 : index
    %c0_221 = arith.constant 0 : index
    %150 = vector.load %arg8[%c0_219, %c0_220, %c0_221] : memref<10x10x16xf32, #tpu.memory_space<vmem>>, vector<8x8x16xf32>
    %c0_222 = arith.constant 0 : index
    %c1_223 = arith.constant 1 : index
    %c0_224 = arith.constant 0 : index
    %151 = vector.load %arg8[%c0_222, %c1_223, %c0_224] : memref<10x10x16xf32, #tpu.memory_space<vmem>>, vector<8x8x16xf32>
    %c0_225 = arith.constant 0 : index
    %c2_226 = arith.constant 2 : index
    %c0_227 = arith.constant 0 : index
    %152 = vector.load %arg8[%c0_225, %c2_226, %c0_227] : memref<10x10x16xf32, #tpu.memory_space<vmem>>, vector<8x8x16xf32>
    %c1_228 = arith.constant 1 : index
    %c0_229 = arith.constant 0 : index
    %c0_230 = arith.constant 0 : index
    %153 = vector.load %arg8[%c1_228, %c0_229, %c0_230] : memref<10x10x16xf32, #tpu.memory_space<vmem>>, vector<8x8x16xf32>
    %c1_231 = arith.constant 1 : index
    %c1_232 = arith.constant 1 : index
    %c0_233 = arith.constant 0 : index
    %154 = vector.load %arg8[%c1_231, %c1_232, %c0_233] : memref<10x10x16xf32, #tpu.memory_space<vmem>>, vector<8x8x16xf32>
    %c1_234 = arith.constant 1 : index
    %c2_235 = arith.constant 2 : index
    %c0_236 = arith.constant 0 : index
    %155 = vector.load %arg8[%c1_234, %c2_235, %c0_236] : memref<10x10x16xf32, #tpu.memory_space<vmem>>, vector<8x8x16xf32>
    %c2_237 = arith.constant 2 : index
    %c0_238 = arith.constant 0 : index
    %c0_239 = arith.constant 0 : index
    %156 = vector.load %arg8[%c2_237, %c0_238, %c0_239] : memref<10x10x16xf32, #tpu.memory_space<vmem>>, vector<8x8x16xf32>
    %c2_240 = arith.constant 2 : index
    %c1_241 = arith.constant 1 : index
    %c0_242 = arith.constant 0 : index
    %157 = vector.load %arg8[%c2_240, %c1_241, %c0_242] : memref<10x10x16xf32, #tpu.memory_space<vmem>>, vector<8x8x16xf32>
    %c2_243 = arith.constant 2 : index
    %c2_244 = arith.constant 2 : index
    %c0_245 = arith.constant 0 : index
    %158 = vector.load %arg8[%c2_243, %c2_244, %c0_245] : memref<10x10x16xf32, #tpu.memory_space<vmem>>, vector<8x8x16xf32>
    %159 = tpu.concatenate %150, %151, %152, %153, %154, %155, %156, %157, %158 in 2 : vector<8x8x16xf32>, vector<8x8x16xf32>, vector<8x8x16xf32>, vector<8x8x16xf32>, vector<8x8x16xf32>, vector<8x8x16xf32>, vector<8x8x16xf32>, vector<8x8x16xf32>, vector<8x8x16xf32> -> vector<8x8x144xf32>
    %160 = vector.shape_cast %159 : vector<8x8x144xf32> to vector<64x144xf32>
    %161 = arith.truncf %160 : vector<64x144xf32> to vector<64x144xbf16>
    %c5 = arith.constant 5 : index
    %c0_246 = arith.constant 0 : index
    %c0_247 = arith.constant 0 : index
    %162 = vector.load %arg2[%c5, %c0_246, %c0_247] : memref<8x144x16xbf16, #tpu.memory_space<vmem>>, vector<1x144x16xbf16>
    %163 = vector.shape_cast %162 : vector<1x144x16xbf16> to vector<144x16xbf16>
    %cst_248 = arith.constant dense<0.000000e+00> : vector<64x16xf32>
    %164 = tpu.matmul %161, %163, %cst_248 {dimension_numbers = #tpu.dot_dimension_numbers<[1], [0], [0], [1], [0, 0, 1, 1], [], []>} : vector<64x144xbf16>, vector<144x16xbf16>, vector<64x16xf32> -> vector<64x16xf32>
    %c5_249 = arith.constant 5 : index
    %c0_250 = arith.constant 0 : index
    %c0_251 = arith.constant 0 : index
    %165 = vector.load %arg3[%c5_249, %c0_250, %c0_251] : memref<8x1x16xf32, #tpu.memory_space<vmem>>, vector<1x1x16xf32>
    %166 = vector.shape_cast %165 : vector<1x1x16xf32> to vector<1x16xf32>
    %167 = vector.broadcast %166 : vector<1x16xf32> to vector<64x16xf32>
    %168 = arith.addf %164, %167 : vector<64x16xf32>
    %cst_252 = arith.constant 0.000000e+00 : f32
    %169 = vector.broadcast %cst_252 : f32 to vector<64x16xf32>
    %170 = arith.cmpf oge, %168, %169 : vector<64x16xf32>
    %c5_253 = arith.constant 5 : index
    %c0_254 = arith.constant 0 : index
    %c0_255 = arith.constant 0 : index
    %171 = vector.load %arg4[%c5_253, %c0_254, %c0_255] : memref<8x1x16xf32, #tpu.memory_space<vmem>>, vector<1x1x16xf32>
    %172 = vector.shape_cast %171 : vector<1x1x16xf32> to vector<1x16xf32>
    %173 = vector.broadcast %172 : vector<1x16xf32> to vector<64x16xf32>
    %174 = arith.mulf %168, %173 : vector<64x16xf32>
    %175 = arith.select %170, %168, %174 : vector<64x16xi1>, vector<64x16xf32>
    %176 = vector.shape_cast %175 : vector<64x16xf32> to vector<8x8x16xf32>
    %c1_256 = arith.constant 1 : index
    %c1_257 = arith.constant 1 : index
    %c0_258 = arith.constant 0 : index
    %177 = vector.load %arg8[%c1_256, %c1_257, %c0_258] : memref<10x10x16xf32, #tpu.memory_space<vmem>>, vector<8x8x16xf32>
    tpu.vector_store %arg8[%c1_256, %c1_257, %c0_258], %176 {strides = array<i32>} : memref<10x10x16xf32, #tpu.memory_space<vmem>>, vector<8x8x16xf32>,
    %c0_259 = arith.constant 0 : index
    %c0_260 = arith.constant 0 : index
    %c0_261 = arith.constant 0 : index
    %178 = vector.load %arg8[%c0_259, %c0_260, %c0_261] : memref<10x10x16xf32, #tpu.memory_space<vmem>>, vector<8x8x16xf32>
    %c0_262 = arith.constant 0 : index
    %c1_263 = arith.constant 1 : index
    %c0_264 = arith.constant 0 : index
    %179 = vector.load %arg8[%c0_262, %c1_263, %c0_264] : memref<10x10x16xf32, #tpu.memory_space<vmem>>, vector<8x8x16xf32>
    %c0_265 = arith.constant 0 : index
    %c2_266 = arith.constant 2 : index
    %c0_267 = arith.constant 0 : index
    %180 = vector.load %arg8[%c0_265, %c2_266, %c0_267] : memref<10x10x16xf32, #tpu.memory_space<vmem>>, vector<8x8x16xf32>
    %c1_268 = arith.constant 1 : index
    %c0_269 = arith.constant 0 : index
    %c0_270 = arith.constant 0 : index
    %181 = vector.load %arg8[%c1_268, %c0_269, %c0_270] : memref<10x10x16xf32, #tpu.memory_space<vmem>>, vector<8x8x16xf32>
    %c1_271 = arith.constant 1 : index
    %c1_272 = arith.constant 1 : index
    %c0_273 = arith.constant 0 : index
    %182 = vector.load %arg8[%c1_271, %c1_272, %c0_273] : memref<10x10x16xf32, #tpu.memory_space<vmem>>, vector<8x8x16xf32>
    %c1_274 = arith.constant 1 : index
    %c2_275 = arith.constant 2 : index
    %c0_276 = arith.constant 0 : index
    %183 = vector.load %arg8[%c1_274, %c2_275, %c0_276] : memref<10x10x16xf32, #tpu.memory_space<vmem>>, vector<8x8x16xf32>
    %c2_277 = arith.constant 2 : index
    %c0_278 = arith.constant 0 : index
    %c0_279 = arith.constant 0 : index
    %184 = vector.load %arg8[%c2_277, %c0_278, %c0_279] : memref<10x10x16xf32, #tpu.memory_space<vmem>>, vector<8x8x16xf32>
    %c2_280 = arith.constant 2 : index
    %c1_281 = arith.constant 1 : index
    %c0_282 = arith.constant 0 : index
    %185 = vector.load %arg8[%c2_280, %c1_281, %c0_282] : memref<10x10x16xf32, #tpu.memory_space<vmem>>, vector<8x8x16xf32>
    %c2_283 = arith.constant 2 : index
    %c2_284 = arith.constant 2 : index
    %c0_285 = arith.constant 0 : index
    %186 = vector.load %arg8[%c2_283, %c2_284, %c0_285] : memref<10x10x16xf32, #tpu.memory_space<vmem>>, vector<8x8x16xf32>
    %187 = tpu.concatenate %178, %179, %180, %181, %182, %183, %184, %185, %186 in 2 : vector<8x8x16xf32>, vector<8x8x16xf32>, vector<8x8x16xf32>, vector<8x8x16xf32>, vector<8x8x16xf32>, vector<8x8x16xf32>, vector<8x8x16xf32>, vector<8x8x16xf32>, vector<8x8x16xf32> -> vector<8x8x144xf32>
    %188 = vector.shape_cast %187 : vector<8x8x144xf32> to vector<64x144xf32>
    %189 = arith.truncf %188 : vector<64x144xf32> to vector<64x144xbf16>
    %c6 = arith.constant 6 : index
    %c0_286 = arith.constant 0 : index
    %c0_287 = arith.constant 0 : index
    %190 = vector.load %arg2[%c6, %c0_286, %c0_287] : memref<8x144x16xbf16, #tpu.memory_space<vmem>>, vector<1x144x16xbf16>
    %191 = vector.shape_cast %190 : vector<1x144x16xbf16> to vector<144x16xbf16>
    %cst_288 = arith.constant dense<0.000000e+00> : vector<64x16xf32>
    %192 = tpu.matmul %189, %191, %cst_288 {dimension_numbers = #tpu.dot_dimension_numbers<[1], [0], [0], [1], [0, 0, 1, 1], [], []>} : vector<64x144xbf16>, vector<144x16xbf16>, vector<64x16xf32> -> vector<64x16xf32>
    %c6_289 = arith.constant 6 : index
    %c0_290 = arith.constant 0 : index
    %c0_291 = arith.constant 0 : index
    %193 = vector.load %arg3[%c6_289, %c0_290, %c0_291] : memref<8x1x16xf32, #tpu.memory_space<vmem>>, vector<1x1x16xf32>
    %194 = vector.shape_cast %193 : vector<1x1x16xf32> to vector<1x16xf32>
    %195 = vector.broadcast %194 : vector<1x16xf32> to vector<64x16xf32>
    %196 = arith.addf %192, %195 : vector<64x16xf32>
    %cst_292 = arith.constant 0.000000e+00 : f32
    %197 = vector.broadcast %cst_292 : f32 to vector<64x16xf32>
    %198 = arith.cmpf oge, %196, %197 : vector<64x16xf32>
    %c6_293 = arith.constant 6 : index
    %c0_294 = arith.constant 0 : index
    %c0_295 = arith.constant 0 : index
    %199 = vector.load %arg4[%c6_293, %c0_294, %c0_295] : memref<8x1x16xf32, #tpu.memory_space<vmem>>, vector<1x1x16xf32>
    %200 = vector.shape_cast %199 : vector<1x1x16xf32> to vector<1x16xf32>
    %201 = vector.broadcast %200 : vector<1x16xf32> to vector<64x16xf32>
    %202 = arith.mulf %196, %201 : vector<64x16xf32>
    %203 = arith.select %198, %196, %202 : vector<64x16xi1>, vector<64x16xf32>
    %204 = vector.shape_cast %203 : vector<64x16xf32> to vector<8x8x16xf32>
    %c1_296 = arith.constant 1 : index
    %c1_297 = arith.constant 1 : index
    %c0_298 = arith.constant 0 : index
    %205 = vector.load %arg8[%c1_296, %c1_297, %c0_298] : memref<10x10x16xf32, #tpu.memory_space<vmem>>, vector<8x8x16xf32>
    tpu.vector_store %arg8[%c1_296, %c1_297, %c0_298], %204 {strides = array<i32>} : memref<10x10x16xf32, #tpu.memory_space<vmem>>, vector<8x8x16xf32>,
    %c0_299 = arith.constant 0 : index
    %c0_300 = arith.constant 0 : index
    %c0_301 = arith.constant 0 : index
    %206 = vector.load %arg8[%c0_299, %c0_300, %c0_301] : memref<10x10x16xf32, #tpu.memory_space<vmem>>, vector<8x8x16xf32>
    %c0_302 = arith.constant 0 : index
    %c1_303 = arith.constant 1 : index
    %c0_304 = arith.constant 0 : index
    %207 = vector.load %arg8[%c0_302, %c1_303, %c0_304] : memref<10x10x16xf32, #tpu.memory_space<vmem>>, vector<8x8x16xf32>
    %c0_305 = arith.constant 0 : index
    %c2_306 = arith.constant 2 : index
    %c0_307 = arith.constant 0 : index
    %208 = vector.load %arg8[%c0_305, %c2_306, %c0_307] : memref<10x10x16xf32, #tpu.memory_space<vmem>>, vector<8x8x16xf32>
    %c1_308 = arith.constant 1 : index
    %c0_309 = arith.constant 0 : index
    %c0_310 = arith.constant 0 : index
    %209 = vector.load %arg8[%c1_308, %c0_309, %c0_310] : memref<10x10x16xf32, #tpu.memory_space<vmem>>, vector<8x8x16xf32>
    %c1_311 = arith.constant 1 : index
    %c1_312 = arith.constant 1 : index
    %c0_313 = arith.constant 0 : index
    %210 = vector.load %arg8[%c1_311, %c1_312, %c0_313] : memref<10x10x16xf32, #tpu.memory_space<vmem>>, vector<8x8x16xf32>
    %c1_314 = arith.constant 1 : index
    %c2_315 = arith.constant 2 : index
    %c0_316 = arith.constant 0 : index
    %211 = vector.load %arg8[%c1_314, %c2_315, %c0_316] : memref<10x10x16xf32, #tpu.memory_space<vmem>>, vector<8x8x16xf32>
    %c2_317 = arith.constant 2 : index
    %c0_318 = arith.constant 0 : index
    %c0_319 = arith.constant 0 : index
    %212 = vector.load %arg8[%c2_317, %c0_318, %c0_319] : memref<10x10x16xf32, #tpu.memory_space<vmem>>, vector<8x8x16xf32>
    %c2_320 = arith.constant 2 : index
    %c1_321 = arith.constant 1 : index
    %c0_322 = arith.constant 0 : index
    %213 = vector.load %arg8[%c2_320, %c1_321, %c0_322] : memref<10x10x16xf32, #tpu.memory_space<vmem>>, vector<8x8x16xf32>
    %c2_323 = arith.constant 2 : index
    %c2_324 = arith.constant 2 : index
    %c0_325 = arith.constant 0 : index
    %214 = vector.load %arg8[%c2_323, %c2_324, %c0_325] : memref<10x10x16xf32, #tpu.memory_space<vmem>>, vector<8x8x16xf32>
    %215 = tpu.concatenate %206, %207, %208, %209, %210, %211, %212, %213, %214 in 2 : vector<8x8x16xf32>, vector<8x8x16xf32>, vector<8x8x16xf32>, vector<8x8x16xf32>, vector<8x8x16xf32>, vector<8x8x16xf32>, vector<8x8x16xf32>, vector<8x8x16xf32>, vector<8x8x16xf32> -> vector<8x8x144xf32>
    %216 = vector.shape_cast %215 : vector<8x8x144xf32> to vector<64x144xf32>
    %217 = arith.truncf %216 : vector<64x144xf32> to vector<64x144xbf16>
    %c7 = arith.constant 7 : index
    %c0_326 = arith.constant 0 : index
    %c0_327 = arith.constant 0 : index
    %218 = vector.load %arg2[%c7, %c0_326, %c0_327] : memref<8x144x16xbf16, #tpu.memory_space<vmem>>, vector<1x144x16xbf16>
    %219 = vector.shape_cast %218 : vector<1x144x16xbf16> to vector<144x16xbf16>
    %cst_328 = arith.constant dense<0.000000e+00> : vector<64x16xf32>
    %220 = tpu.matmul %217, %219, %cst_328 {dimension_numbers = #tpu.dot_dimension_numbers<[1], [0], [0], [1], [0, 0, 1, 1], [], []>} : vector<64x144xbf16>, vector<144x16xbf16>, vector<64x16xf32> -> vector<64x16xf32>
    %c7_329 = arith.constant 7 : index
    %c0_330 = arith.constant 0 : index
    %c0_331 = arith.constant 0 : index
    %221 = vector.load %arg3[%c7_329, %c0_330, %c0_331] : memref<8x1x16xf32, #tpu.memory_space<vmem>>, vector<1x1x16xf32>
    %222 = vector.shape_cast %221 : vector<1x1x16xf32> to vector<1x16xf32>
    %223 = vector.broadcast %222 : vector<1x16xf32> to vector<64x16xf32>
    %224 = arith.addf %220, %223 : vector<64x16xf32>
    %cst_332 = arith.constant 0.000000e+00 : f32
    %225 = vector.broadcast %cst_332 : f32 to vector<64x16xf32>
    %226 = arith.cmpf oge, %224, %225 : vector<64x16xf32>
    %c7_333 = arith.constant 7 : index
    %c0_334 = arith.constant 0 : index
    %c0_335 = arith.constant 0 : index
    %227 = vector.load %arg4[%c7_333, %c0_334, %c0_335] : memref<8x1x16xf32, #tpu.memory_space<vmem>>, vector<1x1x16xf32>
    %228 = vector.shape_cast %227 : vector<1x1x16xf32> to vector<1x16xf32>
    %229 = vector.broadcast %228 : vector<1x16xf32> to vector<64x16xf32>
    %230 = arith.mulf %224, %229 : vector<64x16xf32>
    %231 = arith.select %226, %224, %230 : vector<64x16xi1>, vector<64x16xf32>
    %232 = vector.shape_cast %231 : vector<64x16xf32> to vector<8x8x16xf32>
    %233 = arith.addf %232, %8 : vector<8x8x16xf32>
    %c1_336 = arith.constant 1 : index
    %c1_337 = arith.constant 1 : index
    %c0_338 = arith.constant 0 : index
    %234 = vector.load %arg8[%c1_336, %c1_337, %c0_338] : memref<10x10x16xf32, #tpu.memory_space<vmem>>, vector<8x8x16xf32>
    tpu.vector_store %arg8[%c1_336, %c1_337, %c0_338], %233 {strides = array<i32>} : memref<10x10x16xf32, #tpu.memory_space<vmem>>, vector<8x8x16xf32>,
    %c0_339 = arith.constant 0 : index
    %c0_340 = arith.constant 0 : index
    %c0_341 = arith.constant 0 : index
    %235 = vector.load %arg8[%c0_339, %c0_340, %c0_341] : memref<10x10x16xf32, #tpu.memory_space<vmem>>, vector<8x8x16xf32>
    %c0_342 = arith.constant 0 : index
    %c1_343 = arith.constant 1 : index
    %c0_344 = arith.constant 0 : index
    %236 = vector.load %arg8[%c0_342, %c1_343, %c0_344] : memref<10x10x16xf32, #tpu.memory_space<vmem>>, vector<8x8x16xf32>
    %c0_345 = arith.constant 0 : index
    %c2_346 = arith.constant 2 : index
    %c0_347 = arith.constant 0 : index
    %237 = vector.load %arg8[%c0_345, %c2_346, %c0_347] : memref<10x10x16xf32, #tpu.memory_space<vmem>>, vector<8x8x16xf32>
    %c1_348 = arith.constant 1 : index
    %c0_349 = arith.constant 0 : index
    %c0_350 = arith.constant 0 : index
    %238 = vector.load %arg8[%c1_348, %c0_349, %c0_350] : memref<10x10x16xf32, #tpu.memory_space<vmem>>, vector<8x8x16xf32>
    %c1_351 = arith.constant 1 : index
    %c1_352 = arith.constant 1 : index
    %c0_353 = arith.constant 0 : index
    %239 = vector.load %arg8[%c1_351, %c1_352, %c0_353] : memref<10x10x16xf32, #tpu.memory_space<vmem>>, vector<8x8x16xf32>
    %c1_354 = arith.constant 1 : index
    %c2_355 = arith.constant 2 : index
    %c0_356 = arith.constant 0 : index
    %240 = vector.load %arg8[%c1_354, %c2_355, %c0_356] : memref<10x10x16xf32, #tpu.memory_space<vmem>>, vector<8x8x16xf32>
    %c2_357 = arith.constant 2 : index
    %c0_358 = arith.constant 0 : index
    %c0_359 = arith.constant 0 : index
    %241 = vector.load %arg8[%c2_357, %c0_358, %c0_359] : memref<10x10x16xf32, #tpu.memory_space<vmem>>, vector<8x8x16xf32>
    %c2_360 = arith.constant 2 : index
    %c1_361 = arith.constant 1 : index
    %c0_362 = arith.constant 0 : index
    %242 = vector.load %arg8[%c2_360, %c1_361, %c0_362] : memref<10x10x16xf32, #tpu.memory_space<vmem>>, vector<8x8x16xf32>
    %c2_363 = arith.constant 2 : index
    %c2_364 = arith.constant 2 : index
    %c0_365 = arith.constant 0 : index
    %243 = vector.load %arg8[%c2_363, %c2_364, %c0_365] : memref<10x10x16xf32, #tpu.memory_space<vmem>>, vector<8x8x16xf32>
    %244 = tpu.concatenate %235, %236, %237, %238, %239, %240, %241, %242, %243 in 2 : vector<8x8x16xf32>, vector<8x8x16xf32>, vector<8x8x16xf32>, vector<8x8x16xf32>, vector<8x8x16xf32>, vector<8x8x16xf32>, vector<8x8x16xf32>, vector<8x8x16xf32>, vector<8x8x16xf32> -> vector<8x8x144xf32>
    %245 = vector.shape_cast %244 : vector<8x8x144xf32> to vector<64x144xf32>
    %246 = arith.truncf %245 : vector<64x144xf32> to vector<64x144xbf16>
    %c0_366 = arith.constant 0 : index
    %c0_367 = arith.constant 0 : index
    %247 = vector.load %arg5[%c0_366, %c0_367] : memref<144x20xbf16, #tpu.memory_space<vmem>>, vector<144x20xbf16>
    %cst_368 = arith.constant dense<0.000000e+00> : vector<64x20xf32>
    %248 = tpu.matmul %246, %247, %cst_368 {dimension_numbers = #tpu.dot_dimension_numbers<[1], [0], [0], [1], [0, 0, 1, 1], [], []>} : vector<64x144xbf16>, vector<144x20xbf16>, vector<64x20xf32> -> vector<64x20xf32>
    %c0_369 = arith.constant 0 : index
    %c0_370 = arith.constant 0 : index
    %249 = vector.load %arg6[%c0_369, %c0_370] : memref<1x20xf32, #tpu.memory_space<vmem>>, vector<1x20xf32>
    %250 = vector.broadcast %249 : vector<1x20xf32> to vector<64x20xf32>
    %251 = arith.addf %248, %250 : vector<64x20xf32>
    %252 = vector.shape_cast %251 : vector<64x20xf32> to vector<8x8x20xf32>
    %c0_371 = arith.constant 0 : index
    %c0_372 = arith.constant 0 : index
    %c0_373 = arith.constant 0 : index
    %c0_374 = arith.constant 0 : index
    %253 = vector.load %arg7[%c0_371, %c0_372, %c0_373, %c0_374] : memref<1x8x8x20xf32, #tpu.memory_space<vmem>>, vector<1x8x8x20xf32>
    %254 = vector.shape_cast %253 : vector<1x8x8x20xf32> to vector<8x8x20xf32>
    %255 = vector.shape_cast %252 : vector<8x8x20xf32> to vector<1x8x8x20xf32>
    tpu.vector_store %arg7[%c0_371, %c0_372, %c0_373, %c0_374], %255 {strides = array<i32>} : memref<1x8x8x20xf32, #tpu.memory_space<vmem>>, vector<1x8x8x20xf32>,
    return
  }
  func.func @transform_0(%arg0: i32) -> (i32, i32, i32, i32) {
    %c0_i32 = arith.constant 0 : i32
    %c0_i32_0 = arith.constant 0 : i32
    %c0_i32_1 = arith.constant 0 : i32
    %c0_i32_2 = arith.constant 0 : i32
    return %arg0, %c0_i32, %c0_i32_0, %c0_i32_1 : i32, i32, i32, i32
  }
  func.func @transform_1(%arg0: i32) -> (i32, i32, i32) {
    %c0_i32 = arith.constant 0 : i32
    %c0_i32_0 = arith.constant 0 : i32
    %c0_i32_1 = arith.constant 0 : i32
    %c0_i32_2 = arith.constant 0 : i32
    return %c0_i32, %c0_i32_0, %c0_i32_1 : i32, i32, i32
  }
  func.func @transform_2(%arg0: i32) -> (i32, i32, i32) {
    %c0_i32 = arith.constant 0 : i32
    %c0_i32_0 = arith.constant 0 : i32
    %c0_i32_1 = arith.constant 0 : i32
    %c0_i32_2 = arith.constant 0 : i32
    return %c0_i32, %c0_i32_0, %c0_i32_1 : i32, i32, i32
  }
  func.func @transform_3(%arg0: i32) -> (i32, i32, i32) {
    %c0_i32 = arith.constant 0 : i32
    %c0_i32_0 = arith.constant 0 : i32
    %c0_i32_1 = arith.constant 0 : i32
    %c0_i32_2 = arith.constant 0 : i32
    return %c0_i32, %c0_i32_0, %c0_i32_1 : i32, i32, i32
  }
  func.func @transform_4(%arg0: i32) -> (i32, i32) {
    %c0_i32 = arith.constant 0 : i32
    %c0_i32_0 = arith.constant 0 : i32
    %c0_i32_1 = arith.constant 0 : i32
    return %c0_i32, %c0_i32_0 : i32, i32
  }
  func.func @transform_5(%arg0: i32) -> (i32, i32) {
    %c0_i32 = arith.constant 0 : i32
    %c0_i32_0 = arith.constant 0 : i32
    %c0_i32_1 = arith.constant 0 : i32
    return %c0_i32, %c0_i32_0 : i32, i32
  }
  func.func @transform_6(%arg0: i32) -> (i32, i32, i32, i32) {
    %c0_i32 = arith.constant 0 : i32
    %c0_i32_0 = arith.constant 0 : i32
    %c0_i32_1 = arith.constant 0 : i32
    %c0_i32_2 = arith.constant 0 : i32
    return %arg0, %c0_i32, %c0_i32_0, %c0_i32_1 : i32, i32, i32, i32
  }
}

</mosaic_0001>

<llo_original>
// kernel: ifblock_forward.2
$region0: #{ifblock_forward.2}
  #allocation0 [shape = 'u32[]', space=smem, size = 0x4, offset = 0x4, fixed_abs, tag = 'smem constant byte address 0x4 - core index']
  #allocation1 [shape = 'u32[72,128]{1,0:T(1,128)}', space=vmem, size = 0x9000, scoped, tag = 'internal scratch']
  #allocation2 [shape = 'f32[34,34,7]{2,1,0:T(8,128)}', space=vmem, size = 0xaa000, scoped, tag = 'scratch operand']
  #allocation3 [shape = 'f32[18,18,8]{2,1,0:T(8,128)}', space=vmem, size = 0x36000, scoped, tag = 'scratch operand']
  %s0 = inlined_call_operand.vmem [shape: f32[2,32,32,7], index: 0, kind: input, shape index: {}]
  %s1 = inlined_call_operand.vmem [shape: bf16[63,8], index: 1, kind: input, shape index: {}]
  %s2 = inlined_call_operand.vmem [shape: f32[1,8], index: 2, kind: input, shape index: {}]
  %s3 = inlined_call_operand.vmem [shape: f32[1,8], index: 3, kind: input, shape index: {}]
  %s4 = inlined_call_operand.vmem [shape: bf16[72,16], index: 4, kind: input, shape index: {}]
  %s5 = inlined_call_operand.vmem [shape: f32[1,16], index: 5, kind: input, shape index: {}]
  %s6 = inlined_call_operand.vmem [shape: f32[1,16], index: 6, kind: input, shape index: {}]
  %s7 = inlined_call_operand.vmem [shape: bf16[2,8,8,16], index: 7, kind: output, shape index: {}]
  %s8 = sld [smem:[#allocation0]]
  $region61: #{ifblock_forward.2} parent=0
    _
  %s10 = ssub.s32 1, %s8
  %s11 = scalar_select 0, %s10, %s8
  loop: start=0, step=1, limit=4
  $region2: #{ifblock_forward.2} parent=0 // loop_pre_header
    _
  $region3: #{ifblock_forward.2} parent=0 // loop_header
    %s13 = sphi 0, %s17
    %p14 = scmp.ge.s32.totalorder %s13, 4
    %s23 = sphi 0, %s25
    %s26 = sphi 0, %s23
    %s27 = sphi 0, %s26
    %s43 = sphi 0, %s27
    %s47 = sphi 0, %s47
    %s49 = sphi 0, %s47
    %s50 = sphi 0, %s49
    %s64 = sphi 0, %s50
    %s68 = sphi 0, %s68
    %s70 = sphi 0, %s68
    %s71 = sphi 0, %s70
    %s85 = sphi 0, %s71
    %s89 = sphi 0, %s89
    %s91 = sphi 0, %s89
    %s92 = sphi 0, %s91
    %s106 = sphi 0, %s92
    %s110 = sphi 0, %s110
    %s112 = sphi 0, %s110
    %s113 = sphi 0, %s112
    %s127 = sphi 0, %s113
    %s131 = sphi 0, %s131
    %s133 = sphi 0, %s131
    %s134 = sphi 0, %s133
    %s148 = sphi 0, %s134
    %s152 = sphi 0, %s152
    %s154 = sphi 0, %s152
    %s155 = sphi 0, %s154
    %s169 = sphi 0, %s155
    %s175 = sphi 0, %s177
    %s178 = sphi 0, %s175
    %s179 = sphi 0, %s178
    %s195 = sphi 0, %s179
  $region4: #{ifblock_forward.2} parent=0 // loop_header_branch
    %16 = sbr.rel (%p14) target = $region8
  $region5: #{ifblock_forward.2} parent=0 // loop_body
    %s18 = ssub.s32 %s13, 1
    %s19 = ssub.s32 %s13, 2
    %s20 = sadd.s32 %s13, 1
    %s21 = ssub.s32 %s13, %s20
    %p22 = scmp.eq.s32.totalorder %s21, 0
    %s24 = sadd.s32 %s23, 1
    %s25 = scalar_select %p22, %s23, %s24
    %p28 = pneg %p22
    %p29 = scmp.eq.s32.totalorder %s13, 1
    %p30 = por %p28, %p29
    %p31 = scmp.ne.s32.totalorder %s23, %s26
    %p32 = scmp.eq.s32.totalorder %s13, 0
    %p33 = por %p31, %p32
    %p34 = scmp.ne.s32.totalorder %s23, %s26
    %p35 = scmp.eq.s32.totalorder %s18, 1
    %p36 = por %p34, %p35
    %p37 = scmp.ne.s32.totalorder %s26, %s27
    %p38 = scmp.eq.s32.totalorder %s18, 0
    %p39 = por %p37, %p38
    %p40 = scmp.ne.s32.totalorder %s26, %s27
    %p41 = scmp.eq.s32.totalorder %s19, 1
    %p42 = por %p40, %p41
    %p44 = scmp.ne.s32.totalorder %s27, %s43
    %p45 = scmp.eq.s32.totalorder %s19, 0
    %p46 = por %p44, %p45
    %s48 = sadd.s32 %s47, 1
    %p51 = scmp.eq.s32.totalorder %s13, 1
    %p52 = scmp.ne.s32.totalorder %s47, %s49
    %p53 = scmp.eq.s32.totalorder %s13, 0
    %p54 = por %p52, %p53
    %p55 = scmp.ne.s32.totalorder %s47, %s49
    %p56 = scmp.eq.s32.totalorder %s18, 1
    %p57 = por %p55, %p56
    %p58 = scmp.ne.s32.totalorder %s49, %s50
    %p59 = scmp.eq.s32.totalorder %s18, 0
    %p60 = por %p58, %p59
    %p61 = scmp.ne.s32.totalorder %s49, %s50
    %p62 = scmp.eq.s32.totalorder %s19, 1
    %p63 = por %p61, %p62
    %p65 = scmp.ne.s32.totalorder %s50, %s64
    %p66 = scmp.eq.s32.totalorder %s19, 0
    %p67 = por %p65, %p66
    %s69 = sadd.s32 %s68, 1
    %p72 = scmp.eq.s32.totalorder %s13, 1
    %p73 = scmp.ne.s32.totalorder %s68, %s70
    %p74 = scmp.eq.s32.totalorder %s13, 0
    %p75 = por %p73, %p74
    %p76 = scmp.ne.s32.totalorder %s68, %s70
    %p77 = scmp.eq.s32.totalorder %s18, 1
    %p78 = por %p76, %p77
    %p79 = scmp.ne.s32.totalorder %s70, %s71
    %p80 = scmp.eq.s32.totalorder %s18, 0
    %p81 = por %p79, %p80
    %p82 = scmp.ne.s32.totalorder %s70, %s71
    %p83 = scmp.eq.s32.totalorder %s19, 1
    %p84 = por %p82, %p83
    %p86 = scmp.ne.s32.totalorder %s71, %s85
    %p87 = scmp.eq.s32.totalorder %s19, 0
    %p88 = por %p86, %p87
    %s90 = sadd.s32 %s89, 1
    %p93 = scmp.eq.s32.totalorder %s13, 1
    %p94 = scmp.ne.s32.totalorder %s89, %s91
    %p95 = scmp.eq.s32.totalorder %s13, 0
    %p96 = por %p94, %p95
    %p97 = scmp.ne.s32.totalorder %s89, %s91
    %p98 = scmp.eq.s32.totalorder %s18, 1
    %p99 = por %p97, %p98
    %p100 = scmp.ne.s32.totalorder %s91, %s92
    %p101 = scmp.eq.s32.totalorder %s18, 0
    %p102 = por %p100, %p101
    %p103 = scmp.ne.s32.totalorder %s91, %s92
    %p104 = scmp.eq.s32.totalorder %s19, 1
    %p105 = por %p103, %p104
    %p107 = scmp.ne.s32.totalorder %s92, %s106
    %p108 = scmp.eq.s32.totalorder %s19, 0
    %p109 = por %p107, %p108
    %s111 = sadd.s32 %s110, 1
    %p114 = scmp.eq.s32.totalorder %s13, 1
    %p115 = scmp.ne.s32.totalorder %s110, %s112
    %p116 = scmp.eq.s32.totalorder %s13, 0
    %p117 = por %p115, %p116
    %p118 = scmp.ne.s32.totalorder %s110, %s112
    %p119 = scmp.eq.s32.totalorder %s18, 1
    %p120 = por %p118, %p119
    %p121 = scmp.ne.s32.totalorder %s112, %s113
    %p122 = scmp.eq.s32.totalorder %s18, 0
    %p123 = por %p121, %p122
    %p124 = scmp.ne.s32.totalorder %s112, %s113
    %p125 = scmp.eq.s32.totalorder %s19, 1
    %p126 = por %p124, %p125
    %p128 = scmp.ne.s32.totalorder %s113, %s127
    %p129 = scmp.eq.s32.totalorder %s19, 0
    %p130 = por %p128, %p129
    %s132 = sadd.s32 %s131, 1
    %p135 = scmp.eq.s32.totalorder %s13, 1
    %p136 = scmp.ne.s32.totalorder %s131, %s133
    %p137 = scmp.eq.s32.totalorder %s13, 0
    %p138 = por %p136, %p137
    %p139 = scmp.ne.s32.totalorder %s131, %s133
    %p140 = scmp.eq.s32.totalorder %s18, 1
    %p141 = por %p139, %p140
    %p142 = scmp.ne.s32.totalorder %s133, %s134
    %p143 = scmp.eq.s32.totalorder %s18, 0
    %p144 = por %p142, %p143
    %p145 = scmp.ne.s32.totalorder %s133, %s134
    %p146 = scmp.eq.s32.totalorder %s19, 1
    %p147 = por %p145, %p146
    %p149 = scmp.ne.s32.totalorder %s134, %s148
    %p150 = scmp.eq.s32.totalorder %s19, 0
    %p151 = por %p149, %p150
    %s153 = sadd.s32 %s152, 1
    %p156 = scmp.eq.s32.totalorder %s13, 1
    %p157 = scmp.ne.s32.totalorder %s152, %s154
    %p158 = scmp.eq.s32.totalorder %s13, 0
    %p159 = por %p157, %p158
    %p160 = scmp.ne.s32.totalorder %s152, %s154
    %p161 = scmp.eq.s32.totalorder %s18, 1
    %p162 = por %p160, %p161
    %p163 = scmp.ne.s32.totalorder %s154, %s155
    %p164 = scmp.eq.s32.totalorder %s18, 0
    %p165 = por %p163, %p164
    %p166 = scmp.ne.s32.totalorder %s154, %s155
    %p167 = scmp.eq.s32.totalorder %s19, 1
    %p168 = por %p166, %p167
    %p170 = scmp.ne.s32.totalorder %s155, %s169
    %p171 = scmp.eq.s32.totalorder %s19, 0
    %p172 = por %p170, %p171
    %s173 = ssub.s32 %s13, %s20
    %p174 = scmp.eq.s32.totalorder %s173, 0
    %s176 = sadd.s32 %s175, 1
    %s177 = scalar_select %p174, %s175, %s176
    %p180 = pneg %p174
    %p181 = scmp.eq.s32.totalorder %s13, 1
    %p182 = por %p180, %p181
    %p183 = scmp.ne.s32.totalorder %s175, %s178
    %p184 = scmp.eq.s32.totalorder %s13, 0
    %p185 = por %p183, %p184
    %p186 = scmp.ne.s32.totalorder %s175, %s178
    %p187 = scmp.eq.s32.totalorder %s18, 1
    %p188 = por %p186, %p187
    %p189 = scmp.ne.s32.totalorder %s178, %s179
    %p190 = scmp.eq.s32.totalorder %s18, 0
    %p191 = por %p189, %p190
    %p192 = scmp.ne.s32.totalorder %s178, %s179
    %p193 = scmp.eq.s32.totalorder %s19, 1
    %p194 = por %p192, %p193
    %p196 = scmp.ne.s32.totalorder %s179, %s195
    %p197 = scmp.eq.s32.totalorder %s19, 0
    %p198 = por %p196, %p197
    %p199 = scmp.le.s32.totalorder 1, %s13
    %p200 = scmp.lt.s32.totalorder %s13, 3
    %p201 = pnand %p199, %p200
    %p202 = pneg %p201
    // Predicated region
    $region9: #{ifblock_forward.2} parent=5 // pred_check
      _
    $region10: #{ifblock_forward.2} parent=5 // pred_check_branch
      %204 = sbr.rel (%p201) target = $region12
    $region11: #{ifblock_forward.2} parent=5 // pred_region
      %s205 = ssub.s32 %s13, 1
      // Predicated region
      $region13: #{ifblock_forward.2} parent=11 // pred_check
        %p206 = pneg %p60
      $region14: #{ifblock_forward.2} parent=11 // pred_check_branch
        %208 = sbr.rel (%p206) target = $region16
      $region15: #{ifblock_forward.2} parent=11 // pred_region
        _
      $region16: #{ifblock_forward.2} parent=11 // pred_fallthru
        _
      // Predicated region
      $region17: #{ifblock_forward.2} parent=11 // pred_check
        %p209 = pneg %p81
      $region18: #{ifblock_forward.2} parent=11 // pred_check_branch
        %211 = sbr.rel (%p209) target = $region20
      $region19: #{ifblock_forward.2} parent=11 // pred_region
        _
      $region20: #{ifblock_forward.2} parent=11 // pred_fallthru
        _
      // Predicated region
      $region21: #{ifblock_forward.2} parent=11 // pred_check
        %p212 = pneg %p102
      $region22: #{ifblock_forward.2} parent=11 // pred_check_branch
        %214 = sbr.rel (%p212) target = $region24
      $region23: #{ifblock_forward.2} parent=11 // pred_region
        _
      $region24: #{ifblock_forward.2} parent=11 // pred_fallthru
        _
      // Predicated region
      $region25: #{ifblock_forward.2} parent=11 // pred_check
        %p215 = pneg %p123
      $region26: #{ifblock_forward.2} parent=11 // pred_check_branch
        %217 = sbr.rel (%p215) target = $region28
      $region27: #{ifblock_forward.2} parent=11 // pred_region
        _
      $region28: #{ifblock_forward.2} parent=11 // pred_fallthru
        _
      // Predicated region
      $region29: #{ifblock_forward.2} parent=11 // pred_check
        %p218 = pneg %p144
      $region30: #{ifblock_forward.2} parent=11 // pred_check_branch
        %220 = sbr.rel (%p218) target = $region32
      $region31: #{ifblock_forward.2} parent=11 // pred_region
        _
      $region32: #{ifblock_forward.2} parent=11 // pred_fallthru
        _
      // Predicated region
      $region33: #{ifblock_forward.2} parent=11 // pred_check
        %p221 = pneg %p165
      $region34: #{ifblock_forward.2} parent=11 // pred_check_branch
        %223 = sbr.rel (%p221) target = $region36
      $region35: #{ifblock_forward.2} parent=11 // pred_region
        _
      $region36: #{ifblock_forward.2} parent=11 // pred_fallthru
        _
    $region12: #{ifblock_forward.2} parent=5 // pred_fallthru
      _
    %p224 = scmp.lt.s32.totalorder %s13, 2
    // Predicated region
    $region37: #{ifblock_forward.2} parent=5 // pred_check
      %p225 = pneg %p224
    $region38: #{ifblock_forward.2} parent=5 // pred_check_branch
      %227 = sbr.rel (%p225) target = $region40
    $region39: #{ifblock_forward.2} parent=5 // pred_region
      // Predicated region
      $region41: #{ifblock_forward.2} parent=39 // pred_check
        %p228 = pneg %p33
      $region42: #{ifblock_forward.2} parent=39 // pred_check_branch
        %230 = sbr.rel (%p228) target = $region44
      $region43: #{ifblock_forward.2} parent=39 // pred_region
        %p231 = scmp.lt.s32.totalorder %s13, 1
        %s232 = scalar_select %p231, %s13, 1
        %s233 = smul.addr %s232, 128
        %s234 = smul.addr %s233, 8
        %s235 = scalar_lea.vmem %s0, %s234
      $region44: #{ifblock_forward.2} parent=39 // pred_fallthru
        _
    $region40: #{ifblock_forward.2} parent=5 // pred_fallthru
      _
    %p236 = scmp.le.s32.totalorder 1, %s13
    %p237 = scmp.lt.s32.totalorder %s13, 3
    %p238 = pnand %p236, %p237
    %p239 = pneg %p238
    // Predicated region
    $region45: #{ifblock_forward.2} parent=5 // pred_check
      _
    $region46: #{ifblock_forward.2} parent=5 // pred_check_branch
      %241 = sbr.rel (%p238) target = $region48
    $region47: #{ifblock_forward.2} parent=5 // pred_region
      %s242 = ssub.s32 %s13, 1
      %p243 = scmp.lt.s32.totalorder %s18, 1
      %s244 = scalar_select %p243, %s18, 1
      %s245 = smul.addr %s244, 128
      %s246 = smul.addr %s245, 8
      %s247 = scalar_lea.vmem %s0, %s246
      %p248 = pneg %p39
      %p249 = pneg %p36
      %p250 = pneg %p60
      %p251 = pneg %p57
      %p252 = pneg %p81
      %p253 = pneg %p78
      %p254 = pneg %p102
      %p255 = pneg %p99
      %p256 = pneg %p123
      %p257 = pneg %p120
      %p258 = pneg %p144
      %p259 = pneg %p141
      %p260 = pneg %p165
      %p261 = pneg %p162
      %p262 = pneg %p191
      %p263 = pneg %p188
      %p264 = scmp.lt.s32.totalorder %s18, 1
      %s265 = scalar_select %p264, %s18, 1
      %s266 = smul.addr %s265, 8
      %s267 = smul.addr %s266, 4
      %s268 = scalar_lea.vmem %s7, %s267
      %p269 = scmp.lt.s32.totalorder %s18, 1
      %s270 = scalar_select %p269, %s18, 1
      %s271 = smul.addr %s270, 128
      %s272 = smul.addr %s271, 8
      %s273 = scalar_lea.vmem %s0, %s272
      %p274 = scmp.lt.s32.totalorder %s18, 1
      %s275 = scalar_select %p274, %s18, 1
      %s276 = smul.addr %s275, 8
      %s277 = smul.addr %s276, 4
      %s278 = scalar_lea.vmem %s7, %s277
      %vm280 = vcmask 56320
      %281 = vst.msk [vmem:[#allocation2] sm:$0xff] %vm280, 0.0
      %282 = vst.msk [vmem:[#allocation2 + $0x8] sm:$0xff] %vm280, 0.0
      %283 = vst.msk [vmem:[#allocation2 + $0x10] sm:$0xff] %vm280, 0.0
      %284 = vst.msk [vmem:[#allocation2 + $0x18] sm:$0xff] %vm280, 0.0
      %vm285 = vcmask 50176
      %286 = vst.msk [vmem:[#allocation2 + $0x20] sm:$0x3] %vm285, 0.0
      %s287 = scalar_lea.vmem [#allocation2], 1320
      %288 = vst.msk [vmem:[%s287] sm:$0xff] %vm280, 0.0
      %289 = vst.msk [vmem:[%s287 + $0x8] sm:$0xff] %vm280, 0.0
      %290 = vst.msk [vmem:[%s287 + $0x10] sm:$0xff] %vm280, 0.0
      %291 = vst.msk [vmem:[%s287 + $0x18] sm:$0xff] %vm280, 0.0
      %292 = vst.msk [vmem:[%s287 + $0x20] sm:$0x3] %vm285, 0.0
      %vm293 = vcmask 49152
      %294 = vst.msk [vmem:[#allocation2] sm:$0x1] %vm293, 0.0
      %295 = vst.msk [vmem:[#allocation2 + $0x28] sm:$0x1] %vm293, 0.0
      %296 = vst.msk [vmem:[#allocation2 + $0x50] sm:$0x1] %vm293, 0.0
      %297 = vst.msk [vmem:[#allocation2 + $0x78] sm:$0x1] %vm293, 0.0
      %298 = vst.msk [vmem:[#allocation2 + $0xa0] sm:$0x1] %vm293, 0.0
      %299 = vst.msk [vmem:[#allocation2 + $0xc8] sm:$0x1] %vm293, 0.0
      %300 = vst.msk [vmem:[#allocation2 + $0xf0] sm:$0x1] %vm293, 0.0
      %301 = vst.msk [vmem:[#allocation2 + $0x118] sm:$0x1] %vm293, 0.0
      %302 = vst.msk [vmem:[#allocation2 + $0x140] sm:$0x1] %vm293, 0.0
      %303 = vst.msk [vmem:[#allocation2 + $0x168] sm:$0x1] %vm293, 0.0
      %304 = vst.msk [vmem:[#allocation2 + $0x190] sm:$0x1] %vm293, 0.0
      %305 = vst.msk [vmem:[#allocation2 + $0x1b8] sm:$0x1] %vm293, 0.0
      %306 = vst.msk [vmem:[#allocation2 + $0x1e0] sm:$0x1] %vm293, 0.0
      %307 = vst.msk [vmem:[#allocation2 + $0x208] sm:$0x1] %vm293, 0.0
      %308 = vst.msk [vmem:[#allocation2 + $0x230] sm:$0x1] %vm293, 0.0
      %309 = vst.msk [vmem:[#allocation2 + $0x258] sm:$0x1] %vm293, 0.0
      %310 = vst.msk [vmem:[#allocation2 + $0x280] sm:$0x1] %vm293, 0.0
      %311 = vst.msk [vmem:[#allocation2 + $0x2a8] sm:$0x1] %vm293, 0.0
      %312 = vst.msk [vmem:[#allocation2 + $0x2d0] sm:$0x1] %vm293, 0.0
      %313 = vst.msk [vmem:[#allocation2 + $0x2f8] sm:$0x1] %vm293, 0.0
      %314 = vst.msk [vmem:[#allocation2 + $0x320] sm:$0x1] %vm293, 0.0
      %315 = vst.msk [vmem:[#allocation2 + $0x348] sm:$0x1] %vm293, 0.0
      %316 = vst.msk [vmem:[#allocation2 + $0x370] sm:$0x1] %vm293, 0.0
      %317 = vst.msk [vmem:[#allocation2 + $0x398] sm:$0x1] %vm293, 0.0
      %318 = vst.msk [vmem:[#allocation2 + $0x3c0] sm:$0x1] %vm293, 0.0
      %319 = vst.msk [vmem:[#allocation2 + $0x3e8] sm:$0x1] %vm293, 0.0
      %320 = vst.msk [vmem:[#allocation2 + $0x410] sm:$0x1] %vm293, 0.0
      %321 = vst.msk [vmem:[#allocation2 + $0x438] sm:$0x1] %vm293, 0.0
      %322 = vst.msk [vmem:[#allocation2 + $0x460] sm:$0x1] %vm293, 0.0
      %323 = vst.msk [vmem:[#allocation2 + $0x488] sm:$0x1] %vm293, 0.0
      %324 = vst.msk [vmem:[#allocation2 + $0x4b0] sm:$0x1] %vm293, 0.0
      %325 = vst.msk [vmem:[#allocation2 + $0x4d8] sm:$0x1] %vm293, 0.0
      %326 = vst.msk [vmem:[#allocation2 + $0x500] sm:$0x1] %vm293, 0.0
      %327 = vst.msk [vmem:[#allocation2 + $0x528] sm:$0x1] %vm293, 0.0
      %328 = vst.msk [vmem:[#allocation2 + $0x21] sm:$0x1] %vm293, 0.0
      %329 = vst.msk [vmem:[#allocation2 + $0x49] sm:$0x1] %vm293, 0.0
      %330 = vst.msk [vmem:[#allocation2 + $0x71] sm:$0x1] %vm293, 0.0
      %331 = vst.msk [vmem:[#allocation2 + $0x99] sm:$0x1] %vm293, 0.0
      %332 = vst.msk [vmem:[#allocation2 + $0xc1] sm:$0x1] %vm293, 0.0
      %333 = vst.msk [vmem:[#allocation2 + $0xe9] sm:$0x1] %vm293, 0.0
      %334 = vst.msk [vmem:[#allocation2 + $0x111] sm:$0x1] %vm293, 0.0
      %335 = vst.msk [vmem:[#allocation2 + $0x139] sm:$0x1] %vm293, 0.0
      %336 = vst.msk [vmem:[#allocation2 + $0x161] sm:$0x1] %vm293, 0.0
      %337 = vst.msk [vmem:[#allocation2 + $0x189] sm:$0x1] %vm293, 0.0
      %338 = vst.msk [vmem:[#allocation2 + $0x1b1] sm:$0x1] %vm293, 0.0
      %339 = vst.msk [vmem:[#allocation2 + $0x1d9] sm:$0x1] %vm293, 0.0
      %340 = vst.msk [vmem:[#allocation2 + $0x201] sm:$0x1] %vm293, 0.0
      %341 = vst.msk [vmem:[#allocation2 + $0x229] sm:$0x1] %vm293, 0.0
      %342 = vst.msk [vmem:[#allocation2 + $0x251] sm:$0x1] %vm293, 0.0
      %343 = vst.msk [vmem:[#allocation2 + $0x279] sm:$0x1] %vm293, 0.0
      %344 = vst.msk [vmem:[#allocation2 + $0x2a1] sm:$0x1] %vm293, 0.0
      %345 = vst.msk [vmem:[#allocation2 + $0x2c9] sm:$0x1] %vm293, 0.0
      %346 = vst.msk [vmem:[#allocation2 + $0x2f1] sm:$0x1] %vm293, 0.0
      %347 = vst.msk [vmem:[#allocation2 + $0x319] sm:$0x1] %vm293, 0.0
      %348 = vst.msk [vmem:[#allocation2 + $0x341] sm:$0x1] %vm293, 0.0
      %349 = vst.msk [vmem:[#allocation2 + $0x369] sm:$0x1] %vm293, 0.0
      %350 = vst.msk [vmem:[#allocation2 + $0x391] sm:$0x1] %vm293, 0.0
      %351 = vst.msk [vmem:[#allocation2 + $0x3b9] sm:$0x1] %vm293, 0.0
      %352 = vst.msk [vmem:[#allocation2 + $0x3e1] sm:$0x1] %vm293, 0.0
      %353 = vst.msk [vmem:[#allocation2 + $0x409] sm:$0x1] %vm293, 0.0
      %354 = vst.msk [vmem:[#allocation2 + $0x431] sm:$0x1] %vm293, 0.0
      %355 = vst.msk [vmem:[#allocation2 + $0x459] sm:$0x1] %vm293, 0.0
      %356 = vst.msk [vmem:[#allocation2 + $0x481] sm:$0x1] %vm293, 0.0
      %357 = vst.msk [vmem:[#allocation2 + $0x4a9] sm:$0x1] %vm293, 0.0
      %358 = vst.msk [vmem:[#allocation2 + $0x4d1] sm:$0x1] %vm293, 0.0
      %359 = vst.msk [vmem:[#allocation2 + $0x4f9] sm:$0x1] %vm293, 0.0
      %360 = vst.msk [vmem:[#allocation2 + $0x521] sm:$0x1] %vm293, 0.0
      %361 = vst.msk [vmem:[#allocation2 + $0x549] sm:$0x1] %vm293, 0.0
      %v362 = vld [vmem:[%s273] sm:$0xff]
      %v363 = vld [vmem:[%s273 + $0x8] sm:$0xff]
      %v364 = vld [vmem:[%s273 + $0x10] sm:$0xff]
      %v365 = vld [vmem:[%s273 + $0x18] sm:$0xff]
      %v366 = vld [vmem:[%s273 + $0x20] sm:$0xff]
      %v367 = vld [vmem:[%s273 + $0x28] sm:$0xff]
      %v368 = vld [vmem:[%s273 + $0x30] sm:$0xff]
      %v369 = vld [vmem:[%s273 + $0x38] sm:$0xff]
      %v370 = vld [vmem:[%s273 + $0x40] sm:$0xff]
      %v371 = vld [vmem:[%s273 + $0x48] sm:$0xff]
      %v372 = vld [vmem:[%s273 + $0x50] sm:$0xff]
      %v373 = vld [vmem:[%s273 + $0x58] sm:$0xff]
      %v374 = vld [vmem:[%s273 + $0x60] sm:$0xff]
      %v375 = vld [vmem:[%s273 + $0x68] sm:$0xff]
      %v376 = vld [vmem:[%s273 + $0x70] sm:$0xff]
      %v377 = vld [vmem:[%s273 + $0x78] sm:$0xff]
      %v378 = vld [vmem:[%s273 + $0x80] sm:$0xff]
      %v379 = vld [vmem:[%s273 + $0x88] sm:$0xff]
      %v380 = vld [vmem:[%s273 + $0x90] sm:$0xff]
      %v381 = vld [vmem:[%s273 + $0x98] sm:$0xff]
      %v382 = vld [vmem:[%s273 + $0xa0] sm:$0xff]
      %v383 = vld [vmem:[%s273 + $0xa8] sm:$0xff]
      %v384 = vld [vmem:[%s273 + $0xb0] sm:$0xff]
      %v385 = vld [vmem:[%s273 + $0xb8] sm:$0xff]
      %v386 = vld [vmem:[%s273 + $0xc0] sm:$0xff]
      %v387 = vld [vmem:[%s273 + $0xc8] sm:$0xff]
      %v388 = vld [vmem:[%s273 + $0xd0] sm:$0xff]
      %v389 = vld [vmem:[%s273 + $0xd8] sm:$0xff]
      %v390 = vld [vmem:[%s273 + $0xe0] sm:$0xff]
      %v391 = vld [vmem:[%s273 + $0xe8] sm:$0xff]
      %v392 = vld [vmem:[%s273 + $0xf0] sm:$0xff]
      %v393 = vld [vmem:[%s273 + $0xf8] sm:$0xff]
      %v394 = vld [vmem:[%s273 + $0x100] sm:$0xff]
      %v395 = vld [vmem:[%s273 + $0x108] sm:$0xff]
      %v396 = vld [vmem:[%s273 + $0x110] sm:$0xff]
      %v397 = vld [vmem:[%s273 + $0x118] sm:$0xff]
      %v398 = vld [vmem:[%s273 + $0x120] sm:$0xff]
      %v399 = vld [vmem:[%s273 + $0x128] sm:$0xff]
      %v400 = vld [vmem:[%s273 + $0x130] sm:$0xff]
      %v401 = vld [vmem:[%s273 + $0x138] sm:$0xff]
      %v402 = vld [vmem:[%s273 + $0x140] sm:$0xff]
      %v403 = vld [vmem:[%s273 + $0x148] sm:$0xff]
      %v404 = vld [vmem:[%s273 + $0x150] sm:$0xff]
      %v405 = vld [vmem:[%s273 + $0x158] sm:$0xff]
      %v406 = vld [vmem:[%s273 + $0x160] sm:$0xff]
      %v407 = vld [vmem:[%s273 + $0x168] sm:$0xff]
      %v408 = vld [vmem:[%s273 + $0x170] sm:$0xff]
      %v409 = vld [vmem:[%s273 + $0x178] sm:$0xff]
      %v410 = vld [vmem:[%s273 + $0x180] sm:$0xff]
      %v411 = vld [vmem:[%s273 + $0x188] sm:$0xff]
      %v412 = vld [vmem:[%s273 + $0x190] sm:$0xff]
      %v413 = vld [vmem:[%s273 + $0x198] sm:$0xff]
      %v414 = vld [vmem:[%s273 + $0x1a0] sm:$0xff]
      %v415 = vld [vmem:[%s273 + $0x1a8] sm:$0xff]
      %v416 = vld [vmem:[%s273 + $0x1b0] sm:$0xff]
      %v417 = vld [vmem:[%s273 + $0x1b8] sm:$0xff]
      %v418 = vld [vmem:[%s273 + $0x1c0] sm:$0xff]
      %v419 = vld [vmem:[%s273 + $0x1c8] sm:$0xff]
      %v420 = vld [vmem:[%s273 + $0x1d0] sm:$0xff]
      %v421 = vld [vmem:[%s273 + $0x1d8] sm:$0xff]
      %v422 = vld [vmem:[%s273 + $0x1e0] sm:$0xff]
      %v423 = vld [vmem:[%s273 + $0x1e8] sm:$0xff]
      %v424 = vld [vmem:[%s273 + $0x1f0] sm:$0xff]
      %v425 = vld [vmem:[%s273 + $0x1f8] sm:$0xff]
      %v426 = vld [vmem:[%s273 + $0x200] sm:$0xff]
      %v427 = vld [vmem:[%s273 + $0x208] sm:$0xff]
      %v428 = vld [vmem:[%s273 + $0x210] sm:$0xff]
      %v429 = vld [vmem:[%s273 + $0x218] sm:$0xff]
      %v430 = vld [vmem:[%s273 + $0x220] sm:$0xff]
      %v431 = vld [vmem:[%s273 + $0x228] sm:$0xff]
      %v432 = vld [vmem:[%s273 + $0x230] sm:$0xff]
      %v433 = vld [vmem:[%s273 + $0x238] sm:$0xff]
      %v434 = vld [vmem:[%s273 + $0x240] sm:$0xff]
      %v435 = vld [vmem:[%s273 + $0x248] sm:$0xff]
      %v436 = vld [vmem:[%s273 + $0x250] sm:$0xff]
      %v437 = vld [vmem:[%s273 + $0x258] sm:$0xff]
      %v438 = vld [vmem:[%s273 + $0x260] sm:$0xff]
      %v439 = vld [vmem:[%s273 + $0x268] sm:$0xff]
      %v440 = vld [vmem:[%s273 + $0x270] sm:$0xff]
      %v441 = vld [vmem:[%s273 + $0x278] sm:$0xff]
      %v442 = vld [vmem:[%s273 + $0x280] sm:$0xff]
      %v443 = vld [vmem:[%s273 + $0x288] sm:$0xff]
      %v444 = vld [vmem:[%s273 + $0x290] sm:$0xff]
      %v445 = vld [vmem:[%s273 + $0x298] sm:$0xff]
      %v446 = vld [vmem:[%s273 + $0x2a0] sm:$0xff]
      %v447 = vld [vmem:[%s273 + $0x2a8] sm:$0xff]
      %v448 = vld [vmem:[%s273 + $0x2b0] sm:$0xff]
      %v449 = vld [vmem:[%s273 + $0x2b8] sm:$0xff]
      %v450 = vld [vmem:[%s273 + $0x2c0] sm:$0xff]
      %v451 = vld [vmem:[%s273 + $0x2c8] sm:$0xff]
      %v452 = vld [vmem:[%s273 + $0x2d0] sm:$0xff]
      %v453 = vld [vmem:[%s273 + $0x2d8] sm:$0xff]
      %v454 = vld [vmem:[%s273 + $0x2e0] sm:$0xff]
      %v455 = vld [vmem:[%s273 + $0x2e8] sm:$0xff]
      %v456 = vld [vmem:[%s273 + $0x2f0] sm:$0xff]
      %v457 = vld [vmem:[%s273 + $0x2f8] sm:$0xff]
      %v458 = vld [vmem:[%s273 + $0x300] sm:$0xff]
      %v459 = vld [vmem:[%s273 + $0x308] sm:$0xff]
      %v460 = vld [vmem:[%s273 + $0x310] sm:$0xff]
      %v461 = vld [vmem:[%s273 + $0x318] sm:$0xff]
      %v462 = vld [vmem:[%s273 + $0x320] sm:$0xff]
      %v463 = vld [vmem:[%s273 + $0x328] sm:$0xff]
      %v464 = vld [vmem:[%s273 + $0x330] sm:$0xff]
      %v465 = vld [vmem:[%s273 + $0x338] sm:$0xff]
      %v466 = vld [vmem:[%s273 + $0x340] sm:$0xff]
      %v467 = vld [vmem:[%s273 + $0x348] sm:$0xff]
      %v468 = vld [vmem:[%s273 + $0x350] sm:$0xff]
      %v469 = vld [vmem:[%s273 + $0x358] sm:$0xff]
      %v470 = vld [vmem:[%s273 + $0x360] sm:$0xff]
      %v471 = vld [vmem:[%s273 + $0x368] sm:$0xff]
      %v472 = vld [vmem:[%s273 + $0x370] sm:$0xff]
      %v473 = vld [vmem:[%s273 + $0x378] sm:$0xff]
      %v474 = vld [vmem:[%s273 + $0x380] sm:$0xff]
      %v475 = vld [vmem:[%s273 + $0x388] sm:$0xff]
      %v476 = vld [vmem:[%s273 + $0x390] sm:$0xff]
      %v477 = vld [vmem:[%s273 + $0x398] sm:$0xff]
      %v478 = vld [vmem:[%s273 + $0x3a0] sm:$0xff]
      %v479 = vld [vmem:[%s273 + $0x3a8] sm:$0xff]
      %v480 = vld [vmem:[%s273 + $0x3b0] sm:$0xff]
      %v481 = vld [vmem:[%s273 + $0x3b8] sm:$0xff]
      %v482 = vld [vmem:[%s273 + $0x3c0] sm:$0xff]
      %v483 = vld [vmem:[%s273 + $0x3c8] sm:$0xff]
      %v484 = vld [vmem:[%s273 + $0x3d0] sm:$0xff]
      %v485 = vld [vmem:[%s273 + $0x3d8] sm:$0xff]
      %v486 = vld [vmem:[%s273 + $0x3e0] sm:$0xff]
      %v487 = vld [vmem:[%s273 + $0x3e8] sm:$0xff]
      %v488 = vld [vmem:[%s273 + $0x3f0] sm:$0xff]
      %v489 = vld [vmem:[%s273 + $0x3f8] sm:$0xff]
      %s490 = scalar_lea.vmem [#allocation2], 40
      %491 = vst.msk [vmem:[%s490 + $0x1] sm:$0xff] %vm280, %v362
      %492 = vst.msk [vmem:[%s490 + $0x9] sm:$0xff] %vm280, %v363
      %493 = vst.msk [vmem:[%s490 + $0x11] sm:$0xff] %vm280, %v364
      %494 = vst.msk [vmem:[%s490 + $0x19] sm:$0xff] %vm280, %v365
      %495 = vst.msk [vmem:[%s490 + $0x29] sm:$0xff] %vm280, %v366
      %496 = vst.msk [vmem:[%s490 + $0x31] sm:$0xff] %vm280, %v367
      %497 = vst.msk [vmem:[%s490 + $0x39] sm:$0xff] %vm280, %v368
      %498 = vst.msk [vmem:[%s490 + $0x41] sm:$0xff] %vm280, %v369
      %499 = vst.msk [vmem:[%s490 + $0x51] sm:$0xff] %vm280, %v370
      %500 = vst.msk [vmem:[%s490 + $0x59] sm:$0xff] %vm280, %v371
      %501 = vst.msk [vmem:[%s490 + $0x61] sm:$0xff] %vm280, %v372
      %502 = vst.msk [vmem:[%s490 + $0x69] sm:$0xff] %vm280, %v373
      %503 = vst.msk [vmem:[%s490 + $0x79] sm:$0xff] %vm280, %v374
      %504 = vst.msk [vmem:[%s490 + $0x81] sm:$0xff] %vm280, %v375
      %505 = vst.msk [vmem:[%s490 + $0x89] sm:$0xff] %vm280, %v376
      %506 = vst.msk [vmem:[%s490 + $0x91] sm:$0xff] %vm280, %v377
      %507 = vst.msk [vmem:[%s490 + $0xa1] sm:$0xff] %vm280, %v378
      %508 = vst.msk [vmem:[%s490 + $0xa9] sm:$0xff] %vm280, %v379
      %509 = vst.msk [vmem:[%s490 + $0xb1] sm:$0xff] %vm280, %v380
      %510 = vst.msk [vmem:[%s490 + $0xb9] sm:$0xff] %vm280, %v381
      %511 = vst.msk [vmem:[%s490 + $0xc9] sm:$0xff] %vm280, %v382
      %512 = vst.msk [vmem:[%s490 + $0xd1] sm:$0xff] %vm280, %v383
      %513 = vst.msk [vmem:[%s490 + $0xd9] sm:$0xff] %vm280, %v384
      %514 = vst.msk [vmem:[%s490 + $0xe1] sm:$0xff] %vm280, %v385
      %515 = vst.msk [vmem:[%s490 + $0xf1] sm:$0xff] %vm280, %v386
      %516 = vst.msk [vmem:[%s490 + $0xf9] sm:$0xff] %vm280, %v387
      %517 = vst.msk [vmem:[%s490 + $0x101] sm:$0xff] %vm280, %v388
      %518 = vst.msk [vmem:[%s490 + $0x109] sm:$0xff] %vm280, %v389
      %519 = vst.msk [vmem:[%s490 + $0x119] sm:$0xff] %vm280, %v390
      %520 = vst.msk [vmem:[%s490 + $0x121] sm:$0xff] %vm280, %v391
      %521 = vst.msk [vmem:[%s490 + $0x129] sm:$0xff] %vm280, %v392
      %522 = vst.msk [vmem:[%s490 + $0x131] sm:$0xff] %vm280, %v393
      %523 = vst.msk [vmem:[%s490 + $0x141] sm:$0xff] %vm280, %v394
      %524 = vst.msk [vmem:[%s490 + $0x149] sm:$0xff] %vm280, %v395
      %525 = vst.msk [vmem:[%s490 + $0x151] sm:$0xff] %vm280, %v396
      %526 = vst.msk [vmem:[%s490 + $0x159] sm:$0xff] %vm280, %v397
      %527 = vst.msk [vmem:[%s490 + $0x169] sm:$0xff] %vm280, %v398
      %528 = vst.msk [vmem:[%s490 + $0x171] sm:$0xff] %vm280, %v399
      %529 = vst.msk [vmem:[%s490 + $0x179] sm:$0xff] %vm280, %v400
      %530 = vst.msk [vmem:[%s490 + $0x181] sm:$0xff] %vm280, %v401
      %531 = vst.msk [vmem:[%s490 + $0x191] sm:$0xff] %vm280, %v402
      %532 = vst.msk [vmem:[%s490 + $0x199] sm:$0xff] %vm280, %v403
      %533 = vst.msk [vmem:[%s490 + $0x1a1] sm:$0xff] %vm280, %v404
      %534 = vst.msk [vmem:[%s490 + $0x1a9] sm:$0xff] %vm280, %v405
      %535 = vst.msk [vmem:[%s490 + $0x1b9] sm:$0xff] %vm280, %v406
      %536 = vst.msk [vmem:[%s490 + $0x1c1] sm:$0xff] %vm280, %v407
      %537 = vst.msk [vmem:[%s490 + $0x1c9] sm:$0xff] %vm280, %v408
      %538 = vst.msk [vmem:[%s490 + $0x1d1] sm:$0xff] %vm280, %v409
      %539 = vst.msk [vmem:[%s490 + $0x1e1] sm:$0xff] %vm280, %v410
      %540 = vst.msk [vmem:[%s490 + $0x1e9] sm:$0xff] %vm280, %v411
      %541 = vst.msk [vmem:[%s490 + $0x1f1] sm:$0xff] %vm280, %v412
      %542 = vst.msk [vmem:[%s490 + $0x1f9] sm:$0xff] %vm280, %v413
      %543 = vst.msk [vmem:[%s490 + $0x209] sm:$0xff] %vm280, %v414
      %544 = vst.msk [vmem:[%s490 + $0x211] sm:$0xff] %vm280, %v415
      %545 = vst.msk [vmem:[%s490 + $0x219] sm:$0xff] %vm280, %v416
      %546 = vst.msk [vmem:[%s490 + $0x221] sm:$0xff] %vm280, %v417
      %547 = vst.msk [vmem:[%s490 + $0x231] sm:$0xff] %vm280, %v418
      %548 = vst.msk [vmem:[%s490 + $0x239] sm:$0xff] %vm280, %v419
      %549 = vst.msk [vmem:[%s490 + $0x241] sm:$0xff] %vm280, %v420
      %550 = vst.msk [vmem:[%s490 + $0x249] sm:$0xff] %vm280, %v421
      %551 = vst.msk [vmem:[%s490 + $0x259] sm:$0xff] %vm280, %v422
      %552 = vst.msk [vmem:[%s490 + $0x261] sm:$0xff] %vm280, %v423
      %553 = vst.msk [vmem:[%s490 + $0x269] sm:$0xff] %vm280, %v424
      %554 = vst.msk [vmem:[%s490 + $0x271] sm:$0xff] %vm280, %v425
      %555 = vst.msk [vmem:[%s490 + $0x281] sm:$0xff] %vm280, %v426
      %556 = vst.msk [vmem:[%s490 + $0x289] sm:$0xff] %vm280, %v427
      %557 = vst.msk [vmem:[%s490 + $0x291] sm:$0xff] %vm280, %v428
      %558 = vst.msk [vmem:[%s490 + $0x299] sm:$0xff] %vm280, %v429
      %559 = vst.msk [vmem:[%s490 + $0x2a9] sm:$0xff] %vm280, %v430
      %560 = vst.msk [vmem:[%s490 + $0x2b1] sm:$0xff] %vm280, %v431
      %561 = vst.msk [vmem:[%s490 + $0x2b9] sm:$0xff] %vm280, %v432
      %562 = vst.msk [vmem:[%s490 + $0x2c1] sm:$0xff] %vm280, %v433
      %563 = vst.msk [vmem:[%s490 + $0x2d1] sm:$0xff] %vm280, %v434
      %564 = vst.msk [vmem:[%s490 + $0x2d9] sm:$0xff] %vm280, %v435
      %565 = vst.msk [vmem:[%s490 + $0x2e1] sm:$0xff] %vm280, %v436
      %566 = vst.msk [vmem:[%s490 + $0x2e9] sm:$0xff] %vm280, %v437
      %567 = vst.msk [vmem:[%s490 + $0x2f9] sm:$0xff] %vm280, %v438
      %568 = vst.msk [vmem:[%s490 + $0x301] sm:$0xff] %vm280, %v439
      %569 = vst.msk [vmem:[%s490 + $0x309] sm:$0xff] %vm280, %v440
      %570 = vst.msk [vmem:[%s490 + $0x311] sm:$0xff] %vm280, %v441
      %571 = vst.msk [vmem:[%s490 + $0x321] sm:$0xff] %vm280, %v442
      %572 = vst.msk [vmem:[%s490 + $0x329] sm:$0xff] %vm280, %v443
      %573 = vst.msk [vmem:[%s490 + $0x331] sm:$0xff] %vm280, %v444
      %574 = vst.msk [vmem:[%s490 + $0x339] sm:$0xff] %vm280, %v445
      %575 = vst.msk [vmem:[%s490 + $0x349] sm:$0xff] %vm280, %v446
      %576 = vst.msk [vmem:[%s490 + $0x351] sm:$0xff] %vm280, %v447
      %577 = vst.msk [vmem:[%s490 + $0x359] sm:$0xff] %vm280, %v448
      %578 = vst.msk [vmem:[%s490 + $0x361] sm:$0xff] %vm280, %v449
      %579 = vst.msk [vmem:[%s490 + $0x371] sm:$0xff] %vm280, %v450
      %580 = vst.msk [vmem:[%s490 + $0x379] sm:$0xff] %vm280, %v451
      %581 = vst.msk [vmem:[%s490 + $0x381] sm:$0xff] %vm280, %v452
      %582 = vst.msk [vmem:[%s490 + $0x389] sm:$0xff] %vm280, %v453
      %583 = vst.msk [vmem:[%s490 + $0x399] sm:$0xff] %vm280, %v454
      %584 = vst.msk [vmem:[%s490 + $0x3a1] sm:$0xff] %vm280, %v455
      %585 = vst.msk [vmem:[%s490 + $0x3a9] sm:$0xff] %vm280, %v456
      %586 = vst.msk [vmem:[%s490 + $0x3b1] sm:$0xff] %vm280, %v457
      %587 = vst.msk [vmem:[%s490 + $0x3c1] sm:$0xff] %vm280, %v458
      %588 = vst.msk [vmem:[%s490 + $0x3c9] sm:$0xff] %vm280, %v459
      %589 = vst.msk [vmem:[%s490 + $0x3d1] sm:$0xff] %vm280, %v460
      %590 = vst.msk [vmem:[%s490 + $0x3d9] sm:$0xff] %vm280, %v461
      %591 = vst.msk [vmem:[%s490 + $0x3e9] sm:$0xff] %vm280, %v462
      %592 = vst.msk [vmem:[%s490 + $0x3f1] sm:$0xff] %vm280, %v463
      %593 = vst.msk [vmem:[%s490 + $0x3f9] sm:$0xff] %vm280, %v464
      %594 = vst.msk [vmem:[%s490 + $0x401] sm:$0xff] %vm280, %v465
      %595 = vst.msk [vmem:[%s490 + $0x411] sm:$0xff] %vm280, %v466
      %596 = vst.msk [vmem:[%s490 + $0x419] sm:$0xff] %vm280, %v467
      %597 = vst.msk [vmem:[%s490 + $0x421] sm:$0xff] %vm280, %v468
      %598 = vst.msk [vmem:[%s490 + $0x429] sm:$0xff] %vm280, %v469
      %599 = vst.msk [vmem:[%s490 + $0x439] sm:$0xff] %vm280, %v470
      %600 = vst.msk [vmem:[%s490 + $0x441] sm:$0xff] %vm280, %v471
      %601 = vst.msk [vmem:[%s490 + $0x449] sm:$0xff] %vm280, %v472
      %602 = vst.msk [vmem:[%s490 + $0x451] sm:$0xff] %vm280, %v473
      %603 = vst.msk [vmem:[%s490 + $0x461] sm:$0xff] %vm280, %v474
      %604 = vst.msk [vmem:[%s490 + $0x469] sm:$0xff] %vm280, %v475
      %605 = vst.msk [vmem:[%s490 + $0x471] sm:$0xff] %vm280, %v476
      %606 = vst.msk [vmem:[%s490 + $0x479] sm:$0xff] %vm280, %v477
      %607 = vst.msk [vmem:[%s490 + $0x489] sm:$0xff] %vm280, %v478
      %608 = vst.msk [vmem:[%s490 + $0x491] sm:$0xff] %vm280, %v479
      %609 = vst.msk [vmem:[%s490 + $0x499] sm:$0xff] %vm280, %v480
      %610 = vst.msk [vmem:[%s490 + $0x4a1] sm:$0xff] %vm280, %v481
      %611 = vst.msk [vmem:[%s490 + $0x4b1] sm:$0xff] %vm280, %v482
      %612 = vst.msk [vmem:[%s490 + $0x4b9] sm:$0xff] %vm280, %v483
      %613 = vst.msk [vmem:[%s490 + $0x4c1] sm:$0xff] %vm280, %v484
      %614 = vst.msk [vmem:[%s490 + $0x4c9] sm:$0xff] %vm280, %v485
      %615 = vst.msk [vmem:[%s490 + $0x4d9] sm:$0xff] %vm280, %v486
      %616 = vst.msk [vmem:[%s490 + $0x4e1] sm:$0xff] %vm280, %v487
      %617 = vst.msk [vmem:[%s490 + $0x4e9] sm:$0xff] %vm280, %v488
      %618 = vst.msk [vmem:[%s490 + $0x4f1] sm:$0xff] %vm280, %v489
      %v619 = vld [vmem:[#allocation2] ss:$2 sm:$0xff]
      %s620 = scalar_lea.vmem [#allocation2], 16
      %v621 = vld [vmem:[%s620] ss:$2 sm:$0xff]
      %s622 = scalar_lea.vmem [#allocation2], 80
      %v623 = vld [vmem:[%s622] ss:$2 sm:$0xff]
      %s624 = scalar_lea.vmem [#allocation2], 96
      %v625 = vld [vmem:[%s624] ss:$2 sm:$0xff]
      %s626 = scalar_lea.vmem [#allocation2], 160
      %v627 = vld [vmem:[%s626] ss:$2 sm:$0xff]
      %s628 = scalar_lea.vmem [#allocation2], 176
      %v629 = vld [vmem:[%s628] ss:$2 sm:$0xff]
      %s630 = scalar_lea.vmem [#allocation2], 240
      %v631 = vld [vmem:[%s630] ss:$2 sm:$0xff]
      %s632 = scalar_lea.vmem [#allocation2], 256
      %v633 = vld [vmem:[%s632] ss:$2 sm:$0xff]
      %s634 = scalar_lea.vmem [#allocation2], 320
      %v635 = vld [vmem:[%s634] ss:$2 sm:$0xff]
      %s636 = scalar_lea.vmem [#allocation2], 336
      %v637 = vld [vmem:[%s636] ss:$2 sm:$0xff]
      %s638 = scalar_lea.vmem [#allocation2], 400
      %v639 = vld [vmem:[%s638] ss:$2 sm:$0xff]
      %s640 = scalar_lea.vmem [#allocation2], 416
      %v641 = vld [vmem:[%s640] ss:$2 sm:$0xff]
      %s642 = scalar_lea.vmem [#allocation2], 480
      %v643 = vld [vmem:[%s642] ss:$2 sm:$0xff]
      %s644 = scalar_lea.vmem [#allocation2], 496
      %v645 = vld [vmem:[%s644] ss:$2 sm:$0xff]
      %s646 = scalar_lea.vmem [#allocation2], 560
      %v647 = vld [vmem:[%s646] ss:$2 sm:$0xff]
      %s648 = scalar_lea.vmem [#allocation2], 576
      %v649 = vld [vmem:[%s648] ss:$2 sm:$0xff]
      %s650 = scalar_lea.vmem [#allocation2], 640
      %v651 = vld [vmem:[%s650] ss:$2 sm:$0xff]
      %s652 = scalar_lea.vmem [#allocation2], 656
      %v653 = vld [vmem:[%s652] ss:$2 sm:$0xff]
      %s654 = scalar_lea.vmem [#allocation2], 720
      %v655 = vld [vmem:[%s654] ss:$2 sm:$0xff]
      %s656 = scalar_lea.vmem [#allocation2], 736
      %v657 = vld [vmem:[%s656] ss:$2 sm:$0xff]
      %s658 = scalar_lea.vmem [#allocation2], 800
      %v659 = vld [vmem:[%s658] ss:$2 sm:$0xff]
      %s660 = scalar_lea.vmem [#allocation2], 816
      %v661 = vld [vmem:[%s660] ss:$2 sm:$0xff]
      %s662 = scalar_lea.vmem [#allocation2], 880
      %v663 = vld [vmem:[%s662] ss:$2 sm:$0xff]
      %s664 = scalar_lea.vmem [#allocation2], 896
      %v665 = vld [vmem:[%s664] ss:$2 sm:$0xff]
      %s666 = scalar_lea.vmem [#allocation2], 960
      %v667 = vld [vmem:[%s666] ss:$2 sm:$0xff]
      %s668 = scalar_lea.vmem [#allocation2], 976
      %v669 = vld [vmem:[%s668] ss:$2 sm:$0xff]
      %s670 = scalar_lea.vmem [#allocation2], 1040
      %v671 = vld [vmem:[%s670] ss:$2 sm:$0xff]
      %s672 = scalar_lea.vmem [#allocation2], 1056
      %v673 = vld [vmem:[%s672] ss:$2 sm:$0xff]
      %s674 = scalar_lea.vmem [#allocation2], 1120
      %v675 = vld [vmem:[%s674] ss:$2 sm:$0xff]
      %s676 = scalar_lea.vmem [#allocation2], 1136
      %v677 = vld [vmem:[%s676] ss:$2 sm:$0xff]
      %s678 = scalar_lea.vmem [#allocation2], 1200
      %v679 = vld [vmem:[%s678] ss:$2 sm:$0xff]
      %s680 = scalar_lea.vmem [#allocation2], 1216
      %v681 = vld [vmem:[%s680] ss:$2 sm:$0xff]
      %s682 = scalar_lea.vmem [#allocation2], 1
      %v683 = vld [vmem:[%s682] ss:$2 sm:$0xff]
      %s684 = scalar_lea.vmem [#allocation2], 17
      %v685 = vld [vmem:[%s684] ss:$2 sm:$0xff]
      %s686 = scalar_lea.vmem [#allocation2], 81
      %v687 = vld [vmem:[%s686] ss:$2 sm:$0xff]
      %s688 = scalar_lea.vmem [#allocation2], 97
      %v689 = vld [vmem:[%s688] ss:$2 sm:$0xff]
      %s690 = scalar_lea.vmem [#allocation2], 161
      %v691 = vld [vmem:[%s690] ss:$2 sm:$0xff]
      %s692 = scalar_lea.vmem [#allocation2], 177
      %v693 = vld [vmem:[%s692] ss:$2 sm:$0xff]
      %s694 = scalar_lea.vmem [#allocation2], 241
      %v695 = vld [vmem:[%s694] ss:$2 sm:$0xff]
      %s696 = scalar_lea.vmem [#allocation2], 257
      %v697 = vld [vmem:[%s696] ss:$2 sm:$0xff]
      %s698 = scalar_lea.vmem [#allocation2], 321
      %v699 = vld [vmem:[%s698] ss:$2 sm:$0xff]
      %s700 = scalar_lea.vmem [#allocation2], 337
      %v701 = vld [vmem:[%s700] ss:$2 sm:$0xff]
      %s702 = scalar_lea.vmem [#allocation2], 401
      %v703 = vld [vmem:[%s702] ss:$2 sm:$0xff]
      %s704 = scalar_lea.vmem [#allocation2], 417
      %v705 = vld [vmem:[%s704] ss:$2 sm:$0xff]
      %s706 = scalar_lea.vmem [#allocation2], 481
      %v707 = vld [vmem:[%s706] ss:$2 sm:$0xff]
      %s708 = scalar_lea.vmem [#allocation2], 497
      %v709 = vld [vmem:[%s708] ss:$2 sm:$0xff]
      %s710 = scalar_lea.vmem [#allocation2], 561
      %v711 = vld [vmem:[%s710] ss:$2 sm:$0xff]
      %s712 = scalar_lea.vmem [#allocation2], 577
      %v713 = vld [vmem:[%s712] ss:$2 sm:$0xff]
      %s714 = scalar_lea.vmem [#allocation2], 641
      %v715 = vld [vmem:[%s714] ss:$2 sm:$0xff]
      %s716 = scalar_lea.vmem [#allocation2], 657
      %v717 = vld [vmem:[%s716] ss:$2 sm:$0xff]
      %s718 = scalar_lea.vmem [#allocation2], 721
      %v719 = vld [vmem:[%s718] ss:$2 sm:$0xff]
      %s720 = scalar_lea.vmem [#allocation2], 737
      %v721 = vld [vmem:[%s720] ss:$2 sm:$0xff]
      %s722 = scalar_lea.vmem [#allocation2], 801
      %v723 = vld [vmem:[%s722] ss:$2 sm:$0xff]
      %s724 = scalar_lea.vmem [#allocation2], 817
      %v725 = vld [vmem:[%s724] ss:$2 sm:$0xff]
      %s726 = scalar_lea.vmem [#allocation2], 881
      %v727 = vld [vmem:[%s726] ss:$2 sm:$0xff]
      %s728 = scalar_lea.vmem [#allocation2], 897
      %v729 = vld [vmem:[%s728] ss:$2 sm:$0xff]
      %s730 = scalar_lea.vmem [#allocation2], 961
      %v731 = vld [vmem:[%s730] ss:$2 sm:$0xff]
      %s732 = scalar_lea.vmem [#allocation2], 977
      %v733 = vld [vmem:[%s732] ss:$2 sm:$0xff]
      %s734 = scalar_lea.vmem [#allocation2], 1041
      %v735 = vld [vmem:[%s734] ss:$2 sm:$0xff]
      %s736 = scalar_lea.vmem [#allocation2], 1057
      %v737 = vld [vmem:[%s736] ss:$2 sm:$0xff]
      %s738 = scalar_lea.vmem [#allocation2], 1121
      %v739 = vld [vmem:[%s738] ss:$2 sm:$0xff]
      %s740 = scalar_lea.vmem [#allocation2], 1137
      %v741 = vld [vmem:[%s740] ss:$2 sm:$0xff]
      %s742 = scalar_lea.vmem [#allocation2], 1201
      %v743 = vld [vmem:[%s742] ss:$2 sm:$0xff]
      %s744 = scalar_lea.vmem [#allocation2], 1217
      %v745 = vld [vmem:[%s744] ss:$2 sm:$0xff]
      %s746 = scalar_lea.vmem [#allocation2], 2
      %v747 = vld [vmem:[%s746] ss:$2 sm:$0xff]
      %s748 = scalar_lea.vmem [#allocation2], 18
      %v749 = vld [vmem:[%s748] ss:$2 sm:$0xff]
      %s750 = scalar_lea.vmem [#allocation2], 82
      %v751 = vld [vmem:[%s750] ss:$2 sm:$0xff]
      %s752 = scalar_lea.vmem [#allocation2], 98
      %v753 = vld [vmem:[%s752] ss:$2 sm:$0xff]
      %s754 = scalar_lea.vmem [#allocation2], 162
      %v755 = vld [vmem:[%s754] ss:$2 sm:$0xff]
      %s756 = scalar_lea.vmem [#allocation2], 178
      %v757 = vld [vmem:[%s756] ss:$2 sm:$0xff]
      %s758 = scalar_lea.vmem [#allocation2], 242
      %v759 = vld [vmem:[%s758] ss:$2 sm:$0xff]
      %s760 = scalar_lea.vmem [#allocation2], 258
      %v761 = vld [vmem:[%s760] ss:$2 sm:$0xff]
      %s762 = scalar_lea.vmem [#allocation2], 322
      %v763 = vld [vmem:[%s762] ss:$2 sm:$0xff]
      %s764 = scalar_lea.vmem [#allocation2], 338
      %v765 = vld [vmem:[%s764] ss:$2 sm:$0xff]
      %s766 = scalar_lea.vmem [#allocation2], 402
      %v767 = vld [vmem:[%s766] ss:$2 sm:$0xff]
      %s768 = scalar_lea.vmem [#allocation2], 418
      %v769 = vld [vmem:[%s768] ss:$2 sm:$0xff]
      %s770 = scalar_lea.vmem [#allocation2], 482
      %v771 = vld [vmem:[%s770] ss:$2 sm:$0xff]
      %s772 = scalar_lea.vmem [#allocation2], 498
      %v773 = vld [vmem:[%s772] ss:$2 sm:$0xff]
      %s774 = scalar_lea.vmem [#allocation2], 562
      %v775 = vld [vmem:[%s774] ss:$2 sm:$0xff]
      %s776 = scalar_lea.vmem [#allocation2], 578
      %v777 = vld [vmem:[%s776] ss:$2 sm:$0xff]
      %s778 = scalar_lea.vmem [#allocation2], 642
      %v779 = vld [vmem:[%s778] ss:$2 sm:$0xff]
      %s780 = scalar_lea.vmem [#allocation2], 658
      %v781 = vld [vmem:[%s780] ss:$2 sm:$0xff]
      %s782 = scalar_lea.vmem [#allocation2], 722
      %v783 = vld [vmem:[%s782] ss:$2 sm:$0xff]
      %s784 = scalar_lea.vmem [#allocation2], 738
      %v785 = vld [vmem:[%s784] ss:$2 sm:$0xff]
      %s786 = scalar_lea.vmem [#allocation2], 802
      %v787 = vld [vmem:[%s786] ss:$2 sm:$0xff]
      %s788 = scalar_lea.vmem [#allocation2], 818
      %v789 = vld [vmem:[%s788] ss:$2 sm:$0xff]
      %s790 = scalar_lea.vmem [#allocation2], 882
      %v791 = vld [vmem:[%s790] ss:$2 sm:$0xff]
      %s792 = scalar_lea.vmem [#allocation2], 898
      %v793 = vld [vmem:[%s792] ss:$2 sm:$0xff]
      %s794 = scalar_lea.vmem [#allocation2], 962
      %v795 = vld [vmem:[%s794] ss:$2 sm:$0xff]
      %s796 = scalar_lea.vmem [#allocation2], 978
      %v797 = vld [vmem:[%s796] ss:$2 sm:$0xff]
      %s798 = scalar_lea.vmem [#allocation2], 1042
      %v799 = vld [vmem:[%s798] ss:$2 sm:$0xff]
      %s800 = scalar_lea.vmem [#allocation2], 1058
      %v801 = vld [vmem:[%s800] ss:$2 sm:$0xff]
      %s802 = scalar_lea.vmem [#allocation2], 1122
      %v803 = vld [vmem:[%s802] ss:$2 sm:$0xff]
      %s804 = scalar_lea.vmem [#allocation2], 1138
      %v805 = vld [vmem:[%s804] ss:$2 sm:$0xff]
      %s806 = scalar_lea.vmem [#allocation2], 1202
      %v807 = vld [vmem:[%s806] ss:$2 sm:$0xff]
      %s808 = scalar_lea.vmem [#allocation2], 1218
      %v809 = vld [vmem:[%s808] ss:$2 sm:$0xff]
      %v810 = vld [vmem:[%s490] ss:$2 sm:$0xff]
      %s811 = scalar_lea.vmem %s490, 16 [#allocation2]
      %v812 = vld [vmem:[%s811] ss:$2 sm:$0xff]
      %s813 = scalar_lea.vmem %s490, 80 [#allocation2]
      %v814 = vld [vmem:[%s813] ss:$2 sm:$0xff]
      %s815 = scalar_lea.vmem %s490, 96 [#allocation2]
      %v816 = vld [vmem:[%s815] ss:$2 sm:$0xff]
      %s817 = scalar_lea.vmem %s490, 160 [#allocation2]
      %v818 = vld [vmem:[%s817] ss:$2 sm:$0xff]
      %s819 = scalar_lea.vmem %s490, 176 [#allocation2]
      %v820 = vld [vmem:[%s819] ss:$2 sm:$0xff]
      %s821 = scalar_lea.vmem %s490, 240 [#allocation2]
      %v822 = vld [vmem:[%s821] ss:$2 sm:$0xff]
      %s823 = scalar_lea.vmem %s490, 256 [#allocation2]
      %v824 = vld [vmem:[%s823] ss:$2 sm:$0xff]
      %s825 = scalar_lea.vmem %s490, 320 [#allocation2]
      %v826 = vld [vmem:[%s825] ss:$2 sm:$0xff]
      %s827 = scalar_lea.vmem %s490, 336 [#allocation2]
      %v828 = vld [vmem:[%s827] ss:$2 sm:$0xff]
      %s829 = scalar_lea.vmem %s490, 400 [#allocation2]
      %v830 = vld [vmem:[%s829] ss:$2 sm:$0xff]
      %s831 = scalar_lea.vmem %s490, 416 [#allocation2]
      %v832 = vld [vmem:[%s831] ss:$2 sm:$0xff]
      %s833 = scalar_lea.vmem %s490, 480 [#allocation2]
      %v834 = vld [vmem:[%s833] ss:$2 sm:$0xff]
      %s835 = scalar_lea.vmem %s490, 496 [#allocation2]
      %v836 = vld [vmem:[%s835] ss:$2 sm:$0xff]
      %s837 = scalar_lea.vmem %s490, 560 [#allocation2]
      %v838 = vld [vmem:[%s837] ss:$2 sm:$0xff]
      %s839 = scalar_lea.vmem %s490, 576 [#allocation2]
      %v840 = vld [vmem:[%s839] ss:$2 sm:$0xff]
      %s841 = scalar_lea.vmem %s490, 640 [#allocation2]
      %v842 = vld [vmem:[%s841] ss:$2 sm:$0xff]
      %s843 = scalar_lea.vmem %s490, 656 [#allocation2]
      %v844 = vld [vmem:[%s843] ss:$2 sm:$0xff]
      %s845 = scalar_lea.vmem %s490, 720 [#allocation2]
      %v846 = vld [vmem:[%s845] ss:$2 sm:$0xff]
      %s847 = scalar_lea.vmem %s490, 736 [#allocation2]
      %v848 = vld [vmem:[%s847] ss:$2 sm:$0xff]
      %s849 = scalar_lea.vmem %s490, 800 [#allocation2]
      %v850 = vld [vmem:[%s849] ss:$2 sm:$0xff]
      %s851 = scalar_lea.vmem %s490, 816 [#allocation2]
      %v852 = vld [vmem:[%s851] ss:$2 sm:$0xff]
      %s853 = scalar_lea.vmem %s490, 880 [#allocation2]
      %v854 = vld [vmem:[%s853] ss:$2 sm:$0xff]
      %s855 = scalar_lea.vmem %s490, 896 [#allocation2]
      %v856 = vld [vmem:[%s855] ss:$2 sm:$0xff]
      %s857 = scalar_lea.vmem %s490, 960 [#allocation2]
      %v858 = vld [vmem:[%s857] ss:$2 sm:$0xff]
      %s859 = scalar_lea.vmem %s490, 976 [#allocation2]
      %v860 = vld [vmem:[%s859] ss:$2 sm:$0xff]
      %s861 = scalar_lea.vmem %s490, 1040 [#allocation2]
      %v862 = vld [vmem:[%s861] ss:$2 sm:$0xff]
      %s863 = scalar_lea.vmem %s490, 1056 [#allocation2]
      %v864 = vld [vmem:[%s863] ss:$2 sm:$0xff]
      %s865 = scalar_lea.vmem %s490, 1120 [#allocation2]
      %v866 = vld [vmem:[%s865] ss:$2 sm:$0xff]
      %s867 = scalar_lea.vmem %s490, 1136 [#allocation2]
      %v868 = vld [vmem:[%s867] ss:$2 sm:$0xff]
      %s869 = scalar_lea.vmem %s490, 1200 [#allocation2]
      %v870 = vld [vmem:[%s869] ss:$2 sm:$0xff]
      %s871 = scalar_lea.vmem %s490, 1216 [#allocation2]
      %v872 = vld [vmem:[%s871] ss:$2 sm:$0xff]
      %s873 = scalar_lea.vmem %s490, 1 [#allocation2]
      %v874 = vld [vmem:[%s873] ss:$2 sm:$0xff]
      %s875 = scalar_lea.vmem %s490, 17 [#allocation2]
      %v876 = vld [vmem:[%s875] ss:$2 sm:$0xff]
      %s877 = scalar_lea.vmem %s490, 81 [#allocation2]
      %v878 = vld [vmem:[%s877] ss:$2 sm:$0xff]
      %s879 = scalar_lea.vmem %s490, 97 [#allocation2]
      %v880 = vld [vmem:[%s879] ss:$2 sm:$0xff]
      %s881 = scalar_lea.vmem %s490, 161 [#allocation2]
      %v882 = vld [vmem:[%s881] ss:$2 sm:$0xff]
      %s883 = scalar_lea.vmem %s490, 177 [#allocation2]
      %v884 = vld [vmem:[%s883] ss:$2 sm:$0xff]
      %s885 = scalar_lea.vmem %s490, 241 [#allocation2]
      %v886 = vld [vmem:[%s885] ss:$2 sm:$0xff]
      %s887 = scalar_lea.vmem %s490, 257 [#allocation2]
      %v888 = vld [vmem:[%s887] ss:$2 sm:$0xff]
      %s889 = scalar_lea.vmem %s490, 321 [#allocation2]
      %v890 = vld [vmem:[%s889] ss:$2 sm:$0xff]
      %s891 = scalar_lea.vmem %s490, 337 [#allocation2]
      %v892 = vld [vmem:[%s891] ss:$2 sm:$0xff]
      %s893 = scalar_lea.vmem %s490, 401 [#allocation2]
      %v894 = vld [vmem:[%s893] ss:$2 sm:$0xff]
      %s895 = scalar_lea.vmem %s490, 417 [#allocation2]
      %v896 = vld [vmem:[%s895] ss:$2 sm:$0xff]
      %s897 = scalar_lea.vmem %s490, 481 [#allocation2]
      %v898 = vld [vmem:[%s897] ss:$2 sm:$0xff]
      %s899 = scalar_lea.vmem %s490, 497 [#allocation2]
      %v900 = vld [vmem:[%s899] ss:$2 sm:$0xff]
      %s901 = scalar_lea.vmem %s490, 561 [#allocation2]
      %v902 = vld [vmem:[%s901] ss:$2 sm:$0xff]
      %s903 = scalar_lea.vmem %s490, 577 [#allocation2]
      %v904 = vld [vmem:[%s903] ss:$2 sm:$0xff]
      %s905 = scalar_lea.vmem %s490, 641 [#allocation2]
      %v906 = vld [vmem:[%s905] ss:$2 sm:$0xff]
      %s907 = scalar_lea.vmem %s490, 657 [#allocation2]
      %v908 = vld [vmem:[%s907] ss:$2 sm:$0xff]
      %s909 = scalar_lea.vmem %s490, 721 [#allocation2]
      %v910 = vld [vmem:[%s909] ss:$2 sm:$0xff]
      %s911 = scalar_lea.vmem %s490, 737 [#allocation2]
      %v912 = vld [vmem:[%s911] ss:$2 sm:$0xff]
      %s913 = scalar_lea.vmem %s490, 801 [#allocation2]
      %v914 = vld [vmem:[%s913] ss:$2 sm:$0xff]
      %s915 = scalar_lea.vmem %s490, 817 [#allocation2]
      %v916 = vld [vmem:[%s915] ss:$2 sm:$0xff]
      %s917 = scalar_lea.vmem %s490, 881 [#allocation2]
      %v918 = vld [vmem:[%s917] ss:$2 sm:$0xff]
      %s919 = scalar_lea.vmem %s490, 897 [#allocation2]
      %v920 = vld [vmem:[%s919] ss:$2 sm:$0xff]
      %s921 = scalar_lea.vmem %s490, 961 [#allocation2]
      %v922 = vld [vmem:[%s921] ss:$2 sm:$0xff]
      %s923 = scalar_lea.vmem %s490, 977 [#allocation2]
      %v924 = vld [vmem:[%s923] ss:$2 sm:$0xff]
      %s925 = scalar_lea.vmem %s490, 1041 [#allocation2]
      %v926 = vld [vmem:[%s925] ss:$2 sm:$0xff]
      %s927 = scalar_lea.vmem %s490, 1057 [#allocation2]
      %v928 = vld [vmem:[%s927] ss:$2 sm:$0xff]
      %s929 = scalar_lea.vmem %s490, 1121 [#allocation2]
      %v930 = vld [vmem:[%s929] ss:$2 sm:$0xff]
      %s931 = scalar_lea.vmem %s490, 1137 [#allocation2]
      %v932 = vld [vmem:[%s931] ss:$2 sm:$0xff]
      %s933 = scalar_lea.vmem %s490, 1201 [#allocation2]
      %v934 = vld [vmem:[%s933] ss:$2 sm:$0xff]
      %s935 = scalar_lea.vmem %s490, 1217 [#allocation2]
      %v936 = vld [vmem:[%s935] ss:$2 sm:$0xff]
      %s937 = scalar_lea.vmem %s490, 2 [#allocation2]
      %v938 = vld [vmem:[%s937] ss:$2 sm:$0xff]
      %s939 = scalar_lea.vmem %s490, 18 [#allocation2]
      %v940 = vld [vmem:[%s939] ss:$2 sm:$0xff]
      %s941 = scalar_lea.vmem %s490, 82 [#allocation2]
      %v942 = vld [vmem:[%s941] ss:$2 sm:$0xff]
      %s943 = scalar_lea.vmem %s490, 98 [#allocation2]
      %v944 = vld [vmem:[%s943] ss:$2 sm:$0xff]
      %s945 = scalar_lea.vmem %s490, 162 [#allocation2]
      %v946 = vld [vmem:[%s945] ss:$2 sm:$0xff]
      %s947 = scalar_lea.vmem %s490, 178 [#allocation2]
      %v948 = vld [vmem:[%s947] ss:$2 sm:$0xff]
      %s949 = scalar_lea.vmem %s490, 242 [#allocation2]
      %v950 = vld [vmem:[%s949] ss:$2 sm:$0xff]
      %s951 = scalar_lea.vmem %s490, 258 [#allocation2]
      %v952 = vld [vmem:[%s951] ss:$2 sm:$0xff]
      %s953 = scalar_lea.vmem %s490, 322 [#allocation2]
      %v954 = vld [vmem:[%s953] ss:$2 sm:$0xff]
      %s955 = scalar_lea.vmem %s490, 338 [#allocation2]
      %v956 = vld [vmem:[%s955] ss:$2 sm:$0xff]
      %s957 = scalar_lea.vmem %s490, 402 [#allocation2]
      %v958 = vld [vmem:[%s957] ss:$2 sm:$0xff]
      %s959 = scalar_lea.vmem %s490, 418 [#allocation2]
      %v960 = vld [vmem:[%s959] ss:$2 sm:$0xff]
      %s961 = scalar_lea.vmem %s490, 482 [#allocation2]
      %v962 = vld [vmem:[%s961] ss:$2 sm:$0xff]
      %s963 = scalar_lea.vmem %s490, 498 [#allocation2]
      %v964 = vld [vmem:[%s963] ss:$2 sm:$0xff]
      %s965 = scalar_lea.vmem %s490, 562 [#allocation2]
      %v966 = vld [vmem:[%s965] ss:$2 sm:$0xff]
      %s967 = scalar_lea.vmem %s490, 578 [#allocation2]
      %v968 = vld [vmem:[%s967] ss:$2 sm:$0xff]
      %s969 = scalar_lea.vmem %s490, 642 [#allocation2]
      %v970 = vld [vmem:[%s969] ss:$2 sm:$0xff]
      %s971 = scalar_lea.vmem %s490, 658 [#allocation2]
      %v972 = vld [vmem:[%s971] ss:$2 sm:$0xff]
      %s973 = scalar_lea.vmem %s490, 722 [#allocation2]
      %v974 = vld [vmem:[%s973] ss:$2 sm:$0xff]
      %s975 = scalar_lea.vmem %s490, 738 [#allocation2]
      %v976 = vld [vmem:[%s975] ss:$2 sm:$0xff]
      %s977 = scalar_lea.vmem %s490, 802 [#allocation2]
      %v978 = vld [vmem:[%s977] ss:$2 sm:$0xff]
      %s979 = scalar_lea.vmem %s490, 818 [#allocation2]
      %v980 = vld [vmem:[%s979] ss:$2 sm:$0xff]
      %s981 = scalar_lea.vmem %s490, 882 [#allocation2]
      %v982 = vld [vmem:[%s981] ss:$2 sm:$0xff]
      %s983 = scalar_lea.vmem %s490, 898 [#allocation2]
      %v984 = vld [vmem:[%s983] ss:$2 sm:$0xff]
      %s985 = scalar_lea.vmem %s490, 962 [#allocation2]
      %v986 = vld [vmem:[%s985] ss:$2 sm:$0xff]
      %s987 = scalar_lea.vmem %s490, 978 [#allocation2]
      %v988 = vld [vmem:[%s987] ss:$2 sm:$0xff]
      %s989 = scalar_lea.vmem %s490, 1042 [#allocation2]
      %v990 = vld [vmem:[%s989] ss:$2 sm:$0xff]
      %s991 = scalar_lea.vmem %s490, 1058 [#allocation2]
      %v992 = vld [vmem:[%s991] ss:$2 sm:$0xff]
      %s993 = scalar_lea.vmem %s490, 1122 [#allocation2]
      %v994 = vld [vmem:[%s993] ss:$2 sm:$0xff]
      %s995 = scalar_lea.vmem %s490, 1138 [#allocation2]
      %v996 = vld [vmem:[%s995] ss:$2 sm:$0xff]
      %s997 = scalar_lea.vmem %s490, 1202 [#allocation2]
      %v998 = vld [vmem:[%s997] ss:$2 sm:$0xff]
      %s999 = scalar_lea.vmem %s490, 1218 [#allocation2]
      %v1000 = vld [vmem:[%s999] ss:$2 sm:$0xff]
      %s1001 = scalar_lea.vmem [#allocation2], 80
      %v1002 = vld [vmem:[%s1001] ss:$2 sm:$0xff]
      %s1003 = scalar_lea.vmem %s1001, 16 [#allocation2]
      %v1004 = vld [vmem:[%s1003] ss:$2 sm:$0xff]
      %s1005 = scalar_lea.vmem %s1001, 80 [#allocation2]
      %v1006 = vld [vmem:[%s1005] ss:$2 sm:$0xff]
      %s1007 = scalar_lea.vmem %s1001, 96 [#allocation2]
      %v1008 = vld [vmem:[%s1007] ss:$2 sm:$0xff]
      %s1009 = scalar_lea.vmem %s1001, 160 [#allocation2]
      %v1010 = vld [vmem:[%s1009] ss:$2 sm:$0xff]
      %s1011 = scalar_lea.vmem %s1001, 176 [#allocation2]
      %v1012 = vld [vmem:[%s1011] ss:$2 sm:$0xff]
      %s1013 = scalar_lea.vmem %s1001, 240 [#allocation2]
      %v1014 = vld [vmem:[%s1013] ss:$2 sm:$0xff]
      %s1015 = scalar_lea.vmem %s1001, 256 [#allocation2]
      %v1016 = vld [vmem:[%s1015] ss:$2 sm:$0xff]
      %s1017 = scalar_lea.vmem %s1001, 320 [#allocation2]
      %v1018 = vld [vmem:[%s1017] ss:$2 sm:$0xff]
      %s1019 = scalar_lea.vmem %s1001, 336 [#allocation2]
      %v1020 = vld [vmem:[%s1019] ss:$2 sm:$0xff]
      %s1021 = scalar_lea.vmem %s1001, 400 [#allocation2]
      %v1022 = vld [vmem:[%s1021] ss:$2 sm:$0xff]
      %s1023 = scalar_lea.vmem %s1001, 416 [#allocation2]
      %v1024 = vld [vmem:[%s1023] ss:$2 sm:$0xff]
      %s1025 = scalar_lea.vmem %s1001, 480 [#allocation2]
      %v1026 = vld [vmem:[%s1025] ss:$2 sm:$0xff]
      %s1027 = scalar_lea.vmem %s1001, 496 [#allocation2]
      %v1028 = vld [vmem:[%s1027] ss:$2 sm:$0xff]
      %s1029 = scalar_lea.vmem %s1001, 560 [#allocation2]
      %v1030 = vld [vmem:[%s1029] ss:$2 sm:$0xff]
      %s1031 = scalar_lea.vmem %s1001, 576 [#allocation2]
      %v1032 = vld [vmem:[%s1031] ss:$2 sm:$0xff]
      %s1033 = scalar_lea.vmem %s1001, 640 [#allocation2]
      %v1034 = vld [vmem:[%s1033] ss:$2 sm:$0xff]
      %s1035 = scalar_lea.vmem %s1001, 656 [#allocation2]
      %v1036 = vld [vmem:[%s1035] ss:$2 sm:$0xff]
      %s1037 = scalar_lea.vmem %s1001, 720 [#allocation2]
      %v1038 = vld [vmem:[%s1037] ss:$2 sm:$0xff]
      %s1039 = scalar_lea.vmem %s1001, 736 [#allocation2]
      %v1040 = vld [vmem:[%s1039] ss:$2 sm:$0xff]
      %s1041 = scalar_lea.vmem %s1001, 800 [#allocation2]
      %v1042 = vld [vmem:[%s1041] ss:$2 sm:$0xff]
      %s1043 = scalar_lea.vmem %s1001, 816 [#allocation2]
      %v1044 = vld [vmem:[%s1043] ss:$2 sm:$0xff]
      %s1045 = scalar_lea.vmem %s1001, 880 [#allocation2]
      %v1046 = vld [vmem:[%s1045] ss:$2 sm:$0xff]
      %s1047 = scalar_lea.vmem %s1001, 896 [#allocation2]
      %v1048 = vld [vmem:[%s1047] ss:$2 sm:$0xff]
      %s1049 = scalar_lea.vmem %s1001, 960 [#allocation2]
      %v1050 = vld [vmem:[%s1049] ss:$2 sm:$0xff]
      %s1051 = scalar_lea.vmem %s1001, 976 [#allocation2]
      %v1052 = vld [vmem:[%s1051] ss:$2 sm:$0xff]
      %s1053 = scalar_lea.vmem %s1001, 1040 [#allocation2]
      %v1054 = vld [vmem:[%s1053] ss:$2 sm:$0xff]
      %s1055 = scalar_lea.vmem %s1001, 1056 [#allocation2]
      %v1056 = vld [vmem:[%s1055] ss:$2 sm:$0xff]
      %s1057 = scalar_lea.vmem %s1001, 1120 [#allocation2]
      %v1058 = vld [vmem:[%s1057] ss:$2 sm:$0xff]
      %s1059 = scalar_lea.vmem %s1001, 1136 [#allocation2]
      %v1060 = vld [vmem:[%s1059] ss:$2 sm:$0xff]
      %s1061 = scalar_lea.vmem %s1001, 1200 [#allocation2]
      %v1062 = vld [vmem:[%s1061] ss:$2 sm:$0xff]
      %s1063 = scalar_lea.vmem %s1001, 1216 [#allocation2]
      %v1064 = vld [vmem:[%s1063] ss:$2 sm:$0xff]
      %s1065 = scalar_lea.vmem %s1001, 1 [#allocation2]
      %v1066 = vld [vmem:[%s1065] ss:$2 sm:$0xff]
      %s1067 = scalar_lea.vmem %s1001, 17 [#allocation2]
      %v1068 = vld [vmem:[%s1067] ss:$2 sm:$0xff]
      %s1069 = scalar_lea.vmem %s1001, 81 [#allocation2]
      %v1070 = vld [vmem:[%s1069] ss:$2 sm:$0xff]
      %s1071 = scalar_lea.vmem %s1001, 97 [#allocation2]
      %v1072 = vld [vmem:[%s1071] ss:$2 sm:$0xff]
      %s1073 = scalar_lea.vmem %s1001, 161 [#allocation2]
      %v1074 = vld [vmem:[%s1073] ss:$2 sm:$0xff]
      %s1075 = scalar_lea.vmem %s1001, 177 [#allocation2]
      %v1076 = vld [vmem:[%s1075] ss:$2 sm:$0xff]
      %s1077 = scalar_lea.vmem %s1001, 241 [#allocation2]
      %v1078 = vld [vmem:[%s1077] ss:$2 sm:$0xff]
      %s1079 = scalar_lea.vmem %s1001, 257 [#allocation2]
      %v1080 = vld [vmem:[%s1079] ss:$2 sm:$0xff]
      %s1081 = scalar_lea.vmem %s1001, 321 [#allocation2]
      %v1082 = vld [vmem:[%s1081] ss:$2 sm:$0xff]
      %s1083 = scalar_lea.vmem %s1001, 337 [#allocation2]
      %v1084 = vld [vmem:[%s1083] ss:$2 sm:$0xff]
      %s1085 = scalar_lea.vmem %s1001, 401 [#allocation2]
      %v1086 = vld [vmem:[%s1085] ss:$2 sm:$0xff]
      %s1087 = scalar_lea.vmem %s1001, 417 [#allocation2]
      %v1088 = vld [vmem:[%s1087] ss:$2 sm:$0xff]
      %s1089 = scalar_lea.vmem %s1001, 481 [#allocation2]
      %v1090 = vld [vmem:[%s1089] ss:$2 sm:$0xff]
      %s1091 = scalar_lea.vmem %s1001, 497 [#allocation2]
      %v1092 = vld [vmem:[%s1091] ss:$2 sm:$0xff]
      %s1093 = scalar_lea.vmem %s1001, 561 [#allocation2]
      %v1094 = vld [vmem:[%s1093] ss:$2 sm:$0xff]
      %s1095 = scalar_lea.vmem %s1001, 577 [#allocation2]
      %v1096 = vld [vmem:[%s1095] ss:$2 sm:$0xff]
      %s1097 = scalar_lea.vmem %s1001, 641 [#allocation2]
      %v1098 = vld [vmem:[%s1097] ss:$2 sm:$0xff]
      %s1099 = scalar_lea.vmem %s1001, 657 [#allocation2]
      %v1100 = vld [vmem:[%s1099] ss:$2 sm:$0xff]
      %s1101 = scalar_lea.vmem %s1001, 721 [#allocation2]
      %v1102 = vld [vmem:[%s1101] ss:$2 sm:$0xff]
      %s1103 = scalar_lea.vmem %s1001, 737 [#allocation2]
      %v1104 = vld [vmem:[%s1103] ss:$2 sm:$0xff]
      %s1105 = scalar_lea.vmem %s1001, 801 [#allocation2]
      %v1106 = vld [vmem:[%s1105] ss:$2 sm:$0xff]
      %s1107 = scalar_lea.vmem %s1001, 817 [#allocation2]
      %v1108 = vld [vmem:[%s1107] ss:$2 sm:$0xff]
      %s1109 = scalar_lea.vmem %s1001, 881 [#allocation2]
      %v1110 = vld [vmem:[%s1109] ss:$2 sm:$0xff]
      %s1111 = scalar_lea.vmem %s1001, 897 [#allocation2]
      %v1112 = vld [vmem:[%s1111] ss:$2 sm:$0xff]
      %s1113 = scalar_lea.vmem %s1001, 961 [#allocation2]
      %v1114 = vld [vmem:[%s1113] ss:$2 sm:$0xff]
      %s1115 = scalar_lea.vmem %s1001, 977 [#allocation2]
      %v1116 = vld [vmem:[%s1115] ss:$2 sm:$0xff]
      %s1117 = scalar_lea.vmem %s1001, 1041 [#allocation2]
      %v1118 = vld [vmem:[%s1117] ss:$2 sm:$0xff]
      %s1119 = scalar_lea.vmem %s1001, 1057 [#allocation2]
      %v1120 = vld [vmem:[%s1119] ss:$2 sm:$0xff]
      %s1121 = scalar_lea.vmem %s1001, 1121 [#allocation2]
      %v1122 = vld [vmem:[%s1121] ss:$2 sm:$0xff]
      %s1123 = scalar_lea.vmem %s1001, 1137 [#allocation2]
      %v1124 = vld [vmem:[%s1123] ss:$2 sm:$0xff]
      %s1125 = scalar_lea.vmem %s1001, 1201 [#allocation2]
      %v1126 = vld [vmem:[%s1125] ss:$2 sm:$0xff]
      %s1127 = scalar_lea.vmem %s1001, 1217 [#allocation2]
      %v1128 = vld [vmem:[%s1127] ss:$2 sm:$0xff]
      %s1129 = scalar_lea.vmem %s1001, 2 [#allocation2]
      %v1130 = vld [vmem:[%s1129] ss:$2 sm:$0xff]
      %s1131 = scalar_lea.vmem %s1001, 18 [#allocation2]
      %v1132 = vld [vmem:[%s1131] ss:$2 sm:$0xff]
      %s1133 = scalar_lea.vmem %s1001, 82 [#allocation2]
      %v1134 = vld [vmem:[%s1133] ss:$2 sm:$0xff]
      %s1135 = scalar_lea.vmem %s1001, 98 [#allocation2]
      %v1136 = vld [vmem:[%s1135] ss:$2 sm:$0xff]
      %s1137 = scalar_lea.vmem %s1001, 162 [#allocation2]
      %v1138 = vld [vmem:[%s1137] ss:$2 sm:$0xff]
      %s1139 = scalar_lea.vmem %s1001, 178 [#allocation2]
      %v1140 = vld [vmem:[%s1139] ss:$2 sm:$0xff]
      %s1141 = scalar_lea.vmem %s1001, 242 [#allocation2]
      %v1142 = vld [vmem:[%s1141] ss:$2 sm:$0xff]
      %s1143 = scalar_lea.vmem %s1001, 258 [#allocation2]
      %v1144 = vld [vmem:[%s1143] ss:$2 sm:$0xff]
      %s1145 = scalar_lea.vmem %s1001, 322 [#allocation2]
      %v1146 = vld [vmem:[%s1145] ss:$2 sm:$0xff]
      %s1147 = scalar_lea.vmem %s1001, 338 [#allocation2]
      %v1148 = vld [vmem:[%s1147] ss:$2 sm:$0xff]
      %s1149 = scalar_lea.vmem %s1001, 402 [#allocation2]
      %v1150 = vld [vmem:[%s1149] ss:$2 sm:$0xff]
      %s1151 = scalar_lea.vmem %s1001, 418 [#allocation2]
      %v1152 = vld [vmem:[%s1151] ss:$2 sm:$0xff]
      %s1153 = scalar_lea.vmem %s1001, 482 [#allocation2]
      %v1154 = vld [vmem:[%s1153] ss:$2 sm:$0xff]
      %s1155 = scalar_lea.vmem %s1001, 498 [#allocation2]
      %v1156 = vld [vmem:[%s1155] ss:$2 sm:$0xff]
      %s1157 = scalar_lea.vmem %s1001, 562 [#allocation2]
      %v1158 = vld [vmem:[%s1157] ss:$2 sm:$0xff]
      %s1159 = scalar_lea.vmem %s1001, 578 [#allocation2]
      %v1160 = vld [vmem:[%s1159] ss:$2 sm:$0xff]
      %s1161 = scalar_lea.vmem %s1001, 642 [#allocation2]
      %v1162 = vld [vmem:[%s1161] ss:$2 sm:$0xff]
      %s1163 = scalar_lea.vmem %s1001, 658 [#allocation2]
      %v1164 = vld [vmem:[%s1163] ss:$2 sm:$0xff]
      %s1165 = scalar_lea.vmem %s1001, 722 [#allocation2]
      %v1166 = vld [vmem:[%s1165] ss:$2 sm:$0xff]
      %s1167 = scalar_lea.vmem %s1001, 738 [#allocation2]
      %v1168 = vld [vmem:[%s1167] ss:$2 sm:$0xff]
      %s1169 = scalar_lea.vmem %s1001, 802 [#allocation2]
      %v1170 = vld [vmem:[%s1169] ss:$2 sm:$0xff]
      %s1171 = scalar_lea.vmem %s1001, 818 [#allocation2]
      %v1172 = vld [vmem:[%s1171] ss:$2 sm:$0xff]
      %s1173 = scalar_lea.vmem %s1001, 882 [#allocation2]
      %v1174 = vld [vmem:[%s1173] ss:$2 sm:$0xff]
      %s1175 = scalar_lea.vmem %s1001, 898 [#allocation2]
      %v1176 = vld [vmem:[%s1175] ss:$2 sm:$0xff]
      %s1177 = scalar_lea.vmem %s1001, 962 [#allocation2]
      %v1178 = vld [vmem:[%s1177] ss:$2 sm:$0xff]
      %s1179 = scalar_lea.vmem %s1001, 978 [#allocation2]
      %v1180 = vld [vmem:[%s1179] ss:$2 sm:$0xff]
      %s1181 = scalar_lea.vmem %s1001, 1042 [#allocation2]
      %v1182 = vld [vmem:[%s1181] ss:$2 sm:$0xff]
      %s1183 = scalar_lea.vmem %s1001, 1058 [#allocation2]
      %v1184 = vld [vmem:[%s1183] ss:$2 sm:$0xff]
      %s1185 = scalar_lea.vmem %s1001, 1122 [#allocation2]
      %v1186 = vld [vmem:[%s1185] ss:$2 sm:$0xff]
      %s1187 = scalar_lea.vmem %s1001, 1138 [#allocation2]
      %v1188 = vld [vmem:[%s1187] ss:$2 sm:$0xff]
      %s1189 = scalar_lea.vmem %s1001, 1202 [#allocation2]
      %v1190 = vld [vmem:[%s1189] ss:$2 sm:$0xff]
      %s1191 = scalar_lea.vmem %s1001, 1218 [#allocation2]
      %v1192 = vld [vmem:[%s1191] ss:$2 sm:$0xff]
      %1225 = vrot.lane.b32.xlu0 %v683, 7
      %v1226 = vpop.permute.xlu0 %1225
      %1227 = vrot.lane.b32.xlu0 %v685, 7
      %v1228 = vpop.permute.xlu0 %1227
      %1229 = vrot.lane.b32.xlu0 %v687, 7
      %v1230 = vpop.permute.xlu0 %1229
      %1231 = vrot.lane.b32.xlu0 %v689, 7
      %v1232 = vpop.permute.xlu0 %1231
      %1233 = vrot.lane.b32.xlu0 %v691, 7
      %v1234 = vpop.permute.xlu0 %1233
      %1235 = vrot.lane.b32.xlu0 %v693, 7
      %v1236 = vpop.permute.xlu0 %1235
      %1237 = vrot.lane.b32.xlu0 %v695, 7
      %v1238 = vpop.permute.xlu0 %1237
      %1239 = vrot.lane.b32.xlu0 %v697, 7
      %v1240 = vpop.permute.xlu0 %1239
      %1241 = vrot.lane.b32.xlu0 %v699, 7
      %v1242 = vpop.permute.xlu0 %1241
      %1243 = vrot.lane.b32.xlu0 %v701, 7
      %v1244 = vpop.permute.xlu0 %1243
      %1245 = vrot.lane.b32.xlu0 %v703, 7
      %v1246 = vpop.permute.xlu0 %1245
      %1247 = vrot.lane.b32.xlu0 %v705, 7
      %v1248 = vpop.permute.xlu0 %1247
      %1249 = vrot.lane.b32.xlu0 %v707, 7
      %v1250 = vpop.permute.xlu0 %1249
      %1251 = vrot.lane.b32.xlu0 %v709, 7
      %v1252 = vpop.permute.xlu0 %1251
      %1253 = vrot.lane.b32.xlu0 %v711, 7
      %v1254 = vpop.permute.xlu0 %1253
      %1255 = vrot.lane.b32.xlu0 %v713, 7
      %v1256 = vpop.permute.xlu0 %1255
      %1257 = vrot.lane.b32.xlu0 %v715, 7
      %v1258 = vpop.permute.xlu0 %1257
      %1259 = vrot.lane.b32.xlu0 %v717, 7
      %v1260 = vpop.permute.xlu0 %1259
      %1261 = vrot.lane.b32.xlu0 %v719, 7
      %v1262 = vpop.permute.xlu0 %1261
      %1263 = vrot.lane.b32.xlu0 %v721, 7
      %v1264 = vpop.permute.xlu0 %1263
      %1265 = vrot.lane.b32.xlu0 %v723, 7
      %v1266 = vpop.permute.xlu0 %1265
      %1267 = vrot.lane.b32.xlu0 %v725, 7
      %v1268 = vpop.permute.xlu0 %1267
      %1269 = vrot.lane.b32.xlu0 %v727, 7
      %v1270 = vpop.permute.xlu0 %1269
      %1271 = vrot.lane.b32.xlu0 %v729, 7
      %v1272 = vpop.permute.xlu0 %1271
      %1273 = vrot.lane.b32.xlu0 %v731, 7
      %v1274 = vpop.permute.xlu0 %1273
      %1275 = vrot.lane.b32.xlu0 %v733, 7
      %v1276 = vpop.permute.xlu0 %1275
      %1277 = vrot.lane.b32.xlu0 %v735, 7
      %v1278 = vpop.permute.xlu0 %1277
      %1279 = vrot.lane.b32.xlu0 %v737, 7
      %v1280 = vpop.permute.xlu0 %1279
      %1281 = vrot.lane.b32.xlu0 %v739, 7
      %v1282 = vpop.permute.xlu0 %1281
      %1283 = vrot.lane.b32.xlu0 %v741, 7
      %v1284 = vpop.permute.xlu0 %1283
      %1285 = vrot.lane.b32.xlu0 %v743, 7
      %v1286 = vpop.permute.xlu0 %1285
      %1287 = vrot.lane.b32.xlu0 %v745, 7
      %v1288 = vpop.permute.xlu0 %1287
      %1353 = vrot.lane.b32.xlu0 %v747, 14
      %v1354 = vpop.permute.xlu0 %1353
      %1355 = vrot.lane.b32.xlu0 %v749, 14
      %v1356 = vpop.permute.xlu0 %1355
      %1357 = vrot.lane.b32.xlu0 %v751, 14
      %v1358 = vpop.permute.xlu0 %1357
      %1359 = vrot.lane.b32.xlu0 %v753, 14
      %v1360 = vpop.permute.xlu0 %1359
      %1361 = vrot.lane.b32.xlu0 %v755, 14
      %v1362 = vpop.permute.xlu0 %1361
      %1363 = vrot.lane.b32.xlu0 %v757, 14
      %v1364 = vpop.permute.xlu0 %1363
      %1365 = vrot.lane.b32.xlu0 %v759, 14
      %v1366 = vpop.permute.xlu0 %1365
      %1367 = vrot.lane.b32.xlu0 %v761, 14
      %v1368 = vpop.permute.xlu0 %1367
      %1369 = vrot.lane.b32.xlu0 %v763, 14
      %v1370 = vpop.permute.xlu0 %1369
      %1371 = vrot.lane.b32.xlu0 %v765, 14
      %v1372 = vpop.permute.xlu0 %1371
      %1373 = vrot.lane.b32.xlu0 %v767, 14
      %v1374 = vpop.permute.xlu0 %1373
      %1375 = vrot.lane.b32.xlu0 %v769, 14
      %v1376 = vpop.permute.xlu0 %1375
      %1377 = vrot.lane.b32.xlu0 %v771, 14
      %v1378 = vpop.permute.xlu0 %1377
      %1379 = vrot.lane.b32.xlu0 %v773, 14
      %v1380 = vpop.permute.xlu0 %1379
      %1381 = vrot.lane.b32.xlu0 %v775, 14
      %v1382 = vpop.permute.xlu0 %1381
      %1383 = vrot.lane.b32.xlu0 %v777, 14
      %v1384 = vpop.permute.xlu0 %1383
      %1385 = vrot.lane.b32.xlu0 %v779, 14
      %v1386 = vpop.permute.xlu0 %1385
      %1387 = vrot.lane.b32.xlu0 %v781, 14
      %v1388 = vpop.permute.xlu0 %1387
      %1389 = vrot.lane.b32.xlu0 %v783, 14
      %v1390 = vpop.permute.xlu0 %1389
      %1391 = vrot.lane.b32.xlu0 %v785, 14
      %v1392 = vpop.permute.xlu0 %1391
      %1393 = vrot.lane.b32.xlu0 %v787, 14
      %v1394 = vpop.permute.xlu0 %1393
      %1395 = vrot.lane.b32.xlu0 %v789, 14
      %v1396 = vpop.permute.xlu0 %1395
      %1397 = vrot.lane.b32.xlu0 %v791, 14
      %v1398 = vpop.permute.xlu0 %1397
      %1399 = vrot.lane.b32.xlu0 %v793, 14
      %v1400 = vpop.permute.xlu0 %1399
      %1401 = vrot.lane.b32.xlu0 %v795, 14
      %v1402 = vpop.permute.xlu0 %1401
      %1403 = vrot.lane.b32.xlu0 %v797, 14
      %v1404 = vpop.permute.xlu0 %1403
      %1405 = vrot.lane.b32.xlu0 %v799, 14
      %v1406 = vpop.permute.xlu0 %1405
      %1407 = vrot.lane.b32.xlu0 %v801, 14
      %v1408 = vpop.permute.xlu0 %1407
      %1409 = vrot.lane.b32.xlu0 %v803, 14
      %v1410 = vpop.permute.xlu0 %1409
      %1411 = vrot.lane.b32.xlu0 %v805, 14
      %v1412 = vpop.permute.xlu0 %1411
      %1413 = vrot.lane.b32.xlu0 %v807, 14
      %v1414 = vpop.permute.xlu0 %1413
      %1415 = vrot.lane.b32.xlu0 %v809, 14
      %v1416 = vpop.permute.xlu0 %1415
      %1481 = vrot.lane.b32.xlu0 %v810, 21
      %v1482 = vpop.permute.xlu0 %1481
      %1483 = vrot.lane.b32.xlu0 %v812, 21
      %v1484 = vpop.permute.xlu0 %1483
      %1485 = vrot.lane.b32.xlu0 %v814, 21
      %v1486 = vpop.permute.xlu0 %1485
      %1487 = vrot.lane.b32.xlu0 %v816, 21
      %v1488 = vpop.permute.xlu0 %1487
      %1489 = vrot.lane.b32.xlu0 %v818, 21
      %v1490 = vpop.permute.xlu0 %1489
      %1491 = vrot.lane.b32.xlu0 %v820, 21
      %v1492 = vpop.permute.xlu0 %1491
      %1493 = vrot.lane.b32.xlu0 %v822, 21
      %v1494 = vpop.permute.xlu0 %1493
      %1495 = vrot.lane.b32.xlu0 %v824, 21
      %v1496 = vpop.permute.xlu0 %1495
      %1497 = vrot.lane.b32.xlu0 %v826, 21
      %v1498 = vpop.permute.xlu0 %1497
      %1499 = vrot.lane.b32.xlu0 %v828, 21
      %v1500 = vpop.permute.xlu0 %1499
      %1501 = vrot.lane.b32.xlu0 %v830, 21
      %v1502 = vpop.permute.xlu0 %1501
      %1503 = vrot.lane.b32.xlu0 %v832, 21
      %v1504 = vpop.permute.xlu0 %1503
      %1505 = vrot.lane.b32.xlu0 %v834, 21
      %v1506 = vpop.permute.xlu0 %1505
      %1507 = vrot.lane.b32.xlu0 %v836, 21
      %v1508 = vpop.permute.xlu0 %1507
      %1509 = vrot.lane.b32.xlu0 %v838, 21
      %v1510 = vpop.permute.xlu0 %1509
      %1511 = vrot.lane.b32.xlu0 %v840, 21
      %v1512 = vpop.permute.xlu0 %1511
      %1513 = vrot.lane.b32.xlu0 %v842, 21
      %v1514 = vpop.permute.xlu0 %1513
      %1515 = vrot.lane.b32.xlu0 %v844, 21
      %v1516 = vpop.permute.xlu0 %1515
      %1517 = vrot.lane.b32.xlu0 %v846, 21
      %v1518 = vpop.permute.xlu0 %1517
      %1519 = vrot.lane.b32.xlu0 %v848, 21
      %v1520 = vpop.permute.xlu0 %1519
      %1521 = vrot.lane.b32.xlu0 %v850, 21
      %v1522 = vpop.permute.xlu0 %1521
      %1523 = vrot.lane.b32.xlu0 %v852, 21
      %v1524 = vpop.permute.xlu0 %1523
      %1525 = vrot.lane.b32.xlu0 %v854, 21
      %v1526 = vpop.permute.xlu0 %1525
      %1527 = vrot.lane.b32.xlu0 %v856, 21
      %v1528 = vpop.permute.xlu0 %1527
      %1529 = vrot.lane.b32.xlu0 %v858, 21
      %v1530 = vpop.permute.xlu0 %1529
      %1531 = vrot.lane.b32.xlu0 %v860, 21
      %v1532 = vpop.permute.xlu0 %1531
      %1533 = vrot.lane.b32.xlu0 %v862, 21
      %v1534 = vpop.permute.xlu0 %1533
      %1535 = vrot.lane.b32.xlu0 %v864, 21
      %v1536 = vpop.permute.xlu0 %1535
      %1537 = vrot.lane.b32.xlu0 %v866, 21
      %v1538 = vpop.permute.xlu0 %1537
      %1539 = vrot.lane.b32.xlu0 %v868, 21
      %v1540 = vpop.permute.xlu0 %1539
      %1541 = vrot.lane.b32.xlu0 %v870, 21
      %v1542 = vpop.permute.xlu0 %1541
      %1543 = vrot.lane.b32.xlu0 %v872, 21
      %v1544 = vpop.permute.xlu0 %1543
      %1609 = vrot.lane.b32.xlu0 %v874, 28
      %v1610 = vpop.permute.xlu0 %1609
      %1611 = vrot.lane.b32.xlu0 %v876, 28
      %v1612 = vpop.permute.xlu0 %1611
      %1613 = vrot.lane.b32.xlu0 %v878, 28
      %v1614 = vpop.permute.xlu0 %1613
      %1615 = vrot.lane.b32.xlu0 %v880, 28
      %v1616 = vpop.permute.xlu0 %1615
      %1617 = vrot.lane.b32.xlu0 %v882, 28
      %v1618 = vpop.permute.xlu0 %1617
      %1619 = vrot.lane.b32.xlu0 %v884, 28
      %v1620 = vpop.permute.xlu0 %1619
      %1621 = vrot.lane.b32.xlu0 %v886, 28
      %v1622 = vpop.permute.xlu0 %1621
      %1623 = vrot.lane.b32.xlu0 %v888, 28
      %v1624 = vpop.permute.xlu0 %1623
      %1625 = vrot.lane.b32.xlu0 %v890, 28
      %v1626 = vpop.permute.xlu0 %1625
      %1627 = vrot.lane.b32.xlu0 %v892, 28
      %v1628 = vpop.permute.xlu0 %1627
      %1629 = vrot.lane.b32.xlu0 %v894, 28
      %v1630 = vpop.permute.xlu0 %1629
      %1631 = vrot.lane.b32.xlu0 %v896, 28
      %v1632 = vpop.permute.xlu0 %1631
      %1633 = vrot.lane.b32.xlu0 %v898, 28
      %v1634 = vpop.permute.xlu0 %1633
      %1635 = vrot.lane.b32.xlu0 %v900, 28
      %v1636 = vpop.permute.xlu0 %1635
      %1637 = vrot.lane.b32.xlu0 %v902, 28
      %v1638 = vpop.permute.xlu0 %1637
      %1639 = vrot.lane.b32.xlu0 %v904, 28
      %v1640 = vpop.permute.xlu0 %1639
      %1641 = vrot.lane.b32.xlu0 %v906, 28
      %v1642 = vpop.permute.xlu0 %1641
      %1643 = vrot.lane.b32.xlu0 %v908, 28
      %v1644 = vpop.permute.xlu0 %1643
      %1645 = vrot.lane.b32.xlu0 %v910, 28
      %v1646 = vpop.permute.xlu0 %1645
      %1647 = vrot.lane.b32.xlu0 %v912, 28
      %v1648 = vpop.permute.xlu0 %1647
      %1649 = vrot.lane.b32.xlu0 %v914, 28
      %v1650 = vpop.permute.xlu0 %1649
      %1651 = vrot.lane.b32.xlu0 %v916, 28
      %v1652 = vpop.permute.xlu0 %1651
      %1653 = vrot.lane.b32.xlu0 %v918, 28
      %v1654 = vpop.permute.xlu0 %1653
      %1655 = vrot.lane.b32.xlu0 %v920, 28
      %v1656 = vpop.permute.xlu0 %1655
      %1657 = vrot.lane.b32.xlu0 %v922, 28
      %v1658 = vpop.permute.xlu0 %1657
      %1659 = vrot.lane.b32.xlu0 %v924, 28
      %v1660 = vpop.permute.xlu0 %1659
      %1661 = vrot.lane.b32.xlu0 %v926, 28
      %v1662 = vpop.permute.xlu0 %1661
      %1663 = vrot.lane.b32.xlu0 %v928, 28
      %v1664 = vpop.permute.xlu0 %1663
      %1665 = vrot.lane.b32.xlu0 %v930, 28
      %v1666 = vpop.permute.xlu0 %1665
      %1667 = vrot.lane.b32.xlu0 %v932, 28
      %v1668 = vpop.permute.xlu0 %1667
      %1669 = vrot.lane.b32.xlu0 %v934, 28
      %v1670 = vpop.permute.xlu0 %1669
      %1671 = vrot.lane.b32.xlu0 %v936, 28
      %v1672 = vpop.permute.xlu0 %1671
      %1737 = vrot.lane.b32.xlu0 %v938, 35
      %v1738 = vpop.permute.xlu0 %1737
      %1739 = vrot.lane.b32.xlu0 %v940, 35
      %v1740 = vpop.permute.xlu0 %1739
      %1741 = vrot.lane.b32.xlu0 %v942, 35
      %v1742 = vpop.permute.xlu0 %1741
      %1743 = vrot.lane.b32.xlu0 %v944, 35
      %v1744 = vpop.permute.xlu0 %1743
      %1745 = vrot.lane.b32.xlu0 %v946, 35
      %v1746 = vpop.permute.xlu0 %1745
      %1747 = vrot.lane.b32.xlu0 %v948, 35
      %v1748 = vpop.permute.xlu0 %1747
      %1749 = vrot.lane.b32.xlu0 %v950, 35
      %v1750 = vpop.permute.xlu0 %1749
      %1751 = vrot.lane.b32.xlu0 %v952, 35
      %v1752 = vpop.permute.xlu0 %1751
      %1753 = vrot.lane.b32.xlu0 %v954, 35
      %v1754 = vpop.permute.xlu0 %1753
      %1755 = vrot.lane.b32.xlu0 %v956, 35
      %v1756 = vpop.permute.xlu0 %1755
      %1757 = vrot.lane.b32.xlu0 %v958, 35
      %v1758 = vpop.permute.xlu0 %1757
      %1759 = vrot.lane.b32.xlu0 %v960, 35
      %v1760 = vpop.permute.xlu0 %1759
      %1761 = vrot.lane.b32.xlu0 %v962, 35
      %v1762 = vpop.permute.xlu0 %1761
      %1763 = vrot.lane.b32.xlu0 %v964, 35
      %v1764 = vpop.permute.xlu0 %1763
      %1765 = vrot.lane.b32.xlu0 %v966, 35
      %v1766 = vpop.permute.xlu0 %1765
      %1767 = vrot.lane.b32.xlu0 %v968, 35
      %v1768 = vpop.permute.xlu0 %1767
      %1769 = vrot.lane.b32.xlu0 %v970, 35
      %v1770 = vpop.permute.xlu0 %1769
      %1771 = vrot.lane.b32.xlu0 %v972, 35
      %v1772 = vpop.permute.xlu0 %1771
      %1773 = vrot.lane.b32.xlu0 %v974, 35
      %v1774 = vpop.permute.xlu0 %1773
      %1775 = vrot.lane.b32.xlu0 %v976, 35
      %v1776 = vpop.permute.xlu0 %1775
      %1777 = vrot.lane.b32.xlu0 %v978, 35
      %v1778 = vpop.permute.xlu0 %1777
      %1779 = vrot.lane.b32.xlu0 %v980, 35
      %v1780 = vpop.permute.xlu0 %1779
      %1781 = vrot.lane.b32.xlu0 %v982, 35
      %v1782 = vpop.permute.xlu0 %1781
      %1783 = vrot.lane.b32.xlu0 %v984, 35
      %v1784 = vpop.permute.xlu0 %1783
      %1785 = vrot.lane.b32.xlu0 %v986, 35
      %v1786 = vpop.permute.xlu0 %1785
      %1787 = vrot.lane.b32.xlu0 %v988, 35
      %v1788 = vpop.permute.xlu0 %1787
      %1789 = vrot.lane.b32.xlu0 %v990, 35
      %v1790 = vpop.permute.xlu0 %1789
      %1791 = vrot.lane.b32.xlu0 %v992, 35
      %v1792 = vpop.permute.xlu0 %1791
      %1793 = vrot.lane.b32.xlu0 %v994, 35
      %v1794 = vpop.permute.xlu0 %1793
      %1795 = vrot.lane.b32.xlu0 %v996, 35
      %v1796 = vpop.permute.xlu0 %1795
      %1797 = vrot.lane.b32.xlu0 %v998, 35
      %v1798 = vpop.permute.xlu0 %1797
      %1799 = vrot.lane.b32.xlu0 %v1000, 35
      %v1800 = vpop.permute.xlu0 %1799
      %1865 = vrot.lane.b32.xlu0 %v1002, 42
      %v1866 = vpop.permute.xlu0 %1865
      %1867 = vrot.lane.b32.xlu0 %v1004, 42
      %v1868 = vpop.permute.xlu0 %1867
      %1869 = vrot.lane.b32.xlu0 %v1006, 42
      %v1870 = vpop.permute.xlu0 %1869
      %1871 = vrot.lane.b32.xlu0 %v1008, 42
      %v1872 = vpop.permute.xlu0 %1871
      %1873 = vrot.lane.b32.xlu0 %v1010, 42
      %v1874 = vpop.permute.xlu0 %1873
      %1875 = vrot.lane.b32.xlu0 %v1012, 42
      %v1876 = vpop.permute.xlu0 %1875
      %1877 = vrot.lane.b32.xlu0 %v1014, 42
      %v1878 = vpop.permute.xlu0 %1877
      %1879 = vrot.lane.b32.xlu0 %v1016, 42
      %v1880 = vpop.permute.xlu0 %1879
      %1881 = vrot.lane.b32.xlu0 %v1018, 42
      %v1882 = vpop.permute.xlu0 %1881
      %1883 = vrot.lane.b32.xlu0 %v1020, 42
      %v1884 = vpop.permute.xlu0 %1883
      %1885 = vrot.lane.b32.xlu0 %v1022, 42
      %v1886 = vpop.permute.xlu0 %1885
      %1887 = vrot.lane.b32.xlu0 %v1024, 42
      %v1888 = vpop.permute.xlu0 %1887
      %1889 = vrot.lane.b32.xlu0 %v1026, 42
      %v1890 = vpop.permute.xlu0 %1889
      %1891 = vrot.lane.b32.xlu0 %v1028, 42
      %v1892 = vpop.permute.xlu0 %1891
      %1893 = vrot.lane.b32.xlu0 %v1030, 42
      %v1894 = vpop.permute.xlu0 %1893
      %1895 = vrot.lane.b32.xlu0 %v1032, 42
      %v1896 = vpop.permute.xlu0 %1895
      %1897 = vrot.lane.b32.xlu0 %v1034, 42
      %v1898 = vpop.permute.xlu0 %1897
      %1899 = vrot.lane.b32.xlu0 %v1036, 42
      %v1900 = vpop.permute.xlu0 %1899
      %1901 = vrot.lane.b32.xlu0 %v1038, 42
      %v1902 = vpop.permute.xlu0 %1901
      %1903 = vrot.lane.b32.xlu0 %v1040, 42
      %v1904 = vpop.permute.xlu0 %1903
      %1905 = vrot.lane.b32.xlu0 %v1042, 42
      %v1906 = vpop.permute.xlu0 %1905
      %1907 = vrot.lane.b32.xlu0 %v1044, 42
      %v1908 = vpop.permute.xlu0 %1907
      %1909 = vrot.lane.b32.xlu0 %v1046, 42
      %v1910 = vpop.permute.xlu0 %1909
      %1911 = vrot.lane.b32.xlu0 %v1048, 42
      %v1912 = vpop.permute.xlu0 %1911
      %1913 = vrot.lane.b32.xlu0 %v1050, 42
      %v1914 = vpop.permute.xlu0 %1913
      %1915 = vrot.lane.b32.xlu0 %v1052, 42
      %v1916 = vpop.permute.xlu0 %1915
      %1917 = vrot.lane.b32.xlu0 %v1054, 42
      %v1918 = vpop.permute.xlu0 %1917
      %1919 = vrot.lane.b32.xlu0 %v1056, 42
      %v1920 = vpop.permute.xlu0 %1919
      %1921 = vrot.lane.b32.xlu0 %v1058, 42
      %v1922 = vpop.permute.xlu0 %1921
      %1923 = vrot.lane.b32.xlu0 %v1060, 42
      %v1924 = vpop.permute.xlu0 %1923
      %1925 = vrot.lane.b32.xlu0 %v1062, 42
      %v1926 = vpop.permute.xlu0 %1925
      %1927 = vrot.lane.b32.xlu0 %v1064, 42
      %v1928 = vpop.permute.xlu0 %1927
      %1993 = vrot.lane.b32.xlu0 %v1066, 49
      %v1994 = vpop.permute.xlu0 %1993
      %1995 = vrot.lane.b32.xlu0 %v1068, 49
      %v1996 = vpop.permute.xlu0 %1995
      %1997 = vrot.lane.b32.xlu0 %v1070, 49
      %v1998 = vpop.permute.xlu0 %1997
      %1999 = vrot.lane.b32.xlu0 %v1072, 49
      %v2000 = vpop.permute.xlu0 %1999
      %2001 = vrot.lane.b32.xlu0 %v1074, 49
      %v2002 = vpop.permute.xlu0 %2001
      %2003 = vrot.lane.b32.xlu0 %v1076, 49
      %v2004 = vpop.permute.xlu0 %2003
      %2005 = vrot.lane.b32.xlu0 %v1078, 49
      %v2006 = vpop.permute.xlu0 %2005
      %2007 = vrot.lane.b32.xlu0 %v1080, 49
      %v2008 = vpop.permute.xlu0 %2007
      %2009 = vrot.lane.b32.xlu0 %v1082, 49
      %v2010 = vpop.permute.xlu0 %2009
      %2011 = vrot.lane.b32.xlu0 %v1084, 49
      %v2012 = vpop.permute.xlu0 %2011
      %2013 = vrot.lane.b32.xlu0 %v1086, 49
      %v2014 = vpop.permute.xlu0 %2013
      %2015 = vrot.lane.b32.xlu0 %v1088, 49
      %v2016 = vpop.permute.xlu0 %2015
      %2017 = vrot.lane.b32.xlu0 %v1090, 49
      %v2018 = vpop.permute.xlu0 %2017
      %2019 = vrot.lane.b32.xlu0 %v1092, 49
      %v2020 = vpop.permute.xlu0 %2019
      %2021 = vrot.lane.b32.xlu0 %v1094, 49
      %v2022 = vpop.permute.xlu0 %2021
      %2023 = vrot.lane.b32.xlu0 %v1096, 49
      %v2024 = vpop.permute.xlu0 %2023
      %2025 = vrot.lane.b32.xlu0 %v1098, 49
      %v2026 = vpop.permute.xlu0 %2025
      %2027 = vrot.lane.b32.xlu0 %v1100, 49
      %v2028 = vpop.permute.xlu0 %2027
      %2029 = vrot.lane.b32.xlu0 %v1102, 49
      %v2030 = vpop.permute.xlu0 %2029
      %2031 = vrot.lane.b32.xlu0 %v1104, 49
      %v2032 = vpop.permute.xlu0 %2031
      %2033 = vrot.lane.b32.xlu0 %v1106, 49
      %v2034 = vpop.permute.xlu0 %2033
      %2035 = vrot.lane.b32.xlu0 %v1108, 49
      %v2036 = vpop.permute.xlu0 %2035
      %2037 = vrot.lane.b32.xlu0 %v1110, 49
      %v2038 = vpop.permute.xlu0 %2037
      %2039 = vrot.lane.b32.xlu0 %v1112, 49
      %v2040 = vpop.permute.xlu0 %2039
      %2041 = vrot.lane.b32.xlu0 %v1114, 49
      %v2042 = vpop.permute.xlu0 %2041
      %2043 = vrot.lane.b32.xlu0 %v1116, 49
      %v2044 = vpop.permute.xlu0 %2043
      %2045 = vrot.lane.b32.xlu0 %v1118, 49
      %v2046 = vpop.permute.xlu0 %2045
      %2047 = vrot.lane.b32.xlu0 %v1120, 49
      %v2048 = vpop.permute.xlu0 %2047
      %2049 = vrot.lane.b32.xlu0 %v1122, 49
      %v2050 = vpop.permute.xlu0 %2049
      %2051 = vrot.lane.b32.xlu0 %v1124, 49
      %v2052 = vpop.permute.xlu0 %2051
      %2053 = vrot.lane.b32.xlu0 %v1126, 49
      %v2054 = vpop.permute.xlu0 %2053
      %2055 = vrot.lane.b32.xlu0 %v1128, 49
      %v2056 = vpop.permute.xlu0 %2055
      %2121 = vrot.lane.b32.xlu0 %v1130, 56
      %v2122 = vpop.permute.xlu0 %2121
      %2123 = vrot.lane.b32.xlu0 %v1132, 56
      %v2124 = vpop.permute.xlu0 %2123
      %2125 = vrot.lane.b32.xlu0 %v1134, 56
      %v2126 = vpop.permute.xlu0 %2125
      %2127 = vrot.lane.b32.xlu0 %v1136, 56
      %v2128 = vpop.permute.xlu0 %2127
      %2129 = vrot.lane.b32.xlu0 %v1138, 56
      %v2130 = vpop.permute.xlu0 %2129
      %2131 = vrot.lane.b32.xlu0 %v1140, 56
      %v2132 = vpop.permute.xlu0 %2131
      %2133 = vrot.lane.b32.xlu0 %v1142, 56
      %v2134 = vpop.permute.xlu0 %2133
      %2135 = vrot.lane.b32.xlu0 %v1144, 56
      %v2136 = vpop.permute.xlu0 %2135
      %2137 = vrot.lane.b32.xlu0 %v1146, 56
      %v2138 = vpop.permute.xlu0 %2137
      %2139 = vrot.lane.b32.xlu0 %v1148, 56
      %v2140 = vpop.permute.xlu0 %2139
      %2141 = vrot.lane.b32.xlu0 %v1150, 56
      %v2142 = vpop.permute.xlu0 %2141
      %2143 = vrot.lane.b32.xlu0 %v1152, 56
      %v2144 = vpop.permute.xlu0 %2143
      %2145 = vrot.lane.b32.xlu0 %v1154, 56
      %v2146 = vpop.permute.xlu0 %2145
      %2147 = vrot.lane.b32.xlu0 %v1156, 56
      %v2148 = vpop.permute.xlu0 %2147
      %2149 = vrot.lane.b32.xlu0 %v1158, 56
      %v2150 = vpop.permute.xlu0 %2149
      %2151 = vrot.lane.b32.xlu0 %v1160, 56
      %v2152 = vpop.permute.xlu0 %2151
      %2153 = vrot.lane.b32.xlu0 %v1162, 56
      %v2154 = vpop.permute.xlu0 %2153
      %2155 = vrot.lane.b32.xlu0 %v1164, 56
      %v2156 = vpop.permute.xlu0 %2155
      %2157 = vrot.lane.b32.xlu0 %v1166, 56
      %v2158 = vpop.permute.xlu0 %2157
      %2159 = vrot.lane.b32.xlu0 %v1168, 56
      %v2160 = vpop.permute.xlu0 %2159
      %2161 = vrot.lane.b32.xlu0 %v1170, 56
      %v2162 = vpop.permute.xlu0 %2161
      %2163 = vrot.lane.b32.xlu0 %v1172, 56
      %v2164 = vpop.permute.xlu0 %2163
      %2165 = vrot.lane.b32.xlu0 %v1174, 56
      %v2166 = vpop.permute.xlu0 %2165
      %2167 = vrot.lane.b32.xlu0 %v1176, 56
      %v2168 = vpop.permute.xlu0 %2167
      %2169 = vrot.lane.b32.xlu0 %v1178, 56
      %v2170 = vpop.permute.xlu0 %2169
      %2171 = vrot.lane.b32.xlu0 %v1180, 56
      %v2172 = vpop.permute.xlu0 %2171
      %2173 = vrot.lane.b32.xlu0 %v1182, 56
      %v2174 = vpop.permute.xlu0 %2173
      %2175 = vrot.lane.b32.xlu0 %v1184, 56
      %v2176 = vpop.permute.xlu0 %2175
      %2177 = vrot.lane.b32.xlu0 %v1186, 56
      %v2178 = vpop.permute.xlu0 %2177
      %2179 = vrot.lane.b32.xlu0 %v1188, 56
      %v2180 = vpop.permute.xlu0 %2179
      %2181 = vrot.lane.b32.xlu0 %v1190, 56
      %v2182 = vpop.permute.xlu0 %2181
      %2183 = vrot.lane.b32.xlu0 %v1192, 56
      %v2184 = vpop.permute.xlu0 %2183
      %v2217 = vsel %vm280, %v619, %v1226
      %v2218 = vsel %vm280, %v621, %v1228
      %v2219 = vsel %vm280, %v623, %v1230
      %v2220 = vsel %vm280, %v625, %v1232
      %v2221 = vsel %vm280, %v627, %v1234
      %v2222 = vsel %vm280, %v629, %v1236
      %v2223 = vsel %vm280, %v631, %v1238
      %v2224 = vsel %vm280, %v633, %v1240
      %v2225 = vsel %vm280, %v635, %v1242
      %v2226 = vsel %vm280, %v637, %v1244
      %v2227 = vsel %vm280, %v639, %v1246
      %v2228 = vsel %vm280, %v641, %v1248
      %v2229 = vsel %vm280, %v643, %v1250
      %v2230 = vsel %vm280, %v645, %v1252
      %v2231 = vsel %vm280, %v647, %v1254
      %v2232 = vsel %vm280, %v649, %v1256
      %v2233 = vsel %vm280, %v651, %v1258
      %v2234 = vsel %vm280, %v653, %v1260
      %v2235 = vsel %vm280, %v655, %v1262
      %v2236 = vsel %vm280, %v657, %v1264
      %v2237 = vsel %vm280, %v659, %v1266
      %v2238 = vsel %vm280, %v661, %v1268
      %v2239 = vsel %vm280, %v663, %v1270
      %v2240 = vsel %vm280, %v665, %v1272
      %v2241 = vsel %vm280, %v667, %v1274
      %v2242 = vsel %vm280, %v669, %v1276
      %v2243 = vsel %vm280, %v671, %v1278
      %v2244 = vsel %vm280, %v673, %v1280
      %v2245 = vsel %vm280, %v675, %v1282
      %v2246 = vsel %vm280, %v677, %v1284
      %v2247 = vsel %vm280, %v679, %v1286
      %v2248 = vsel %vm280, %v681, %v1288
      %vm2249 = vcmask 113664
      %v2250 = vsel %vm2249, %v2217, %v1354
      %v2251 = vsel %vm2249, %v2218, %v1356
      %v2252 = vsel %vm2249, %v2219, %v1358
      %v2253 = vsel %vm2249, %v2220, %v1360
      %v2254 = vsel %vm2249, %v2221, %v1362
      %v2255 = vsel %vm2249, %v2222, %v1364
      %v2256 = vsel %vm2249, %v2223, %v1366
      %v2257 = vsel %vm2249, %v2224, %v1368
      %v2258 = vsel %vm2249, %v2225, %v1370
      %v2259 = vsel %vm2249, %v2226, %v1372
      %v2260 = vsel %vm2249, %v2227, %v1374
      %v2261 = vsel %vm2249, %v2228, %v1376
      %v2262 = vsel %vm2249, %v2229, %v1378
      %v2263 = vsel %vm2249, %v2230, %v1380
      %v2264 = vsel %vm2249, %v2231, %v1382
      %v2265 = vsel %vm2249, %v2232, %v1384
      %v2266 = vsel %vm2249, %v2233, %v1386
      %v2267 = vsel %vm2249, %v2234, %v1388
      %v2268 = vsel %vm2249, %v2235, %v1390
      %v2269 = vsel %vm2249, %v2236, %v1392
      %v2270 = vsel %vm2249, %v2237, %v1394
      %v2271 = vsel %vm2249, %v2238, %v1396
      %v2272 = vsel %vm2249, %v2239, %v1398
      %v2273 = vsel %vm2249, %v2240, %v1400
      %v2274 = vsel %vm2249, %v2241, %v1402
      %v2275 = vsel %vm2249, %v2242, %v1404
      %v2276 = vsel %vm2249, %v2243, %v1406
      %v2277 = vsel %vm2249, %v2244, %v1408
      %v2278 = vsel %vm2249, %v2245, %v1410
      %v2279 = vsel %vm2249, %v2246, %v1412
      %v2280 = vsel %vm2249, %v2247, %v1414
      %v2281 = vsel %vm2249, %v2248, %v1416
      %vm2282 = vcmask 171008
      %v2283 = vsel %vm2282, %v2250, %v1482
      %v2284 = vsel %vm2282, %v2251, %v1484
      %v2285 = vsel %vm2282, %v2252, %v1486
      %v2286 = vsel %vm2282, %v2253, %v1488
      %v2287 = vsel %vm2282, %v2254, %v1490
      %v2288 = vsel %vm2282, %v2255, %v1492
      %v2289 = vsel %vm2282, %v2256, %v1494
      %v2290 = vsel %vm2282, %v2257, %v1496
      %v2291 = vsel %vm2282, %v2258, %v1498
      %v2292 = vsel %vm2282, %v2259, %v1500
      %v2293 = vsel %vm2282, %v2260, %v1502
      %v2294 = vsel %vm2282, %v2261, %v1504
      %v2295 = vsel %vm2282, %v2262, %v1506
      %v2296 = vsel %vm2282, %v2263, %v1508
      %v2297 = vsel %vm2282, %v2264, %v1510
      %v2298 = vsel %vm2282, %v2265, %v1512
      %v2299 = vsel %vm2282, %v2266, %v1514
      %v2300 = vsel %vm2282, %v2267, %v1516
      %v2301 = vsel %vm2282, %v2268, %v1518
      %v2302 = vsel %vm2282, %v2269, %v1520
      %v2303 = vsel %vm2282, %v2270, %v1522
      %v2304 = vsel %vm2282, %v2271, %v1524
      %v2305 = vsel %vm2282, %v2272, %v1526
      %v2306 = vsel %vm2282, %v2273, %v1528
      %v2307 = vsel %vm2282, %v2274, %v1530
      %v2308 = vsel %vm2282, %v2275, %v1532
      %v2309 = vsel %vm2282, %v2276, %v1534
      %v2310 = vsel %vm2282, %v2277, %v1536
      %v2311 = vsel %vm2282, %v2278, %v1538
      %v2312 = vsel %vm2282, %v2279, %v1540
      %v2313 = vsel %vm2282, %v2280, %v1542
      %v2314 = vsel %vm2282, %v2281, %v1544
      %vm2315 = vcmask 228352
      %v2316 = vsel %vm2315, %v2283, %v1610
      %v2317 = vsel %vm2315, %v2284, %v1612
      %v2318 = vsel %vm2315, %v2285, %v1614
      %v2319 = vsel %vm2315, %v2286, %v1616
      %v2320 = vsel %vm2315, %v2287, %v1618
      %v2321 = vsel %vm2315, %v2288, %v1620
      %v2322 = vsel %vm2315, %v2289, %v1622
      %v2323 = vsel %vm2315, %v2290, %v1624
      %v2324 = vsel %vm2315, %v2291, %v1626
      %v2325 = vsel %vm2315, %v2292, %v1628
      %v2326 = vsel %vm2315, %v2293, %v1630
      %v2327 = vsel %vm2315, %v2294, %v1632
      %v2328 = vsel %vm2315, %v2295, %v1634
      %v2329 = vsel %vm2315, %v2296, %v1636
      %v2330 = vsel %vm2315, %v2297, %v1638
      %v2331 = vsel %vm2315, %v2298, %v1640
      %v2332 = vsel %vm2315, %v2299, %v1642
      %v2333 = vsel %vm2315, %v2300, %v1644
      %v2334 = vsel %vm2315, %v2301, %v1646
      %v2335 = vsel %vm2315, %v2302, %v1648
      %v2336 = vsel %vm2315, %v2303, %v1650
      %v2337 = vsel %vm2315, %v2304, %v1652
      %v2338 = vsel %vm2315, %v2305, %v1654
      %v2339 = vsel %vm2315, %v2306, %v1656
      %v2340 = vsel %vm2315, %v2307, %v1658
      %v2341 = vsel %vm2315, %v2308, %v1660
      %v2342 = vsel %vm2315, %v2309, %v1662
      %v2343 = vsel %vm2315, %v2310, %v1664
      %v2344 = vsel %vm2315, %v2311, %v1666
      %v2345 = vsel %vm2315, %v2312, %v1668
      %v2346 = vsel %vm2315, %v2313, %v1670
      %v2347 = vsel %vm2315, %v2314, %v1672
      %vm2348 = vcmask 285696
      %v2349 = vsel %vm2348, %v2316, %v1738
      %v2350 = vsel %vm2348, %v2317, %v1740
      %v2351 = vsel %vm2348, %v2318, %v1742
      %v2352 = vsel %vm2348, %v2319, %v1744
      %v2353 = vsel %vm2348, %v2320, %v1746
      %v2354 = vsel %vm2348, %v2321, %v1748
      %v2355 = vsel %vm2348, %v2322, %v1750
      %v2356 = vsel %vm2348, %v2323, %v1752
      %v2357 = vsel %vm2348, %v2324, %v1754
      %v2358 = vsel %vm2348, %v2325, %v1756
      %v2359 = vsel %vm2348, %v2326, %v1758
      %v2360 = vsel %vm2348, %v2327, %v1760
      %v2361 = vsel %vm2348, %v2328, %v1762
      %v2362 = vsel %vm2348, %v2329, %v1764
      %v2363 = vsel %vm2348, %v2330, %v1766
      %v2364 = vsel %vm2348, %v2331, %v1768
      %v2365 = vsel %vm2348, %v2332, %v1770
      %v2366 = vsel %vm2348, %v2333, %v1772
      %v2367 = vsel %vm2348, %v2334, %v1774
      %v2368 = vsel %vm2348, %v2335, %v1776
      %v2369 = vsel %vm2348, %v2336, %v1778
      %v2370 = vsel %vm2348, %v2337, %v1780
      %v2371 = vsel %vm2348, %v2338, %v1782
      %v2372 = vsel %vm2348, %v2339, %v1784
      %v2373 = vsel %vm2348, %v2340, %v1786
      %v2374 = vsel %vm2348, %v2341, %v1788
      %v2375 = vsel %vm2348, %v2342, %v1790
      %v2376 = vsel %vm2348, %v2343, %v1792
      %v2377 = vsel %vm2348, %v2344, %v1794
      %v2378 = vsel %vm2348, %v2345, %v1796
      %v2379 = vsel %vm2348, %v2346, %v1798
      %v2380 = vsel %vm2348, %v2347, %v1800
      %vm2381 = vcmask 343040
      %v2382 = vsel %vm2381, %v2349, %v1866
      %v2383 = vsel %vm2381, %v2350, %v1868
      %v2384 = vsel %vm2381, %v2351, %v1870
      %v2385 = vsel %vm2381, %v2352, %v1872
      %v2386 = vsel %vm2381, %v2353, %v1874
      %v2387 = vsel %vm2381, %v2354, %v1876
      %v2388 = vsel %vm2381, %v2355, %v1878
      %v2389 = vsel %vm2381, %v2356, %v1880
      %v2390 = vsel %vm2381, %v2357, %v1882
      %v2391 = vsel %vm2381, %v2358, %v1884
      %v2392 = vsel %vm2381, %v2359, %v1886
      %v2393 = vsel %vm2381, %v2360, %v1888
      %v2394 = vsel %vm2381, %v2361, %v1890
      %v2395 = vsel %vm2381, %v2362, %v1892
      %v2396 = vsel %vm2381, %v2363, %v1894
      %v2397 = vsel %vm2381, %v2364, %v1896
      %v2398 = vsel %vm2381, %v2365, %v1898
      %v2399 = vsel %vm2381, %v2366, %v1900
      %v2400 = vsel %vm2381, %v2367, %v1902
      %v2401 = vsel %vm2381, %v2368, %v1904
      %v2402 = vsel %vm2381, %v2369, %v1906
      %v2403 = vsel %vm2381, %v2370, %v1908
      %v2404 = vsel %vm2381, %v2371, %v1910
      %v2405 = vsel %vm2381, %v2372, %v1912
      %v2406 = vsel %vm2381, %v2373, %v1914
      %v2407 = vsel %vm2381, %v2374, %v1916
      %v2408 = vsel %vm2381, %v2375, %v1918
      %v2409 = vsel %vm2381, %v2376, %v1920
      %v2410 = vsel %vm2381, %v2377, %v1922
      %v2411 = vsel %vm2381, %v2378, %v1924
      %v2412 = vsel %vm2381, %v2379, %v1926
      %v2413 = vsel %vm2381, %v2380, %v1928
      %vm2414 = vcmask 400384
      %v2415 = vsel %vm2414, %v2382, %v1994
      %v2416 = vsel %vm2414, %v2383, %v1996
      %v2417 = vsel %vm2414, %v2384, %v1998
      %v2418 = vsel %vm2414, %v2385, %v2000
      %v2419 = vsel %vm2414, %v2386, %v2002
      %v2420 = vsel %vm2414, %v2387, %v2004
      %v2421 = vsel %vm2414, %v2388, %v2006
      %v2422 = vsel %vm2414, %v2389, %v2008
      %v2423 = vsel %vm2414, %v2390, %v2010
      %v2424 = vsel %vm2414, %v2391, %v2012
      %v2425 = vsel %vm2414, %v2392, %v2014
      %v2426 = vsel %vm2414, %v2393, %v2016
      %v2427 = vsel %vm2414, %v2394, %v2018
      %v2428 = vsel %vm2414, %v2395, %v2020
      %v2429 = vsel %vm2414, %v2396, %v2022
      %v2430 = vsel %vm2414, %v2397, %v2024
      %v2431 = vsel %vm2414, %v2398, %v2026
      %v2432 = vsel %vm2414, %v2399, %v2028
      %v2433 = vsel %vm2414, %v2400, %v2030
      %v2434 = vsel %vm2414, %v2401, %v2032
      %v2435 = vsel %vm2414, %v2402, %v2034
      %v2436 = vsel %vm2414, %v2403, %v2036
      %v2437 = vsel %vm2414, %v2404, %v2038
      %v2438 = vsel %vm2414, %v2405, %v2040
      %v2439 = vsel %vm2414, %v2406, %v2042
      %v2440 = vsel %vm2414, %v2407, %v2044
      %v2441 = vsel %vm2414, %v2408, %v2046
      %v2442 = vsel %vm2414, %v2409, %v2048
      %v2443 = vsel %vm2414, %v2410, %v2050
      %v2444 = vsel %vm2414, %v2411, %v2052
      %v2445 = vsel %vm2414, %v2412, %v2054
      %v2446 = vsel %vm2414, %v2413, %v2056
      %vm2447 = vcmask 457728
      %v2448 = vsel %vm2447, %v2415, %v2122
      %v2449 = vsel %vm2447, %v2416, %v2124
      %v2450 = vsel %vm2447, %v2417, %v2126
      %v2451 = vsel %vm2447, %v2418, %v2128
      %v2452 = vsel %vm2447, %v2419, %v2130
      %v2453 = vsel %vm2447, %v2420, %v2132
      %v2454 = vsel %vm2447, %v2421, %v2134
      %v2455 = vsel %vm2447, %v2422, %v2136
      %v2456 = vsel %vm2447, %v2423, %v2138
      %v2457 = vsel %vm2447, %v2424, %v2140
      %v2458 = vsel %vm2447, %v2425, %v2142
      %v2459 = vsel %vm2447, %v2426, %v2144
      %v2460 = vsel %vm2447, %v2427, %v2146
      %v2461 = vsel %vm2447, %v2428, %v2148
      %v2462 = vsel %vm2447, %v2429, %v2150
      %v2463 = vsel %vm2447, %v2430, %v2152
      %v2464 = vsel %vm2447, %v2431, %v2154
      %v2465 = vsel %vm2447, %v2432, %v2156
      %v2466 = vsel %vm2447, %v2433, %v2158
      %v2467 = vsel %vm2447, %v2434, %v2160
      %v2468 = vsel %vm2447, %v2435, %v2162
      %v2469 = vsel %vm2447, %v2436, %v2164
      %v2470 = vsel %vm2447, %v2437, %v2166
      %v2471 = vsel %vm2447, %v2438, %v2168
      %v2472 = vsel %vm2447, %v2439, %v2170
      %v2473 = vsel %vm2447, %v2440, %v2172
      %v2474 = vsel %vm2447, %v2441, %v2174
      %v2475 = vsel %vm2447, %v2442, %v2176
      %v2476 = vsel %vm2447, %v2443, %v2178
      %v2477 = vsel %vm2447, %v2444, %v2180
      %v2478 = vsel %vm2447, %v2445, %v2182
      %v2479 = vsel %vm2447, %v2446, %v2184
      %v2480 = vpack.c.bf16 %v2449, %v2448
      %v2481 = vpack.c.bf16 %v2451, %v2450
      %v2482 = vpack.c.bf16 %v2453, %v2452
      %v2483 = vpack.c.bf16 %v2455, %v2454
      %v2484 = vpack.c.bf16 %v2457, %v2456
      %v2485 = vpack.c.bf16 %v2459, %v2458
      %v2486 = vpack.c.bf16 %v2461, %v2460
      %v2487 = vpack.c.bf16 %v2463, %v2462
      %v2488 = vpack.c.bf16 %v2465, %v2464
      %v2489 = vpack.c.bf16 %v2467, %v2466
      %v2490 = vpack.c.bf16 %v2469, %v2468
      %v2491 = vpack.c.bf16 %v2471, %v2470
      %v2492 = vpack.c.bf16 %v2473, %v2472
      %v2493 = vpack.c.bf16 %v2475, %v2474
      %v2494 = vpack.c.bf16 %v2477, %v2476
      %v2495 = vpack.c.bf16 %v2479, %v2478
      %v2496 = vld [vmem:[%s1] sm:$0xf]
      %v2497 = vld [vmem:[%s1 + $0x4] sm:$0xf]
      %v2498 = vld [vmem:[%s1 + $0x8] sm:$0xf]
      %v2499 = vld [vmem:[%s1 + $0xc] sm:$0xf]
      %v2500 = vld [vmem:[%s1 + $0x10] sm:$0xf]
      %v2501 = vld [vmem:[%s1 + $0x14] sm:$0xf]
      %v2502 = vld [vmem:[%s1 + $0x18] sm:$0xf]
      %v2503 = vld [vmem:[%s1 + $0x1c] sm:$0xf]
      %v2504 = vld [vmem:[%s2] sm:$0x1]
      %v2506 = vperm.slane %v2504, 0
      %v2516 = vunpack.c.l.b16 %v2496
      %v2517 = vunpack.c.l.b16 %v2497
      %v2518 = vunpack.c.l.b16 %v2498
      %v2519 = vunpack.c.l.b16 %v2499
      %v2520 = vunpack.c.l.b16 %v2500
      %v2521 = vunpack.c.l.b16 %v2501
      %v2522 = vunpack.c.l.b16 %v2502
      %v2523 = vunpack.c.l.b16 %v2503
      %v2524 = vpack.c.b16 %v2517, %v2516
      %v2525 = vpack.c.b16 %v2519, %v2518
      %v2526 = vpack.c.b16 %v2521, %v2520
      %v2527 = vpack.c.b16 %v2523, %v2522
      %vm2531 = vcmask 515072
      %v2533 = vsel %vm2531, %v2480, 0
      %v2536 = vsel %vm2531, %v2481, 0
      %v2539 = vsel %vm2531, %v2482, 0
      %v2542 = vsel %vm2531, %v2483, 0
      %v2545 = vsel %vm2531, %v2484, 0
      %v2548 = vsel %vm2531, %v2485, 0
      %v2551 = vsel %vm2531, %v2486, 0
      %v2554 = vsel %vm2531, %v2487, 0
      %v2557 = vsel %vm2531, %v2488, 0
      %v2560 = vsel %vm2531, %v2489, 0
      %v2563 = vsel %vm2531, %v2490, 0
      %v2566 = vsel %vm2531, %v2491, 0
      %v2569 = vsel %vm2531, %v2492, 0
      %v2572 = vsel %vm2531, %v2493, 0
      %v2575 = vsel %vm2531, %v2494, 0
      %v2578 = vsel %vm2531, %v2495, 0
      %vm2580 = vcmask 1046528
      %vm2581 = vcmask 1047552
      %v2582 = vsel %vm2580, 4294967295, 65535
      %v2583 = vsel %vm2581, %v2582, 0
      %v2585 = vand.u32 %v2527, %v2583
      %2587 = vmatpush.bf16.msra.mxu0 0
      %2588 = vmatpush.bf16.msra.mxu0 0
      %2589 = vmatpush.bf16.msra.mxu0 0
      %2590 = vmatpush.bf16.msra.mxu0 0
      %2591 = vmatpush.bf16.msra.mxu0 %v2585
      %2592 = vmatpush.bf16.msra.mxu0 %v2526
      %2593 = vmatpush.bf16.msra.mxu0 %v2525
      %2594 = vmatpush.bf16.msra.mxu0 %v2524
      %2595 = vmatmul.bf16.gmra.mxu0 %v2533
      %v2596 = vpop.f32.mrf.mxu0
      %v2597 = vadd.f32 %v2506, %v2596
      %v2598 = vpop.f32.mrf.mxu0
      %v2599 = vadd.f32 %v2506, %v2598
      %2600 = vmatmul.bf16.gmra.mxu0 %v2536
      %v2601 = vpop.f32.mrf.mxu0
      %v2602 = vadd.f32 %v2506, %v2601
      %v2603 = vpop.f32.mrf.mxu0
      %v2604 = vadd.f32 %v2506, %v2603
      %2605 = vmatmul.bf16.gmra.mxu0 %v2539
      %v2606 = vpop.f32.mrf.mxu0
      %v2607 = vadd.f32 %v2506, %v2606
      %v2608 = vpop.f32.mrf.mxu0
      %v2609 = vadd.f32 %v2506, %v2608
      %2610 = vmatmul.bf16.gmra.mxu0 %v2542
      %v2611 = vpop.f32.mrf.mxu0
      %v2612 = vadd.f32 %v2506, %v2611
      %v2613 = vpop.f32.mrf.mxu0
      %v2614 = vadd.f32 %v2506, %v2613
      %2615 = vmatmul.bf16.gmra.mxu0 %v2545
      %v2616 = vpop.f32.mrf.mxu0
      %v2617 = vadd.f32 %v2506, %v2616
      %v2618 = vpop.f32.mrf.mxu0
      %v2619 = vadd.f32 %v2506, %v2618
      %2620 = vmatmul.bf16.gmra.mxu0 %v2548
      %v2621 = vpop.f32.mrf.mxu0
      %v2622 = vadd.f32 %v2506, %v2621
      %v2623 = vpop.f32.mrf.mxu0
      %v2624 = vadd.f32 %v2506, %v2623
      %2625 = vmatmul.bf16.gmra.mxu0 %v2551
      %v2626 = vpop.f32.mrf.mxu0
      %v2627 = vadd.f32 %v2506, %v2626
      %v2628 = vpop.f32.mrf.mxu0
      %v2629 = vadd.f32 %v2506, %v2628
      %2630 = vmatmul.bf16.gmra.mxu0 %v2554
      %v2631 = vpop.f32.mrf.mxu0
      %v2632 = vadd.f32 %v2506, %v2631
      %v2633 = vpop.f32.mrf.mxu0
      %v2634 = vadd.f32 %v2506, %v2633
      %2635 = vmatmul.bf16.gmra.mxu0 %v2557
      %v2636 = vpop.f32.mrf.mxu0
      %v2637 = vadd.f32 %v2506, %v2636
      %v2638 = vpop.f32.mrf.mxu0
      %v2639 = vadd.f32 %v2506, %v2638
      %2640 = vmatmul.bf16.gmra.mxu0 %v2560
      %v2641 = vpop.f32.mrf.mxu0
      %v2642 = vadd.f32 %v2506, %v2641
      %v2643 = vpop.f32.mrf.mxu0
      %v2644 = vadd.f32 %v2506, %v2643
      %2645 = vmatmul.bf16.gmra.mxu0 %v2563
      %v2646 = vpop.f32.mrf.mxu0
      %v2647 = vadd.f32 %v2506, %v2646
      %v2648 = vpop.f32.mrf.mxu0
      %v2649 = vadd.f32 %v2506, %v2648
      %2650 = vmatmul.bf16.gmra.mxu0 %v2566
      %v2651 = vpop.f32.mrf.mxu0
      %v2652 = vadd.f32 %v2506, %v2651
      %v2653 = vpop.f32.mrf.mxu0
      %v2654 = vadd.f32 %v2506, %v2653
      %2655 = vmatmul.bf16.gmra.mxu0 %v2569
      %v2656 = vpop.f32.mrf.mxu0
      %v2657 = vadd.f32 %v2506, %v2656
      %v2658 = vpop.f32.mrf.mxu0
      %v2659 = vadd.f32 %v2506, %v2658
      %2660 = vmatmul.bf16.gmra.mxu0 %v2572
      %v2661 = vpop.f32.mrf.mxu0
      %v2662 = vadd.f32 %v2506, %v2661
      %v2663 = vpop.f32.mrf.mxu0
      %v2664 = vadd.f32 %v2506, %v2663
      %2665 = vmatmul.bf16.gmra.mxu0 %v2575
      %v2666 = vpop.f32.mrf.mxu0
      %v2667 = vadd.f32 %v2506, %v2666
      %v2668 = vpop.f32.mrf.mxu0
      %v2669 = vadd.f32 %v2506, %v2668
      %2670 = vmatmul.bf16.gmra.mxu0 %v2578
      %v2671 = vpop.f32.mrf.mxu0
      %v2672 = vadd.f32 %v2506, %v2671
      %v2673 = vpop.f32.mrf.mxu0
      %v2674 = vadd.f32 %v2506, %v2673
      %2675 = vdwg.mxu0
      %vm2676 = vcmp.ge.f32.partialorder %v2597, 0.0
      %vm2677 = vcmp.ge.f32.partialorder %v2599, 0.0
      %vm2678 = vcmp.ge.f32.partialorder %v2602, 0.0
      %vm2679 = vcmp.ge.f32.partialorder %v2604, 0.0
      %vm2680 = vcmp.ge.f32.partialorder %v2607, 0.0
      %vm2681 = vcmp.ge.f32.partialorder %v2609, 0.0
      %vm2682 = vcmp.ge.f32.partialorder %v2612, 0.0
      %vm2683 = vcmp.ge.f32.partialorder %v2614, 0.0
      %vm2684 = vcmp.ge.f32.partialorder %v2617, 0.0
      %vm2685 = vcmp.ge.f32.partialorder %v2619, 0.0
      %vm2686 = vcmp.ge.f32.partialorder %v2622, 0.0
      %vm2687 = vcmp.ge.f32.partialorder %v2624, 0.0
      %vm2688 = vcmp.ge.f32.partialorder %v2627, 0.0
      %vm2689 = vcmp.ge.f32.partialorder %v2629, 0.0
      %vm2690 = vcmp.ge.f32.partialorder %v2632, 0.0
      %vm2691 = vcmp.ge.f32.partialorder %v2634, 0.0
      %vm2692 = vcmp.ge.f32.partialorder %v2637, 0.0
      %vm2693 = vcmp.ge.f32.partialorder %v2639, 0.0
      %vm2694 = vcmp.ge.f32.partialorder %v2642, 0.0
      %vm2695 = vcmp.ge.f32.partialorder %v2644, 0.0
      %vm2696 = vcmp.ge.f32.partialorder %v2647, 0.0
      %vm2697 = vcmp.ge.f32.partialorder %v2649, 0.0
      %vm2698 = vcmp.ge.f32.partialorder %v2652, 0.0
      %vm2699 = vcmp.ge.f32.partialorder %v2654, 0.0
      %vm2700 = vcmp.ge.f32.partialorder %v2657, 0.0
      %vm2701 = vcmp.ge.f32.partialorder %v2659, 0.0
      %vm2702 = vcmp.ge.f32.partialorder %v2662, 0.0
      %vm2703 = vcmp.ge.f32.partialorder %v2664, 0.0
      %vm2704 = vcmp.ge.f32.partialorder %v2667, 0.0
      %vm2705 = vcmp.ge.f32.partialorder %v2669, 0.0
      %vm2706 = vcmp.ge.f32.partialorder %v2672, 0.0
      %vm2707 = vcmp.ge.f32.partialorder %v2674, 0.0
      %v2708 = vld [vmem:[%s3] sm:$0x1]
      %v2710 = vperm.slane %v2708, 0
      %v2712 = vmul.f32 %v2597, %v2710
      %v2713 = vmul.f32 %v2599, %v2710
      %v2714 = vmul.f32 %v2602, %v2710
      %v2715 = vmul.f32 %v2604, %v2710
      %v2716 = vmul.f32 %v2607, %v2710
      %v2717 = vmul.f32 %v2609, %v2710
      %v2718 = vmul.f32 %v2612, %v2710
      %v2719 = vmul.f32 %v2614, %v2710
      %v2720 = vmul.f32 %v2617, %v2710
      %v2721 = vmul.f32 %v2619, %v2710
      %v2722 = vmul.f32 %v2622, %v2710
      %v2723 = vmul.f32 %v2624, %v2710
      %v2724 = vmul.f32 %v2627, %v2710
      %v2725 = vmul.f32 %v2629, %v2710
      %v2726 = vmul.f32 %v2632, %v2710
      %v2727 = vmul.f32 %v2634, %v2710
      %v2728 = vmul.f32 %v2637, %v2710
      %v2729 = vmul.f32 %v2639, %v2710
      %v2730 = vmul.f32 %v2642, %v2710
      %v2731 = vmul.f32 %v2644, %v2710
      %v2732 = vmul.f32 %v2647, %v2710
      %v2733 = vmul.f32 %v2649, %v2710
      %v2734 = vmul.f32 %v2652, %v2710
      %v2735 = vmul.f32 %v2654, %v2710
      %v2736 = vmul.f32 %v2657, %v2710
      %v2737 = vmul.f32 %v2659, %v2710
      %v2738 = vmul.f32 %v2662, %v2710
      %v2739 = vmul.f32 %v2664, %v2710
      %v2740 = vmul.f32 %v2667, %v2710
      %v2741 = vmul.f32 %v2669, %v2710
      %v2742 = vmul.f32 %v2672, %v2710
      %v2743 = vmul.f32 %v2674, %v2710
      %v2744 = vsel %vm2676, %v2597, %v2712
      %v2745 = vsel %vm2677, %v2599, %v2713
      %v2746 = vsel %vm2678, %v2602, %v2714
      %v2747 = vsel %vm2679, %v2604, %v2715
      %v2748 = vsel %vm2680, %v2607, %v2716
      %v2749 = vsel %vm2681, %v2609, %v2717
      %v2750 = vsel %vm2682, %v2612, %v2718
      %v2751 = vsel %vm2683, %v2614, %v2719
      %v2752 = vsel %vm2684, %v2617, %v2720
      %v2753 = vsel %vm2685, %v2619, %v2721
      %v2754 = vsel %vm2686, %v2622, %v2722
      %v2755 = vsel %vm2687, %v2624, %v2723
      %v2756 = vsel %vm2688, %v2627, %v2724
      %v2757 = vsel %vm2689, %v2629, %v2725
      %v2758 = vsel %vm2690, %v2632, %v2726
      %v2759 = vsel %vm2691, %v2634, %v2727
      %v2760 = vsel %vm2692, %v2637, %v2728
      %v2761 = vsel %vm2693, %v2639, %v2729
      %v2762 = vsel %vm2694, %v2642, %v2730
      %v2763 = vsel %vm2695, %v2644, %v2731
      %v2764 = vsel %vm2696, %v2647, %v2732
      %v2765 = vsel %vm2697, %v2649, %v2733
      %v2766 = vsel %vm2698, %v2652, %v2734
      %v2767 = vsel %vm2699, %v2654, %v2735
      %v2768 = vsel %vm2700, %v2657, %v2736
      %v2769 = vsel %vm2701, %v2659, %v2737
      %v2770 = vsel %vm2702, %v2662, %v2738
      %v2771 = vsel %vm2703, %v2664, %v2739
      %v2772 = vsel %vm2704, %v2667, %v2740
      %v2773 = vsel %vm2705, %v2669, %v2741
      %v2774 = vsel %vm2706, %v2672, %v2742
      %v2775 = vsel %vm2707, %v2674, %v2743
      %vm2776 = vcmask 64512
      %2777 = vst.msk [vmem:[#allocation3] sm:$0xff] %vm2776, 0.0
      %2778 = vst.msk [vmem:[#allocation3 + $0x8] sm:$0xff] %vm2776, 0.0
      %vm2779 = vcmask 58368
      %2780 = vst.msk [vmem:[#allocation3 + $0x10] sm:$0x3] %vm2779, 0.0
      %s2781 = scalar_lea.vmem [#allocation3], 408
      %2782 = vst.msk [vmem:[%s2781] sm:$0xff] %vm2776, 0.0
      %2783 = vst.msk [vmem:[%s2781 + $0x8] sm:$0xff] %vm2776, 0.0
      %2784 = vst.msk [vmem:[%s2781 + $0x10] sm:$0x3] %vm2779, 0.0
      %vm2785 = vcmask 57344
      %2786 = vst.msk [vmem:[#allocation3] sm:$0x1] %vm2785, 0.0
      %2787 = vst.msk [vmem:[#allocation3 + $0x18] sm:$0x1] %vm2785, 0.0
      %2788 = vst.msk [vmem:[#allocation3 + $0x30] sm:$0x1] %vm2785, 0.0
      %2789 = vst.msk [vmem:[#allocation3 + $0x48] sm:$0x1] %vm2785, 0.0
      %2790 = vst.msk [vmem:[#allocation3 + $0x60] sm:$0x1] %vm2785, 0.0
      %2791 = vst.msk [vmem:[#allocation3 + $0x78] sm:$0x1] %vm2785, 0.0
      %2792 = vst.msk [vmem:[#allocation3 + $0x90] sm:$0x1] %vm2785, 0.0
      %2793 = vst.msk [vmem:[#allocation3 + $0xa8] sm:$0x1] %vm2785, 0.0
      %2794 = vst.msk [vmem:[#allocation3 + $0xc0] sm:$0x1] %vm2785, 0.0
      %2795 = vst.msk [vmem:[#allocation3 + $0xd8] sm:$0x1] %vm2785, 0.0
      %2796 = vst.msk [vmem:[#allocation3 + $0xf0] sm:$0x1] %vm2785, 0.0
      %2797 = vst.msk [vmem:[#allocation3 + $0x108] sm:$0x1] %vm2785, 0.0
      %2798 = vst.msk [vmem:[#allocation3 + $0x120] sm:$0x1] %vm2785, 0.0
      %2799 = vst.msk [vmem:[#allocation3 + $0x138] sm:$0x1] %vm2785, 0.0
      %2800 = vst.msk [vmem:[#allocation3 + $0x150] sm:$0x1] %vm2785, 0.0
      %2801 = vst.msk [vmem:[#allocation3 + $0x168] sm:$0x1] %vm2785, 0.0
      %2802 = vst.msk [vmem:[#allocation3 + $0x180] sm:$0x1] %vm2785, 0.0
      %2803 = vst.msk [vmem:[#allocation3 + $0x198] sm:$0x1] %vm2785, 0.0
      %2804 = vst.msk [vmem:[#allocation3 + $0x11] sm:$0x1] %vm2785, 0.0
      %2805 = vst.msk [vmem:[#allocation3 + $0x29] sm:$0x1] %vm2785, 0.0
      %2806 = vst.msk [vmem:[#allocation3 + $0x41] sm:$0x1] %vm2785, 0.0
      %2807 = vst.msk [vmem:[#allocation3 + $0x59] sm:$0x1] %vm2785, 0.0
      %2808 = vst.msk [vmem:[#allocation3 + $0x71] sm:$0x1] %vm2785, 0.0
      %2809 = vst.msk [vmem:[#allocation3 + $0x89] sm:$0x1] %vm2785, 0.0
      %2810 = vst.msk [vmem:[#allocation3 + $0xa1] sm:$0x1] %vm2785, 0.0
      %2811 = vst.msk [vmem:[#allocation3 + $0xb9] sm:$0x1] %vm2785, 0.0
      %2812 = vst.msk [vmem:[#allocation3 + $0xd1] sm:$0x1] %vm2785, 0.0
      %2813 = vst.msk [vmem:[#allocation3 + $0xe9] sm:$0x1] %vm2785, 0.0
      %2814 = vst.msk [vmem:[#allocation3 + $0x101] sm:$0x1] %vm2785, 0.0
      %2815 = vst.msk [vmem:[#allocation3 + $0x119] sm:$0x1] %vm2785, 0.0
      %2816 = vst.msk [vmem:[#allocation3 + $0x131] sm:$0x1] %vm2785, 0.0
      %2817 = vst.msk [vmem:[#allocation3 + $0x149] sm:$0x1] %vm2785, 0.0
      %2818 = vst.msk [vmem:[#allocation3 + $0x161] sm:$0x1] %vm2785, 0.0
      %2819 = vst.msk [vmem:[#allocation3 + $0x179] sm:$0x1] %vm2785, 0.0
      %2820 = vst.msk [vmem:[#allocation3 + $0x191] sm:$0x1] %vm2785, 0.0
      %2821 = vst.msk [vmem:[#allocation3 + $0x1a9] sm:$0x1] %vm2785, 0.0
      %s2822 = scalar_lea.vmem [#allocation3], 24
      %2823 = vst.msk [vmem:[%s2822 + $0x1] sm:$0xff] %vm2776, %v2744
      %2824 = vst.msk [vmem:[%s2822 + $0x9] sm:$0xff] %vm2776, %v2745
      %2825 = vst.msk [vmem:[%s2822 + $0x19] sm:$0xff] %vm2776, %v2746
      %2826 = vst.msk [vmem:[%s2822 + $0x21] sm:$0xff] %vm2776, %v2747
      %2827 = vst.msk [vmem:[%s2822 + $0x31] sm:$0xff] %vm2776, %v2748
      %2828 = vst.msk [vmem:[%s2822 + $0x39] sm:$0xff] %vm2776, %v2749
      %2829 = vst.msk [vmem:[%s2822 + $0x49] sm:$0xff] %vm2776, %v2750
      %2830 = vst.msk [vmem:[%s2822 + $0x51] sm:$0xff] %vm2776, %v2751
      %2831 = vst.msk [vmem:[%s2822 + $0x61] sm:$0xff] %vm2776, %v2752
      %2832 = vst.msk [vmem:[%s2822 + $0x69] sm:$0xff] %vm2776, %v2753
      %2833 = vst.msk [vmem:[%s2822 + $0x79] sm:$0xff] %vm2776, %v2754
      %2834 = vst.msk [vmem:[%s2822 + $0x81] sm:$0xff] %vm2776, %v2755
      %2835 = vst.msk [vmem:[%s2822 + $0x91] sm:$0xff] %vm2776, %v2756
      %2836 = vst.msk [vmem:[%s2822 + $0x99] sm:$0xff] %vm2776, %v2757
      %2837 = vst.msk [vmem:[%s2822 + $0xa9] sm:$0xff] %vm2776, %v2758
      %2838 = vst.msk [vmem:[%s2822 + $0xb1] sm:$0xff] %vm2776, %v2759
      %2839 = vst.msk [vmem:[%s2822 + $0xc1] sm:$0xff] %vm2776, %v2760
      %2840 = vst.msk [vmem:[%s2822 + $0xc9] sm:$0xff] %vm2776, %v2761
      %2841 = vst.msk [vmem:[%s2822 + $0xd9] sm:$0xff] %vm2776, %v2762
      %2842 = vst.msk [vmem:[%s2822 + $0xe1] sm:$0xff] %vm2776, %v2763
      %2843 = vst.msk [vmem:[%s2822 + $0xf1] sm:$0xff] %vm2776, %v2764
      %2844 = vst.msk [vmem:[%s2822 + $0xf9] sm:$0xff] %vm2776, %v2765
      %2845 = vst.msk [vmem:[%s2822 + $0x109] sm:$0xff] %vm2776, %v2766
      %2846 = vst.msk [vmem:[%s2822 + $0x111] sm:$0xff] %vm2776, %v2767
      %2847 = vst.msk [vmem:[%s2822 + $0x121] sm:$0xff] %vm2776, %v2768
      %2848 = vst.msk [vmem:[%s2822 + $0x129] sm:$0xff] %vm2776, %v2769
      %2849 = vst.msk [vmem:[%s2822 + $0x139] sm:$0xff] %vm2776, %v2770
      %2850 = vst.msk [vmem:[%s2822 + $0x141] sm:$0xff] %vm2776, %v2771
      %2851 = vst.msk [vmem:[%s2822 + $0x151] sm:$0xff] %vm2776, %v2772
      %2852 = vst.msk [vmem:[%s2822 + $0x159] sm:$0xff] %vm2776, %v2773
      %2853 = vst.msk [vmem:[%s2822 + $0x169] sm:$0xff] %vm2776, %v2774
      %2854 = vst.msk [vmem:[%s2822 + $0x171] sm:$0xff] %vm2776, %v2775
      %v2855 = vld [vmem:[#allocation3] ss:$2 sm:$0xff]
      %s2856 = scalar_lea.vmem [#allocation3], 48
      %v2857 = vld [vmem:[%s2856] ss:$2 sm:$0xff]
      %s2858 = scalar_lea.vmem [#allocation3], 96
      %v2859 = vld [vmem:[%s2858] ss:$2 sm:$0xff]
      %s2860 = scalar_lea.vmem [#allocation3], 144
      %v2861 = vld [vmem:[%s2860] ss:$2 sm:$0xff]
      %s2862 = scalar_lea.vmem [#allocation3], 192
      %v2863 = vld [vmem:[%s2862] ss:$2 sm:$0xff]
      %s2864 = scalar_lea.vmem [#allocation3], 240
      %v2865 = vld [vmem:[%s2864] ss:$2 sm:$0xff]
      %s2866 = scalar_lea.vmem [#allocation3], 288
      %v2867 = vld [vmem:[%s2866] ss:$2 sm:$0xff]
      %s2868 = scalar_lea.vmem [#allocation3], 336
      %v2869 = vld [vmem:[%s2868] ss:$2 sm:$0xff]
      %s2870 = scalar_lea.vmem [#allocation3], 1
      %v2871 = vld [vmem:[%s2870] ss:$2 sm:$0xff]
      %s2872 = scalar_lea.vmem [#allocation3], 49
      %v2873 = vld [vmem:[%s2872] ss:$2 sm:$0xff]
      %s2874 = scalar_lea.vmem [#allocation3], 97
      %v2875 = vld [vmem:[%s2874] ss:$2 sm:$0xff]
      %s2876 = scalar_lea.vmem [#allocation3], 145
      %v2877 = vld [vmem:[%s2876] ss:$2 sm:$0xff]
      %s2878 = scalar_lea.vmem [#allocation3], 193
      %v2879 = vld [vmem:[%s2878] ss:$2 sm:$0xff]
      %s2880 = scalar_lea.vmem [#allocation3], 241
      %v2881 = vld [vmem:[%s2880] ss:$2 sm:$0xff]
      %s2882 = scalar_lea.vmem [#allocation3], 289
      %v2883 = vld [vmem:[%s2882] ss:$2 sm:$0xff]
      %s2884 = scalar_lea.vmem [#allocation3], 337
      %v2885 = vld [vmem:[%s2884] ss:$2 sm:$0xff]
      %s2886 = scalar_lea.vmem [#allocation3], 2
      %v2887 = vld [vmem:[%s2886] ss:$2 sm:$0xff]
      %s2888 = scalar_lea.vmem [#allocation3], 50
      %v2889 = vld [vmem:[%s2888] ss:$2 sm:$0xff]
      %s2890 = scalar_lea.vmem [#allocation3], 98
      %v2891 = vld [vmem:[%s2890] ss:$2 sm:$0xff]
      %s2892 = scalar_lea.vmem [#allocation3], 146
      %v2893 = vld [vmem:[%s2892] ss:$2 sm:$0xff]
      %s2894 = scalar_lea.vmem [#allocation3], 194
      %v2895 = vld [vmem:[%s2894] ss:$2 sm:$0xff]
      %s2896 = scalar_lea.vmem [#allocation3], 242
      %v2897 = vld [vmem:[%s2896] ss:$2 sm:$0xff]
      %s2898 = scalar_lea.vmem [#allocation3], 290
      %v2899 = vld [vmem:[%s2898] ss:$2 sm:$0xff]
      %s2900 = scalar_lea.vmem [#allocation3], 338
      %v2901 = vld [vmem:[%s2900] ss:$2 sm:$0xff]
      %v2902 = vld [vmem:[%s2822] ss:$2 sm:$0xff]
      %s2903 = scalar_lea.vmem %s2822, 48 [#allocation3]
      %v2904 = vld [vmem:[%s2903] ss:$2 sm:$0xff]
      %s2905 = scalar_lea.vmem %s2822, 96 [#allocation3]
      %v2906 = vld [vmem:[%s2905] ss:$2 sm:$0xff]
      %s2907 = scalar_lea.vmem %s2822, 144 [#allocation3]
      %v2908 = vld [vmem:[%s2907] ss:$2 sm:$0xff]
      %s2909 = scalar_lea.vmem %s2822, 192 [#allocation3]
      %v2910 = vld [vmem:[%s2909] ss:$2 sm:$0xff]
      %s2911 = scalar_lea.vmem %s2822, 240 [#allocation3]
      %v2912 = vld [vmem:[%s2911] ss:$2 sm:$0xff]
      %s2913 = scalar_lea.vmem %s2822, 288 [#allocation3]
      %v2914 = vld [vmem:[%s2913] ss:$2 sm:$0xff]
      %s2915 = scalar_lea.vmem %s2822, 336 [#allocation3]
      %v2916 = vld [vmem:[%s2915] ss:$2 sm:$0xff]
      %s2917 = scalar_lea.vmem %s2822, 1 [#allocation3]
      %v2918 = vld [vmem:[%s2917] ss:$2 sm:$0xff]
      %s2919 = scalar_lea.vmem %s2822, 49 [#allocation3]
      %v2920 = vld [vmem:[%s2919] ss:$2 sm:$0xff]
      %s2921 = scalar_lea.vmem %s2822, 97 [#allocation3]
      %v2922 = vld [vmem:[%s2921] ss:$2 sm:$0xff]
      %s2923 = scalar_lea.vmem %s2822, 145 [#allocation3]
      %v2924 = vld [vmem:[%s2923] ss:$2 sm:$0xff]
      %s2925 = scalar_lea.vmem %s2822, 193 [#allocation3]
      %v2926 = vld [vmem:[%s2925] ss:$2 sm:$0xff]
      %s2927 = scalar_lea.vmem %s2822, 241 [#allocation3]
      %v2928 = vld [vmem:[%s2927] ss:$2 sm:$0xff]
      %s2929 = scalar_lea.vmem %s2822, 289 [#allocation3]
      %v2930 = vld [vmem:[%s2929] ss:$2 sm:$0xff]
      %s2931 = scalar_lea.vmem %s2822, 337 [#allocation3]
      %v2932 = vld [vmem:[%s2931] ss:$2 sm:$0xff]
      %s2933 = scalar_lea.vmem %s2822, 2 [#allocation3]
      %v2934 = vld [vmem:[%s2933] ss:$2 sm:$0xff]
      %s2935 = scalar_lea.vmem %s2822, 50 [#allocation3]
      %v2936 = vld [vmem:[%s2935] ss:$2 sm:$0xff]
      %s2937 = scalar_lea.vmem %s2822, 98 [#allocation3]
      %v2938 = vld [vmem:[%s2937] ss:$2 sm:$0xff]
      %s2939 = scalar_lea.vmem %s2822, 146 [#allocation3]
      %v2940 = vld [vmem:[%s2939] ss:$2 sm:$0xff]
      %s2941 = scalar_lea.vmem %s2822, 194 [#allocation3]
      %v2942 = vld [vmem:[%s2941] ss:$2 sm:$0xff]
      %s2943 = scalar_lea.vmem %s2822, 242 [#allocation3]
      %v2944 = vld [vmem:[%s2943] ss:$2 sm:$0xff]
      %s2945 = scalar_lea.vmem %s2822, 290 [#allocation3]
      %v2946 = vld [vmem:[%s2945] ss:$2 sm:$0xff]
      %s2947 = scalar_lea.vmem %s2822, 338 [#allocation3]
      %v2948 = vld [vmem:[%s2947] ss:$2 sm:$0xff]
      %s2949 = scalar_lea.vmem [#allocation3], 48
      %v2950 = vld [vmem:[%s2949] ss:$2 sm:$0xff]
      %s2951 = scalar_lea.vmem %s2949, 48 [#allocation3]
      %v2952 = vld [vmem:[%s2951] ss:$2 sm:$0xff]
      %s2953 = scalar_lea.vmem %s2949, 96 [#allocation3]
      %v2954 = vld [vmem:[%s2953] ss:$2 sm:$0xff]
      %s2955 = scalar_lea.vmem %s2949, 144 [#allocation3]
      %v2956 = vld [vmem:[%s2955] ss:$2 sm:$0xff]
      %s2957 = scalar_lea.vmem %s2949, 192 [#allocation3]
      %v2958 = vld [vmem:[%s2957] ss:$2 sm:$0xff]
      %s2959 = scalar_lea.vmem %s2949, 240 [#allocation3]
      %v2960 = vld [vmem:[%s2959] ss:$2 sm:$0xff]
      %s2961 = scalar_lea.vmem %s2949, 288 [#allocation3]
      %v2962 = vld [vmem:[%s2961] ss:$2 sm:$0xff]
      %s2963 = scalar_lea.vmem %s2949, 336 [#allocation3]
      %v2964 = vld [vmem:[%s2963] ss:$2 sm:$0xff]
      %s2965 = scalar_lea.vmem %s2949, 1 [#allocation3]
      %v2966 = vld [vmem:[%s2965] ss:$2 sm:$0xff]
      %s2967 = scalar_lea.vmem %s2949, 49 [#allocation3]
      %v2968 = vld [vmem:[%s2967] ss:$2 sm:$0xff]
      %s2969 = scalar_lea.vmem %s2949, 97 [#allocation3]
      %v2970 = vld [vmem:[%s2969] ss:$2 sm:$0xff]
      %s2971 = scalar_lea.vmem %s2949, 145 [#allocation3]
      %v2972 = vld [vmem:[%s2971] ss:$2 sm:$0xff]
      %s2973 = scalar_lea.vmem %s2949, 193 [#allocation3]
      %v2974 = vld [vmem:[%s2973] ss:$2 sm:$0xff]
      %s2975 = scalar_lea.vmem %s2949, 241 [#allocation3]
      %v2976 = vld [vmem:[%s2975] ss:$2 sm:$0xff]
      %s2977 = scalar_lea.vmem %s2949, 289 [#allocation3]
      %v2978 = vld [vmem:[%s2977] ss:$2 sm:$0xff]
      %s2979 = scalar_lea.vmem %s2949, 337 [#allocation3]
      %v2980 = vld [vmem:[%s2979] ss:$2 sm:$0xff]
      %s2981 = scalar_lea.vmem %s2949, 2 [#allocation3]
      %v2982 = vld [vmem:[%s2981] ss:$2 sm:$0xff]
      %s2983 = scalar_lea.vmem %s2949, 50 [#allocation3]
      %v2984 = vld [vmem:[%s2983] ss:$2 sm:$0xff]
      %s2985 = scalar_lea.vmem %s2949, 98 [#allocation3]
      %v2986 = vld [vmem:[%s2985] ss:$2 sm:$0xff]
      %s2987 = scalar_lea.vmem %s2949, 146 [#allocation3]
      %v2988 = vld [vmem:[%s2987] ss:$2 sm:$0xff]
      %s2989 = scalar_lea.vmem %s2949, 194 [#allocation3]
      %v2990 = vld [vmem:[%s2989] ss:$2 sm:$0xff]
      %s2991 = scalar_lea.vmem %s2949, 242 [#allocation3]
      %v2992 = vld [vmem:[%s2991] ss:$2 sm:$0xff]
      %s2993 = scalar_lea.vmem %s2949, 290 [#allocation3]
      %v2994 = vld [vmem:[%s2993] ss:$2 sm:$0xff]
      %s2995 = scalar_lea.vmem %s2949, 338 [#allocation3]
      %v2996 = vld [vmem:[%s2995] ss:$2 sm:$0xff]
      %3005 = vrot.lane.b32.xlu0 %v2871, 8
      %v3006 = vpop.permute.xlu0 %3005
      %3007 = vrot.lane.b32.xlu0 %v2873, 8
      %v3008 = vpop.permute.xlu0 %3007
      %3009 = vrot.lane.b32.xlu0 %v2875, 8
      %v3010 = vpop.permute.xlu0 %3009
      %3011 = vrot.lane.b32.xlu0 %v2877, 8
      %v3012 = vpop.permute.xlu0 %3011
      %3013 = vrot.lane.b32.xlu0 %v2879, 8
      %v3014 = vpop.permute.xlu0 %3013
      %3015 = vrot.lane.b32.xlu0 %v2881, 8
      %v3016 = vpop.permute.xlu0 %3015
      %3017 = vrot.lane.b32.xlu0 %v2883, 8
      %v3018 = vpop.permute.xlu0 %3017
      %3019 = vrot.lane.b32.xlu0 %v2885, 8
      %v3020 = vpop.permute.xlu0 %3019
      %3037 = vrot.lane.b32.xlu0 %v2887, 16
      %v3038 = vpop.permute.xlu0 %3037
      %3039 = vrot.lane.b32.xlu0 %v2889, 16
      %v3040 = vpop.permute.xlu0 %3039
      %3041 = vrot.lane.b32.xlu0 %v2891, 16
      %v3042 = vpop.permute.xlu0 %3041
      %3043 = vrot.lane.b32.xlu0 %v2893, 16
      %v3044 = vpop.permute.xlu0 %3043
      %3045 = vrot.lane.b32.xlu0 %v2895, 16
      %v3046 = vpop.permute.xlu0 %3045
      %3047 = vrot.lane.b32.xlu0 %v2897, 16
      %v3048 = vpop.permute.xlu0 %3047
      %3049 = vrot.lane.b32.xlu0 %v2899, 16
      %v3050 = vpop.permute.xlu0 %3049
      %3051 = vrot.lane.b32.xlu0 %v2901, 16
      %v3052 = vpop.permute.xlu0 %3051
      %3069 = vrot.lane.b32.xlu0 %v2902, 24
      %v3070 = vpop.permute.xlu0 %3069
      %3071 = vrot.lane.b32.xlu0 %v2904, 24
      %v3072 = vpop.permute.xlu0 %3071
      %3073 = vrot.lane.b32.xlu0 %v2906, 24
      %v3074 = vpop.permute.xlu0 %3073
      %3075 = vrot.lane.b32.xlu0 %v2908, 24
      %v3076 = vpop.permute.xlu0 %3075
      %3077 = vrot.lane.b32.xlu0 %v2910, 24
      %v3078 = vpop.permute.xlu0 %3077
      %3079 = vrot.lane.b32.xlu0 %v2912, 24
      %v3080 = vpop.permute.xlu0 %3079
      %3081 = vrot.lane.b32.xlu0 %v2914, 24
      %v3082 = vpop.permute.xlu0 %3081
      %3083 = vrot.lane.b32.xlu0 %v2916, 24
      %v3084 = vpop.permute.xlu0 %3083
      %3101 = vrot.lane.b32.xlu0 %v2918, 32
      %v3102 = vpop.permute.xlu0 %3101
      %3103 = vrot.lane.b32.xlu0 %v2920, 32
      %v3104 = vpop.permute.xlu0 %3103
      %3105 = vrot.lane.b32.xlu0 %v2922, 32
      %v3106 = vpop.permute.xlu0 %3105
      %3107 = vrot.lane.b32.xlu0 %v2924, 32
      %v3108 = vpop.permute.xlu0 %3107
      %3109 = vrot.lane.b32.xlu0 %v2926, 32
      %v3110 = vpop.permute.xlu0 %3109
      %3111 = vrot.lane.b32.xlu0 %v2928, 32
      %v3112 = vpop.permute.xlu0 %3111
      %3113 = vrot.lane.b32.xlu0 %v2930, 32
      %v3114 = vpop.permute.xlu0 %3113
      %3115 = vrot.lane.b32.xlu0 %v2932, 32
      %v3116 = vpop.permute.xlu0 %3115
      %3133 = vrot.lane.b32.xlu0 %v2934, 40
      %v3134 = vpop.permute.xlu0 %3133
      %3135 = vrot.lane.b32.xlu0 %v2936, 40
      %v3136 = vpop.permute.xlu0 %3135
      %3137 = vrot.lane.b32.xlu0 %v2938, 40
      %v3138 = vpop.permute.xlu0 %3137
      %3139 = vrot.lane.b32.xlu0 %v2940, 40
      %v3140 = vpop.permute.xlu0 %3139
      %3141 = vrot.lane.b32.xlu0 %v2942, 40
      %v3142 = vpop.permute.xlu0 %3141
      %3143 = vrot.lane.b32.xlu0 %v2944, 40
      %v3144 = vpop.permute.xlu0 %3143
      %3145 = vrot.lane.b32.xlu0 %v2946, 40
      %v3146 = vpop.permute.xlu0 %3145
      %3147 = vrot.lane.b32.xlu0 %v2948, 40
      %v3148 = vpop.permute.xlu0 %3147
      %3165 = vrot.lane.b32.xlu0 %v2950, 48
      %v3166 = vpop.permute.xlu0 %3165
      %3167 = vrot.lane.b32.xlu0 %v2952, 48
      %v3168 = vpop.permute.xlu0 %3167
      %3169 = vrot.lane.b32.xlu0 %v2954, 48
      %v3170 = vpop.permute.xlu0 %3169
      %3171 = vrot.lane.b32.xlu0 %v2956, 48
      %v3172 = vpop.permute.xlu0 %3171
      %3173 = vrot.lane.b32.xlu0 %v2958, 48
      %v3174 = vpop.permute.xlu0 %3173
      %3175 = vrot.lane.b32.xlu0 %v2960, 48
      %v3176 = vpop.permute.xlu0 %3175
      %3177 = vrot.lane.b32.xlu0 %v2962, 48
      %v3178 = vpop.permute.xlu0 %3177
      %3179 = vrot.lane.b32.xlu0 %v2964, 48
      %v3180 = vpop.permute.xlu0 %3179
      %3197 = vrot.lane.b32.xlu0 %v2966, 56
      %v3198 = vpop.permute.xlu0 %3197
      %3199 = vrot.lane.b32.xlu0 %v2968, 56
      %v3200 = vpop.permute.xlu0 %3199
      %3201 = vrot.lane.b32.xlu0 %v2970, 56
      %v3202 = vpop.permute.xlu0 %3201
      %3203 = vrot.lane.b32.xlu0 %v2972, 56
      %v3204 = vpop.permute.xlu0 %3203
      %3205 = vrot.lane.b32.xlu0 %v2974, 56
      %v3206 = vpop.permute.xlu0 %3205
      %3207 = vrot.lane.b32.xlu0 %v2976, 56
      %v3208 = vpop.permute.xlu0 %3207
      %3209 = vrot.lane.b32.xlu0 %v2978, 56
      %v3210 = vpop.permute.xlu0 %3209
      %3211 = vrot.lane.b32.xlu0 %v2980, 56
      %v3212 = vpop.permute.xlu0 %3211
      %3229 = vrot.lane.b32.xlu0 %v2982, 64
      %v3230 = vpop.permute.xlu0 %3229
      %3231 = vrot.lane.b32.xlu0 %v2984, 64
      %v3232 = vpop.permute.xlu0 %3231
      %3233 = vrot.lane.b32.xlu0 %v2986, 64
      %v3234 = vpop.permute.xlu0 %3233
      %3235 = vrot.lane.b32.xlu0 %v2988, 64
      %v3236 = vpop.permute.xlu0 %3235
      %3237 = vrot.lane.b32.xlu0 %v2990, 64
      %v3238 = vpop.permute.xlu0 %3237
      %3239 = vrot.lane.b32.xlu0 %v2992, 64
      %v3240 = vpop.permute.xlu0 %3239
      %3241 = vrot.lane.b32.xlu0 %v2994, 64
      %v3242 = vpop.permute.xlu0 %3241
      %3243 = vrot.lane.b32.xlu0 %v2996, 64
      %v3244 = vpop.permute.xlu0 %3243
      %v3253 = vsel %vm2776, %v2855, %v3006
      %v3254 = vsel %vm2776, %v2857, %v3008
      %v3255 = vsel %vm2776, %v2859, %v3010
      %v3256 = vsel %vm2776, %v2861, %v3012
      %v3257 = vsel %vm2776, %v2863, %v3014
      %v3258 = vsel %vm2776, %v2865, %v3016
      %v3259 = vsel %vm2776, %v2867, %v3018
      %v3260 = vsel %vm2776, %v2869, %v3020
      %vm3261 = vcmask 130048
      %v3262 = vsel %vm3261, %v3253, %v3038
      %v3263 = vsel %vm3261, %v3254, %v3040
      %v3264 = vsel %vm3261, %v3255, %v3042
      %v3265 = vsel %vm3261, %v3256, %v3044
      %v3266 = vsel %vm3261, %v3257, %v3046
      %v3267 = vsel %vm3261, %v3258, %v3048
      %v3268 = vsel %vm3261, %v3259, %v3050
      %v3269 = vsel %vm3261, %v3260, %v3052
      %vm3270 = vcmask 195584
      %v3271 = vsel %vm3270, %v3262, %v3070
      %v3272 = vsel %vm3270, %v3263, %v3072
      %v3273 = vsel %vm3270, %v3264, %v3074
      %v3274 = vsel %vm3270, %v3265, %v3076
      %v3275 = vsel %vm3270, %v3266, %v3078
      %v3276 = vsel %vm3270, %v3267, %v3080
      %v3277 = vsel %vm3270, %v3268, %v3082
      %v3278 = vsel %vm3270, %v3269, %v3084
      %vm3279 = vcmask 261120
      %v3280 = vsel %vm3279, %v3271, %v3102
      %v3281 = vsel %vm3279, %v3272, %v3104
      %v3282 = vsel %vm3279, %v3273, %v3106
      %v3283 = vsel %vm3279, %v3274, %v3108
      %v3284 = vsel %vm3279, %v3275, %v3110
      %v3285 = vsel %vm3279, %v3276, %v3112
      %v3286 = vsel %vm3279, %v3277, %v3114
      %v3287 = vsel %vm3279, %v3278, %v3116
      %vm3288 = vcmask 326656
      %v3289 = vsel %vm3288, %v3280, %v3134
      %v3290 = vsel %vm3288, %v3281, %v3136
      %v3291 = vsel %vm3288, %v3282, %v3138
      %v3292 = vsel %vm3288, %v3283, %v3140
      %v3293 = vsel %vm3288, %v3284, %v3142
      %v3294 = vsel %vm3288, %v3285, %v3144
      %v3295 = vsel %vm3288, %v3286, %v3146
      %v3296 = vsel %vm3288, %v3287, %v3148
      %vm3297 = vcmask 392192
      %v3298 = vsel %vm3297, %v3289, %v3166
      %v3299 = vsel %vm3297, %v3290, %v3168
      %v3300 = vsel %vm3297, %v3291, %v3170
      %v3301 = vsel %vm3297, %v3292, %v3172
      %v3302 = vsel %vm3297, %v3293, %v3174
      %v3303 = vsel %vm3297, %v3294, %v3176
      %v3304 = vsel %vm3297, %v3295, %v3178
      %v3305 = vsel %vm3297, %v3296, %v3180
      %v3306 = vsel %vm2447, %v3298, %v3198
      %v3307 = vsel %vm2447, %v3299, %v3200
      %v3308 = vsel %vm2447, %v3300, %v3202
      %v3309 = vsel %vm2447, %v3301, %v3204
      %v3310 = vsel %vm2447, %v3302, %v3206
      %v3311 = vsel %vm2447, %v3303, %v3208
      %v3312 = vsel %vm2447, %v3304, %v3210
      %v3313 = vsel %vm2447, %v3305, %v3212
      %vm3314 = vcmask 523264
      %v3315 = vsel %vm3314, %v3306, %v3230
      %v3316 = vsel %vm3314, %v3307, %v3232
      %v3317 = vsel %vm3314, %v3308, %v3234
      %v3318 = vsel %vm3314, %v3309, %v3236
      %v3319 = vsel %vm3314, %v3310, %v3238
      %v3320 = vsel %vm3314, %v3311, %v3240
      %v3321 = vsel %vm3314, %v3312, %v3242
      %v3322 = vsel %vm3314, %v3313, %v3244
      %v3323 = vpack.c.bf16 %v3316, %v3315
      %v3324 = vpack.c.bf16 %v3318, %v3317
      %v3325 = vpack.c.bf16 %v3320, %v3319
      %v3326 = vpack.c.bf16 %v3322, %v3321
      %v3327 = vld [vmem:[%s4] sm:$0xf]
      %v3328 = vld [vmem:[%s4 + $0x4] sm:$0xf]
      %v3329 = vld [vmem:[%s4 + $0x8] sm:$0xf]
      %v3330 = vld [vmem:[%s4 + $0xc] sm:$0xf]
      %v3331 = vld [vmem:[%s4 + $0x10] sm:$0xf]
      %v3332 = vld [vmem:[%s4 + $0x14] sm:$0xf]
      %v3333 = vld [vmem:[%s4 + $0x18] sm:$0xf]
      %v3334 = vld [vmem:[%s4 + $0x1c] sm:$0xf]
      %v3335 = vld [vmem:[%s4 + $0x20] sm:$0xf]
      %v3336 = vld [vmem:[%s5] sm:$0x1]
      %v3338 = vperm.slane %v3336, 0
      %v3349 = vunpack.c.l.b16 %v3327
      %v3350 = vunpack.c.l.b16 %v3328
      %v3351 = vunpack.c.l.b16 %v3329
      %v3352 = vunpack.c.l.b16 %v3330
      %v3353 = vunpack.c.l.b16 %v3331
      %v3354 = vunpack.c.l.b16 %v3332
      %v3355 = vunpack.c.l.b16 %v3333
      %v3356 = vunpack.c.l.b16 %v3334
      %v3357 = vunpack.c.l.b16 %v3335
      %v3358 = vpack.c.b16 %v3350, %v3349
      %v3359 = vpack.c.b16 %v3352, %v3351
      %v3360 = vpack.c.b16 %v3354, %v3353
      %v3361 = vpack.c.b16 %v3356, %v3355
      %v3362 = vpack.c.b16 %v3357, %v3357
      %vm3367 = vcmask 588800
      %v3369 = vsel %vm3367, %v3323, 0
      %v3372 = vsel %vm3367, %v3324, 0
      %v3375 = vsel %vm3367, %v3325, 0
      %v3378 = vsel %vm3367, %v3326, 0
      %vm3380 = vcmask 1043456
      %v3382 = vsel %vm3380, %v3362, 0
      %3384 = vmatpush.bf16.msra.mxu0 0
      %3385 = vmatpush.bf16.msra.mxu0 0
      %3386 = vmatpush.bf16.msra.mxu0 0
      %3387 = vmatpush.bf16.msra.mxu0 %v3382
      %3388 = vmatpush.bf16.msra.mxu0 %v3361
      %3389 = vmatpush.bf16.msra.mxu0 %v3360
      %3390 = vmatpush.bf16.msra.mxu0 %v3359
      %3391 = vmatpush.bf16.msra.mxu0 %v3358
      %3392 = vmatmul.bf16.gmra.mxu0 %v3369
      %v3393 = vpop.f32.mrf.mxu0
      %v3394 = vadd.f32 %v3338, %v3393
      %v3395 = vpop.f32.mrf.mxu0
      %v3396 = vadd.f32 %v3338, %v3395
      %3397 = vmatmul.bf16.gmra.mxu0 %v3372
      %v3398 = vpop.f32.mrf.mxu0
      %v3399 = vadd.f32 %v3338, %v3398
      %v3400 = vpop.f32.mrf.mxu0
      %v3401 = vadd.f32 %v3338, %v3400
      %3402 = vmatmul.bf16.gmra.mxu0 %v3375
      %v3403 = vpop.f32.mrf.mxu0
      %v3404 = vadd.f32 %v3338, %v3403
      %v3405 = vpop.f32.mrf.mxu0
      %v3406 = vadd.f32 %v3338, %v3405
      %3407 = vmatmul.bf16.gmra.mxu0 %v3378
      %v3408 = vpop.f32.mrf.mxu0
      %v3409 = vadd.f32 %v3338, %v3408
      %v3410 = vpop.f32.mrf.mxu0
      %v3411 = vadd.f32 %v3338, %v3410
      %3412 = vdwg.mxu0
      %vm3413 = vcmp.ge.f32.partialorder %v3394, 0.0
      %vm3414 = vcmp.ge.f32.partialorder %v3396, 0.0
      %vm3415 = vcmp.ge.f32.partialorder %v3399, 0.0
      %vm3416 = vcmp.ge.f32.partialorder %v3401, 0.0
      %vm3417 = vcmp.ge.f32.partialorder %v3404, 0.0
      %vm3418 = vcmp.ge.f32.partialorder %v3406, 0.0
      %vm3419 = vcmp.ge.f32.partialorder %v3409, 0.0
      %vm3420 = vcmp.ge.f32.partialorder %v3411, 0.0
      %v3421 = vld [vmem:[%s6] sm:$0x1]
      %v3423 = vperm.slane %v3421, 0
      %v3425 = vmul.f32 %v3394, %v3423
      %v3426 = vmul.f32 %v3396, %v3423
      %v3427 = vmul.f32 %v3399, %v3423
      %v3428 = vmul.f32 %v3401, %v3423
      %v3429 = vmul.f32 %v3404, %v3423
      %v3430 = vmul.f32 %v3406, %v3423
      %v3431 = vmul.f32 %v3409, %v3423
      %v3432 = vmul.f32 %v3411, %v3423
      %v3433 = vsel %vm3413, %v3394, %v3425
      %v3434 = vsel %vm3414, %v3396, %v3426
      %v3435 = vsel %vm3415, %v3399, %v3427
      %v3436 = vsel %vm3416, %v3401, %v3428
      %v3437 = vsel %vm3417, %v3404, %v3429
      %v3438 = vsel %vm3418, %v3406, %v3430
      %v3439 = vsel %vm3419, %v3409, %v3431
      %v3440 = vsel %vm3420, %v3411, %v3432
      %v3441 = vpack.c.bf16 %v3433, %v3433
      %v3442 = vpack.c.bf16 %v3434, %v3434
      %v3443 = vpack.c.bf16 %v3435, %v3435
      %v3444 = vpack.c.bf16 %v3436, %v3436
      %v3445 = vpack.c.bf16 %v3437, %v3437
      %v3446 = vpack.c.bf16 %v3438, %v3438
      %v3447 = vpack.c.bf16 %v3439, %v3439
      %v3448 = vpack.c.bf16 %v3440, %v3440
      %vm3449 = vcmask 125952
      %3450 = vst.msk [vmem:[%s278] sm:$0xf] %vm3449, %v3441
      %3451 = vst.msk [vmem:[%s278 + $0x4] sm:$0xf] %vm3449, %v3442
      %3452 = vst.msk [vmem:[%s278 + $0x8] sm:$0xf] %vm3449, %v3443
      %3453 = vst.msk [vmem:[%s278 + $0xc] sm:$0xf] %vm3449, %v3444
      %3454 = vst.msk [vmem:[%s278 + $0x10] sm:$0xf] %vm3449, %v3445
      %3455 = vst.msk [vmem:[%s278 + $0x14] sm:$0xf] %vm3449, %v3446
      %3456 = vst.msk [vmem:[%s278 + $0x18] sm:$0xf] %vm3449, %v3447
      %3457 = vst.msk [vmem:[%s278 + $0x1c] sm:$0xf] %vm3449, %v3448
      %p3458 = scmp.lt.s32.totalorder %s18, 1
      %s3459 = scalar_select %p3458, %s18, 1
      %s3460 = smul.addr %s3459, 8
      %s3461 = smul.addr %s3460, 4
      %s3462 = scalar_lea.vmem %s7, %s3461
      // Predicated region
      $region49: #{ifblock_forward.2} parent=47 // pred_check
        %p3463 = pneg %p188
      $region50: #{ifblock_forward.2} parent=47 // pred_check_branch
        %3465 = sbr.rel (%p3463) target = $region52
      $region51: #{ifblock_forward.2} parent=47 // pred_region
        _
      $region52: #{ifblock_forward.2} parent=47 // pred_fallthru
        _
    $region48: #{ifblock_forward.2} parent=5 // pred_fallthru
      _
    %p3466 = scmp.le.s32.totalorder 2, %s13
    // Predicated region
    $region53: #{ifblock_forward.2} parent=5 // pred_check
      %p3467 = pneg %p3466
    $region54: #{ifblock_forward.2} parent=5 // pred_check_branch
      %3469 = sbr.rel (%p3467) target = $region56
    $region55: #{ifblock_forward.2} parent=5 // pred_region
      %s3470 = ssub.s32 %s13, 2
      // Predicated region
      $region57: #{ifblock_forward.2} parent=55 // pred_check
        %p3471 = pneg %p194
      $region58: #{ifblock_forward.2} parent=55 // pred_check_branch
        %3473 = sbr.rel (%p3471) target = $region60
      $region59: #{ifblock_forward.2} parent=55 // pred_region
        %p3474 = scmp.lt.s32.totalorder %s19, 1
        %s3475 = scalar_select %p3474, %s19, 1
        %s3476 = smul.addr %s3475, 8
        %s3477 = smul.addr %s3476, 4
        %s3478 = scalar_lea.vmem %s7, %s3477
      $region60: #{ifblock_forward.2} parent=55 // pred_fallthru
        _
    $region56: #{ifblock_forward.2} parent=5 // pred_fallthru
      _
  $region6: #{ifblock_forward.2} parent=0 // loop_footer
    %s17 = sadd.s32 1, %s13
  $region7: #{ifblock_forward.2} parent=0 // loop_footer_branch
    %12 = sbr.rel target = $region3
  $region8: #{ifblock_forward.2} parent=0 // loop_exit
    _

// kernel: ifblock_forward.3
$region0: #{ifblock_forward.3}
  #allocation0 [shape = 'u32[]', space=smem, size = 0x4, offset = 0x4, fixed_abs, tag = 'smem constant byte address 0x4 - core index']
  #allocation1 [shape = 'u32[72,128]{1,0:T(1,128)}', space=vmem, size = 0x9000, scoped, tag = 'internal scratch']
  #allocation2 [shape = 'f32[10,10,16]{2,1,0:T(8,128)}', space=vmem, size = 0x14000, scoped, tag = 'scratch operand']
  %s0 = inlined_call_operand.vmem [shape: bf16[2,8,8,16], index: 0, kind: input, shape index: {}]
  %s1 = inlined_call_operand.vmem [shape: bf16[8,144,16], index: 1, kind: input, shape index: {}]
  %s2 = inlined_call_operand.vmem [shape: f32[8,1,16], index: 2, kind: input, shape index: {}]
  %s3 = inlined_call_operand.vmem [shape: f32[8,1,16], index: 3, kind: input, shape index: {}]
  %s4 = inlined_call_operand.vmem [shape: bf16[144,20], index: 4, kind: input, shape index: {}]
  %s5 = inlined_call_operand.vmem [shape: f32[1,20], index: 5, kind: input, shape index: {}]
  %s6 = inlined_call_operand.vmem [shape: f32[2,8,8,20], index: 6, kind: output, shape index: {}]
  %s7 = sld [smem:[#allocation0]]
  $region57: #{ifblock_forward.3} parent=0
    _
  %s9 = ssub.s32 1, %s7
  %s10 = scalar_select 0, %s9, %s7
  loop: start=0, step=1, limit=4
  $region2: #{ifblock_forward.3} parent=0 // loop_pre_header
    _
  $region3: #{ifblock_forward.3} parent=0 // loop_header
    %s12 = sphi 0, %s16
    %p13 = scmp.ge.s32.totalorder %s12, 4
    %s22 = sphi 0, %s24
    %s25 = sphi 0, %s22
    %s26 = sphi 0, %s25
    %s42 = sphi 0, %s26
    %s46 = sphi 0, %s46
    %s48 = sphi 0, %s46
    %s49 = sphi 0, %s48
    %s63 = sphi 0, %s49
    %s67 = sphi 0, %s67
    %s69 = sphi 0, %s67
    %s70 = sphi 0, %s69
    %s84 = sphi 0, %s70
    %s88 = sphi 0, %s88
    %s90 = sphi 0, %s88
    %s91 = sphi 0, %s90
    %s105 = sphi 0, %s91
    %s109 = sphi 0, %s109
    %s111 = sphi 0, %s109
    %s112 = sphi 0, %s111
    %s126 = sphi 0, %s112
    %s130 = sphi 0, %s130
    %s132 = sphi 0, %s130
    %s133 = sphi 0, %s132
    %s147 = sphi 0, %s133
    %s153 = sphi 0, %s155
    %s156 = sphi 0, %s153
    %s157 = sphi 0, %s156
    %s173 = sphi 0, %s157
  $region4: #{ifblock_forward.3} parent=0 // loop_header_branch
    %15 = sbr.rel (%p13) target = $region8
  $region5: #{ifblock_forward.3} parent=0 // loop_body
    %s17 = ssub.s32 %s12, 1
    %s18 = ssub.s32 %s12, 2
    %s19 = sadd.s32 %s12, 1
    %s20 = ssub.s32 %s12, %s19
    %p21 = scmp.eq.s32.totalorder %s20, 0
    %s23 = sadd.s32 %s22, 1
    %s24 = scalar_select %p21, %s22, %s23
    %p27 = pneg %p21
    %p28 = scmp.eq.s32.totalorder %s12, 1
    %p29 = por %p27, %p28
    %p30 = scmp.ne.s32.totalorder %s22, %s25
    %p31 = scmp.eq.s32.totalorder %s12, 0
    %p32 = por %p30, %p31
    %p33 = scmp.ne.s32.totalorder %s22, %s25
    %p34 = scmp.eq.s32.totalorder %s17, 1
    %p35 = por %p33, %p34
    %p36 = scmp.ne.s32.totalorder %s25, %s26
    %p37 = scmp.eq.s32.totalorder %s17, 0
    %p38 = por %p36, %p37
    %p39 = scmp.ne.s32.totalorder %s25, %s26
    %p40 = scmp.eq.s32.totalorder %s18, 1
    %p41 = por %p39, %p40
    %p43 = scmp.ne.s32.totalorder %s26, %s42
    %p44 = scmp.eq.s32.totalorder %s18, 0
    %p45 = por %p43, %p44
    %s47 = sadd.s32 %s46, 1
    %p50 = scmp.eq.s32.totalorder %s12, 1
    %p51 = scmp.ne.s32.totalorder %s46, %s48
    %p52 = scmp.eq.s32.totalorder %s12, 0
    %p53 = por %p51, %p52
    %p54 = scmp.ne.s32.totalorder %s46, %s48
    %p55 = scmp.eq.s32.totalorder %s17, 1
    %p56 = por %p54, %p55
    %p57 = scmp.ne.s32.totalorder %s48, %s49
    %p58 = scmp.eq.s32.totalorder %s17, 0
    %p59 = por %p57, %p58
    %p60 = scmp.ne.s32.totalorder %s48, %s49
    %p61 = scmp.eq.s32.totalorder %s18, 1
    %p62 = por %p60, %p61
    %p64 = scmp.ne.s32.totalorder %s49, %s63
    %p65 = scmp.eq.s32.totalorder %s18, 0
    %p66 = por %p64, %p65
    %s68 = sadd.s32 %s67, 1
    %p71 = scmp.eq.s32.totalorder %s12, 1
    %p72 = scmp.ne.s32.totalorder %s67, %s69
    %p73 = scmp.eq.s32.totalorder %s12, 0
    %p74 = por %p72, %p73
    %p75 = scmp.ne.s32.totalorder %s67, %s69
    %p76 = scmp.eq.s32.totalorder %s17, 1
    %p77 = por %p75, %p76
    %p78 = scmp.ne.s32.totalorder %s69, %s70
    %p79 = scmp.eq.s32.totalorder %s17, 0
    %p80 = por %p78, %p79
    %p81 = scmp.ne.s32.totalorder %s69, %s70
    %p82 = scmp.eq.s32.totalorder %s18, 1
    %p83 = por %p81, %p82
    %p85 = scmp.ne.s32.totalorder %s70, %s84
    %p86 = scmp.eq.s32.totalorder %s18, 0
    %p87 = por %p85, %p86
    %s89 = sadd.s32 %s88, 1
    %p92 = scmp.eq.s32.totalorder %s12, 1
    %p93 = scmp.ne.s32.totalorder %s88, %s90
    %p94 = scmp.eq.s32.totalorder %s12, 0
    %p95 = por %p93, %p94
    %p96 = scmp.ne.s32.totalorder %s88, %s90
    %p97 = scmp.eq.s32.totalorder %s17, 1
    %p98 = por %p96, %p97
    %p99 = scmp.ne.s32.totalorder %s90, %s91
    %p100 = scmp.eq.s32.totalorder %s17, 0
    %p101 = por %p99, %p100
    %p102 = scmp.ne.s32.totalorder %s90, %s91
    %p103 = scmp.eq.s32.totalorder %s18, 1
    %p104 = por %p102, %p103
    %p106 = scmp.ne.s32.totalorder %s91, %s105
    %p107 = scmp.eq.s32.totalorder %s18, 0
    %p108 = por %p106, %p107
    %s110 = sadd.s32 %s109, 1
    %p113 = scmp.eq.s32.totalorder %s12, 1
    %p114 = scmp.ne.s32.totalorder %s109, %s111
    %p115 = scmp.eq.s32.totalorder %s12, 0
    %p116 = por %p114, %p115
    %p117 = scmp.ne.s32.totalorder %s109, %s111
    %p118 = scmp.eq.s32.totalorder %s17, 1
    %p119 = por %p117, %p118
    %p120 = scmp.ne.s32.totalorder %s111, %s112
    %p121 = scmp.eq.s32.totalorder %s17, 0
    %p122 = por %p120, %p121
    %p123 = scmp.ne.s32.totalorder %s111, %s112
    %p124 = scmp.eq.s32.totalorder %s18, 1
    %p125 = por %p123, %p124
    %p127 = scmp.ne.s32.totalorder %s112, %s126
    %p128 = scmp.eq.s32.totalorder %s18, 0
    %p129 = por %p127, %p128
    %s131 = sadd.s32 %s130, 1
    %p134 = scmp.eq.s32.totalorder %s12, 1
    %p135 = scmp.ne.s32.totalorder %s130, %s132
    %p136 = scmp.eq.s32.totalorder %s12, 0
    %p137 = por %p135, %p136
    %p138 = scmp.ne.s32.totalorder %s130, %s132
    %p139 = scmp.eq.s32.totalorder %s17, 1
    %p140 = por %p138, %p139
    %p141 = scmp.ne.s32.totalorder %s132, %s133
    %p142 = scmp.eq.s32.totalorder %s17, 0
    %p143 = por %p141, %p142
    %p144 = scmp.ne.s32.totalorder %s132, %s133
    %p145 = scmp.eq.s32.totalorder %s18, 1
    %p146 = por %p144, %p145
    %p148 = scmp.ne.s32.totalorder %s133, %s147
    %p149 = scmp.eq.s32.totalorder %s18, 0
    %p150 = por %p148, %p149
    %s151 = ssub.s32 %s12, %s19
    %p152 = scmp.eq.s32.totalorder %s151, 0
    %s154 = sadd.s32 %s153, 1
    %s155 = scalar_select %p152, %s153, %s154
    %p158 = pneg %p152
    %p159 = scmp.eq.s32.totalorder %s12, 1
    %p160 = por %p158, %p159
    %p161 = scmp.ne.s32.totalorder %s153, %s156
    %p162 = scmp.eq.s32.totalorder %s12, 0
    %p163 = por %p161, %p162
    %p164 = scmp.ne.s32.totalorder %s153, %s156
    %p165 = scmp.eq.s32.totalorder %s17, 1
    %p166 = por %p164, %p165
    %p167 = scmp.ne.s32.totalorder %s156, %s157
    %p168 = scmp.eq.s32.totalorder %s17, 0
    %p169 = por %p167, %p168
    %p170 = scmp.ne.s32.totalorder %s156, %s157
    %p171 = scmp.eq.s32.totalorder %s18, 1
    %p172 = por %p170, %p171
    %p174 = scmp.ne.s32.totalorder %s157, %s173
    %p175 = scmp.eq.s32.totalorder %s18, 0
    %p176 = por %p174, %p175
    %p177 = scmp.le.s32.totalorder 1, %s12
    %p178 = scmp.lt.s32.totalorder %s12, 3
    %p179 = pnand %p177, %p178
    %p180 = pneg %p179
    // Predicated region
    $region9: #{ifblock_forward.3} parent=5 // pred_check
      _
    $region10: #{ifblock_forward.3} parent=5 // pred_check_branch
      %182 = sbr.rel (%p179) target = $region12
    $region11: #{ifblock_forward.3} parent=5 // pred_region
      %s183 = ssub.s32 %s12, 1
      // Predicated region
      $region13: #{ifblock_forward.3} parent=11 // pred_check
        %p184 = pneg %p59
      $region14: #{ifblock_forward.3} parent=11 // pred_check_branch
        %186 = sbr.rel (%p184) target = $region16
      $region15: #{ifblock_forward.3} parent=11 // pred_region
        _
      $region16: #{ifblock_forward.3} parent=11 // pred_fallthru
        _
      // Predicated region
      $region17: #{ifblock_forward.3} parent=11 // pred_check
        %p187 = pneg %p80
      $region18: #{ifblock_forward.3} parent=11 // pred_check_branch
        %189 = sbr.rel (%p187) target = $region20
      $region19: #{ifblock_forward.3} parent=11 // pred_region
        _
      $region20: #{ifblock_forward.3} parent=11 // pred_fallthru
        _
      // Predicated region
      $region21: #{ifblock_forward.3} parent=11 // pred_check
        %p190 = pneg %p101
      $region22: #{ifblock_forward.3} parent=11 // pred_check_branch
        %192 = sbr.rel (%p190) target = $region24
      $region23: #{ifblock_forward.3} parent=11 // pred_region
        _
      $region24: #{ifblock_forward.3} parent=11 // pred_fallthru
        _
      // Predicated region
      $region25: #{ifblock_forward.3} parent=11 // pred_check
        %p193 = pneg %p122
      $region26: #{ifblock_forward.3} parent=11 // pred_check_branch
        %195 = sbr.rel (%p193) target = $region28
      $region27: #{ifblock_forward.3} parent=11 // pred_region
        _
      $region28: #{ifblock_forward.3} parent=11 // pred_fallthru
        _
      // Predicated region
      $region29: #{ifblock_forward.3} parent=11 // pred_check
        %p196 = pneg %p143
      $region30: #{ifblock_forward.3} parent=11 // pred_check_branch
        %198 = sbr.rel (%p196) target = $region32
      $region31: #{ifblock_forward.3} parent=11 // pred_region
        _
      $region32: #{ifblock_forward.3} parent=11 // pred_fallthru
        _
    $region12: #{ifblock_forward.3} parent=5 // pred_fallthru
      _
    %p199 = scmp.lt.s32.totalorder %s12, 2
    // Predicated region
    $region33: #{ifblock_forward.3} parent=5 // pred_check
      %p200 = pneg %p199
    $region34: #{ifblock_forward.3} parent=5 // pred_check_branch
      %202 = sbr.rel (%p200) target = $region36
    $region35: #{ifblock_forward.3} parent=5 // pred_region
      // Predicated region
      $region37: #{ifblock_forward.3} parent=35 // pred_check
        %p203 = pneg %p32
      $region38: #{ifblock_forward.3} parent=35 // pred_check_branch
        %205 = sbr.rel (%p203) target = $region40
      $region39: #{ifblock_forward.3} parent=35 // pred_region
        %p206 = scmp.lt.s32.totalorder %s12, 1
        %s207 = scalar_select %p206, %s12, 1
        %s208 = smul.addr %s207, 8
        %s209 = smul.addr %s208, 4
        %s210 = scalar_lea.vmem %s0, %s209
      $region40: #{ifblock_forward.3} parent=35 // pred_fallthru
        _
    $region36: #{ifblock_forward.3} parent=5 // pred_fallthru
      _
    %p211 = scmp.le.s32.totalorder 1, %s12
    %p212 = scmp.lt.s32.totalorder %s12, 3
    %p213 = pnand %p211, %p212
    %p214 = pneg %p213
    // Predicated region
    $region41: #{ifblock_forward.3} parent=5 // pred_check
      _
    $region42: #{ifblock_forward.3} parent=5 // pred_check_branch
      %216 = sbr.rel (%p213) target = $region44
    $region43: #{ifblock_forward.3} parent=5 // pred_region
      %s217 = ssub.s32 %s12, 1
      %p218 = scmp.lt.s32.totalorder %s17, 1
      %s219 = scalar_select %p218, %s17, 1
      %s220 = smul.addr %s219, 8
      %s221 = smul.addr %s220, 4
      %s222 = scalar_lea.vmem %s0, %s221
      %p223 = pneg %p38
      %p224 = pneg %p35
      %p225 = pneg %p59
      %p226 = pneg %p56
      %p227 = pneg %p80
      %p228 = pneg %p77
      %p229 = pneg %p101
      %p230 = pneg %p98
      %p231 = pneg %p122
      %p232 = pneg %p119
      %p233 = pneg %p143
      %p234 = pneg %p140
      %p235 = pneg %p169
      %p236 = pneg %p166
      %p237 = scmp.lt.s32.totalorder %s17, 1
      %s238 = scalar_select %p237, %s17, 1
      %s239 = smul.addr %s238, 8
      %s240 = smul.addr %s239, 8
      %s241 = scalar_lea.vmem %s6, %s240
      %p242 = scmp.lt.s32.totalorder %s17, 1
      %s243 = scalar_select %p242, %s17, 1
      %s244 = smul.addr %s243, 8
      %s245 = smul.addr %s244, 4
      %s246 = scalar_lea.vmem %s0, %s245
      %p247 = scmp.lt.s32.totalorder %s17, 1
      %s248 = scalar_select %p247, %s17, 1
      %s249 = smul.addr %s248, 8
      %s250 = smul.addr %s249, 8
      %s251 = scalar_lea.vmem %s6, %s250
      %vm253 = vcmask 130048
      %254 = vst.msk [vmem:[#allocation2] sm:$0xff] %vm253, 0.0
      %vm255 = vcmask 123904
      %256 = vst.msk [vmem:[#allocation2 + $0x8] sm:$0x3] %vm255, 0.0
      %s257 = scalar_lea.vmem [#allocation2], 144
      %258 = vst.msk [vmem:[%s257] sm:$0xff] %vm253, 0.0
      %259 = vst.msk [vmem:[%s257 + $0x8] sm:$0x3] %vm255, 0.0
      %vm260 = vcmask 122880
      %261 = vst.msk [vmem:[#allocation2] sm:$0x1] %vm260, 0.0
      %262 = vst.msk [vmem:[#allocation2 + $0x10] sm:$0x1] %vm260, 0.0
      %263 = vst.msk [vmem:[#allocation2 + $0x20] sm:$0x1] %vm260, 0.0
      %264 = vst.msk [vmem:[#allocation2 + $0x30] sm:$0x1] %vm260, 0.0
      %265 = vst.msk [vmem:[#allocation2 + $0x40] sm:$0x1] %vm260, 0.0
      %266 = vst.msk [vmem:[#allocation2 + $0x50] sm:$0x1] %vm260, 0.0
      %267 = vst.msk [vmem:[#allocation2 + $0x60] sm:$0x1] %vm260, 0.0
      %268 = vst.msk [vmem:[#allocation2 + $0x70] sm:$0x1] %vm260, 0.0
      %269 = vst.msk [vmem:[#allocation2 + $0x80] sm:$0x1] %vm260, 0.0
      %270 = vst.msk [vmem:[#allocation2 + $0x90] sm:$0x1] %vm260, 0.0
      %271 = vst.msk [vmem:[#allocation2 + $0x9] sm:$0x1] %vm260, 0.0
      %272 = vst.msk [vmem:[#allocation2 + $0x19] sm:$0x1] %vm260, 0.0
      %273 = vst.msk [vmem:[#allocation2 + $0x29] sm:$0x1] %vm260, 0.0
      %274 = vst.msk [vmem:[#allocation2 + $0x39] sm:$0x1] %vm260, 0.0
      %275 = vst.msk [vmem:[#allocation2 + $0x49] sm:$0x1] %vm260, 0.0
      %276 = vst.msk [vmem:[#allocation2 + $0x59] sm:$0x1] %vm260, 0.0
      %277 = vst.msk [vmem:[#allocation2 + $0x69] sm:$0x1] %vm260, 0.0
      %278 = vst.msk [vmem:[#allocation2 + $0x79] sm:$0x1] %vm260, 0.0
      %279 = vst.msk [vmem:[#allocation2 + $0x89] sm:$0x1] %vm260, 0.0
      %280 = vst.msk [vmem:[#allocation2 + $0x99] sm:$0x1] %vm260, 0.0
      %v281 = vld [vmem:[%s246] sm:$0xf]
      %v282 = vld [vmem:[%s246 + $0x4] sm:$0xf]
      %v283 = vld [vmem:[%s246 + $0x8] sm:$0xf]
      %v284 = vld [vmem:[%s246 + $0xc] sm:$0xf]
      %v285 = vld [vmem:[%s246 + $0x10] sm:$0xf]
      %v286 = vld [vmem:[%s246 + $0x14] sm:$0xf]
      %v287 = vld [vmem:[%s246 + $0x18] sm:$0xf]
      %v288 = vld [vmem:[%s246 + $0x1c] sm:$0xf]
      %v289 = vunpack.c.l.bf16 %v281
      %v290 = vunpack.c.l.bf16 %v282
      %v291 = vunpack.c.l.bf16 %v283
      %v292 = vunpack.c.l.bf16 %v284
      %v293 = vunpack.c.l.bf16 %v285
      %v294 = vunpack.c.l.bf16 %v286
      %v295 = vunpack.c.l.bf16 %v287
      %v296 = vunpack.c.l.bf16 %v288
      %s297 = scalar_lea.vmem [#allocation2], 16
      %298 = vst.msk [vmem:[%s297 + $0x1] sm:$0xff] %vm253, %v289
      %299 = vst.msk [vmem:[%s297 + $0x11] sm:$0xff] %vm253, %v290
      %300 = vst.msk [vmem:[%s297 + $0x21] sm:$0xff] %vm253, %v291
      %301 = vst.msk [vmem:[%s297 + $0x31] sm:$0xff] %vm253, %v292
      %302 = vst.msk [vmem:[%s297 + $0x41] sm:$0xff] %vm253, %v293
      %303 = vst.msk [vmem:[%s297 + $0x51] sm:$0xff] %vm253, %v294
      %304 = vst.msk [vmem:[%s297 + $0x61] sm:$0xff] %vm253, %v295
      %305 = vst.msk [vmem:[%s297 + $0x71] sm:$0xff] %vm253, %v296
      %v306 = vld [vmem:[#allocation2] sm:$0xff]
      %v307 = vld [vmem:[#allocation2 + $0x10] sm:$0xff]
      %v308 = vld [vmem:[#allocation2 + $0x20] sm:$0xff]
      %v309 = vld [vmem:[#allocation2 + $0x30] sm:$0xff]
      %v310 = vld [vmem:[#allocation2 + $0x40] sm:$0xff]
      %v311 = vld [vmem:[#allocation2 + $0x50] sm:$0xff]
      %v312 = vld [vmem:[#allocation2 + $0x60] sm:$0xff]
      %v313 = vld [vmem:[#allocation2 + $0x70] sm:$0xff]
      %v314 = vld [vmem:[#allocation2 + $0x1] sm:$0xff]
      %v315 = vld [vmem:[#allocation2 + $0x11] sm:$0xff]
      %v316 = vld [vmem:[#allocation2 + $0x21] sm:$0xff]
      %v317 = vld [vmem:[#allocation2 + $0x31] sm:$0xff]
      %v318 = vld [vmem:[#allocation2 + $0x41] sm:$0xff]
      %v319 = vld [vmem:[#allocation2 + $0x51] sm:$0xff]
      %v320 = vld [vmem:[#allocation2 + $0x61] sm:$0xff]
      %v321 = vld [vmem:[#allocation2 + $0x71] sm:$0xff]
      %v322 = vld [vmem:[#allocation2 + $0x2] sm:$0xff]
      %v323 = vld [vmem:[#allocation2 + $0x12] sm:$0xff]
      %v324 = vld [vmem:[#allocation2 + $0x22] sm:$0xff]
      %v325 = vld [vmem:[#allocation2 + $0x32] sm:$0xff]
      %v326 = vld [vmem:[#allocation2 + $0x42] sm:$0xff]
      %v327 = vld [vmem:[#allocation2 + $0x52] sm:$0xff]
      %v328 = vld [vmem:[#allocation2 + $0x62] sm:$0xff]
      %v329 = vld [vmem:[#allocation2 + $0x72] sm:$0xff]
      %v330 = vld [vmem:[%s297] sm:$0xff]
      %v331 = vld [vmem:[%s297 + $0x10] sm:$0xff]
      %v332 = vld [vmem:[%s297 + $0x20] sm:$0xff]
      %v333 = vld [vmem:[%s297 + $0x30] sm:$0xff]
      %v334 = vld [vmem:[%s297 + $0x40] sm:$0xff]
      %v335 = vld [vmem:[%s297 + $0x50] sm:$0xff]
      %v336 = vld [vmem:[%s297 + $0x60] sm:$0xff]
      %v337 = vld [vmem:[%s297 + $0x70] sm:$0xff]
      %v338 = vld [vmem:[%s297 + $0x1] sm:$0xff]
      %v339 = vld [vmem:[%s297 + $0x11] sm:$0xff]
      %v340 = vld [vmem:[%s297 + $0x21] sm:$0xff]
      %v341 = vld [vmem:[%s297 + $0x31] sm:$0xff]
      %v342 = vld [vmem:[%s297 + $0x41] sm:$0xff]
      %v343 = vld [vmem:[%s297 + $0x51] sm:$0xff]
      %v344 = vld [vmem:[%s297 + $0x61] sm:$0xff]
      %v345 = vld [vmem:[%s297 + $0x71] sm:$0xff]
      %v346 = vld [vmem:[%s297 + $0x2] sm:$0xff]
      %v347 = vld [vmem:[%s297 + $0x12] sm:$0xff]
      %v348 = vld [vmem:[%s297 + $0x22] sm:$0xff]
      %v349 = vld [vmem:[%s297 + $0x32] sm:$0xff]
      %v350 = vld [vmem:[%s297 + $0x42] sm:$0xff]
      %v351 = vld [vmem:[%s297 + $0x52] sm:$0xff]
      %v352 = vld [vmem:[%s297 + $0x62] sm:$0xff]
      %v353 = vld [vmem:[%s297 + $0x72] sm:$0xff]
      %s354 = scalar_lea.vmem [#allocation2], 32
      %v355 = vld [vmem:[%s354] sm:$0xff]
      %v356 = vld [vmem:[%s354 + $0x10] sm:$0xff]
      %v357 = vld [vmem:[%s354 + $0x20] sm:$0xff]
      %v358 = vld [vmem:[%s354 + $0x30] sm:$0xff]
      %v359 = vld [vmem:[%s354 + $0x40] sm:$0xff]
      %v360 = vld [vmem:[%s354 + $0x50] sm:$0xff]
      %v361 = vld [vmem:[%s354 + $0x60] sm:$0xff]
      %v362 = vld [vmem:[%s354 + $0x70] sm:$0xff]
      %v363 = vld [vmem:[%s354 + $0x1] sm:$0xff]
      %v364 = vld [vmem:[%s354 + $0x11] sm:$0xff]
      %v365 = vld [vmem:[%s354 + $0x21] sm:$0xff]
      %v366 = vld [vmem:[%s354 + $0x31] sm:$0xff]
      %v367 = vld [vmem:[%s354 + $0x41] sm:$0xff]
      %v368 = vld [vmem:[%s354 + $0x51] sm:$0xff]
      %v369 = vld [vmem:[%s354 + $0x61] sm:$0xff]
      %v370 = vld [vmem:[%s354 + $0x71] sm:$0xff]
      %v371 = vld [vmem:[%s354 + $0x2] sm:$0xff]
      %v372 = vld [vmem:[%s354 + $0x12] sm:$0xff]
      %v373 = vld [vmem:[%s354 + $0x22] sm:$0xff]
      %v374 = vld [vmem:[%s354 + $0x32] sm:$0xff]
      %v375 = vld [vmem:[%s354 + $0x42] sm:$0xff]
      %v376 = vld [vmem:[%s354 + $0x52] sm:$0xff]
      %v377 = vld [vmem:[%s354 + $0x62] sm:$0xff]
      %v378 = vld [vmem:[%s354 + $0x72] sm:$0xff]
      %387 = vrot.lane.b32.xlu0 %v314, 16
      %v388 = vpop.permute.xlu0 %387
      %389 = vrot.lane.b32.xlu0 %v315, 16
      %v390 = vpop.permute.xlu0 %389
      %391 = vrot.lane.b32.xlu0 %v316, 16
      %v392 = vpop.permute.xlu0 %391
      %393 = vrot.lane.b32.xlu0 %v317, 16
      %v394 = vpop.permute.xlu0 %393
      %395 = vrot.lane.b32.xlu0 %v318, 16
      %v396 = vpop.permute.xlu0 %395
      %397 = vrot.lane.b32.xlu0 %v319, 16
      %v398 = vpop.permute.xlu0 %397
      %399 = vrot.lane.b32.xlu0 %v320, 16
      %v400 = vpop.permute.xlu0 %399
      %401 = vrot.lane.b32.xlu0 %v321, 16
      %v402 = vpop.permute.xlu0 %401
      %419 = vrot.lane.b32.xlu0 %v322, 32
      %v420 = vpop.permute.xlu0 %419
      %421 = vrot.lane.b32.xlu0 %v323, 32
      %v422 = vpop.permute.xlu0 %421
      %423 = vrot.lane.b32.xlu0 %v324, 32
      %v424 = vpop.permute.xlu0 %423
      %425 = vrot.lane.b32.xlu0 %v325, 32
      %v426 = vpop.permute.xlu0 %425
      %427 = vrot.lane.b32.xlu0 %v326, 32
      %v428 = vpop.permute.xlu0 %427
      %429 = vrot.lane.b32.xlu0 %v327, 32
      %v430 = vpop.permute.xlu0 %429
      %431 = vrot.lane.b32.xlu0 %v328, 32
      %v432 = vpop.permute.xlu0 %431
      %433 = vrot.lane.b32.xlu0 %v329, 32
      %v434 = vpop.permute.xlu0 %433
      %451 = vrot.lane.b32.xlu0 %v330, 48
      %v452 = vpop.permute.xlu0 %451
      %453 = vrot.lane.b32.xlu0 %v331, 48
      %v454 = vpop.permute.xlu0 %453
      %455 = vrot.lane.b32.xlu0 %v332, 48
      %v456 = vpop.permute.xlu0 %455
      %457 = vrot.lane.b32.xlu0 %v333, 48
      %v458 = vpop.permute.xlu0 %457
      %459 = vrot.lane.b32.xlu0 %v334, 48
      %v460 = vpop.permute.xlu0 %459
      %461 = vrot.lane.b32.xlu0 %v335, 48
      %v462 = vpop.permute.xlu0 %461
      %463 = vrot.lane.b32.xlu0 %v336, 48
      %v464 = vpop.permute.xlu0 %463
      %465 = vrot.lane.b32.xlu0 %v337, 48
      %v466 = vpop.permute.xlu0 %465
      %483 = vrot.lane.b32.xlu0 %v338, 64
      %v484 = vpop.permute.xlu0 %483
      %485 = vrot.lane.b32.xlu0 %v339, 64
      %v486 = vpop.permute.xlu0 %485
      %487 = vrot.lane.b32.xlu0 %v340, 64
      %v488 = vpop.permute.xlu0 %487
      %489 = vrot.lane.b32.xlu0 %v341, 64
      %v490 = vpop.permute.xlu0 %489
      %491 = vrot.lane.b32.xlu0 %v342, 64
      %v492 = vpop.permute.xlu0 %491
      %493 = vrot.lane.b32.xlu0 %v343, 64
      %v494 = vpop.permute.xlu0 %493
      %495 = vrot.lane.b32.xlu0 %v344, 64
      %v496 = vpop.permute.xlu0 %495
      %497 = vrot.lane.b32.xlu0 %v345, 64
      %v498 = vpop.permute.xlu0 %497
      %515 = vrot.lane.b32.xlu0 %v346, 80
      %v516 = vpop.permute.xlu0 %515
      %517 = vrot.lane.b32.xlu0 %v347, 80
      %v518 = vpop.permute.xlu0 %517
      %519 = vrot.lane.b32.xlu0 %v348, 80
      %v520 = vpop.permute.xlu0 %519
      %521 = vrot.lane.b32.xlu0 %v349, 80
      %v522 = vpop.permute.xlu0 %521
      %523 = vrot.lane.b32.xlu0 %v350, 80
      %v524 = vpop.permute.xlu0 %523
      %525 = vrot.lane.b32.xlu0 %v351, 80
      %v526 = vpop.permute.xlu0 %525
      %527 = vrot.lane.b32.xlu0 %v352, 80
      %v528 = vpop.permute.xlu0 %527
      %529 = vrot.lane.b32.xlu0 %v353, 80
      %v530 = vpop.permute.xlu0 %529
      %547 = vrot.lane.b32.xlu0 %v355, 96
      %v548 = vpop.permute.xlu0 %547
      %549 = vrot.lane.b32.xlu0 %v356, 96
      %v550 = vpop.permute.xlu0 %549
      %551 = vrot.lane.b32.xlu0 %v357, 96
      %v552 = vpop.permute.xlu0 %551
      %553 = vrot.lane.b32.xlu0 %v358, 96
      %v554 = vpop.permute.xlu0 %553
      %555 = vrot.lane.b32.xlu0 %v359, 96
      %v556 = vpop.permute.xlu0 %555
      %557 = vrot.lane.b32.xlu0 %v360, 96
      %v558 = vpop.permute.xlu0 %557
      %559 = vrot.lane.b32.xlu0 %v361, 96
      %v560 = vpop.permute.xlu0 %559
      %561 = vrot.lane.b32.xlu0 %v362, 96
      %v562 = vpop.permute.xlu0 %561
      %579 = vrot.lane.b32.xlu0 %v363, 112
      %v580 = vpop.permute.xlu0 %579
      %581 = vrot.lane.b32.xlu0 %v364, 112
      %v582 = vpop.permute.xlu0 %581
      %583 = vrot.lane.b32.xlu0 %v365, 112
      %v584 = vpop.permute.xlu0 %583
      %585 = vrot.lane.b32.xlu0 %v366, 112
      %v586 = vpop.permute.xlu0 %585
      %587 = vrot.lane.b32.xlu0 %v367, 112
      %v588 = vpop.permute.xlu0 %587
      %589 = vrot.lane.b32.xlu0 %v368, 112
      %v590 = vpop.permute.xlu0 %589
      %591 = vrot.lane.b32.xlu0 %v369, 112
      %v592 = vpop.permute.xlu0 %591
      %593 = vrot.lane.b32.xlu0 %v370, 112
      %v594 = vpop.permute.xlu0 %593
      %v603 = vsel %vm253, %v306, %v388
      %v604 = vsel %vm253, %v307, %v390
      %v605 = vsel %vm253, %v308, %v392
      %v606 = vsel %vm253, %v309, %v394
      %v607 = vsel %vm253, %v310, %v396
      %v608 = vsel %vm253, %v311, %v398
      %v609 = vsel %vm253, %v312, %v400
      %v610 = vsel %vm253, %v313, %v402
      %vm611 = vcmask 261120
      %v612 = vsel %vm611, %v603, %v420
      %v613 = vsel %vm611, %v604, %v422
      %v614 = vsel %vm611, %v605, %v424
      %v615 = vsel %vm611, %v606, %v426
      %v616 = vsel %vm611, %v607, %v428
      %v617 = vsel %vm611, %v608, %v430
      %v618 = vsel %vm611, %v609, %v432
      %v619 = vsel %vm611, %v610, %v434
      %vm620 = vcmask 392192
      %v621 = vsel %vm620, %v612, %v452
      %v622 = vsel %vm620, %v613, %v454
      %v623 = vsel %vm620, %v614, %v456
      %v624 = vsel %vm620, %v615, %v458
      %v625 = vsel %vm620, %v616, %v460
      %v626 = vsel %vm620, %v617, %v462
      %v627 = vsel %vm620, %v618, %v464
      %v628 = vsel %vm620, %v619, %v466
      %vm629 = vcmask 523264
      %v630 = vsel %vm629, %v621, %v484
      %v631 = vsel %vm629, %v622, %v486
      %v632 = vsel %vm629, %v623, %v488
      %v633 = vsel %vm629, %v624, %v490
      %v634 = vsel %vm629, %v625, %v492
      %v635 = vsel %vm629, %v626, %v494
      %v636 = vsel %vm629, %v627, %v496
      %v637 = vsel %vm629, %v628, %v498
      %vm638 = vcmask 654336
      %v639 = vsel %vm638, %v630, %v516
      %v640 = vsel %vm638, %v631, %v518
      %v641 = vsel %vm638, %v632, %v520
      %v642 = vsel %vm638, %v633, %v522
      %v643 = vsel %vm638, %v634, %v524
      %v644 = vsel %vm638, %v635, %v526
      %v645 = vsel %vm638, %v636, %v528
      %v646 = vsel %vm638, %v637, %v530
      %vm647 = vcmask 785408
      %v648 = vsel %vm647, %v639, %v548
      %v649 = vsel %vm647, %v640, %v550
      %v650 = vsel %vm647, %v641, %v552
      %v651 = vsel %vm647, %v642, %v554
      %v652 = vsel %vm647, %v643, %v556
      %v653 = vsel %vm647, %v644, %v558
      %v654 = vsel %vm647, %v645, %v560
      %v655 = vsel %vm647, %v646, %v562
      %vm656 = vcmask 916480
      %v657 = vsel %vm656, %v648, %v580
      %v658 = vsel %vm656, %v649, %v582
      %v659 = vsel %vm656, %v650, %v584
      %v660 = vsel %vm656, %v651, %v586
      %v661 = vsel %vm656, %v652, %v588
      %v662 = vsel %vm656, %v653, %v590
      %v663 = vsel %vm656, %v654, %v592
      %v664 = vsel %vm656, %v655, %v594
      %v665 = vpack.c.bf16 %v658, %v657
      %v666 = vpack.c.bf16 %v372, %v371
      %v667 = vpack.c.bf16 %v660, %v659
      %v668 = vpack.c.bf16 %v374, %v373
      %v669 = vpack.c.bf16 %v662, %v661
      %v670 = vpack.c.bf16 %v376, %v375
      %v671 = vpack.c.bf16 %v664, %v663
      %v672 = vpack.c.bf16 %v378, %v377
      %v673 = vld [vmem:[%s1] sm:$0xf]
      %v674 = vld [vmem:[%s1 + $0x4] sm:$0xf]
      %v675 = vld [vmem:[%s1 + $0x8] sm:$0xf]
      %v676 = vld [vmem:[%s1 + $0xc] sm:$0xf]
      %v677 = vld [vmem:[%s1 + $0x10] sm:$0xf]
      %v678 = vld [vmem:[%s1 + $0x14] sm:$0xf]
      %v679 = vld [vmem:[%s1 + $0x18] sm:$0xf]
      %v680 = vld [vmem:[%s1 + $0x1c] sm:$0xf]
      %v681 = vld [vmem:[%s1 + $0x20] sm:$0xf]
      %v682 = vld [vmem:[%s1 + $0x24] sm:$0xf]
      %v683 = vld [vmem:[%s1 + $0x28] sm:$0xf]
      %v684 = vld [vmem:[%s1 + $0x2c] sm:$0xf]
      %v685 = vld [vmem:[%s1 + $0x30] sm:$0xf]
      %v686 = vld [vmem:[%s1 + $0x34] sm:$0xf]
      %v687 = vld [vmem:[%s1 + $0x38] sm:$0xf]
      %v688 = vld [vmem:[%s1 + $0x3c] sm:$0xf]
      %v689 = vld [vmem:[%s1 + $0x40] sm:$0xf]
      %v690 = vld [vmem:[%s1 + $0x44] sm:$0xf]
      %v691 = vld [vmem:[%s2] sm:$0x1]
      %v693 = vperm.slane %v691, 0
      %v713 = vunpack.c.l.b16 %v673
      %v714 = vunpack.c.l.b16 %v674
      %v715 = vunpack.c.l.b16 %v675
      %v716 = vunpack.c.l.b16 %v676
      %v717 = vunpack.c.l.b16 %v677
      %v718 = vunpack.c.l.b16 %v678
      %v719 = vunpack.c.l.b16 %v679
      %v720 = vunpack.c.l.b16 %v680
      %v721 = vunpack.c.l.b16 %v681
      %v722 = vunpack.c.l.b16 %v682
      %v723 = vunpack.c.l.b16 %v683
      %v724 = vunpack.c.l.b16 %v684
      %v725 = vunpack.c.l.b16 %v685
      %v726 = vunpack.c.l.b16 %v686
      %v727 = vunpack.c.l.b16 %v687
      %v728 = vunpack.c.l.b16 %v688
      %v729 = vunpack.c.l.b16 %v689
      %v730 = vunpack.c.l.b16 %v690
      %v731 = vpack.c.b16 %v714, %v713
      %v732 = vpack.c.b16 %v716, %v715
      %v733 = vpack.c.b16 %v718, %v717
      %v734 = vpack.c.b16 %v720, %v719
      %v735 = vpack.c.b16 %v722, %v721
      %v736 = vpack.c.b16 %v724, %v723
      %v737 = vpack.c.b16 %v726, %v725
      %v738 = vpack.c.b16 %v728, %v727
      %v739 = vpack.c.b16 %v730, %v729
      %v750 = vsel %vm253, %v666, 0
      %v753 = vsel %vm253, %v668, 0
      %v756 = vsel %vm253, %v670, 0
      %v759 = vsel %vm253, %v672, 0
      %761 = vmatpush.bf16.msra.mxu0 %v738
      %762 = vmatpush.bf16.msra.mxu0 %v737
      %763 = vmatpush.bf16.msra.mxu0 %v736
      %764 = vmatpush.bf16.msra.mxu0 %v735
      %765 = vmatpush.bf16.msra.mxu0 %v734
      %766 = vmatpush.bf16.msra.mxu0 %v733
      %767 = vmatpush.bf16.msra.mxu0 %v732
      %768 = vmatpush.bf16.msra.mxu0 %v731
      %769 = vmatmul.bf16.gmra.mxu0 %v665
      %v770 = vpop.f32.mrf.mxu0
      %v771 = vadd.f32 %v693, %v770
      %v772 = vpop.f32.mrf.mxu0
      %v773 = vadd.f32 %v693, %v772
      %774 = vmatmul.bf16.gmra.mxu0 %v667
      %v775 = vpop.f32.mrf.mxu0
      %v776 = vadd.f32 %v693, %v775
      %v777 = vpop.f32.mrf.mxu0
      %v778 = vadd.f32 %v693, %v777
      %779 = vmatmul.bf16.gmra.mxu0 %v669
      %v780 = vpop.f32.mrf.mxu0
      %v781 = vadd.f32 %v693, %v780
      %v782 = vpop.f32.mrf.mxu0
      %v783 = vadd.f32 %v693, %v782
      %784 = vmatmul.bf16.gmra.mxu0 %v671
      %v785 = vpop.f32.mrf.mxu0
      %v786 = vadd.f32 %v693, %v785
      %v787 = vpop.f32.mrf.mxu0
      %v788 = vadd.f32 %v693, %v787
      %789 = vdwg.mxu0
      %790 = vmatpush.bf16.msra.mxu0 0
      %791 = vmatpush.bf16.msra.mxu0 0
      %792 = vmatpush.bf16.msra.mxu0 0
      %793 = vmatpush.bf16.msra.mxu0 0
      %794 = vmatpush.bf16.msra.mxu0 0
      %795 = vmatpush.bf16.msra.mxu0 0
      %796 = vmatpush.bf16.msra.mxu0 0
      %797 = vmatpush.bf16.msra.mxu0 %v739
      %798 = vmatmul.bf16.gmra.mxu0 %v750
      %v799 = vpop.f32.mrf.mxu0
      %v800 = vadd.f32 %v771, %v799
      %v801 = vpop.f32.mrf.mxu0
      %v802 = vadd.f32 %v773, %v801
      %803 = vmatmul.bf16.gmra.mxu0 %v753
      %v804 = vpop.f32.mrf.mxu0
      %v805 = vadd.f32 %v776, %v804
      %v806 = vpop.f32.mrf.mxu0
      %v807 = vadd.f32 %v778, %v806
      %808 = vmatmul.bf16.gmra.mxu0 %v756
      %v809 = vpop.f32.mrf.mxu0
      %v810 = vadd.f32 %v781, %v809
      %v811 = vpop.f32.mrf.mxu0
      %v812 = vadd.f32 %v783, %v811
      %813 = vmatmul.bf16.gmra.mxu0 %v759
      %v814 = vpop.f32.mrf.mxu0
      %v815 = vadd.f32 %v786, %v814
      %v816 = vpop.f32.mrf.mxu0
      %v817 = vadd.f32 %v788, %v816
      %818 = vdwg.mxu0
      %vm819 = vcmp.ge.f32.partialorder %v800, 0.0
      %vm820 = vcmp.ge.f32.partialorder %v802, 0.0
      %vm821 = vcmp.ge.f32.partialorder %v805, 0.0
      %vm822 = vcmp.ge.f32.partialorder %v807, 0.0
      %vm823 = vcmp.ge.f32.partialorder %v810, 0.0
      %vm824 = vcmp.ge.f32.partialorder %v812, 0.0
      %vm825 = vcmp.ge.f32.partialorder %v815, 0.0
      %vm826 = vcmp.ge.f32.partialorder %v817, 0.0
      %v827 = vld [vmem:[%s3] sm:$0x1]
      %v829 = vperm.slane %v827, 0
      %v831 = vmul.f32 %v800, %v829
      %v832 = vmul.f32 %v802, %v829
      %v833 = vmul.f32 %v805, %v829
      %v834 = vmul.f32 %v807, %v829
      %v835 = vmul.f32 %v810, %v829
      %v836 = vmul.f32 %v812, %v829
      %v837 = vmul.f32 %v815, %v829
      %v838 = vmul.f32 %v817, %v829
      %v839 = vsel %vm819, %v800, %v831
      %v840 = vsel %vm820, %v802, %v832
      %v841 = vsel %vm821, %v805, %v833
      %v842 = vsel %vm822, %v807, %v834
      %v843 = vsel %vm823, %v810, %v835
      %v844 = vsel %vm824, %v812, %v836
      %v845 = vsel %vm825, %v815, %v837
      %v846 = vsel %vm826, %v817, %v838
      %847 = vst.msk [vmem:[%s297 + $0x1] sm:$0xff] %vm253, %v839
      %848 = vst.msk [vmem:[%s297 + $0x11] sm:$0xff] %vm253, %v840
      %849 = vst.msk [vmem:[%s297 + $0x21] sm:$0xff] %vm253, %v841
      %850 = vst.msk [vmem:[%s297 + $0x31] sm:$0xff] %vm253, %v842
      %851 = vst.msk [vmem:[%s297 + $0x41] sm:$0xff] %vm253, %v843
      %852 = vst.msk [vmem:[%s297 + $0x51] sm:$0xff] %vm253, %v844
      %853 = vst.msk [vmem:[%s297 + $0x61] sm:$0xff] %vm253, %v845
      %854 = vst.msk [vmem:[%s297 + $0x71] sm:$0xff] %vm253, %v846
      %v855 = vld [vmem:[#allocation2] sm:$0xff]
      %v856 = vld [vmem:[#allocation2 + $0x10] sm:$0xff]
      %v857 = vld [vmem:[#allocation2 + $0x20] sm:$0xff]
      %v858 = vld [vmem:[#allocation2 + $0x30] sm:$0xff]
      %v859 = vld [vmem:[#allocation2 + $0x40] sm:$0xff]
      %v860 = vld [vmem:[#allocation2 + $0x50] sm:$0xff]
      %v861 = vld [vmem:[#allocation2 + $0x60] sm:$0xff]
      %v862 = vld [vmem:[#allocation2 + $0x70] sm:$0xff]
      %v863 = vld [vmem:[#allocation2 + $0x1] sm:$0xff]
      %v864 = vld [vmem:[#allocation2 + $0x11] sm:$0xff]
      %v865 = vld [vmem:[#allocation2 + $0x21] sm:$0xff]
      %v866 = vld [vmem:[#allocation2 + $0x31] sm:$0xff]
      %v867 = vld [vmem:[#allocation2 + $0x41] sm:$0xff]
      %v868 = vld [vmem:[#allocation2 + $0x51] sm:$0xff]
      %v869 = vld [vmem:[#allocation2 + $0x61] sm:$0xff]
      %v870 = vld [vmem:[#allocation2 + $0x71] sm:$0xff]
      %v871 = vld [vmem:[#allocation2 + $0x2] sm:$0xff]
      %v872 = vld [vmem:[#allocation2 + $0x12] sm:$0xff]
      %v873 = vld [vmem:[#allocation2 + $0x22] sm:$0xff]
      %v874 = vld [vmem:[#allocation2 + $0x32] sm:$0xff]
      %v875 = vld [vmem:[#allocation2 + $0x42] sm:$0xff]
      %v876 = vld [vmem:[#allocation2 + $0x52] sm:$0xff]
      %v877 = vld [vmem:[#allocation2 + $0x62] sm:$0xff]
      %v878 = vld [vmem:[#allocation2 + $0x72] sm:$0xff]
      %v879 = vld [vmem:[%s297] sm:$0xff]
      %v880 = vld [vmem:[%s297 + $0x10] sm:$0xff]
      %v881 = vld [vmem:[%s297 + $0x20] sm:$0xff]
      %v882 = vld [vmem:[%s297 + $0x30] sm:$0xff]
      %v883 = vld [vmem:[%s297 + $0x40] sm:$0xff]
      %v884 = vld [vmem:[%s297 + $0x50] sm:$0xff]
      %v885 = vld [vmem:[%s297 + $0x60] sm:$0xff]
      %v886 = vld [vmem:[%s297 + $0x70] sm:$0xff]
      %v887 = vld [vmem:[%s297 + $0x1] sm:$0xff]
      %v888 = vld [vmem:[%s297 + $0x11] sm:$0xff]
      %v889 = vld [vmem:[%s297 + $0x21] sm:$0xff]
      %v890 = vld [vmem:[%s297 + $0x31] sm:$0xff]
      %v891 = vld [vmem:[%s297 + $0x41] sm:$0xff]
      %v892 = vld [vmem:[%s297 + $0x51] sm:$0xff]
      %v893 = vld [vmem:[%s297 + $0x61] sm:$0xff]
      %v894 = vld [vmem:[%s297 + $0x71] sm:$0xff]
      %v895 = vld [vmem:[%s297 + $0x2] sm:$0xff]
      %v896 = vld [vmem:[%s297 + $0x12] sm:$0xff]
      %v897 = vld [vmem:[%s297 + $0x22] sm:$0xff]
      %v898 = vld [vmem:[%s297 + $0x32] sm:$0xff]
      %v899 = vld [vmem:[%s297 + $0x42] sm:$0xff]
      %v900 = vld [vmem:[%s297 + $0x52] sm:$0xff]
      %v901 = vld [vmem:[%s297 + $0x62] sm:$0xff]
      %v902 = vld [vmem:[%s297 + $0x72] sm:$0xff]
      %v903 = vld [vmem:[%s354] sm:$0xff]
      %v904 = vld [vmem:[%s354 + $0x10] sm:$0xff]
      %v905 = vld [vmem:[%s354 + $0x20] sm:$0xff]
      %v906 = vld [vmem:[%s354 + $0x30] sm:$0xff]
      %v907 = vld [vmem:[%s354 + $0x40] sm:$0xff]
      %v908 = vld [vmem:[%s354 + $0x50] sm:$0xff]
      %v909 = vld [vmem:[%s354 + $0x60] sm:$0xff]
      %v910 = vld [vmem:[%s354 + $0x70] sm:$0xff]
      %v911 = vld [vmem:[%s354 + $0x1] sm:$0xff]
      %v912 = vld [vmem:[%s354 + $0x11] sm:$0xff]
      %v913 = vld [vmem:[%s354 + $0x21] sm:$0xff]
      %v914 = vld [vmem:[%s354 + $0x31] sm:$0xff]
      %v915 = vld [vmem:[%s354 + $0x41] sm:$0xff]
      %v916 = vld [vmem:[%s354 + $0x51] sm:$0xff]
      %v917 = vld [vmem:[%s354 + $0x61] sm:$0xff]
      %v918 = vld [vmem:[%s354 + $0x71] sm:$0xff]
      %v919 = vld [vmem:[%s354 + $0x2] sm:$0xff]
      %v920 = vld [vmem:[%s354 + $0x12] sm:$0xff]
      %v921 = vld [vmem:[%s354 + $0x22] sm:$0xff]
      %v922 = vld [vmem:[%s354 + $0x32] sm:$0xff]
      %v923 = vld [vmem:[%s354 + $0x42] sm:$0xff]
      %v924 = vld [vmem:[%s354 + $0x52] sm:$0xff]
      %v925 = vld [vmem:[%s354 + $0x62] sm:$0xff]
      %v926 = vld [vmem:[%s354 + $0x72] sm:$0xff]
      %935 = vrot.lane.b32.xlu0 %v863, 16
      %v936 = vpop.permute.xlu0 %935
      %937 = vrot.lane.b32.xlu0 %v864, 16
      %v938 = vpop.permute.xlu0 %937
      %939 = vrot.lane.b32.xlu0 %v865, 16
      %v940 = vpop.permute.xlu0 %939
      %941 = vrot.lane.b32.xlu0 %v866, 16
      %v942 = vpop.permute.xlu0 %941
      %943 = vrot.lane.b32.xlu0 %v867, 16
      %v944 = vpop.permute.xlu0 %943
      %945 = vrot.lane.b32.xlu0 %v868, 16
      %v946 = vpop.permute.xlu0 %945
      %947 = vrot.lane.b32.xlu0 %v869, 16
      %v948 = vpop.permute.xlu0 %947
      %949 = vrot.lane.b32.xlu0 %v870, 16
      %v950 = vpop.permute.xlu0 %949
      %967 = vrot.lane.b32.xlu0 %v871, 32
      %v968 = vpop.permute.xlu0 %967
      %969 = vrot.lane.b32.xlu0 %v872, 32
      %v970 = vpop.permute.xlu0 %969
      %971 = vrot.lane.b32.xlu0 %v873, 32
      %v972 = vpop.permute.xlu0 %971
      %973 = vrot.lane.b32.xlu0 %v874, 32
      %v974 = vpop.permute.xlu0 %973
      %975 = vrot.lane.b32.xlu0 %v875, 32
      %v976 = vpop.permute.xlu0 %975
      %977 = vrot.lane.b32.xlu0 %v876, 32
      %v978 = vpop.permute.xlu0 %977
      %979 = vrot.lane.b32.xlu0 %v877, 32
      %v980 = vpop.permute.xlu0 %979
      %981 = vrot.lane.b32.xlu0 %v878, 32
      %v982 = vpop.permute.xlu0 %981
      %999 = vrot.lane.b32.xlu0 %v879, 48
      %v1000 = vpop.permute.xlu0 %999
      %1001 = vrot.lane.b32.xlu0 %v880, 48
      %v1002 = vpop.permute.xlu0 %1001
      %1003 = vrot.lane.b32.xlu0 %v881, 48
      %v1004 = vpop.permute.xlu0 %1003
      %1005 = vrot.lane.b32.xlu0 %v882, 48
      %v1006 = vpop.permute.xlu0 %1005
      %1007 = vrot.lane.b32.xlu0 %v883, 48
      %v1008 = vpop.permute.xlu0 %1007
      %1009 = vrot.lane.b32.xlu0 %v884, 48
      %v1010 = vpop.permute.xlu0 %1009
      %1011 = vrot.lane.b32.xlu0 %v885, 48
      %v1012 = vpop.permute.xlu0 %1011
      %1013 = vrot.lane.b32.xlu0 %v886, 48
      %v1014 = vpop.permute.xlu0 %1013
      %1031 = vrot.lane.b32.xlu0 %v887, 64
      %v1032 = vpop.permute.xlu0 %1031
      %1033 = vrot.lane.b32.xlu0 %v888, 64
      %v1034 = vpop.permute.xlu0 %1033
      %1035 = vrot.lane.b32.xlu0 %v889, 64
      %v1036 = vpop.permute.xlu0 %1035
      %1037 = vrot.lane.b32.xlu0 %v890, 64
      %v1038 = vpop.permute.xlu0 %1037
      %1039 = vrot.lane.b32.xlu0 %v891, 64
      %v1040 = vpop.permute.xlu0 %1039
      %1041 = vrot.lane.b32.xlu0 %v892, 64
      %v1042 = vpop.permute.xlu0 %1041
      %1043 = vrot.lane.b32.xlu0 %v893, 64
      %v1044 = vpop.permute.xlu0 %1043
      %1045 = vrot.lane.b32.xlu0 %v894, 64
      %v1046 = vpop.permute.xlu0 %1045
      %1063 = vrot.lane.b32.xlu0 %v895, 80
      %v1064 = vpop.permute.xlu0 %1063
      %1065 = vrot.lane.b32.xlu0 %v896, 80
      %v1066 = vpop.permute.xlu0 %1065
      %1067 = vrot.lane.b32.xlu0 %v897, 80
      %v1068 = vpop.permute.xlu0 %1067
      %1069 = vrot.lane.b32.xlu0 %v898, 80
      %v1070 = vpop.permute.xlu0 %1069
      %1071 = vrot.lane.b32.xlu0 %v899, 80
      %v1072 = vpop.permute.xlu0 %1071
      %1073 = vrot.lane.b32.xlu0 %v900, 80
      %v1074 = vpop.permute.xlu0 %1073
      %1075 = vrot.lane.b32.xlu0 %v901, 80
      %v1076 = vpop.permute.xlu0 %1075
      %1077 = vrot.lane.b32.xlu0 %v902, 80
      %v1078 = vpop.permute.xlu0 %1077
      %1095 = vrot.lane.b32.xlu0 %v903, 96
      %v1096 = vpop.permute.xlu0 %1095
      %1097 = vrot.lane.b32.xlu0 %v904, 96
      %v1098 = vpop.permute.xlu0 %1097
      %1099 = vrot.lane.b32.xlu0 %v905, 96
      %v1100 = vpop.permute.xlu0 %1099
      %1101 = vrot.lane.b32.xlu0 %v906, 96
      %v1102 = vpop.permute.xlu0 %1101
      %1103 = vrot.lane.b32.xlu0 %v907, 96
      %v1104 = vpop.permute.xlu0 %1103
      %1105 = vrot.lane.b32.xlu0 %v908, 96
      %v1106 = vpop.permute.xlu0 %1105
      %1107 = vrot.lane.b32.xlu0 %v909, 96
      %v1108 = vpop.permute.xlu0 %1107
      %1109 = vrot.lane.b32.xlu0 %v910, 96
      %v1110 = vpop.permute.xlu0 %1109
      %1127 = vrot.lane.b32.xlu0 %v911, 112
      %v1128 = vpop.permute.xlu0 %1127
      %1129 = vrot.lane.b32.xlu0 %v912, 112
      %v1130 = vpop.permute.xlu0 %1129
      %1131 = vrot.lane.b32.xlu0 %v913, 112
      %v1132 = vpop.permute.xlu0 %1131
      %1133 = vrot.lane.b32.xlu0 %v914, 112
      %v1134 = vpop.permute.xlu0 %1133
      %1135 = vrot.lane.b32.xlu0 %v915, 112
      %v1136 = vpop.permute.xlu0 %1135
      %1137 = vrot.lane.b32.xlu0 %v916, 112
      %v1138 = vpop.permute.xlu0 %1137
      %1139 = vrot.lane.b32.xlu0 %v917, 112
      %v1140 = vpop.permute.xlu0 %1139
      %1141 = vrot.lane.b32.xlu0 %v918, 112
      %v1142 = vpop.permute.xlu0 %1141
      %v1151 = vsel %vm253, %v855, %v936
      %v1152 = vsel %vm253, %v856, %v938
      %v1153 = vsel %vm253, %v857, %v940
      %v1154 = vsel %vm253, %v858, %v942
      %v1155 = vsel %vm253, %v859, %v944
      %v1156 = vsel %vm253, %v860, %v946
      %v1157 = vsel %vm253, %v861, %v948
      %v1158 = vsel %vm253, %v862, %v950
      %v1159 = vsel %vm611, %v1151, %v968
      %v1160 = vsel %vm611, %v1152, %v970
      %v1161 = vsel %vm611, %v1153, %v972
      %v1162 = vsel %vm611, %v1154, %v974
      %v1163 = vsel %vm611, %v1155, %v976
      %v1164 = vsel %vm611, %v1156, %v978
      %v1165 = vsel %vm611, %v1157, %v980
      %v1166 = vsel %vm611, %v1158, %v982
      %v1167 = vsel %vm620, %v1159, %v1000
      %v1168 = vsel %vm620, %v1160, %v1002
      %v1169 = vsel %vm620, %v1161, %v1004
      %v1170 = vsel %vm620, %v1162, %v1006
      %v1171 = vsel %vm620, %v1163, %v1008
      %v1172 = vsel %vm620, %v1164, %v1010
      %v1173 = vsel %vm620, %v1165, %v1012
      %v1174 = vsel %vm620, %v1166, %v1014
      %v1175 = vsel %vm629, %v1167, %v1032
      %v1176 = vsel %vm629, %v1168, %v1034
      %v1177 = vsel %vm629, %v1169, %v1036
      %v1178 = vsel %vm629, %v1170, %v1038
      %v1179 = vsel %vm629, %v1171, %v1040
      %v1180 = vsel %vm629, %v1172, %v1042
      %v1181 = vsel %vm629, %v1173, %v1044
      %v1182 = vsel %vm629, %v1174, %v1046
      %v1183 = vsel %vm638, %v1175, %v1064
      %v1184 = vsel %vm638, %v1176, %v1066
      %v1185 = vsel %vm638, %v1177, %v1068
      %v1186 = vsel %vm638, %v1178, %v1070
      %v1187 = vsel %vm638, %v1179, %v1072
      %v1188 = vsel %vm638, %v1180, %v1074
      %v1189 = vsel %vm638, %v1181, %v1076
      %v1190 = vsel %vm638, %v1182, %v1078
      %v1191 = vsel %vm647, %v1183, %v1096
      %v1192 = vsel %vm647, %v1184, %v1098
      %v1193 = vsel %vm647, %v1185, %v1100
      %v1194 = vsel %vm647, %v1186, %v1102
      %v1195 = vsel %vm647, %v1187, %v1104
      %v1196 = vsel %vm647, %v1188, %v1106
      %v1197 = vsel %vm647, %v1189, %v1108
      %v1198 = vsel %vm647, %v1190, %v1110
      %v1199 = vsel %vm656, %v1191, %v1128
      %v1200 = vsel %vm656, %v1192, %v1130
      %v1201 = vsel %vm656, %v1193, %v1132
      %v1202 = vsel %vm656, %v1194, %v1134
      %v1203 = vsel %vm656, %v1195, %v1136
      %v1204 = vsel %vm656, %v1196, %v1138
      %v1205 = vsel %vm656, %v1197, %v1140
      %v1206 = vsel %vm656, %v1198, %v1142
      %v1207 = vpack.c.bf16 %v1200, %v1199
      %v1208 = vpack.c.bf16 %v920, %v919
      %v1209 = vpack.c.bf16 %v1202, %v1201
      %v1210 = vpack.c.bf16 %v922, %v921
      %v1211 = vpack.c.bf16 %v1204, %v1203
      %v1212 = vpack.c.bf16 %v924, %v923
      %v1213 = vpack.c.bf16 %v1206, %v1205
      %v1214 = vpack.c.bf16 %v926, %v925
      %s1215 = scalar_lea.vmem %s1, 72
      %v1216 = vld [vmem:[%s1215] sm:$0xf]
      %v1217 = vld [vmem:[%s1215 + $0x4] sm:$0xf]
      %v1218 = vld [vmem:[%s1215 + $0x8] sm:$0xf]
      %v1219 = vld [vmem:[%s1215 + $0xc] sm:$0xf]
      %v1220 = vld [vmem:[%s1215 + $0x10] sm:$0xf]
      %v1221 = vld [vmem:[%s1215 + $0x14] sm:$0xf]
      %v1222 = vld [vmem:[%s1215 + $0x18] sm:$0xf]
      %v1223 = vld [vmem:[%s1215 + $0x1c] sm:$0xf]
      %v1224 = vld [vmem:[%s1215 + $0x20] sm:$0xf]
      %v1225 = vld [vmem:[%s1215 + $0x24] sm:$0xf]
      %v1226 = vld [vmem:[%s1215 + $0x28] sm:$0xf]
      %v1227 = vld [vmem:[%s1215 + $0x2c] sm:$0xf]
      %v1228 = vld [vmem:[%s1215 + $0x30] sm:$0xf]
      %v1229 = vld [vmem:[%s1215 + $0x34] sm:$0xf]
      %v1230 = vld [vmem:[%s1215 + $0x38] sm:$0xf]
      %v1231 = vld [vmem:[%s1215 + $0x3c] sm:$0xf]
      %v1232 = vld [vmem:[%s1215 + $0x40] sm:$0xf]
      %v1233 = vld [vmem:[%s1215 + $0x44] sm:$0xf]
      %s1234 = scalar_lea.vmem %s2, 1
      %v1235 = vld [vmem:[%s1234] sm:$0x1]
      %v1237 = vperm.slane %v1235, 0
      %v1257 = vunpack.c.l.b16 %v1216
      %v1258 = vunpack.c.l.b16 %v1217
      %v1259 = vunpack.c.l.b16 %v1218
      %v1260 = vunpack.c.l.b16 %v1219
      %v1261 = vunpack.c.l.b16 %v1220
      %v1262 = vunpack.c.l.b16 %v1221
      %v1263 = vunpack.c.l.b16 %v1222
      %v1264 = vunpack.c.l.b16 %v1223
      %v1265 = vunpack.c.l.b16 %v1224
      %v1266 = vunpack.c.l.b16 %v1225
      %v1267 = vunpack.c.l.b16 %v1226
      %v1268 = vunpack.c.l.b16 %v1227
      %v1269 = vunpack.c.l.b16 %v1228
      %v1270 = vunpack.c.l.b16 %v1229
      %v1271 = vunpack.c.l.b16 %v1230
      %v1272 = vunpack.c.l.b16 %v1231
      %v1273 = vunpack.c.l.b16 %v1232
      %v1274 = vunpack.c.l.b16 %v1233
      %v1275 = vpack.c.b16 %v1258, %v1257
      %v1276 = vpack.c.b16 %v1260, %v1259
      %v1277 = vpack.c.b16 %v1262, %v1261
      %v1278 = vpack.c.b16 %v1264, %v1263
      %v1279 = vpack.c.b16 %v1266, %v1265
      %v1280 = vpack.c.b16 %v1268, %v1267
      %v1281 = vpack.c.b16 %v1270, %v1269
      %v1282 = vpack.c.b16 %v1272, %v1271
      %v1283 = vpack.c.b16 %v1274, %v1273
      %v1294 = vsel %vm253, %v1208, 0
      %v1297 = vsel %vm253, %v1210, 0
      %v1300 = vsel %vm253, %v1212, 0
      %v1303 = vsel %vm253, %v1214, 0
      %1305 = vmatpush.bf16.msra.mxu0 %v1282
      %1306 = vmatpush.bf16.msra.mxu0 %v1281
      %1307 = vmatpush.bf16.msra.mxu0 %v1280
      %1308 = vmatpush.bf16.msra.mxu0 %v1279
      %1309 = vmatpush.bf16.msra.mxu0 %v1278
      %1310 = vmatpush.bf16.msra.mxu0 %v1277
      %1311 = vmatpush.bf16.msra.mxu0 %v1276
      %1312 = vmatpush.bf16.msra.mxu0 %v1275
      %1313 = vmatmul.bf16.gmra.mxu0 %v1207
      %v1314 = vpop.f32.mrf.mxu0
      %v1315 = vadd.f32 %v1237, %v1314
      %v1316 = vpop.f32.mrf.mxu0
      %v1317 = vadd.f32 %v1237, %v1316
      %1318 = vmatmul.bf16.gmra.mxu0 %v1209
      %v1319 = vpop.f32.mrf.mxu0
      %v1320 = vadd.f32 %v1237, %v1319
      %v1321 = vpop.f32.mrf.mxu0
      %v1322 = vadd.f32 %v1237, %v1321
      %1323 = vmatmul.bf16.gmra.mxu0 %v1211
      %v1324 = vpop.f32.mrf.mxu0
      %v1325 = vadd.f32 %v1237, %v1324
      %v1326 = vpop.f32.mrf.mxu0
      %v1327 = vadd.f32 %v1237, %v1326
      %1328 = vmatmul.bf16.gmra.mxu0 %v1213
      %v1329 = vpop.f32.mrf.mxu0
      %v1330 = vadd.f32 %v1237, %v1329
      %v1331 = vpop.f32.mrf.mxu0
      %v1332 = vadd.f32 %v1237, %v1331
      %1333 = vdwg.mxu0
      %1334 = vmatpush.bf16.msra.mxu0 0
      %1335 = vmatpush.bf16.msra.mxu0 0
      %1336 = vmatpush.bf16.msra.mxu0 0
      %1337 = vmatpush.bf16.msra.mxu0 0
      %1338 = vmatpush.bf16.msra.mxu0 0
      %1339 = vmatpush.bf16.msra.mxu0 0
      %1340 = vmatpush.bf16.msra.mxu0 0
      %1341 = vmatpush.bf16.msra.mxu0 %v1283
      %1342 = vmatmul.bf16.gmra.mxu0 %v1294
      %v1343 = vpop.f32.mrf.mxu0
      %v1344 = vadd.f32 %v1315, %v1343
      %v1345 = vpop.f32.mrf.mxu0
      %v1346 = vadd.f32 %v1317, %v1345
      %1347 = vmatmul.bf16.gmra.mxu0 %v1297
      %v1348 = vpop.f32.mrf.mxu0
      %v1349 = vadd.f32 %v1320, %v1348
      %v1350 = vpop.f32.mrf.mxu0
      %v1351 = vadd.f32 %v1322, %v1350
      %1352 = vmatmul.bf16.gmra.mxu0 %v1300
      %v1353 = vpop.f32.mrf.mxu0
      %v1354 = vadd.f32 %v1325, %v1353
      %v1355 = vpop.f32.mrf.mxu0
      %v1356 = vadd.f32 %v1327, %v1355
      %1357 = vmatmul.bf16.gmra.mxu0 %v1303
      %v1358 = vpop.f32.mrf.mxu0
      %v1359 = vadd.f32 %v1330, %v1358
      %v1360 = vpop.f32.mrf.mxu0
      %v1361 = vadd.f32 %v1332, %v1360
      %1362 = vdwg.mxu0
      %vm1363 = vcmp.ge.f32.partialorder %v1344, 0.0
      %vm1364 = vcmp.ge.f32.partialorder %v1346, 0.0
      %vm1365 = vcmp.ge.f32.partialorder %v1349, 0.0
      %vm1366 = vcmp.ge.f32.partialorder %v1351, 0.0
      %vm1367 = vcmp.ge.f32.partialorder %v1354, 0.0
      %vm1368 = vcmp.ge.f32.partialorder %v1356, 0.0
      %vm1369 = vcmp.ge.f32.partialorder %v1359, 0.0
      %vm1370 = vcmp.ge.f32.partialorder %v1361, 0.0
      %s1371 = scalar_lea.vmem %s3, 1
      %v1372 = vld [vmem:[%s1371] sm:$0x1]
      %v1374 = vperm.slane %v1372, 0
      %v1376 = vmul.f32 %v1344, %v1374
      %v1377 = vmul.f32 %v1346, %v1374
      %v1378 = vmul.f32 %v1349, %v1374
      %v1379 = vmul.f32 %v1351, %v1374
      %v1380 = vmul.f32 %v1354, %v1374
      %v1381 = vmul.f32 %v1356, %v1374
      %v1382 = vmul.f32 %v1359, %v1374
      %v1383 = vmul.f32 %v1361, %v1374
      %v1384 = vsel %vm1363, %v1344, %v1376
      %v1385 = vsel %vm1364, %v1346, %v1377
      %v1386 = vsel %vm1365, %v1349, %v1378
      %v1387 = vsel %vm1366, %v1351, %v1379
      %v1388 = vsel %vm1367, %v1354, %v1380
      %v1389 = vsel %vm1368, %v1356, %v1381
      %v1390 = vsel %vm1369, %v1359, %v1382
      %v1391 = vsel %vm1370, %v1361, %v1383
      %1392 = vst.msk [vmem:[%s297 + $0x1] sm:$0xff] %vm253, %v1384
      %1393 = vst.msk [vmem:[%s297 + $0x11] sm:$0xff] %vm253, %v1385
      %1394 = vst.msk [vmem:[%s297 + $0x21] sm:$0xff] %vm253, %v1386
      %1395 = vst.msk [vmem:[%s297 + $0x31] sm:$0xff] %vm253, %v1387
      %1396 = vst.msk [vmem:[%s297 + $0x41] sm:$0xff] %vm253, %v1388
      %1397 = vst.msk [vmem:[%s297 + $0x51] sm:$0xff] %vm253, %v1389
      %1398 = vst.msk [vmem:[%s297 + $0x61] sm:$0xff] %vm253, %v1390
      %1399 = vst.msk [vmem:[%s297 + $0x71] sm:$0xff] %vm253, %v1391
      %v1400 = vld [vmem:[#allocation2] sm:$0xff]
      %v1401 = vld [vmem:[#allocation2 + $0x10] sm:$0xff]
      %v1402 = vld [vmem:[#allocation2 + $0x20] sm:$0xff]
      %v1403 = vld [vmem:[#allocation2 + $0x30] sm:$0xff]
      %v1404 = vld [vmem:[#allocation2 + $0x40] sm:$0xff]
      %v1405 = vld [vmem:[#allocation2 + $0x50] sm:$0xff]
      %v1406 = vld [vmem:[#allocation2 + $0x60] sm:$0xff]
      %v1407 = vld [vmem:[#allocation2 + $0x70] sm:$0xff]
      %v1408 = vld [vmem:[#allocation2 + $0x1] sm:$0xff]
      %v1409 = vld [vmem:[#allocation2 + $0x11] sm:$0xff]
      %v1410 = vld [vmem:[#allocation2 + $0x21] sm:$0xff]
      %v1411 = vld [vmem:[#allocation2 + $0x31] sm:$0xff]
      %v1412 = vld [vmem:[#allocation2 + $0x41] sm:$0xff]
      %v1413 = vld [vmem:[#allocation2 + $0x51] sm:$0xff]
      %v1414 = vld [vmem:[#allocation2 + $0x61] sm:$0xff]
      %v1415 = vld [vmem:[#allocation2 + $0x71] sm:$0xff]
      %v1416 = vld [vmem:[#allocation2 + $0x2] sm:$0xff]
      %v1417 = vld [vmem:[#allocation2 + $0x12] sm:$0xff]
      %v1418 = vld [vmem:[#allocation2 + $0x22] sm:$0xff]
      %v1419 = vld [vmem:[#allocation2 + $0x32] sm:$0xff]
      %v1420 = vld [vmem:[#allocation2 + $0x42] sm:$0xff]
      %v1421 = vld [vmem:[#allocation2 + $0x52] sm:$0xff]
      %v1422 = vld [vmem:[#allocation2 + $0x62] sm:$0xff]
      %v1423 = vld [vmem:[#allocation2 + $0x72] sm:$0xff]
      %v1424 = vld [vmem:[%s297] sm:$0xff]
      %v1425 = vld [vmem:[%s297 + $0x10] sm:$0xff]
      %v1426 = vld [vmem:[%s297 + $0x20] sm:$0xff]
      %v1427 = vld [vmem:[%s297 + $0x30] sm:$0xff]
      %v1428 = vld [vmem:[%s297 + $0x40] sm:$0xff]
      %v1429 = vld [vmem:[%s297 + $0x50] sm:$0xff]
      %v1430 = vld [vmem:[%s297 + $0x60] sm:$0xff]
      %v1431 = vld [vmem:[%s297 + $0x70] sm:$0xff]
      %v1432 = vld [vmem:[%s297 + $0x1] sm:$0xff]
      %v1433 = vld [vmem:[%s297 + $0x11] sm:$0xff]
      %v1434 = vld [vmem:[%s297 + $0x21] sm:$0xff]
      %v1435 = vld [vmem:[%s297 + $0x31] sm:$0xff]
      %v1436 = vld [vmem:[%s297 + $0x41] sm:$0xff]
      %v1437 = vld [vmem:[%s297 + $0x51] sm:$0xff]
      %v1438 = vld [vmem:[%s297 + $0x61] sm:$0xff]
      %v1439 = vld [vmem:[%s297 + $0x71] sm:$0xff]
      %v1440 = vld [vmem:[%s297 + $0x2] sm:$0xff]
      %v1441 = vld [vmem:[%s297 + $0x12] sm:$0xff]
      %v1442 = vld [vmem:[%s297 + $0x22] sm:$0xff]
      %v1443 = vld [vmem:[%s297 + $0x32] sm:$0xff]
      %v1444 = vld [vmem:[%s297 + $0x42] sm:$0xff]
      %v1445 = vld [vmem:[%s297 + $0x52] sm:$0xff]
      %v1446 = vld [vmem:[%s297 + $0x62] sm:$0xff]
      %v1447 = vld [vmem:[%s297 + $0x72] sm:$0xff]
      %v1448 = vld [vmem:[%s354] sm:$0xff]
      %v1449 = vld [vmem:[%s354 + $0x10] sm:$0xff]
      %v1450 = vld [vmem:[%s354 + $0x20] sm:$0xff]
      %v1451 = vld [vmem:[%s354 + $0x30] sm:$0xff]
      %v1452 = vld [vmem:[%s354 + $0x40] sm:$0xff]
      %v1453 = vld [vmem:[%s354 + $0x50] sm:$0xff]
      %v1454 = vld [vmem:[%s354 + $0x60] sm:$0xff]
      %v1455 = vld [vmem:[%s354 + $0x70] sm:$0xff]
      %v1456 = vld [vmem:[%s354 + $0x1] sm:$0xff]
      %v1457 = vld [vmem:[%s354 + $0x11] sm:$0xff]
      %v1458 = vld [vmem:[%s354 + $0x21] sm:$0xff]
      %v1459 = vld [vmem:[%s354 + $0x31] sm:$0xff]
      %v1460 = vld [vmem:[%s354 + $0x41] sm:$0xff]
      %v1461 = vld [vmem:[%s354 + $0x51] sm:$0xff]
      %v1462 = vld [vmem:[%s354 + $0x61] sm:$0xff]
      %v1463 = vld [vmem:[%s354 + $0x71] sm:$0xff]
      %v1464 = vld [vmem:[%s354 + $0x2] sm:$0xff]
      %v1465 = vld [vmem:[%s354 + $0x12] sm:$0xff]
      %v1466 = vld [vmem:[%s354 + $0x22] sm:$0xff]
      %v1467 = vld [vmem:[%s354 + $0x32] sm:$0xff]
      %v1468 = vld [vmem:[%s354 + $0x42] sm:$0xff]
      %v1469 = vld [vmem:[%s354 + $0x52] sm:$0xff]
      %v1470 = vld [vmem:[%s354 + $0x62] sm:$0xff]
      %v1471 = vld [vmem:[%s354 + $0x72] sm:$0xff]
      %1480 = vrot.lane.b32.xlu0 %v1408, 16
      %v1481 = vpop.permute.xlu0 %1480
      %1482 = vrot.lane.b32.xlu0 %v1409, 16
      %v1483 = vpop.permute.xlu0 %1482
      %1484 = vrot.lane.b32.xlu0 %v1410, 16
      %v1485 = vpop.permute.xlu0 %1484
      %1486 = vrot.lane.b32.xlu0 %v1411, 16
      %v1487 = vpop.permute.xlu0 %1486
      %1488 = vrot.lane.b32.xlu0 %v1412, 16
      %v1489 = vpop.permute.xlu0 %1488
      %1490 = vrot.lane.b32.xlu0 %v1413, 16
      %v1491 = vpop.permute.xlu0 %1490
      %1492 = vrot.lane.b32.xlu0 %v1414, 16
      %v1493 = vpop.permute.xlu0 %1492
      %1494 = vrot.lane.b32.xlu0 %v1415, 16
      %v1495 = vpop.permute.xlu0 %1494
      %1512 = vrot.lane.b32.xlu0 %v1416, 32
      %v1513 = vpop.permute.xlu0 %1512
      %1514 = vrot.lane.b32.xlu0 %v1417, 32
      %v1515 = vpop.permute.xlu0 %1514
      %1516 = vrot.lane.b32.xlu0 %v1418, 32
      %v1517 = vpop.permute.xlu0 %1516
      %1518 = vrot.lane.b32.xlu0 %v1419, 32
      %v1519 = vpop.permute.xlu0 %1518
      %1520 = vrot.lane.b32.xlu0 %v1420, 32
      %v1521 = vpop.permute.xlu0 %1520
      %1522 = vrot.lane.b32.xlu0 %v1421, 32
      %v1523 = vpop.permute.xlu0 %1522
      %1524 = vrot.lane.b32.xlu0 %v1422, 32
      %v1525 = vpop.permute.xlu0 %1524
      %1526 = vrot.lane.b32.xlu0 %v1423, 32
      %v1527 = vpop.permute.xlu0 %1526
      %1544 = vrot.lane.b32.xlu0 %v1424, 48
      %v1545 = vpop.permute.xlu0 %1544
      %1546 = vrot.lane.b32.xlu0 %v1425, 48
      %v1547 = vpop.permute.xlu0 %1546
      %1548 = vrot.lane.b32.xlu0 %v1426, 48
      %v1549 = vpop.permute.xlu0 %1548
      %1550 = vrot.lane.b32.xlu0 %v1427, 48
      %v1551 = vpop.permute.xlu0 %1550
      %1552 = vrot.lane.b32.xlu0 %v1428, 48
      %v1553 = vpop.permute.xlu0 %1552
      %1554 = vrot.lane.b32.xlu0 %v1429, 48
      %v1555 = vpop.permute.xlu0 %1554
      %1556 = vrot.lane.b32.xlu0 %v1430, 48
      %v1557 = vpop.permute.xlu0 %1556
      %1558 = vrot.lane.b32.xlu0 %v1431, 48
      %v1559 = vpop.permute.xlu0 %1558
      %1576 = vrot.lane.b32.xlu0 %v1432, 64
      %v1577 = vpop.permute.xlu0 %1576
      %1578 = vrot.lane.b32.xlu0 %v1433, 64
      %v1579 = vpop.permute.xlu0 %1578
      %1580 = vrot.lane.b32.xlu0 %v1434, 64
      %v1581 = vpop.permute.xlu0 %1580
      %1582 = vrot.lane.b32.xlu0 %v1435, 64
      %v1583 = vpop.permute.xlu0 %1582
      %1584 = vrot.lane.b32.xlu0 %v1436, 64
      %v1585 = vpop.permute.xlu0 %1584
      %1586 = vrot.lane.b32.xlu0 %v1437, 64
      %v1587 = vpop.permute.xlu0 %1586
      %1588 = vrot.lane.b32.xlu0 %v1438, 64
      %v1589 = vpop.permute.xlu0 %1588
      %1590 = vrot.lane.b32.xlu0 %v1439, 64
      %v1591 = vpop.permute.xlu0 %1590
      %1608 = vrot.lane.b32.xlu0 %v1440, 80
      %v1609 = vpop.permute.xlu0 %1608
      %1610 = vrot.lane.b32.xlu0 %v1441, 80
      %v1611 = vpop.permute.xlu0 %1610
      %1612 = vrot.lane.b32.xlu0 %v1442, 80
      %v1613 = vpop.permute.xlu0 %1612
      %1614 = vrot.lane.b32.xlu0 %v1443, 80
      %v1615 = vpop.permute.xlu0 %1614
      %1616 = vrot.lane.b32.xlu0 %v1444, 80
      %v1617 = vpop.permute.xlu0 %1616
      %1618 = vrot.lane.b32.xlu0 %v1445, 80
      %v1619 = vpop.permute.xlu0 %1618
      %1620 = vrot.lane.b32.xlu0 %v1446, 80
      %v1621 = vpop.permute.xlu0 %1620
      %1622 = vrot.lane.b32.xlu0 %v1447, 80
      %v1623 = vpop.permute.xlu0 %1622
      %1640 = vrot.lane.b32.xlu0 %v1448, 96
      %v1641 = vpop.permute.xlu0 %1640
      %1642 = vrot.lane.b32.xlu0 %v1449, 96
      %v1643 = vpop.permute.xlu0 %1642
      %1644 = vrot.lane.b32.xlu0 %v1450, 96
      %v1645 = vpop.permute.xlu0 %1644
      %1646 = vrot.lane.b32.xlu0 %v1451, 96
      %v1647 = vpop.permute.xlu0 %1646
      %1648 = vrot.lane.b32.xlu0 %v1452, 96
      %v1649 = vpop.permute.xlu0 %1648
      %1650 = vrot.lane.b32.xlu0 %v1453, 96
      %v1651 = vpop.permute.xlu0 %1650
      %1652 = vrot.lane.b32.xlu0 %v1454, 96
      %v1653 = vpop.permute.xlu0 %1652
      %1654 = vrot.lane.b32.xlu0 %v1455, 96
      %v1655 = vpop.permute.xlu0 %1654
      %1672 = vrot.lane.b32.xlu0 %v1456, 112
      %v1673 = vpop.permute.xlu0 %1672
      %1674 = vrot.lane.b32.xlu0 %v1457, 112
      %v1675 = vpop.permute.xlu0 %1674
      %1676 = vrot.lane.b32.xlu0 %v1458, 112
      %v1677 = vpop.permute.xlu0 %1676
      %1678 = vrot.lane.b32.xlu0 %v1459, 112
      %v1679 = vpop.permute.xlu0 %1678
      %1680 = vrot.lane.b32.xlu0 %v1460, 112
      %v1681 = vpop.permute.xlu0 %1680
      %1682 = vrot.lane.b32.xlu0 %v1461, 112
      %v1683 = vpop.permute.xlu0 %1682
      %1684 = vrot.lane.b32.xlu0 %v1462, 112
      %v1685 = vpop.permute.xlu0 %1684
      %1686 = vrot.lane.b32.xlu0 %v1463, 112
      %v1687 = vpop.permute.xlu0 %1686
      %v1696 = vsel %vm253, %v1400, %v1481
      %v1697 = vsel %vm253, %v1401, %v1483
      %v1698 = vsel %vm253, %v1402, %v1485
      %v1699 = vsel %vm253, %v1403, %v1487
      %v1700 = vsel %vm253, %v1404, %v1489
      %v1701 = vsel %vm253, %v1405, %v1491
      %v1702 = vsel %vm253, %v1406, %v1493
      %v1703 = vsel %vm253, %v1407, %v1495
      %v1704 = vsel %vm611, %v1696, %v1513
      %v1705 = vsel %vm611, %v1697, %v1515
      %v1706 = vsel %vm611, %v1698, %v1517
      %v1707 = vsel %vm611, %v1699, %v1519
      %v1708 = vsel %vm611, %v1700, %v1521
      %v1709 = vsel %vm611, %v1701, %v1523
      %v1710 = vsel %vm611, %v1702, %v1525
      %v1711 = vsel %vm611, %v1703, %v1527
      %v1712 = vsel %vm620, %v1704, %v1545
      %v1713 = vsel %vm620, %v1705, %v1547
      %v1714 = vsel %vm620, %v1706, %v1549
      %v1715 = vsel %vm620, %v1707, %v1551
      %v1716 = vsel %vm620, %v1708, %v1553
      %v1717 = vsel %vm620, %v1709, %v1555
      %v1718 = vsel %vm620, %v1710, %v1557
      %v1719 = vsel %vm620, %v1711, %v1559
      %v1720 = vsel %vm629, %v1712, %v1577
      %v1721 = vsel %vm629, %v1713, %v1579
      %v1722 = vsel %vm629, %v1714, %v1581
      %v1723 = vsel %vm629, %v1715, %v1583
      %v1724 = vsel %vm629, %v1716, %v1585
      %v1725 = vsel %vm629, %v1717, %v1587
      %v1726 = vsel %vm629, %v1718, %v1589
      %v1727 = vsel %vm629, %v1719, %v1591
      %v1728 = vsel %vm638, %v1720, %v1609
      %v1729 = vsel %vm638, %v1721, %v1611
      %v1730 = vsel %vm638, %v1722, %v1613
      %v1731 = vsel %vm638, %v1723, %v1615
      %v1732 = vsel %vm638, %v1724, %v1617
      %v1733 = vsel %vm638, %v1725, %v1619
      %v1734 = vsel %vm638, %v1726, %v1621
      %v1735 = vsel %vm638, %v1727, %v1623
      %v1736 = vsel %vm647, %v1728, %v1641
      %v1737 = vsel %vm647, %v1729, %v1643
      %v1738 = vsel %vm647, %v1730, %v1645
      %v1739 = vsel %vm647, %v1731, %v1647
      %v1740 = vsel %vm647, %v1732, %v1649
      %v1741 = vsel %vm647, %v1733, %v1651
      %v1742 = vsel %vm647, %v1734, %v1653
      %v1743 = vsel %vm647, %v1735, %v1655
      %v1744 = vsel %vm656, %v1736, %v1673
      %v1745 = vsel %vm656, %v1737, %v1675
      %v1746 = vsel %vm656, %v1738, %v1677
      %v1747 = vsel %vm656, %v1739, %v1679
      %v1748 = vsel %vm656, %v1740, %v1681
      %v1749 = vsel %vm656, %v1741, %v1683
      %v1750 = vsel %vm656, %v1742, %v1685
      %v1751 = vsel %vm656, %v1743, %v1687
      %v1752 = vpack.c.bf16 %v1745, %v1744
      %v1753 = vpack.c.bf16 %v1465, %v1464
      %v1754 = vpack.c.bf16 %v1747, %v1746
      %v1755 = vpack.c.bf16 %v1467, %v1466
      %v1756 = vpack.c.bf16 %v1749, %v1748
      %v1757 = vpack.c.bf16 %v1469, %v1468
      %v1758 = vpack.c.bf16 %v1751, %v1750
      %v1759 = vpack.c.bf16 %v1471, %v1470
      %s1760 = scalar_lea.vmem %s1, 144
      %v1761 = vld [vmem:[%s1760] sm:$0xf]
      %v1762 = vld [vmem:[%s1760 + $0x4] sm:$0xf]
      %v1763 = vld [vmem:[%s1760 + $0x8] sm:$0xf]
      %v1764 = vld [vmem:[%s1760 + $0xc] sm:$0xf]
      %v1765 = vld [vmem:[%s1760 + $0x10] sm:$0xf]
      %v1766 = vld [vmem:[%s1760 + $0x14] sm:$0xf]
      %v1767 = vld [vmem:[%s1760 + $0x18] sm:$0xf]
      %v1768 = vld [vmem:[%s1760 + $0x1c] sm:$0xf]
      %v1769 = vld [vmem:[%s1760 + $0x20] sm:$0xf]
      %v1770 = vld [vmem:[%s1760 + $0x24] sm:$0xf]
      %v1771 = vld [vmem:[%s1760 + $0x28] sm:$0xf]
      %v1772 = vld [vmem:[%s1760 + $0x2c] sm:$0xf]
      %v1773 = vld [vmem:[%s1760 + $0x30] sm:$0xf]
      %v1774 = vld [vmem:[%s1760 + $0x34] sm:$0xf]
      %v1775 = vld [vmem:[%s1760 + $0x38] sm:$0xf]
      %v1776 = vld [vmem:[%s1760 + $0x3c] sm:$0xf]
      %v1777 = vld [vmem:[%s1760 + $0x40] sm:$0xf]
      %v1778 = vld [vmem:[%s1760 + $0x44] sm:$0xf]
      %s1779 = scalar_lea.vmem %s2, 2
      %v1780 = vld [vmem:[%s1779] sm:$0x1]
      %v1782 = vperm.slane %v1780, 0
      %v1802 = vunpack.c.l.b16 %v1761
      %v1803 = vunpack.c.l.b16 %v1762
      %v1804 = vunpack.c.l.b16 %v1763
      %v1805 = vunpack.c.l.b16 %v1764
      %v1806 = vunpack.c.l.b16 %v1765
      %v1807 = vunpack.c.l.b16 %v1766
      %v1808 = vunpack.c.l.b16 %v1767
      %v1809 = vunpack.c.l.b16 %v1768
      %v1810 = vunpack.c.l.b16 %v1769
      %v1811 = vunpack.c.l.b16 %v1770
      %v1812 = vunpack.c.l.b16 %v1771
      %v1813 = vunpack.c.l.b16 %v1772
      %v1814 = vunpack.c.l.b16 %v1773
      %v1815 = vunpack.c.l.b16 %v1774
      %v1816 = vunpack.c.l.b16 %v1775
      %v1817 = vunpack.c.l.b16 %v1776
      %v1818 = vunpack.c.l.b16 %v1777
      %v1819 = vunpack.c.l.b16 %v1778
      %v1820 = vpack.c.b16 %v1803, %v1802
      %v1821 = vpack.c.b16 %v1805, %v1804
      %v1822 = vpack.c.b16 %v1807, %v1806
      %v1823 = vpack.c.b16 %v1809, %v1808
      %v1824 = vpack.c.b16 %v1811, %v1810
      %v1825 = vpack.c.b16 %v1813, %v1812
      %v1826 = vpack.c.b16 %v1815, %v1814
      %v1827 = vpack.c.b16 %v1817, %v1816
      %v1828 = vpack.c.b16 %v1819, %v1818
      %v1839 = vsel %vm253, %v1753, 0
      %v1842 = vsel %vm253, %v1755, 0
      %v1845 = vsel %vm253, %v1757, 0
      %v1848 = vsel %vm253, %v1759, 0
      %1850 = vmatpush.bf16.msra.mxu0 %v1827
      %1851 = vmatpush.bf16.msra.mxu0 %v1826
      %1852 = vmatpush.bf16.msra.mxu0 %v1825
      %1853 = vmatpush.bf16.msra.mxu0 %v1824
      %1854 = vmatpush.bf16.msra.mxu0 %v1823
      %1855 = vmatpush.bf16.msra.mxu0 %v1822
      %1856 = vmatpush.bf16.msra.mxu0 %v1821
      %1857 = vmatpush.bf16.msra.mxu0 %v1820
      %1858 = vmatmul.bf16.gmra.mxu0 %v1752
      %v1859 = vpop.f32.mrf.mxu0
      %v1860 = vadd.f32 %v1782, %v1859
      %v1861 = vpop.f32.mrf.mxu0
      %v1862 = vadd.f32 %v1782, %v1861
      %1863 = vmatmul.bf16.gmra.mxu0 %v1754
      %v1864 = vpop.f32.mrf.mxu0
      %v1865 = vadd.f32 %v1782, %v1864
      %v1866 = vpop.f32.mrf.mxu0
      %v1867 = vadd.f32 %v1782, %v1866
      %1868 = vmatmul.bf16.gmra.mxu0 %v1756
      %v1869 = vpop.f32.mrf.mxu0
      %v1870 = vadd.f32 %v1782, %v1869
      %v1871 = vpop.f32.mrf.mxu0
      %v1872 = vadd.f32 %v1782, %v1871
      %1873 = vmatmul.bf16.gmra.mxu0 %v1758
      %v1874 = vpop.f32.mrf.mxu0
      %v1875 = vadd.f32 %v1782, %v1874
      %v1876 = vpop.f32.mrf.mxu0
      %v1877 = vadd.f32 %v1782, %v1876
      %1878 = vdwg.mxu0
      %1879 = vmatpush.bf16.msra.mxu0 0
      %1880 = vmatpush.bf16.msra.mxu0 0
      %1881 = vmatpush.bf16.msra.mxu0 0
      %1882 = vmatpush.bf16.msra.mxu0 0
      %1883 = vmatpush.bf16.msra.mxu0 0
      %1884 = vmatpush.bf16.msra.mxu0 0
      %1885 = vmatpush.bf16.msra.mxu0 0
      %1886 = vmatpush.bf16.msra.mxu0 %v1828
      %1887 = vmatmul.bf16.gmra.mxu0 %v1839
      %v1888 = vpop.f32.mrf.mxu0
      %v1889 = vadd.f32 %v1860, %v1888
      %v1890 = vpop.f32.mrf.mxu0
      %v1891 = vadd.f32 %v1862, %v1890
      %1892 = vmatmul.bf16.gmra.mxu0 %v1842
      %v1893 = vpop.f32.mrf.mxu0
      %v1894 = vadd.f32 %v1865, %v1893
      %v1895 = vpop.f32.mrf.mxu0
      %v1896 = vadd.f32 %v1867, %v1895
      %1897 = vmatmul.bf16.gmra.mxu0 %v1845
      %v1898 = vpop.f32.mrf.mxu0
      %v1899 = vadd.f32 %v1870, %v1898
      %v1900 = vpop.f32.mrf.mxu0
      %v1901 = vadd.f32 %v1872, %v1900
      %1902 = vmatmul.bf16.gmra.mxu0 %v1848
      %v1903 = vpop.f32.mrf.mxu0
      %v1904 = vadd.f32 %v1875, %v1903
      %v1905 = vpop.f32.mrf.mxu0
      %v1906 = vadd.f32 %v1877, %v1905
      %1907 = vdwg.mxu0
      %vm1908 = vcmp.ge.f32.partialorder %v1889, 0.0
      %vm1909 = vcmp.ge.f32.partialorder %v1891, 0.0
      %vm1910 = vcmp.ge.f32.partialorder %v1894, 0.0
      %vm1911 = vcmp.ge.f32.partialorder %v1896, 0.0
      %vm1912 = vcmp.ge.f32.partialorder %v1899, 0.0
      %vm1913 = vcmp.ge.f32.partialorder %v1901, 0.0
      %vm1914 = vcmp.ge.f32.partialorder %v1904, 0.0
      %vm1915 = vcmp.ge.f32.partialorder %v1906, 0.0
      %s1916 = scalar_lea.vmem %s3, 2
      %v1917 = vld [vmem:[%s1916] sm:$0x1]
      %v1919 = vperm.slane %v1917, 0
      %v1921 = vmul.f32 %v1889, %v1919
      %v1922 = vmul.f32 %v1891, %v1919
      %v1923 = vmul.f32 %v1894, %v1919
      %v1924 = vmul.f32 %v1896, %v1919
      %v1925 = vmul.f32 %v1899, %v1919
      %v1926 = vmul.f32 %v1901, %v1919
      %v1927 = vmul.f32 %v1904, %v1919
      %v1928 = vmul.f32 %v1906, %v1919
      %v1929 = vsel %vm1908, %v1889, %v1921
      %v1930 = vsel %vm1909, %v1891, %v1922
      %v1931 = vsel %vm1910, %v1894, %v1923
      %v1932 = vsel %vm1911, %v1896, %v1924
      %v1933 = vsel %vm1912, %v1899, %v1925
      %v1934 = vsel %vm1913, %v1901, %v1926
      %v1935 = vsel %vm1914, %v1904, %v1927
      %v1936 = vsel %vm1915, %v1906, %v1928
      %1937 = vst.msk [vmem:[%s297 + $0x1] sm:$0xff] %vm253, %v1929
      %1938 = vst.msk [vmem:[%s297 + $0x11] sm:$0xff] %vm253, %v1930
      %1939 = vst.msk [vmem:[%s297 + $0x21] sm:$0xff] %vm253, %v1931
      %1940 = vst.msk [vmem:[%s297 + $0x31] sm:$0xff] %vm253, %v1932
      %1941 = vst.msk [vmem:[%s297 + $0x41] sm:$0xff] %vm253, %v1933
      %1942 = vst.msk [vmem:[%s297 + $0x51] sm:$0xff] %vm253, %v1934
      %1943 = vst.msk [vmem:[%s297 + $0x61] sm:$0xff] %vm253, %v1935
      %1944 = vst.msk [vmem:[%s297 + $0x71] sm:$0xff] %vm253, %v1936
      %v1945 = vld [vmem:[#allocation2] sm:$0xff]
      %v1946 = vld [vmem:[#allocation2 + $0x10] sm:$0xff]
      %v1947 = vld [vmem:[#allocation2 + $0x20] sm:$0xff]
      %v1948 = vld [vmem:[#allocation2 + $0x30] sm:$0xff]
      %v1949 = vld [vmem:[#allocation2 + $0x40] sm:$0xff]
      %v1950 = vld [vmem:[#allocation2 + $0x50] sm:$0xff]
      %v1951 = vld [vmem:[#allocation2 + $0x60] sm:$0xff]
      %v1952 = vld [vmem:[#allocation2 + $0x70] sm:$0xff]
      %v1953 = vld [vmem:[#allocation2 + $0x1] sm:$0xff]
      %v1954 = vld [vmem:[#allocation2 + $0x11] sm:$0xff]
      %v1955 = vld [vmem:[#allocation2 + $0x21] sm:$0xff]
      %v1956 = vld [vmem:[#allocation2 + $0x31] sm:$0xff]
      %v1957 = vld [vmem:[#allocation2 + $0x41] sm:$0xff]
      %v1958 = vld [vmem:[#allocation2 + $0x51] sm:$0xff]
      %v1959 = vld [vmem:[#allocation2 + $0x61] sm:$0xff]
      %v1960 = vld [vmem:[#allocation2 + $0x71] sm:$0xff]
      %v1961 = vld [vmem:[#allocation2 + $0x2] sm:$0xff]
      %v1962 = vld [vmem:[#allocation2 + $0x12] sm:$0xff]
      %v1963 = vld [vmem:[#allocation2 + $0x22] sm:$0xff]
      %v1964 = vld [vmem:[#allocation2 + $0x32] sm:$0xff]
      %v1965 = vld [vmem:[#allocation2 + $0x42] sm:$0xff]
      %v1966 = vld [vmem:[#allocation2 + $0x52] sm:$0xff]
      %v1967 = vld [vmem:[#allocation2 + $0x62] sm:$0xff]
      %v1968 = vld [vmem:[#allocation2 + $0x72] sm:$0xff]
      %v1969 = vld [vmem:[%s297] sm:$0xff]
      %v1970 = vld [vmem:[%s297 + $0x10] sm:$0xff]
      %v1971 = vld [vmem:[%s297 + $0x20] sm:$0xff]
      %v1972 = vld [vmem:[%s297 + $0x30] sm:$0xff]
      %v1973 = vld [vmem:[%s297 + $0x40] sm:$0xff]
      %v1974 = vld [vmem:[%s297 + $0x50] sm:$0xff]
      %v1975 = vld [vmem:[%s297 + $0x60] sm:$0xff]
      %v1976 = vld [vmem:[%s297 + $0x70] sm:$0xff]
      %v1977 = vld [vmem:[%s297 + $0x1] sm:$0xff]
      %v1978 = vld [vmem:[%s297 + $0x11] sm:$0xff]
      %v1979 = vld [vmem:[%s297 + $0x21] sm:$0xff]
      %v1980 = vld [vmem:[%s297 + $0x31] sm:$0xff]
      %v1981 = vld [vmem:[%s297 + $0x41] sm:$0xff]
      %v1982 = vld [vmem:[%s297 + $0x51] sm:$0xff]
      %v1983 = vld [vmem:[%s297 + $0x61] sm:$0xff]
      %v1984 = vld [vmem:[%s297 + $0x71] sm:$0xff]
      %v1985 = vld [vmem:[%s297 + $0x2] sm:$0xff]
      %v1986 = vld [vmem:[%s297 + $0x12] sm:$0xff]
      %v1987 = vld [vmem:[%s297 + $0x22] sm:$0xff]
      %v1988 = vld [vmem:[%s297 + $0x32] sm:$0xff]
      %v1989 = vld [vmem:[%s297 + $0x42] sm:$0xff]
      %v1990 = vld [vmem:[%s297 + $0x52] sm:$0xff]
      %v1991 = vld [vmem:[%s297 + $0x62] sm:$0xff]
      %v1992 = vld [vmem:[%s297 + $0x72] sm:$0xff]
      %v1993 = vld [vmem:[%s354] sm:$0xff]
      %v1994 = vld [vmem:[%s354 + $0x10] sm:$0xff]
      %v1995 = vld [vmem:[%s354 + $0x20] sm:$0xff]
      %v1996 = vld [vmem:[%s354 + $0x30] sm:$0xff]
      %v1997 = vld [vmem:[%s354 + $0x40] sm:$0xff]
      %v1998 = vld [vmem:[%s354 + $0x50] sm:$0xff]
      %v1999 = vld [vmem:[%s354 + $0x60] sm:$0xff]
      %v2000 = vld [vmem:[%s354 + $0x70] sm:$0xff]
      %v2001 = vld [vmem:[%s354 + $0x1] sm:$0xff]
      %v2002 = vld [vmem:[%s354 + $0x11] sm:$0xff]
      %v2003 = vld [vmem:[%s354 + $0x21] sm:$0xff]
      %v2004 = vld [vmem:[%s354 + $0x31] sm:$0xff]
      %v2005 = vld [vmem:[%s354 + $0x41] sm:$0xff]
      %v2006 = vld [vmem:[%s354 + $0x51] sm:$0xff]
      %v2007 = vld [vmem:[%s354 + $0x61] sm:$0xff]
      %v2008 = vld [vmem:[%s354 + $0x71] sm:$0xff]
      %v2009 = vld [vmem:[%s354 + $0x2] sm:$0xff]
      %v2010 = vld [vmem:[%s354 + $0x12] sm:$0xff]
      %v2011 = vld [vmem:[%s354 + $0x22] sm:$0xff]
      %v2012 = vld [vmem:[%s354 + $0x32] sm:$0xff]
      %v2013 = vld [vmem:[%s354 + $0x42] sm:$0xff]
      %v2014 = vld [vmem:[%s354 + $0x52] sm:$0xff]
      %v2015 = vld [vmem:[%s354 + $0x62] sm:$0xff]
      %v2016 = vld [vmem:[%s354 + $0x72] sm:$0xff]
      %2025 = vrot.lane.b32.xlu0 %v1953, 16
      %v2026 = vpop.permute.xlu0 %2025
      %2027 = vrot.lane.b32.xlu0 %v1954, 16
      %v2028 = vpop.permute.xlu0 %2027
      %2029 = vrot.lane.b32.xlu0 %v1955, 16
      %v2030 = vpop.permute.xlu0 %2029
      %2031 = vrot.lane.b32.xlu0 %v1956, 16
      %v2032 = vpop.permute.xlu0 %2031
      %2033 = vrot.lane.b32.xlu0 %v1957, 16
      %v2034 = vpop.permute.xlu0 %2033
      %2035 = vrot.lane.b32.xlu0 %v1958, 16
      %v2036 = vpop.permute.xlu0 %2035
      %2037 = vrot.lane.b32.xlu0 %v1959, 16
      %v2038 = vpop.permute.xlu0 %2037
      %2039 = vrot.lane.b32.xlu0 %v1960, 16
      %v2040 = vpop.permute.xlu0 %2039
      %2057 = vrot.lane.b32.xlu0 %v1961, 32
      %v2058 = vpop.permute.xlu0 %2057
      %2059 = vrot.lane.b32.xlu0 %v1962, 32
      %v2060 = vpop.permute.xlu0 %2059
      %2061 = vrot.lane.b32.xlu0 %v1963, 32
      %v2062 = vpop.permute.xlu0 %2061
      %2063 = vrot.lane.b32.xlu0 %v1964, 32
      %v2064 = vpop.permute.xlu0 %2063
      %2065 = vrot.lane.b32.xlu0 %v1965, 32
      %v2066 = vpop.permute.xlu0 %2065
      %2067 = vrot.lane.b32.xlu0 %v1966, 32
      %v2068 = vpop.permute.xlu0 %2067
      %2069 = vrot.lane.b32.xlu0 %v1967, 32
      %v2070 = vpop.permute.xlu0 %2069
      %2071 = vrot.lane.b32.xlu0 %v1968, 32
      %v2072 = vpop.permute.xlu0 %2071
      %2089 = vrot.lane.b32.xlu0 %v1969, 48
      %v2090 = vpop.permute.xlu0 %2089
      %2091 = vrot.lane.b32.xlu0 %v1970, 48
      %v2092 = vpop.permute.xlu0 %2091
      %2093 = vrot.lane.b32.xlu0 %v1971, 48
      %v2094 = vpop.permute.xlu0 %2093
      %2095 = vrot.lane.b32.xlu0 %v1972, 48
      %v2096 = vpop.permute.xlu0 %2095
      %2097 = vrot.lane.b32.xlu0 %v1973, 48
      %v2098 = vpop.permute.xlu0 %2097
      %2099 = vrot.lane.b32.xlu0 %v1974, 48
      %v2100 = vpop.permute.xlu0 %2099
      %2101 = vrot.lane.b32.xlu0 %v1975, 48
      %v2102 = vpop.permute.xlu0 %2101
      %2103 = vrot.lane.b32.xlu0 %v1976, 48
      %v2104 = vpop.permute.xlu0 %2103
      %2121 = vrot.lane.b32.xlu0 %v1977, 64
      %v2122 = vpop.permute.xlu0 %2121
      %2123 = vrot.lane.b32.xlu0 %v1978, 64
      %v2124 = vpop.permute.xlu0 %2123
      %2125 = vrot.lane.b32.xlu0 %v1979, 64
      %v2126 = vpop.permute.xlu0 %2125
      %2127 = vrot.lane.b32.xlu0 %v1980, 64
      %v2128 = vpop.permute.xlu0 %2127
      %2129 = vrot.lane.b32.xlu0 %v1981, 64
      %v2130 = vpop.permute.xlu0 %2129
      %2131 = vrot.lane.b32.xlu0 %v1982, 64
      %v2132 = vpop.permute.xlu0 %2131
      %2133 = vrot.lane.b32.xlu0 %v1983, 64
      %v2134 = vpop.permute.xlu0 %2133
      %2135 = vrot.lane.b32.xlu0 %v1984, 64
      %v2136 = vpop.permute.xlu0 %2135
      %2153 = vrot.lane.b32.xlu0 %v1985, 80
      %v2154 = vpop.permute.xlu0 %2153
      %2155 = vrot.lane.b32.xlu0 %v1986, 80
      %v2156 = vpop.permute.xlu0 %2155
      %2157 = vrot.lane.b32.xlu0 %v1987, 80
      %v2158 = vpop.permute.xlu0 %2157
      %2159 = vrot.lane.b32.xlu0 %v1988, 80
      %v2160 = vpop.permute.xlu0 %2159
      %2161 = vrot.lane.b32.xlu0 %v1989, 80
      %v2162 = vpop.permute.xlu0 %2161
      %2163 = vrot.lane.b32.xlu0 %v1990, 80
      %v2164 = vpop.permute.xlu0 %2163
      %2165 = vrot.lane.b32.xlu0 %v1991, 80
      %v2166 = vpop.permute.xlu0 %2165
      %2167 = vrot.lane.b32.xlu0 %v1992, 80
      %v2168 = vpop.permute.xlu0 %2167
      %2185 = vrot.lane.b32.xlu0 %v1993, 96
      %v2186 = vpop.permute.xlu0 %2185
      %2187 = vrot.lane.b32.xlu0 %v1994, 96
      %v2188 = vpop.permute.xlu0 %2187
      %2189 = vrot.lane.b32.xlu0 %v1995, 96
      %v2190 = vpop.permute.xlu0 %2189
      %2191 = vrot.lane.b32.xlu0 %v1996, 96
      %v2192 = vpop.permute.xlu0 %2191
      %2193 = vrot.lane.b32.xlu0 %v1997, 96
      %v2194 = vpop.permute.xlu0 %2193
      %2195 = vrot.lane.b32.xlu0 %v1998, 96
      %v2196 = vpop.permute.xlu0 %2195
      %2197 = vrot.lane.b32.xlu0 %v1999, 96
      %v2198 = vpop.permute.xlu0 %2197
      %2199 = vrot.lane.b32.xlu0 %v2000, 96
      %v2200 = vpop.permute.xlu0 %2199
      %2217 = vrot.lane.b32.xlu0 %v2001, 112
      %v2218 = vpop.permute.xlu0 %2217
      %2219 = vrot.lane.b32.xlu0 %v2002, 112
      %v2220 = vpop.permute.xlu0 %2219
      %2221 = vrot.lane.b32.xlu0 %v2003, 112
      %v2222 = vpop.permute.xlu0 %2221
      %2223 = vrot.lane.b32.xlu0 %v2004, 112
      %v2224 = vpop.permute.xlu0 %2223
      %2225 = vrot.lane.b32.xlu0 %v2005, 112
      %v2226 = vpop.permute.xlu0 %2225
      %2227 = vrot.lane.b32.xlu0 %v2006, 112
      %v2228 = vpop.permute.xlu0 %2227
      %2229 = vrot.lane.b32.xlu0 %v2007, 112
      %v2230 = vpop.permute.xlu0 %2229
      %2231 = vrot.lane.b32.xlu0 %v2008, 112
      %v2232 = vpop.permute.xlu0 %2231
      %v2241 = vsel %vm253, %v1945, %v2026
      %v2242 = vsel %vm253, %v1946, %v2028
      %v2243 = vsel %vm253, %v1947, %v2030
      %v2244 = vsel %vm253, %v1948, %v2032
      %v2245 = vsel %vm253, %v1949, %v2034
      %v2246 = vsel %vm253, %v1950, %v2036
      %v2247 = vsel %vm253, %v1951, %v2038
      %v2248 = vsel %vm253, %v1952, %v2040
      %v2249 = vsel %vm611, %v2241, %v2058
      %v2250 = vsel %vm611, %v2242, %v2060
      %v2251 = vsel %vm611, %v2243, %v2062
      %v2252 = vsel %vm611, %v2244, %v2064
      %v2253 = vsel %vm611, %v2245, %v2066
      %v2254 = vsel %vm611, %v2246, %v2068
      %v2255 = vsel %vm611, %v2247, %v2070
      %v2256 = vsel %vm611, %v2248, %v2072
      %v2257 = vsel %vm620, %v2249, %v2090
      %v2258 = vsel %vm620, %v2250, %v2092
      %v2259 = vsel %vm620, %v2251, %v2094
      %v2260 = vsel %vm620, %v2252, %v2096
      %v2261 = vsel %vm620, %v2253, %v2098
      %v2262 = vsel %vm620, %v2254, %v2100
      %v2263 = vsel %vm620, %v2255, %v2102
      %v2264 = vsel %vm620, %v2256, %v2104
      %v2265 = vsel %vm629, %v2257, %v2122
      %v2266 = vsel %vm629, %v2258, %v2124
      %v2267 = vsel %vm629, %v2259, %v2126
      %v2268 = vsel %vm629, %v2260, %v2128
      %v2269 = vsel %vm629, %v2261, %v2130
      %v2270 = vsel %vm629, %v2262, %v2132
      %v2271 = vsel %vm629, %v2263, %v2134
      %v2272 = vsel %vm629, %v2264, %v2136
      %v2273 = vsel %vm638, %v2265, %v2154
      %v2274 = vsel %vm638, %v2266, %v2156
      %v2275 = vsel %vm638, %v2267, %v2158
      %v2276 = vsel %vm638, %v2268, %v2160
      %v2277 = vsel %vm638, %v2269, %v2162
      %v2278 = vsel %vm638, %v2270, %v2164
      %v2279 = vsel %vm638, %v2271, %v2166
      %v2280 = vsel %vm638, %v2272, %v2168
      %v2281 = vsel %vm647, %v2273, %v2186
      %v2282 = vsel %vm647, %v2274, %v2188
      %v2283 = vsel %vm647, %v2275, %v2190
      %v2284 = vsel %vm647, %v2276, %v2192
      %v2285 = vsel %vm647, %v2277, %v2194
      %v2286 = vsel %vm647, %v2278, %v2196
      %v2287 = vsel %vm647, %v2279, %v2198
      %v2288 = vsel %vm647, %v2280, %v2200
      %v2289 = vsel %vm656, %v2281, %v2218
      %v2290 = vsel %vm656, %v2282, %v2220
      %v2291 = vsel %vm656, %v2283, %v2222
      %v2292 = vsel %vm656, %v2284, %v2224
      %v2293 = vsel %vm656, %v2285, %v2226
      %v2294 = vsel %vm656, %v2286, %v2228
      %v2295 = vsel %vm656, %v2287, %v2230
      %v2296 = vsel %vm656, %v2288, %v2232
      %v2297 = vpack.c.bf16 %v2290, %v2289
      %v2298 = vpack.c.bf16 %v2010, %v2009
      %v2299 = vpack.c.bf16 %v2292, %v2291
      %v2300 = vpack.c.bf16 %v2012, %v2011
      %v2301 = vpack.c.bf16 %v2294, %v2293
      %v2302 = vpack.c.bf16 %v2014, %v2013
      %v2303 = vpack.c.bf16 %v2296, %v2295
      %v2304 = vpack.c.bf16 %v2016, %v2015
      %s2305 = scalar_lea.vmem %s1, 216
      %v2306 = vld [vmem:[%s2305] sm:$0xf]
      %v2307 = vld [vmem:[%s2305 + $0x4] sm:$0xf]
      %v2308 = vld [vmem:[%s2305 + $0x8] sm:$0xf]
      %v2309 = vld [vmem:[%s2305 + $0xc] sm:$0xf]
      %v2310 = vld [vmem:[%s2305 + $0x10] sm:$0xf]
      %v2311 = vld [vmem:[%s2305 + $0x14] sm:$0xf]
      %v2312 = vld [vmem:[%s2305 + $0x18] sm:$0xf]
      %v2313 = vld [vmem:[%s2305 + $0x1c] sm:$0xf]
      %v2314 = vld [vmem:[%s2305 + $0x20] sm:$0xf]
      %v2315 = vld [vmem:[%s2305 + $0x24] sm:$0xf]
      %v2316 = vld [vmem:[%s2305 + $0x28] sm:$0xf]
      %v2317 = vld [vmem:[%s2305 + $0x2c] sm:$0xf]
      %v2318 = vld [vmem:[%s2305 + $0x30] sm:$0xf]
      %v2319 = vld [vmem:[%s2305 + $0x34] sm:$0xf]
      %v2320 = vld [vmem:[%s2305 + $0x38] sm:$0xf]
      %v2321 = vld [vmem:[%s2305 + $0x3c] sm:$0xf]
      %v2322 = vld [vmem:[%s2305 + $0x40] sm:$0xf]
      %v2323 = vld [vmem:[%s2305 + $0x44] sm:$0xf]
      %s2324 = scalar_lea.vmem %s2, 3
      %v2325 = vld [vmem:[%s2324] sm:$0x1]
      %v2327 = vperm.slane %v2325, 0
      %v2347 = vunpack.c.l.b16 %v2306
      %v2348 = vunpack.c.l.b16 %v2307
      %v2349 = vunpack.c.l.b16 %v2308
      %v2350 = vunpack.c.l.b16 %v2309
      %v2351 = vunpack.c.l.b16 %v2310
      %v2352 = vunpack.c.l.b16 %v2311
      %v2353 = vunpack.c.l.b16 %v2312
      %v2354 = vunpack.c.l.b16 %v2313
      %v2355 = vunpack.c.l.b16 %v2314
      %v2356 = vunpack.c.l.b16 %v2315
      %v2357 = vunpack.c.l.b16 %v2316
      %v2358 = vunpack.c.l.b16 %v2317
      %v2359 = vunpack.c.l.b16 %v2318
      %v2360 = vunpack.c.l.b16 %v2319
      %v2361 = vunpack.c.l.b16 %v2320
      %v2362 = vunpack.c.l.b16 %v2321
      %v2363 = vunpack.c.l.b16 %v2322
      %v2364 = vunpack.c.l.b16 %v2323
      %v2365 = vpack.c.b16 %v2348, %v2347
      %v2366 = vpack.c.b16 %v2350, %v2349
      %v2367 = vpack.c.b16 %v2352, %v2351
      %v2368 = vpack.c.b16 %v2354, %v2353
      %v2369 = vpack.c.b16 %v2356, %v2355
      %v2370 = vpack.c.b16 %v2358, %v2357
      %v2371 = vpack.c.b16 %v2360, %v2359
      %v2372 = vpack.c.b16 %v2362, %v2361
      %v2373 = vpack.c.b16 %v2364, %v2363
      %v2384 = vsel %vm253, %v2298, 0
      %v2387 = vsel %vm253, %v2300, 0
      %v2390 = vsel %vm253, %v2302, 0
      %v2393 = vsel %vm253, %v2304, 0
      %2395 = vmatpush.bf16.msra.mxu0 %v2372
      %2396 = vmatpush.bf16.msra.mxu0 %v2371
      %2397 = vmatpush.bf16.msra.mxu0 %v2370
      %2398 = vmatpush.bf16.msra.mxu0 %v2369
      %2399 = vmatpush.bf16.msra.mxu0 %v2368
      %2400 = vmatpush.bf16.msra.mxu0 %v2367
      %2401 = vmatpush.bf16.msra.mxu0 %v2366
      %2402 = vmatpush.bf16.msra.mxu0 %v2365
      %2403 = vmatmul.bf16.gmra.mxu0 %v2297
      %v2404 = vpop.f32.mrf.mxu0
      %v2405 = vadd.f32 %v2327, %v2404
      %v2406 = vpop.f32.mrf.mxu0
      %v2407 = vadd.f32 %v2327, %v2406
      %2408 = vmatmul.bf16.gmra.mxu0 %v2299
      %v2409 = vpop.f32.mrf.mxu0
      %v2410 = vadd.f32 %v2327, %v2409
      %v2411 = vpop.f32.mrf.mxu0
      %v2412 = vadd.f32 %v2327, %v2411
      %2413 = vmatmul.bf16.gmra.mxu0 %v2301
      %v2414 = vpop.f32.mrf.mxu0
      %v2415 = vadd.f32 %v2327, %v2414
      %v2416 = vpop.f32.mrf.mxu0
      %v2417 = vadd.f32 %v2327, %v2416
      %2418 = vmatmul.bf16.gmra.mxu0 %v2303
      %v2419 = vpop.f32.mrf.mxu0
      %v2420 = vadd.f32 %v2327, %v2419
      %v2421 = vpop.f32.mrf.mxu0
      %v2422 = vadd.f32 %v2327, %v2421
      %2423 = vdwg.mxu0
      %2424 = vmatpush.bf16.msra.mxu0 0
      %2425 = vmatpush.bf16.msra.mxu0 0
      %2426 = vmatpush.bf16.msra.mxu0 0
      %2427 = vmatpush.bf16.msra.mxu0 0
      %2428 = vmatpush.bf16.msra.mxu0 0
      %2429 = vmatpush.bf16.msra.mxu0 0
      %2430 = vmatpush.bf16.msra.mxu0 0
      %2431 = vmatpush.bf16.msra.mxu0 %v2373
      %2432 = vmatmul.bf16.gmra.mxu0 %v2384
      %v2433 = vpop.f32.mrf.mxu0
      %v2434 = vadd.f32 %v2405, %v2433
      %v2435 = vpop.f32.mrf.mxu0
      %v2436 = vadd.f32 %v2407, %v2435
      %2437 = vmatmul.bf16.gmra.mxu0 %v2387
      %v2438 = vpop.f32.mrf.mxu0
      %v2439 = vadd.f32 %v2410, %v2438
      %v2440 = vpop.f32.mrf.mxu0
      %v2441 = vadd.f32 %v2412, %v2440
      %2442 = vmatmul.bf16.gmra.mxu0 %v2390
      %v2443 = vpop.f32.mrf.mxu0
      %v2444 = vadd.f32 %v2415, %v2443
      %v2445 = vpop.f32.mrf.mxu0
      %v2446 = vadd.f32 %v2417, %v2445
      %2447 = vmatmul.bf16.gmra.mxu0 %v2393
      %v2448 = vpop.f32.mrf.mxu0
      %v2449 = vadd.f32 %v2420, %v2448
      %v2450 = vpop.f32.mrf.mxu0
      %v2451 = vadd.f32 %v2422, %v2450
      %2452 = vdwg.mxu0
      %vm2453 = vcmp.ge.f32.partialorder %v2434, 0.0
      %vm2454 = vcmp.ge.f32.partialorder %v2436, 0.0
      %vm2455 = vcmp.ge.f32.partialorder %v2439, 0.0
      %vm2456 = vcmp.ge.f32.partialorder %v2441, 0.0
      %vm2457 = vcmp.ge.f32.partialorder %v2444, 0.0
      %vm2458 = vcmp.ge.f32.partialorder %v2446, 0.0
      %vm2459 = vcmp.ge.f32.partialorder %v2449, 0.0
      %vm2460 = vcmp.ge.f32.partialorder %v2451, 0.0
      %s2461 = scalar_lea.vmem %s3, 3
      %v2462 = vld [vmem:[%s2461] sm:$0x1]
      %v2464 = vperm.slane %v2462, 0
      %v2466 = vmul.f32 %v2434, %v2464
      %v2467 = vmul.f32 %v2436, %v2464
      %v2468 = vmul.f32 %v2439, %v2464
      %v2469 = vmul.f32 %v2441, %v2464
      %v2470 = vmul.f32 %v2444, %v2464
      %v2471 = vmul.f32 %v2446, %v2464
      %v2472 = vmul.f32 %v2449, %v2464
      %v2473 = vmul.f32 %v2451, %v2464
      %v2474 = vsel %vm2453, %v2434, %v2466
      %v2475 = vsel %vm2454, %v2436, %v2467
      %v2476 = vsel %vm2455, %v2439, %v2468
      %v2477 = vsel %vm2456, %v2441, %v2469
      %v2478 = vsel %vm2457, %v2444, %v2470
      %v2479 = vsel %vm2458, %v2446, %v2471
      %v2480 = vsel %vm2459, %v2449, %v2472
      %v2481 = vsel %vm2460, %v2451, %v2473
      %2482 = vst.msk [vmem:[%s297 + $0x1] sm:$0xff] %vm253, %v2474
      %2483 = vst.msk [vmem:[%s297 + $0x11] sm:$0xff] %vm253, %v2475
      %2484 = vst.msk [vmem:[%s297 + $0x21] sm:$0xff] %vm253, %v2476
      %2485 = vst.msk [vmem:[%s297 + $0x31] sm:$0xff] %vm253, %v2477
      %2486 = vst.msk [vmem:[%s297 + $0x41] sm:$0xff] %vm253, %v2478
      %2487 = vst.msk [vmem:[%s297 + $0x51] sm:$0xff] %vm253, %v2479
      %2488 = vst.msk [vmem:[%s297 + $0x61] sm:$0xff] %vm253, %v2480
      %2489 = vst.msk [vmem:[%s297 + $0x71] sm:$0xff] %vm253, %v2481
      %v2490 = vld [vmem:[#allocation2] sm:$0xff]
      %v2491 = vld [vmem:[#allocation2 + $0x10] sm:$0xff]
      %v2492 = vld [vmem:[#allocation2 + $0x20] sm:$0xff]
      %v2493 = vld [vmem:[#allocation2 + $0x30] sm:$0xff]
      %v2494 = vld [vmem:[#allocation2 + $0x40] sm:$0xff]
      %v2495 = vld [vmem:[#allocation2 + $0x50] sm:$0xff]
      %v2496 = vld [vmem:[#allocation2 + $0x60] sm:$0xff]
      %v2497 = vld [vmem:[#allocation2 + $0x70] sm:$0xff]
      %v2498 = vld [vmem:[#allocation2 + $0x1] sm:$0xff]
      %v2499 = vld [vmem:[#allocation2 + $0x11] sm:$0xff]
      %v2500 = vld [vmem:[#allocation2 + $0x21] sm:$0xff]
      %v2501 = vld [vmem:[#allocation2 + $0x31] sm:$0xff]
      %v2502 = vld [vmem:[#allocation2 + $0x41] sm:$0xff]
      %v2503 = vld [vmem:[#allocation2 + $0x51] sm:$0xff]
      %v2504 = vld [vmem:[#allocation2 + $0x61] sm:$0xff]
      %v2505 = vld [vmem:[#allocation2 + $0x71] sm:$0xff]
      %v2506 = vld [vmem:[#allocation2 + $0x2] sm:$0xff]
      %v2507 = vld [vmem:[#allocation2 + $0x12] sm:$0xff]
      %v2508 = vld [vmem:[#allocation2 + $0x22] sm:$0xff]
      %v2509 = vld [vmem:[#allocation2 + $0x32] sm:$0xff]
      %v2510 = vld [vmem:[#allocation2 + $0x42] sm:$0xff]
      %v2511 = vld [vmem:[#allocation2 + $0x52] sm:$0xff]
      %v2512 = vld [vmem:[#allocation2 + $0x62] sm:$0xff]
      %v2513 = vld [vmem:[#allocation2 + $0x72] sm:$0xff]
      %v2514 = vld [vmem:[%s297] sm:$0xff]
      %v2515 = vld [vmem:[%s297 + $0x10] sm:$0xff]
      %v2516 = vld [vmem:[%s297 + $0x20] sm:$0xff]
      %v2517 = vld [vmem:[%s297 + $0x30] sm:$0xff]
      %v2518 = vld [vmem:[%s297 + $0x40] sm:$0xff]
      %v2519 = vld [vmem:[%s297 + $0x50] sm:$0xff]
      %v2520 = vld [vmem:[%s297 + $0x60] sm:$0xff]
      %v2521 = vld [vmem:[%s297 + $0x70] sm:$0xff]
      %v2522 = vld [vmem:[%s297 + $0x1] sm:$0xff]
      %v2523 = vld [vmem:[%s297 + $0x11] sm:$0xff]
      %v2524 = vld [vmem:[%s297 + $0x21] sm:$0xff]
      %v2525 = vld [vmem:[%s297 + $0x31] sm:$0xff]
      %v2526 = vld [vmem:[%s297 + $0x41] sm:$0xff]
      %v2527 = vld [vmem:[%s297 + $0x51] sm:$0xff]
      %v2528 = vld [vmem:[%s297 + $0x61] sm:$0xff]
      %v2529 = vld [vmem:[%s297 + $0x71] sm:$0xff]
      %v2530 = vld [vmem:[%s297 + $0x2] sm:$0xff]
      %v2531 = vld [vmem:[%s297 + $0x12] sm:$0xff]
      %v2532 = vld [vmem:[%s297 + $0x22] sm:$0xff]
      %v2533 = vld [vmem:[%s297 + $0x32] sm:$0xff]
      %v2534 = vld [vmem:[%s297 + $0x42] sm:$0xff]
      %v2535 = vld [vmem:[%s297 + $0x52] sm:$0xff]
      %v2536 = vld [vmem:[%s297 + $0x62] sm:$0xff]
      %v2537 = vld [vmem:[%s297 + $0x72] sm:$0xff]
      %v2538 = vld [vmem:[%s354] sm:$0xff]
      %v2539 = vld [vmem:[%s354 + $0x10] sm:$0xff]
      %v2540 = vld [vmem:[%s354 + $0x20] sm:$0xff]
      %v2541 = vld [vmem:[%s354 + $0x30] sm:$0xff]
      %v2542 = vld [vmem:[%s354 + $0x40] sm:$0xff]
      %v2543 = vld [vmem:[%s354 + $0x50] sm:$0xff]
      %v2544 = vld [vmem:[%s354 + $0x60] sm:$0xff]
      %v2545 = vld [vmem:[%s354 + $0x70] sm:$0xff]
      %v2546 = vld [vmem:[%s354 + $0x1] sm:$0xff]
      %v2547 = vld [vmem:[%s354 + $0x11] sm:$0xff]
      %v2548 = vld [vmem:[%s354 + $0x21] sm:$0xff]
      %v2549 = vld [vmem:[%s354 + $0x31] sm:$0xff]
      %v2550 = vld [vmem:[%s354 + $0x41] sm:$0xff]
      %v2551 = vld [vmem:[%s354 + $0x51] sm:$0xff]
      %v2552 = vld [vmem:[%s354 + $0x61] sm:$0xff]
      %v2553 = vld [vmem:[%s354 + $0x71] sm:$0xff]
      %v2554 = vld [vmem:[%s354 + $0x2] sm:$0xff]
      %v2555 = vld [vmem:[%s354 + $0x12] sm:$0xff]
      %v2556 = vld [vmem:[%s354 + $0x22] sm:$0xff]
      %v2557 = vld [vmem:[%s354 + $0x32] sm:$0xff]
      %v2558 = vld [vmem:[%s354 + $0x42] sm:$0xff]
      %v2559 = vld [vmem:[%s354 + $0x52] sm:$0xff]
      %v2560 = vld [vmem:[%s354 + $0x62] sm:$0xff]
      %v2561 = vld [vmem:[%s354 + $0x72] sm:$0xff]
      %2570 = vrot.lane.b32.xlu0 %v2498, 16
      %v2571 = vpop.permute.xlu0 %2570
      %2572 = vrot.lane.b32.xlu0 %v2499, 16
      %v2573 = vpop.permute.xlu0 %2572
      %2574 = vrot.lane.b32.xlu0 %v2500, 16
      %v2575 = vpop.permute.xlu0 %2574
      %2576 = vrot.lane.b32.xlu0 %v2501, 16
      %v2577 = vpop.permute.xlu0 %2576
      %2578 = vrot.lane.b32.xlu0 %v2502, 16
      %v2579 = vpop.permute.xlu0 %2578
      %2580 = vrot.lane.b32.xlu0 %v2503, 16
      %v2581 = vpop.permute.xlu0 %2580
      %2582 = vrot.lane.b32.xlu0 %v2504, 16
      %v2583 = vpop.permute.xlu0 %2582
      %2584 = vrot.lane.b32.xlu0 %v2505, 16
      %v2585 = vpop.permute.xlu0 %2584
      %2602 = vrot.lane.b32.xlu0 %v2506, 32
      %v2603 = vpop.permute.xlu0 %2602
      %2604 = vrot.lane.b32.xlu0 %v2507, 32
      %v2605 = vpop.permute.xlu0 %2604
      %2606 = vrot.lane.b32.xlu0 %v2508, 32
      %v2607 = vpop.permute.xlu0 %2606
      %2608 = vrot.lane.b32.xlu0 %v2509, 32
      %v2609 = vpop.permute.xlu0 %2608
      %2610 = vrot.lane.b32.xlu0 %v2510, 32
      %v2611 = vpop.permute.xlu0 %2610
      %2612 = vrot.lane.b32.xlu0 %v2511, 32
      %v2613 = vpop.permute.xlu0 %2612
      %2614 = vrot.lane.b32.xlu0 %v2512, 32
      %v2615 = vpop.permute.xlu0 %2614
      %2616 = vrot.lane.b32.xlu0 %v2513, 32
      %v2617 = vpop.permute.xlu0 %2616
      %2634 = vrot.lane.b32.xlu0 %v2514, 48
      %v2635 = vpop.permute.xlu0 %2634
      %2636 = vrot.lane.b32.xlu0 %v2515, 48
      %v2637 = vpop.permute.xlu0 %2636
      %2638 = vrot.lane.b32.xlu0 %v2516, 48
      %v2639 = vpop.permute.xlu0 %2638
      %2640 = vrot.lane.b32.xlu0 %v2517, 48
      %v2641 = vpop.permute.xlu0 %2640
      %2642 = vrot.lane.b32.xlu0 %v2518, 48
      %v2643 = vpop.permute.xlu0 %2642
      %2644 = vrot.lane.b32.xlu0 %v2519, 48
      %v2645 = vpop.permute.xlu0 %2644
      %2646 = vrot.lane.b32.xlu0 %v2520, 48
      %v2647 = vpop.permute.xlu0 %2646
      %2648 = vrot.lane.b32.xlu0 %v2521, 48
      %v2649 = vpop.permute.xlu0 %2648
      %2666 = vrot.lane.b32.xlu0 %v2522, 64
      %v2667 = vpop.permute.xlu0 %2666
      %2668 = vrot.lane.b32.xlu0 %v2523, 64
      %v2669 = vpop.permute.xlu0 %2668
      %2670 = vrot.lane.b32.xlu0 %v2524, 64
      %v2671 = vpop.permute.xlu0 %2670
      %2672 = vrot.lane.b32.xlu0 %v2525, 64
      %v2673 = vpop.permute.xlu0 %2672
      %2674 = vrot.lane.b32.xlu0 %v2526, 64
      %v2675 = vpop.permute.xlu0 %2674
      %2676 = vrot.lane.b32.xlu0 %v2527, 64
      %v2677 = vpop.permute.xlu0 %2676
      %2678 = vrot.lane.b32.xlu0 %v2528, 64
      %v2679 = vpop.permute.xlu0 %2678
      %2680 = vrot.lane.b32.xlu0 %v2529, 64
      %v2681 = vpop.permute.xlu0 %2680
      %2698 = vrot.lane.b32.xlu0 %v2530, 80
      %v2699 = vpop.permute.xlu0 %2698
      %2700 = vrot.lane.b32.xlu0 %v2531, 80
      %v2701 = vpop.permute.xlu0 %2700
      %2702 = vrot.lane.b32.xlu0 %v2532, 80
      %v2703 = vpop.permute.xlu0 %2702
      %2704 = vrot.lane.b32.xlu0 %v2533, 80
      %v2705 = vpop.permute.xlu0 %2704
      %2706 = vrot.lane.b32.xlu0 %v2534, 80
      %v2707 = vpop.permute.xlu0 %2706
      %2708 = vrot.lane.b32.xlu0 %v2535, 80
      %v2709 = vpop.permute.xlu0 %2708
      %2710 = vrot.lane.b32.xlu0 %v2536, 80
      %v2711 = vpop.permute.xlu0 %2710
      %2712 = vrot.lane.b32.xlu0 %v2537, 80
      %v2713 = vpop.permute.xlu0 %2712
      %2730 = vrot.lane.b32.xlu0 %v2538, 96
      %v2731 = vpop.permute.xlu0 %2730
      %2732 = vrot.lane.b32.xlu0 %v2539, 96
      %v2733 = vpop.permute.xlu0 %2732
      %2734 = vrot.lane.b32.xlu0 %v2540, 96
      %v2735 = vpop.permute.xlu0 %2734
      %2736 = vrot.lane.b32.xlu0 %v2541, 96
      %v2737 = vpop.permute.xlu0 %2736
      %2738 = vrot.lane.b32.xlu0 %v2542, 96
      %v2739 = vpop.permute.xlu0 %2738
      %2740 = vrot.lane.b32.xlu0 %v2543, 96
      %v2741 = vpop.permute.xlu0 %2740
      %2742 = vrot.lane.b32.xlu0 %v2544, 96
      %v2743 = vpop.permute.xlu0 %2742
      %2744 = vrot.lane.b32.xlu0 %v2545, 96
      %v2745 = vpop.permute.xlu0 %2744
      %2762 = vrot.lane.b32.xlu0 %v2546, 112
      %v2763 = vpop.permute.xlu0 %2762
      %2764 = vrot.lane.b32.xlu0 %v2547, 112
      %v2765 = vpop.permute.xlu0 %2764
      %2766 = vrot.lane.b32.xlu0 %v2548, 112
      %v2767 = vpop.permute.xlu0 %2766
      %2768 = vrot.lane.b32.xlu0 %v2549, 112
      %v2769 = vpop.permute.xlu0 %2768
      %2770 = vrot.lane.b32.xlu0 %v2550, 112
      %v2771 = vpop.permute.xlu0 %2770
      %2772 = vrot.lane.b32.xlu0 %v2551, 112
      %v2773 = vpop.permute.xlu0 %2772
      %2774 = vrot.lane.b32.xlu0 %v2552, 112
      %v2775 = vpop.permute.xlu0 %2774
      %2776 = vrot.lane.b32.xlu0 %v2553, 112
      %v2777 = vpop.permute.xlu0 %2776
      %v2786 = vsel %vm253, %v2490, %v2571
      %v2787 = vsel %vm253, %v2491, %v2573
      %v2788 = vsel %vm253, %v2492, %v2575
      %v2789 = vsel %vm253, %v2493, %v2577
      %v2790 = vsel %vm253, %v2494, %v2579
      %v2791 = vsel %vm253, %v2495, %v2581
      %v2792 = vsel %vm253, %v2496, %v2583
      %v2793 = vsel %vm253, %v2497, %v2585
      %v2794 = vsel %vm611, %v2786, %v2603
      %v2795 = vsel %vm611, %v2787, %v2605
      %v2796 = vsel %vm611, %v2788, %v2607
      %v2797 = vsel %vm611, %v2789, %v2609
      %v2798 = vsel %vm611, %v2790, %v2611
      %v2799 = vsel %vm611, %v2791, %v2613
      %v2800 = vsel %vm611, %v2792, %v2615
      %v2801 = vsel %vm611, %v2793, %v2617
      %v2802 = vsel %vm620, %v2794, %v2635
      %v2803 = vsel %vm620, %v2795, %v2637
      %v2804 = vsel %vm620, %v2796, %v2639
      %v2805 = vsel %vm620, %v2797, %v2641
      %v2806 = vsel %vm620, %v2798, %v2643
      %v2807 = vsel %vm620, %v2799, %v2645
      %v2808 = vsel %vm620, %v2800, %v2647
      %v2809 = vsel %vm620, %v2801, %v2649
      %v2810 = vsel %vm629, %v2802, %v2667
      %v2811 = vsel %vm629, %v2803, %v2669
      %v2812 = vsel %vm629, %v2804, %v2671
      %v2813 = vsel %vm629, %v2805, %v2673
      %v2814 = vsel %vm629, %v2806, %v2675
      %v2815 = vsel %vm629, %v2807, %v2677
      %v2816 = vsel %vm629, %v2808, %v2679
      %v2817 = vsel %vm629, %v2809, %v2681
      %v2818 = vsel %vm638, %v2810, %v2699
      %v2819 = vsel %vm638, %v2811, %v2701
      %v2820 = vsel %vm638, %v2812, %v2703
      %v2821 = vsel %vm638, %v2813, %v2705
      %v2822 = vsel %vm638, %v2814, %v2707
      %v2823 = vsel %vm638, %v2815, %v2709
      %v2824 = vsel %vm638, %v2816, %v2711
      %v2825 = vsel %vm638, %v2817, %v2713
      %v2826 = vsel %vm647, %v2818, %v2731
      %v2827 = vsel %vm647, %v2819, %v2733
      %v2828 = vsel %vm647, %v2820, %v2735
      %v2829 = vsel %vm647, %v2821, %v2737
      %v2830 = vsel %vm647, %v2822, %v2739
      %v2831 = vsel %vm647, %v2823, %v2741
      %v2832 = vsel %vm647, %v2824, %v2743
      %v2833 = vsel %vm647, %v2825, %v2745
      %v2834 = vsel %vm656, %v2826, %v2763
      %v2835 = vsel %vm656, %v2827, %v2765
      %v2836 = vsel %vm656, %v2828, %v2767
      %v2837 = vsel %vm656, %v2829, %v2769
      %v2838 = vsel %vm656, %v2830, %v2771
      %v2839 = vsel %vm656, %v2831, %v2773
      %v2840 = vsel %vm656, %v2832, %v2775
      %v2841 = vsel %vm656, %v2833, %v2777
      %v2842 = vpack.c.bf16 %v2835, %v2834
      %v2843 = vpack.c.bf16 %v2555, %v2554
      %v2844 = vpack.c.bf16 %v2837, %v2836
      %v2845 = vpack.c.bf16 %v2557, %v2556
      %v2846 = vpack.c.bf16 %v2839, %v2838
      %v2847 = vpack.c.bf16 %v2559, %v2558
      %v2848 = vpack.c.bf16 %v2841, %v2840
      %v2849 = vpack.c.bf16 %v2561, %v2560
      %s2850 = scalar_lea.vmem %s1, 288
      %v2851 = vld [vmem:[%s2850] sm:$0xf]
      %v2852 = vld [vmem:[%s2850 + $0x4] sm:$0xf]
      %v2853 = vld [vmem:[%s2850 + $0x8] sm:$0xf]
      %v2854 = vld [vmem:[%s2850 + $0xc] sm:$0xf]
      %v2855 = vld [vmem:[%s2850 + $0x10] sm:$0xf]
      %v2856 = vld [vmem:[%s2850 + $0x14] sm:$0xf]
      %v2857 = vld [vmem:[%s2850 + $0x18] sm:$0xf]
      %v2858 = vld [vmem:[%s2850 + $0x1c] sm:$0xf]
      %v2859 = vld [vmem:[%s2850 + $0x20] sm:$0xf]
      %v2860 = vld [vmem:[%s2850 + $0x24] sm:$0xf]
      %v2861 = vld [vmem:[%s2850 + $0x28] sm:$0xf]
      %v2862 = vld [vmem:[%s2850 + $0x2c] sm:$0xf]
      %v2863 = vld [vmem:[%s2850 + $0x30] sm:$0xf]
      %v2864 = vld [vmem:[%s2850 + $0x34] sm:$0xf]
      %v2865 = vld [vmem:[%s2850 + $0x38] sm:$0xf]
      %v2866 = vld [vmem:[%s2850 + $0x3c] sm:$0xf]
      %v2867 = vld [vmem:[%s2850 + $0x40] sm:$0xf]
      %v2868 = vld [vmem:[%s2850 + $0x44] sm:$0xf]
      %s2869 = scalar_lea.vmem %s2, 4
      %v2870 = vld [vmem:[%s2869] sm:$0x1]
      %v2872 = vperm.slane %v2870, 0
      %v2892 = vunpack.c.l.b16 %v2851
      %v2893 = vunpack.c.l.b16 %v2852
      %v2894 = vunpack.c.l.b16 %v2853
      %v2895 = vunpack.c.l.b16 %v2854
      %v2896 = vunpack.c.l.b16 %v2855
      %v2897 = vunpack.c.l.b16 %v2856
      %v2898 = vunpack.c.l.b16 %v2857
      %v2899 = vunpack.c.l.b16 %v2858
      %v2900 = vunpack.c.l.b16 %v2859
      %v2901 = vunpack.c.l.b16 %v2860
      %v2902 = vunpack.c.l.b16 %v2861
      %v2903 = vunpack.c.l.b16 %v2862
      %v2904 = vunpack.c.l.b16 %v2863
      %v2905 = vunpack.c.l.b16 %v2864
      %v2906 = vunpack.c.l.b16 %v2865
      %v2907 = vunpack.c.l.b16 %v2866
      %v2908 = vunpack.c.l.b16 %v2867
      %v2909 = vunpack.c.l.b16 %v2868
      %v2910 = vpack.c.b16 %v2893, %v2892
      %v2911 = vpack.c.b16 %v2895, %v2894
      %v2912 = vpack.c.b16 %v2897, %v2896
      %v2913 = vpack.c.b16 %v2899, %v2898
      %v2914 = vpack.c.b16 %v2901, %v2900
      %v2915 = vpack.c.b16 %v2903, %v2902
      %v2916 = vpack.c.b16 %v2905, %v2904
      %v2917 = vpack.c.b16 %v2907, %v2906
      %v2918 = vpack.c.b16 %v2909, %v2908
      %v2929 = vsel %vm253, %v2843, 0
      %v2932 = vsel %vm253, %v2845, 0
      %v2935 = vsel %vm253, %v2847, 0
      %v2938 = vsel %vm253, %v2849, 0
      %2940 = vmatpush.bf16.msra.mxu0 %v2917
      %2941 = vmatpush.bf16.msra.mxu0 %v2916
      %2942 = vmatpush.bf16.msra.mxu0 %v2915
      %2943 = vmatpush.bf16.msra.mxu0 %v2914
      %2944 = vmatpush.bf16.msra.mxu0 %v2913
      %2945 = vmatpush.bf16.msra.mxu0 %v2912
      %2946 = vmatpush.bf16.msra.mxu0 %v2911
      %2947 = vmatpush.bf16.msra.mxu0 %v2910
      %2948 = vmatmul.bf16.gmra.mxu0 %v2842
      %v2949 = vpop.f32.mrf.mxu0
      %v2950 = vadd.f32 %v2872, %v2949
      %v2951 = vpop.f32.mrf.mxu0
      %v2952 = vadd.f32 %v2872, %v2951
      %2953 = vmatmul.bf16.gmra.mxu0 %v2844
      %v2954 = vpop.f32.mrf.mxu0
      %v2955 = vadd.f32 %v2872, %v2954
      %v2956 = vpop.f32.mrf.mxu0
      %v2957 = vadd.f32 %v2872, %v2956
      %2958 = vmatmul.bf16.gmra.mxu0 %v2846
      %v2959 = vpop.f32.mrf.mxu0
      %v2960 = vadd.f32 %v2872, %v2959
      %v2961 = vpop.f32.mrf.mxu0
      %v2962 = vadd.f32 %v2872, %v2961
      %2963 = vmatmul.bf16.gmra.mxu0 %v2848
      %v2964 = vpop.f32.mrf.mxu0
      %v2965 = vadd.f32 %v2872, %v2964
      %v2966 = vpop.f32.mrf.mxu0
      %v2967 = vadd.f32 %v2872, %v2966
      %2968 = vdwg.mxu0
      %2969 = vmatpush.bf16.msra.mxu0 0
      %2970 = vmatpush.bf16.msra.mxu0 0
      %2971 = vmatpush.bf16.msra.mxu0 0
      %2972 = vmatpush.bf16.msra.mxu0 0
      %2973 = vmatpush.bf16.msra.mxu0 0
      %2974 = vmatpush.bf16.msra.mxu0 0
      %2975 = vmatpush.bf16.msra.mxu0 0
      %2976 = vmatpush.bf16.msra.mxu0 %v2918
      %2977 = vmatmul.bf16.gmra.mxu0 %v2929
      %v2978 = vpop.f32.mrf.mxu0
      %v2979 = vadd.f32 %v2950, %v2978
      %v2980 = vpop.f32.mrf.mxu0
      %v2981 = vadd.f32 %v2952, %v2980
      %2982 = vmatmul.bf16.gmra.mxu0 %v2932
      %v2983 = vpop.f32.mrf.mxu0
      %v2984 = vadd.f32 %v2955, %v2983
      %v2985 = vpop.f32.mrf.mxu0
      %v2986 = vadd.f32 %v2957, %v2985
      %2987 = vmatmul.bf16.gmra.mxu0 %v2935
      %v2988 = vpop.f32.mrf.mxu0
      %v2989 = vadd.f32 %v2960, %v2988
      %v2990 = vpop.f32.mrf.mxu0
      %v2991 = vadd.f32 %v2962, %v2990
      %2992 = vmatmul.bf16.gmra.mxu0 %v2938
      %v2993 = vpop.f32.mrf.mxu0
      %v2994 = vadd.f32 %v2965, %v2993
      %v2995 = vpop.f32.mrf.mxu0
      %v2996 = vadd.f32 %v2967, %v2995
      %2997 = vdwg.mxu0
      %vm2998 = vcmp.ge.f32.partialorder %v2979, 0.0
      %vm2999 = vcmp.ge.f32.partialorder %v2981, 0.0
      %vm3000 = vcmp.ge.f32.partialorder %v2984, 0.0
      %vm3001 = vcmp.ge.f32.partialorder %v2986, 0.0
      %vm3002 = vcmp.ge.f32.partialorder %v2989, 0.0
      %vm3003 = vcmp.ge.f32.partialorder %v2991, 0.0
      %vm3004 = vcmp.ge.f32.partialorder %v2994, 0.0
      %vm3005 = vcmp.ge.f32.partialorder %v2996, 0.0
      %s3006 = scalar_lea.vmem %s3, 4
      %v3007 = vld [vmem:[%s3006] sm:$0x1]
      %v3009 = vperm.slane %v3007, 0
      %v3011 = vmul.f32 %v2979, %v3009
      %v3012 = vmul.f32 %v2981, %v3009
      %v3013 = vmul.f32 %v2984, %v3009
      %v3014 = vmul.f32 %v2986, %v3009
      %v3015 = vmul.f32 %v2989, %v3009
      %v3016 = vmul.f32 %v2991, %v3009
      %v3017 = vmul.f32 %v2994, %v3009
      %v3018 = vmul.f32 %v2996, %v3009
      %v3019 = vsel %vm2998, %v2979, %v3011
      %v3020 = vsel %vm2999, %v2981, %v3012
      %v3021 = vsel %vm3000, %v2984, %v3013
      %v3022 = vsel %vm3001, %v2986, %v3014
      %v3023 = vsel %vm3002, %v2989, %v3015
      %v3024 = vsel %vm3003, %v2991, %v3016
      %v3025 = vsel %vm3004, %v2994, %v3017
      %v3026 = vsel %vm3005, %v2996, %v3018
      %3027 = vst.msk [vmem:[%s297 + $0x1] sm:$0xff] %vm253, %v3019
      %3028 = vst.msk [vmem:[%s297 + $0x11] sm:$0xff] %vm253, %v3020
      %3029 = vst.msk [vmem:[%s297 + $0x21] sm:$0xff] %vm253, %v3021
      %3030 = vst.msk [vmem:[%s297 + $0x31] sm:$0xff] %vm253, %v3022
      %3031 = vst.msk [vmem:[%s297 + $0x41] sm:$0xff] %vm253, %v3023
      %3032 = vst.msk [vmem:[%s297 + $0x51] sm:$0xff] %vm253, %v3024
      %3033 = vst.msk [vmem:[%s297 + $0x61] sm:$0xff] %vm253, %v3025
      %3034 = vst.msk [vmem:[%s297 + $0x71] sm:$0xff] %vm253, %v3026
      %v3035 = vld [vmem:[#allocation2] sm:$0xff]
      %v3036 = vld [vmem:[#allocation2 + $0x10] sm:$0xff]
      %v3037 = vld [vmem:[#allocation2 + $0x20] sm:$0xff]
      %v3038 = vld [vmem:[#allocation2 + $0x30] sm:$0xff]
      %v3039 = vld [vmem:[#allocation2 + $0x40] sm:$0xff]
      %v3040 = vld [vmem:[#allocation2 + $0x50] sm:$0xff]
      %v3041 = vld [vmem:[#allocation2 + $0x60] sm:$0xff]
      %v3042 = vld [vmem:[#allocation2 + $0x70] sm:$0xff]
      %v3043 = vld [vmem:[#allocation2 + $0x1] sm:$0xff]
      %v3044 = vld [vmem:[#allocation2 + $0x11] sm:$0xff]
      %v3045 = vld [vmem:[#allocation2 + $0x21] sm:$0xff]
      %v3046 = vld [vmem:[#allocation2 + $0x31] sm:$0xff]
      %v3047 = vld [vmem:[#allocation2 + $0x41] sm:$0xff]
      %v3048 = vld [vmem:[#allocation2 + $0x51] sm:$0xff]
      %v3049 = vld [vmem:[#allocation2 + $0x61] sm:$0xff]
      %v3050 = vld [vmem:[#allocation2 + $0x71] sm:$0xff]
      %v3051 = vld [vmem:[#allocation2 + $0x2] sm:$0xff]
      %v3052 = vld [vmem:[#allocation2 + $0x12] sm:$0xff]
      %v3053 = vld [vmem:[#allocation2 + $0x22] sm:$0xff]
      %v3054 = vld [vmem:[#allocation2 + $0x32] sm:$0xff]
      %v3055 = vld [vmem:[#allocation2 + $0x42] sm:$0xff]
      %v3056 = vld [vmem:[#allocation2 + $0x52] sm:$0xff]
      %v3057 = vld [vmem:[#allocation2 + $0x62] sm:$0xff]
      %v3058 = vld [vmem:[#allocation2 + $0x72] sm:$0xff]
      %v3059 = vld [vmem:[%s297] sm:$0xff]
      %v3060 = vld [vmem:[%s297 + $0x10] sm:$0xff]
      %v3061 = vld [vmem:[%s297 + $0x20] sm:$0xff]
      %v3062 = vld [vmem:[%s297 + $0x30] sm:$0xff]
      %v3063 = vld [vmem:[%s297 + $0x40] sm:$0xff]
      %v3064 = vld [vmem:[%s297 + $0x50] sm:$0xff]
      %v3065 = vld [vmem:[%s297 + $0x60] sm:$0xff]
      %v3066 = vld [vmem:[%s297 + $0x70] sm:$0xff]
      %v3067 = vld [vmem:[%s297 + $0x1] sm:$0xff]
      %v3068 = vld [vmem:[%s297 + $0x11] sm:$0xff]
      %v3069 = vld [vmem:[%s297 + $0x21] sm:$0xff]
      %v3070 = vld [vmem:[%s297 + $0x31] sm:$0xff]
      %v3071 = vld [vmem:[%s297 + $0x41] sm:$0xff]
      %v3072 = vld [vmem:[%s297 + $0x51] sm:$0xff]
      %v3073 = vld [vmem:[%s297 + $0x61] sm:$0xff]
      %v3074 = vld [vmem:[%s297 + $0x71] sm:$0xff]
      %v3075 = vld [vmem:[%s297 + $0x2] sm:$0xff]
      %v3076 = vld [vmem:[%s297 + $0x12] sm:$0xff]
      %v3077 = vld [vmem:[%s297 + $0x22] sm:$0xff]
      %v3078 = vld [vmem:[%s297 + $0x32] sm:$0xff]
      %v3079 = vld [vmem:[%s297 + $0x42] sm:$0xff]
      %v3080 = vld [vmem:[%s297 + $0x52] sm:$0xff]
      %v3081 = vld [vmem:[%s297 + $0x62] sm:$0xff]
      %v3082 = vld [vmem:[%s297 + $0x72] sm:$0xff]
      %v3083 = vld [vmem:[%s354] sm:$0xff]
      %v3084 = vld [vmem:[%s354 + $0x10] sm:$0xff]
      %v3085 = vld [vmem:[%s354 + $0x20] sm:$0xff]
      %v3086 = vld [vmem:[%s354 + $0x30] sm:$0xff]
      %v3087 = vld [vmem:[%s354 + $0x40] sm:$0xff]
      %v3088 = vld [vmem:[%s354 + $0x50] sm:$0xff]
      %v3089 = vld [vmem:[%s354 + $0x60] sm:$0xff]
      %v3090 = vld [vmem:[%s354 + $0x70] sm:$0xff]
      %v3091 = vld [vmem:[%s354 + $0x1] sm:$0xff]
      %v3092 = vld [vmem:[%s354 + $0x11] sm:$0xff]
      %v3093 = vld [vmem:[%s354 + $0x21] sm:$0xff]
      %v3094 = vld [vmem:[%s354 + $0x31] sm:$0xff]
      %v3095 = vld [vmem:[%s354 + $0x41] sm:$0xff]
      %v3096 = vld [vmem:[%s354 + $0x51] sm:$0xff]
      %v3097 = vld [vmem:[%s354 + $0x61] sm:$0xff]
      %v3098 = vld [vmem:[%s354 + $0x71] sm:$0xff]
      %v3099 = vld [vmem:[%s354 + $0x2] sm:$0xff]
      %v3100 = vld [vmem:[%s354 + $0x12] sm:$0xff]
      %v3101 = vld [vmem:[%s354 + $0x22] sm:$0xff]
      %v3102 = vld [vmem:[%s354 + $0x32] sm:$0xff]
      %v3103 = vld [vmem:[%s354 + $0x42] sm:$0xff]
      %v3104 = vld [vmem:[%s354 + $0x52] sm:$0xff]
      %v3105 = vld [vmem:[%s354 + $0x62] sm:$0xff]
      %v3106 = vld [vmem:[%s354 + $0x72] sm:$0xff]
      %3115 = vrot.lane.b32.xlu0 %v3043, 16
      %v3116 = vpop.permute.xlu0 %3115
      %3117 = vrot.lane.b32.xlu0 %v3044, 16
      %v3118 = vpop.permute.xlu0 %3117
      %3119 = vrot.lane.b32.xlu0 %v3045, 16
      %v3120 = vpop.permute.xlu0 %3119
      %3121 = vrot.lane.b32.xlu0 %v3046, 16
      %v3122 = vpop.permute.xlu0 %3121
      %3123 = vrot.lane.b32.xlu0 %v3047, 16
      %v3124 = vpop.permute.xlu0 %3123
      %3125 = vrot.lane.b32.xlu0 %v3048, 16
      %v3126 = vpop.permute.xlu0 %3125
      %3127 = vrot.lane.b32.xlu0 %v3049, 16
      %v3128 = vpop.permute.xlu0 %3127
      %3129 = vrot.lane.b32.xlu0 %v3050, 16
      %v3130 = vpop.permute.xlu0 %3129
      %3147 = vrot.lane.b32.xlu0 %v3051, 32
      %v3148 = vpop.permute.xlu0 %3147
      %3149 = vrot.lane.b32.xlu0 %v3052, 32
      %v3150 = vpop.permute.xlu0 %3149
      %3151 = vrot.lane.b32.xlu0 %v3053, 32
      %v3152 = vpop.permute.xlu0 %3151
      %3153 = vrot.lane.b32.xlu0 %v3054, 32
      %v3154 = vpop.permute.xlu0 %3153
      %3155 = vrot.lane.b32.xlu0 %v3055, 32
      %v3156 = vpop.permute.xlu0 %3155
      %3157 = vrot.lane.b32.xlu0 %v3056, 32
      %v3158 = vpop.permute.xlu0 %3157
      %3159 = vrot.lane.b32.xlu0 %v3057, 32
      %v3160 = vpop.permute.xlu0 %3159
      %3161 = vrot.lane.b32.xlu0 %v3058, 32
      %v3162 = vpop.permute.xlu0 %3161
      %3179 = vrot.lane.b32.xlu0 %v3059, 48
      %v3180 = vpop.permute.xlu0 %3179
      %3181 = vrot.lane.b32.xlu0 %v3060, 48
      %v3182 = vpop.permute.xlu0 %3181
      %3183 = vrot.lane.b32.xlu0 %v3061, 48
      %v3184 = vpop.permute.xlu0 %3183
      %3185 = vrot.lane.b32.xlu0 %v3062, 48
      %v3186 = vpop.permute.xlu0 %3185
      %3187 = vrot.lane.b32.xlu0 %v3063, 48
      %v3188 = vpop.permute.xlu0 %3187
      %3189 = vrot.lane.b32.xlu0 %v3064, 48
      %v3190 = vpop.permute.xlu0 %3189
      %3191 = vrot.lane.b32.xlu0 %v3065, 48
      %v3192 = vpop.permute.xlu0 %3191
      %3193 = vrot.lane.b32.xlu0 %v3066, 48
      %v3194 = vpop.permute.xlu0 %3193
      %3211 = vrot.lane.b32.xlu0 %v3067, 64
      %v3212 = vpop.permute.xlu0 %3211
      %3213 = vrot.lane.b32.xlu0 %v3068, 64
      %v3214 = vpop.permute.xlu0 %3213
      %3215 = vrot.lane.b32.xlu0 %v3069, 64
      %v3216 = vpop.permute.xlu0 %3215
      %3217 = vrot.lane.b32.xlu0 %v3070, 64
      %v3218 = vpop.permute.xlu0 %3217
      %3219 = vrot.lane.b32.xlu0 %v3071, 64
      %v3220 = vpop.permute.xlu0 %3219
      %3221 = vrot.lane.b32.xlu0 %v3072, 64
      %v3222 = vpop.permute.xlu0 %3221
      %3223 = vrot.lane.b32.xlu0 %v3073, 64
      %v3224 = vpop.permute.xlu0 %3223
      %3225 = vrot.lane.b32.xlu0 %v3074, 64
      %v3226 = vpop.permute.xlu0 %3225
      %3243 = vrot.lane.b32.xlu0 %v3075, 80
      %v3244 = vpop.permute.xlu0 %3243
      %3245 = vrot.lane.b32.xlu0 %v3076, 80
      %v3246 = vpop.permute.xlu0 %3245
      %3247 = vrot.lane.b32.xlu0 %v3077, 80
      %v3248 = vpop.permute.xlu0 %3247
      %3249 = vrot.lane.b32.xlu0 %v3078, 80
      %v3250 = vpop.permute.xlu0 %3249
      %3251 = vrot.lane.b32.xlu0 %v3079, 80
      %v3252 = vpop.permute.xlu0 %3251
      %3253 = vrot.lane.b32.xlu0 %v3080, 80
      %v3254 = vpop.permute.xlu0 %3253
      %3255 = vrot.lane.b32.xlu0 %v3081, 80
      %v3256 = vpop.permute.xlu0 %3255
      %3257 = vrot.lane.b32.xlu0 %v3082, 80
      %v3258 = vpop.permute.xlu0 %3257
      %3275 = vrot.lane.b32.xlu0 %v3083, 96
      %v3276 = vpop.permute.xlu0 %3275
      %3277 = vrot.lane.b32.xlu0 %v3084, 96
      %v3278 = vpop.permute.xlu0 %3277
      %3279 = vrot.lane.b32.xlu0 %v3085, 96
      %v3280 = vpop.permute.xlu0 %3279
      %3281 = vrot.lane.b32.xlu0 %v3086, 96
      %v3282 = vpop.permute.xlu0 %3281
      %3283 = vrot.lane.b32.xlu0 %v3087, 96
      %v3284 = vpop.permute.xlu0 %3283
      %3285 = vrot.lane.b32.xlu0 %v3088, 96
      %v3286 = vpop.permute.xlu0 %3285
      %3287 = vrot.lane.b32.xlu0 %v3089, 96
      %v3288 = vpop.permute.xlu0 %3287
      %3289 = vrot.lane.b32.xlu0 %v3090, 96
      %v3290 = vpop.permute.xlu0 %3289
      %3307 = vrot.lane.b32.xlu0 %v3091, 112
      %v3308 = vpop.permute.xlu0 %3307
      %3309 = vrot.lane.b32.xlu0 %v3092, 112
      %v3310 = vpop.permute.xlu0 %3309
      %3311 = vrot.lane.b32.xlu0 %v3093, 112
      %v3312 = vpop.permute.xlu0 %3311
      %3313 = vrot.lane.b32.xlu0 %v3094, 112
      %v3314 = vpop.permute.xlu0 %3313
      %3315 = vrot.lane.b32.xlu0 %v3095, 112
      %v3316 = vpop.permute.xlu0 %3315
      %3317 = vrot.lane.b32.xlu0 %v3096, 112
      %v3318 = vpop.permute.xlu0 %3317
      %3319 = vrot.lane.b32.xlu0 %v3097, 112
      %v3320 = vpop.permute.xlu0 %3319
      %3321 = vrot.lane.b32.xlu0 %v3098, 112
      %v3322 = vpop.permute.xlu0 %3321
      %v3331 = vsel %vm253, %v3035, %v3116
      %v3332 = vsel %vm253, %v3036, %v3118
      %v3333 = vsel %vm253, %v3037, %v3120
      %v3334 = vsel %vm253, %v3038, %v3122
      %v3335 = vsel %vm253, %v3039, %v3124
      %v3336 = vsel %vm253, %v3040, %v3126
      %v3337 = vsel %vm253, %v3041, %v3128
      %v3338 = vsel %vm253, %v3042, %v3130
      %v3339 = vsel %vm611, %v3331, %v3148
      %v3340 = vsel %vm611, %v3332, %v3150
      %v3341 = vsel %vm611, %v3333, %v3152
      %v3342 = vsel %vm611, %v3334, %v3154
      %v3343 = vsel %vm611, %v3335, %v3156
      %v3344 = vsel %vm611, %v3336, %v3158
      %v3345 = vsel %vm611, %v3337, %v3160
      %v3346 = vsel %vm611, %v3338, %v3162
      %v3347 = vsel %vm620, %v3339, %v3180
      %v3348 = vsel %vm620, %v3340, %v3182
      %v3349 = vsel %vm620, %v3341, %v3184
      %v3350 = vsel %vm620, %v3342, %v3186
      %v3351 = vsel %vm620, %v3343, %v3188
      %v3352 = vsel %vm620, %v3344, %v3190
      %v3353 = vsel %vm620, %v3345, %v3192
      %v3354 = vsel %vm620, %v3346, %v3194
      %v3355 = vsel %vm629, %v3347, %v3212
      %v3356 = vsel %vm629, %v3348, %v3214
      %v3357 = vsel %vm629, %v3349, %v3216
      %v3358 = vsel %vm629, %v3350, %v3218
      %v3359 = vsel %vm629, %v3351, %v3220
      %v3360 = vsel %vm629, %v3352, %v3222
      %v3361 = vsel %vm629, %v3353, %v3224
      %v3362 = vsel %vm629, %v3354, %v3226
      %v3363 = vsel %vm638, %v3355, %v3244
      %v3364 = vsel %vm638, %v3356, %v3246
      %v3365 = vsel %vm638, %v3357, %v3248
      %v3366 = vsel %vm638, %v3358, %v3250
      %v3367 = vsel %vm638, %v3359, %v3252
      %v3368 = vsel %vm638, %v3360, %v3254
      %v3369 = vsel %vm638, %v3361, %v3256
      %v3370 = vsel %vm638, %v3362, %v3258
      %v3371 = vsel %vm647, %v3363, %v3276
      %v3372 = vsel %vm647, %v3364, %v3278
      %v3373 = vsel %vm647, %v3365, %v3280
      %v3374 = vsel %vm647, %v3366, %v3282
      %v3375 = vsel %vm647, %v3367, %v3284
      %v3376 = vsel %vm647, %v3368, %v3286
      %v3377 = vsel %vm647, %v3369, %v3288
      %v3378 = vsel %vm647, %v3370, %v3290
      %v3379 = vsel %vm656, %v3371, %v3308
      %v3380 = vsel %vm656, %v3372, %v3310
      %v3381 = vsel %vm656, %v3373, %v3312
      %v3382 = vsel %vm656, %v3374, %v3314
      %v3383 = vsel %vm656, %v3375, %v3316
      %v3384 = vsel %vm656, %v3376, %v3318
      %v3385 = vsel %vm656, %v3377, %v3320
      %v3386 = vsel %vm656, %v3378, %v3322
      %v3387 = vpack.c.bf16 %v3380, %v3379
      %v3388 = vpack.c.bf16 %v3100, %v3099
      %v3389 = vpack.c.bf16 %v3382, %v3381
      %v3390 = vpack.c.bf16 %v3102, %v3101
      %v3391 = vpack.c.bf16 %v3384, %v3383
      %v3392 = vpack.c.bf16 %v3104, %v3103
      %v3393 = vpack.c.bf16 %v3386, %v3385
      %v3394 = vpack.c.bf16 %v3106, %v3105
      %s3395 = scalar_lea.vmem %s1, 360
      %v3396 = vld [vmem:[%s3395] sm:$0xf]
      %v3397 = vld [vmem:[%s3395 + $0x4] sm:$0xf]
      %v3398 = vld [vmem:[%s3395 + $0x8] sm:$0xf]
      %v3399 = vld [vmem:[%s3395 + $0xc] sm:$0xf]
      %v3400 = vld [vmem:[%s3395 + $0x10] sm:$0xf]
      %v3401 = vld [vmem:[%s3395 + $0x14] sm:$0xf]
      %v3402 = vld [vmem:[%s3395 + $0x18] sm:$0xf]
      %v3403 = vld [vmem:[%s3395 + $0x1c] sm:$0xf]
      %v3404 = vld [vmem:[%s3395 + $0x20] sm:$0xf]
      %v3405 = vld [vmem:[%s3395 + $0x24] sm:$0xf]
      %v3406 = vld [vmem:[%s3395 + $0x28] sm:$0xf]
      %v3407 = vld [vmem:[%s3395 + $0x2c] sm:$0xf]
      %v3408 = vld [vmem:[%s3395 + $0x30] sm:$0xf]
      %v3409 = vld [vmem:[%s3395 + $0x34] sm:$0xf]
      %v3410 = vld [vmem:[%s3395 + $0x38] sm:$0xf]
      %v3411 = vld [vmem:[%s3395 + $0x3c] sm:$0xf]
      %v3412 = vld [vmem:[%s3395 + $0x40] sm:$0xf]
      %v3413 = vld [vmem:[%s3395 + $0x44] sm:$0xf]
      %s3414 = scalar_lea.vmem %s2, 5
      %v3415 = vld [vmem:[%s3414] sm:$0x1]
      %v3417 = vperm.slane %v3415, 0
      %v3437 = vunpack.c.l.b16 %v3396
      %v3438 = vunpack.c.l.b16 %v3397
      %v3439 = vunpack.c.l.b16 %v3398
      %v3440 = vunpack.c.l.b16 %v3399
      %v3441 = vunpack.c.l.b16 %v3400
      %v3442 = vunpack.c.l.b16 %v3401
      %v3443 = vunpack.c.l.b16 %v3402
      %v3444 = vunpack.c.l.b16 %v3403
      %v3445 = vunpack.c.l.b16 %v3404
      %v3446 = vunpack.c.l.b16 %v3405
      %v3447 = vunpack.c.l.b16 %v3406
      %v3448 = vunpack.c.l.b16 %v3407
      %v3449 = vunpack.c.l.b16 %v3408
      %v3450 = vunpack.c.l.b16 %v3409
      %v3451 = vunpack.c.l.b16 %v3410
      %v3452 = vunpack.c.l.b16 %v3411
      %v3453 = vunpack.c.l.b16 %v3412
      %v3454 = vunpack.c.l.b16 %v3413
      %v3455 = vpack.c.b16 %v3438, %v3437
      %v3456 = vpack.c.b16 %v3440, %v3439
      %v3457 = vpack.c.b16 %v3442, %v3441
      %v3458 = vpack.c.b16 %v3444, %v3443
      %v3459 = vpack.c.b16 %v3446, %v3445
      %v3460 = vpack.c.b16 %v3448, %v3447
      %v3461 = vpack.c.b16 %v3450, %v3449
      %v3462 = vpack.c.b16 %v3452, %v3451
      %v3463 = vpack.c.b16 %v3454, %v3453
      %v3474 = vsel %vm253, %v3388, 0
      %v3477 = vsel %vm253, %v3390, 0
      %v3480 = vsel %vm253, %v3392, 0
      %v3483 = vsel %vm253, %v3394, 0
      %3485 = vmatpush.bf16.msra.mxu0 %v3462
      %3486 = vmatpush.bf16.msra.mxu0 %v3461
      %3487 = vmatpush.bf16.msra.mxu0 %v3460
      %3488 = vmatpush.bf16.msra.mxu0 %v3459
      %3489 = vmatpush.bf16.msra.mxu0 %v3458
      %3490 = vmatpush.bf16.msra.mxu0 %v3457
      %3491 = vmatpush.bf16.msra.mxu0 %v3456
      %3492 = vmatpush.bf16.msra.mxu0 %v3455
      %3493 = vmatmul.bf16.gmra.mxu0 %v3387
      %v3494 = vpop.f32.mrf.mxu0
      %v3495 = vadd.f32 %v3417, %v3494
      %v3496 = vpop.f32.mrf.mxu0
      %v3497 = vadd.f32 %v3417, %v3496
      %3498 = vmatmul.bf16.gmra.mxu0 %v3389
      %v3499 = vpop.f32.mrf.mxu0
      %v3500 = vadd.f32 %v3417, %v3499
      %v3501 = vpop.f32.mrf.mxu0
      %v3502 = vadd.f32 %v3417, %v3501
      %3503 = vmatmul.bf16.gmra.mxu0 %v3391
      %v3504 = vpop.f32.mrf.mxu0
      %v3505 = vadd.f32 %v3417, %v3504
      %v3506 = vpop.f32.mrf.mxu0
      %v3507 = vadd.f32 %v3417, %v3506
      %3508 = vmatmul.bf16.gmra.mxu0 %v3393
      %v3509 = vpop.f32.mrf.mxu0
      %v3510 = vadd.f32 %v3417, %v3509
      %v3511 = vpop.f32.mrf.mxu0
      %v3512 = vadd.f32 %v3417, %v3511
      %3513 = vdwg.mxu0
      %3514 = vmatpush.bf16.msra.mxu0 0
      %3515 = vmatpush.bf16.msra.mxu0 0
      %3516 = vmatpush.bf16.msra.mxu0 0
      %3517 = vmatpush.bf16.msra.mxu0 0
      %3518 = vmatpush.bf16.msra.mxu0 0
      %3519 = vmatpush.bf16.msra.mxu0 0
      %3520 = vmatpush.bf16.msra.mxu0 0
      %3521 = vmatpush.bf16.msra.mxu0 %v3463
      %3522 = vmatmul.bf16.gmra.mxu0 %v3474
      %v3523 = vpop.f32.mrf.mxu0
      %v3524 = vadd.f32 %v3495, %v3523
      %v3525 = vpop.f32.mrf.mxu0
      %v3526 = vadd.f32 %v3497, %v3525
      %3527 = vmatmul.bf16.gmra.mxu0 %v3477
      %v3528 = vpop.f32.mrf.mxu0
      %v3529 = vadd.f32 %v3500, %v3528
      %v3530 = vpop.f32.mrf.mxu0
      %v3531 = vadd.f32 %v3502, %v3530
      %3532 = vmatmul.bf16.gmra.mxu0 %v3480
      %v3533 = vpop.f32.mrf.mxu0
      %v3534 = vadd.f32 %v3505, %v3533
      %v3535 = vpop.f32.mrf.mxu0
      %v3536 = vadd.f32 %v3507, %v3535
      %3537 = vmatmul.bf16.gmra.mxu0 %v3483
      %v3538 = vpop.f32.mrf.mxu0
      %v3539 = vadd.f32 %v3510, %v3538
      %v3540 = vpop.f32.mrf.mxu0
      %v3541 = vadd.f32 %v3512, %v3540
      %3542 = vdwg.mxu0
      %vm3543 = vcmp.ge.f32.partialorder %v3524, 0.0
      %vm3544 = vcmp.ge.f32.partialorder %v3526, 0.0
      %vm3545 = vcmp.ge.f32.partialorder %v3529, 0.0
      %vm3546 = vcmp.ge.f32.partialorder %v3531, 0.0
      %vm3547 = vcmp.ge.f32.partialorder %v3534, 0.0
      %vm3548 = vcmp.ge.f32.partialorder %v3536, 0.0
      %vm3549 = vcmp.ge.f32.partialorder %v3539, 0.0
      %vm3550 = vcmp.ge.f32.partialorder %v3541, 0.0
      %s3551 = scalar_lea.vmem %s3, 5
      %v3552 = vld [vmem:[%s3551] sm:$0x1]
      %v3554 = vperm.slane %v3552, 0
      %v3556 = vmul.f32 %v3524, %v3554
      %v3557 = vmul.f32 %v3526, %v3554
      %v3558 = vmul.f32 %v3529, %v3554
      %v3559 = vmul.f32 %v3531, %v3554
      %v3560 = vmul.f32 %v3534, %v3554
      %v3561 = vmul.f32 %v3536, %v3554
      %v3562 = vmul.f32 %v3539, %v3554
      %v3563 = vmul.f32 %v3541, %v3554
      %v3564 = vsel %vm3543, %v3524, %v3556
      %v3565 = vsel %vm3544, %v3526, %v3557
      %v3566 = vsel %vm3545, %v3529, %v3558
      %v3567 = vsel %vm3546, %v3531, %v3559
      %v3568 = vsel %vm3547, %v3534, %v3560
      %v3569 = vsel %vm3548, %v3536, %v3561
      %v3570 = vsel %vm3549, %v3539, %v3562
      %v3571 = vsel %vm3550, %v3541, %v3563
      %3572 = vst.msk [vmem:[%s297 + $0x1] sm:$0xff] %vm253, %v3564
      %3573 = vst.msk [vmem:[%s297 + $0x11] sm:$0xff] %vm253, %v3565
      %3574 = vst.msk [vmem:[%s297 + $0x21] sm:$0xff] %vm253, %v3566
      %3575 = vst.msk [vmem:[%s297 + $0x31] sm:$0xff] %vm253, %v3567
      %3576 = vst.msk [vmem:[%s297 + $0x41] sm:$0xff] %vm253, %v3568
      %3577 = vst.msk [vmem:[%s297 + $0x51] sm:$0xff] %vm253, %v3569
      %3578 = vst.msk [vmem:[%s297 + $0x61] sm:$0xff] %vm253, %v3570
      %3579 = vst.msk [vmem:[%s297 + $0x71] sm:$0xff] %vm253, %v3571
      %v3580 = vld [vmem:[#allocation2] sm:$0xff]
      %v3581 = vld [vmem:[#allocation2 + $0x10] sm:$0xff]
      %v3582 = vld [vmem:[#allocation2 + $0x20] sm:$0xff]
      %v3583 = vld [vmem:[#allocation2 + $0x30] sm:$0xff]
      %v3584 = vld [vmem:[#allocation2 + $0x40] sm:$0xff]
      %v3585 = vld [vmem:[#allocation2 + $0x50] sm:$0xff]
      %v3586 = vld [vmem:[#allocation2 + $0x60] sm:$0xff]
      %v3587 = vld [vmem:[#allocation2 + $0x70] sm:$0xff]
      %v3588 = vld [vmem:[#allocation2 + $0x1] sm:$0xff]
      %v3589 = vld [vmem:[#allocation2 + $0x11] sm:$0xff]
      %v3590 = vld [vmem:[#allocation2 + $0x21] sm:$0xff]
      %v3591 = vld [vmem:[#allocation2 + $0x31] sm:$0xff]
      %v3592 = vld [vmem:[#allocation2 + $0x41] sm:$0xff]
      %v3593 = vld [vmem:[#allocation2 + $0x51] sm:$0xff]
      %v3594 = vld [vmem:[#allocation2 + $0x61] sm:$0xff]
      %v3595 = vld [vmem:[#allocation2 + $0x71] sm:$0xff]
      %v3596 = vld [vmem:[#allocation2 + $0x2] sm:$0xff]
      %v3597 = vld [vmem:[#allocation2 + $0x12] sm:$0xff]
      %v3598 = vld [vmem:[#allocation2 + $0x22] sm:$0xff]
      %v3599 = vld [vmem:[#allocation2 + $0x32] sm:$0xff]
      %v3600 = vld [vmem:[#allocation2 + $0x42] sm:$0xff]
      %v3601 = vld [vmem:[#allocation2 + $0x52] sm:$0xff]
      %v3602 = vld [vmem:[#allocation2 + $0x62] sm:$0xff]
      %v3603 = vld [vmem:[#allocation2 + $0x72] sm:$0xff]
      %v3604 = vld [vmem:[%s297] sm:$0xff]
      %v3605 = vld [vmem:[%s297 + $0x10] sm:$0xff]
      %v3606 = vld [vmem:[%s297 + $0x20] sm:$0xff]
      %v3607 = vld [vmem:[%s297 + $0x30] sm:$0xff]
      %v3608 = vld [vmem:[%s297 + $0x40] sm:$0xff]
      %v3609 = vld [vmem:[%s297 + $0x50] sm:$0xff]
      %v3610 = vld [vmem:[%s297 + $0x60] sm:$0xff]
      %v3611 = vld [vmem:[%s297 + $0x70] sm:$0xff]
      %v3612 = vld [vmem:[%s297 + $0x1] sm:$0xff]
      %v3613 = vld [vmem:[%s297 + $0x11] sm:$0xff]
      %v3614 = vld [vmem:[%s297 + $0x21] sm:$0xff]
      %v3615 = vld [vmem:[%s297 + $0x31] sm:$0xff]
      %v3616 = vld [vmem:[%s297 + $0x41] sm:$0xff]
      %v3617 = vld [vmem:[%s297 + $0x51] sm:$0xff]
      %v3618 = vld [vmem:[%s297 + $0x61] sm:$0xff]
      %v3619 = vld [vmem:[%s297 + $0x71] sm:$0xff]
      %v3620 = vld [vmem:[%s297 + $0x2] sm:$0xff]
      %v3621 = vld [vmem:[%s297 + $0x12] sm:$0xff]
      %v3622 = vld [vmem:[%s297 + $0x22] sm:$0xff]
      %v3623 = vld [vmem:[%s297 + $0x32] sm:$0xff]
      %v3624 = vld [vmem:[%s297 + $0x42] sm:$0xff]
      %v3625 = vld [vmem:[%s297 + $0x52] sm:$0xff]
      %v3626 = vld [vmem:[%s297 + $0x62] sm:$0xff]
      %v3627 = vld [vmem:[%s297 + $0x72] sm:$0xff]
      %v3628 = vld [vmem:[%s354] sm:$0xff]
      %v3629 = vld [vmem:[%s354 + $0x10] sm:$0xff]
      %v3630 = vld [vmem:[%s354 + $0x20] sm:$0xff]
      %v3631 = vld [vmem:[%s354 + $0x30] sm:$0xff]
      %v3632 = vld [vmem:[%s354 + $0x40] sm:$0xff]
      %v3633 = vld [vmem:[%s354 + $0x50] sm:$0xff]
      %v3634 = vld [vmem:[%s354 + $0x60] sm:$0xff]
      %v3635 = vld [vmem:[%s354 + $0x70] sm:$0xff]
      %v3636 = vld [vmem:[%s354 + $0x1] sm:$0xff]
      %v3637 = vld [vmem:[%s354 + $0x11] sm:$0xff]
      %v3638 = vld [vmem:[%s354 + $0x21] sm:$0xff]
      %v3639 = vld [vmem:[%s354 + $0x31] sm:$0xff]
      %v3640 = vld [vmem:[%s354 + $0x41] sm:$0xff]
      %v3641 = vld [vmem:[%s354 + $0x51] sm:$0xff]
      %v3642 = vld [vmem:[%s354 + $0x61] sm:$0xff]
      %v3643 = vld [vmem:[%s354 + $0x71] sm:$0xff]
      %v3644 = vld [vmem:[%s354 + $0x2] sm:$0xff]
      %v3645 = vld [vmem:[%s354 + $0x12] sm:$0xff]
      %v3646 = vld [vmem:[%s354 + $0x22] sm:$0xff]
      %v3647 = vld [vmem:[%s354 + $0x32] sm:$0xff]
      %v3648 = vld [vmem:[%s354 + $0x42] sm:$0xff]
      %v3649 = vld [vmem:[%s354 + $0x52] sm:$0xff]
      %v3650 = vld [vmem:[%s354 + $0x62] sm:$0xff]
      %v3651 = vld [vmem:[%s354 + $0x72] sm:$0xff]
      %3660 = vrot.lane.b32.xlu0 %v3588, 16
      %v3661 = vpop.permute.xlu0 %3660
      %3662 = vrot.lane.b32.xlu0 %v3589, 16
      %v3663 = vpop.permute.xlu0 %3662
      %3664 = vrot.lane.b32.xlu0 %v3590, 16
      %v3665 = vpop.permute.xlu0 %3664
      %3666 = vrot.lane.b32.xlu0 %v3591, 16
      %v3667 = vpop.permute.xlu0 %3666
      %3668 = vrot.lane.b32.xlu0 %v3592, 16
      %v3669 = vpop.permute.xlu0 %3668
      %3670 = vrot.lane.b32.xlu0 %v3593, 16
      %v3671 = vpop.permute.xlu0 %3670
      %3672 = vrot.lane.b32.xlu0 %v3594, 16
      %v3673 = vpop.permute.xlu0 %3672
      %3674 = vrot.lane.b32.xlu0 %v3595, 16
      %v3675 = vpop.permute.xlu0 %3674
      %3692 = vrot.lane.b32.xlu0 %v3596, 32
      %v3693 = vpop.permute.xlu0 %3692
      %3694 = vrot.lane.b32.xlu0 %v3597, 32
      %v3695 = vpop.permute.xlu0 %3694
      %3696 = vrot.lane.b32.xlu0 %v3598, 32
      %v3697 = vpop.permute.xlu0 %3696
      %3698 = vrot.lane.b32.xlu0 %v3599, 32
      %v3699 = vpop.permute.xlu0 %3698
      %3700 = vrot.lane.b32.xlu0 %v3600, 32
      %v3701 = vpop.permute.xlu0 %3700
      %3702 = vrot.lane.b32.xlu0 %v3601, 32
      %v3703 = vpop.permute.xlu0 %3702
      %3704 = vrot.lane.b32.xlu0 %v3602, 32
      %v3705 = vpop.permute.xlu0 %3704
      %3706 = vrot.lane.b32.xlu0 %v3603, 32
      %v3707 = vpop.permute.xlu0 %3706
      %3724 = vrot.lane.b32.xlu0 %v3604, 48
      %v3725 = vpop.permute.xlu0 %3724
      %3726 = vrot.lane.b32.xlu0 %v3605, 48
      %v3727 = vpop.permute.xlu0 %3726
      %3728 = vrot.lane.b32.xlu0 %v3606, 48
      %v3729 = vpop.permute.xlu0 %3728
      %3730 = vrot.lane.b32.xlu0 %v3607, 48
      %v3731 = vpop.permute.xlu0 %3730
      %3732 = vrot.lane.b32.xlu0 %v3608, 48
      %v3733 = vpop.permute.xlu0 %3732
      %3734 = vrot.lane.b32.xlu0 %v3609, 48
      %v3735 = vpop.permute.xlu0 %3734
      %3736 = vrot.lane.b32.xlu0 %v3610, 48
      %v3737 = vpop.permute.xlu0 %3736
      %3738 = vrot.lane.b32.xlu0 %v3611, 48
      %v3739 = vpop.permute.xlu0 %3738
      %3756 = vrot.lane.b32.xlu0 %v3612, 64
      %v3757 = vpop.permute.xlu0 %3756
      %3758 = vrot.lane.b32.xlu0 %v3613, 64
      %v3759 = vpop.permute.xlu0 %3758
      %3760 = vrot.lane.b32.xlu0 %v3614, 64
      %v3761 = vpop.permute.xlu0 %3760
      %3762 = vrot.lane.b32.xlu0 %v3615, 64
      %v3763 = vpop.permute.xlu0 %3762
      %3764 = vrot.lane.b32.xlu0 %v3616, 64
      %v3765 = vpop.permute.xlu0 %3764
      %3766 = vrot.lane.b32.xlu0 %v3617, 64
      %v3767 = vpop.permute.xlu0 %3766
      %3768 = vrot.lane.b32.xlu0 %v3618, 64
      %v3769 = vpop.permute.xlu0 %3768
      %3770 = vrot.lane.b32.xlu0 %v3619, 64
      %v3771 = vpop.permute.xlu0 %3770
      %3788 = vrot.lane.b32.xlu0 %v3620, 80
      %v3789 = vpop.permute.xlu0 %3788
      %3790 = vrot.lane.b32.xlu0 %v3621, 80
      %v3791 = vpop.permute.xlu0 %3790
      %3792 = vrot.lane.b32.xlu0 %v3622, 80
      %v3793 = vpop.permute.xlu0 %3792
      %3794 = vrot.lane.b32.xlu0 %v3623, 80
      %v3795 = vpop.permute.xlu0 %3794
      %3796 = vrot.lane.b32.xlu0 %v3624, 80
      %v3797 = vpop.permute.xlu0 %3796
      %3798 = vrot.lane.b32.xlu0 %v3625, 80
      %v3799 = vpop.permute.xlu0 %3798
      %3800 = vrot.lane.b32.xlu0 %v3626, 80
      %v3801 = vpop.permute.xlu0 %3800
      %3802 = vrot.lane.b32.xlu0 %v3627, 80
      %v3803 = vpop.permute.xlu0 %3802
      %3820 = vrot.lane.b32.xlu0 %v3628, 96
      %v3821 = vpop.permute.xlu0 %3820
      %3822 = vrot.lane.b32.xlu0 %v3629, 96
      %v3823 = vpop.permute.xlu0 %3822
      %3824 = vrot.lane.b32.xlu0 %v3630, 96
      %v3825 = vpop.permute.xlu0 %3824
      %3826 = vrot.lane.b32.xlu0 %v3631, 96
      %v3827 = vpop.permute.xlu0 %3826
      %3828 = vrot.lane.b32.xlu0 %v3632, 96
      %v3829 = vpop.permute.xlu0 %3828
      %3830 = vrot.lane.b32.xlu0 %v3633, 96
      %v3831 = vpop.permute.xlu0 %3830
      %3832 = vrot.lane.b32.xlu0 %v3634, 96
      %v3833 = vpop.permute.xlu0 %3832
      %3834 = vrot.lane.b32.xlu0 %v3635, 96
      %v3835 = vpop.permute.xlu0 %3834
      %3852 = vrot.lane.b32.xlu0 %v3636, 112
      %v3853 = vpop.permute.xlu0 %3852
      %3854 = vrot.lane.b32.xlu0 %v3637, 112
      %v3855 = vpop.permute.xlu0 %3854
      %3856 = vrot.lane.b32.xlu0 %v3638, 112
      %v3857 = vpop.permute.xlu0 %3856
      %3858 = vrot.lane.b32.xlu0 %v3639, 112
      %v3859 = vpop.permute.xlu0 %3858
      %3860 = vrot.lane.b32.xlu0 %v3640, 112
      %v3861 = vpop.permute.xlu0 %3860
      %3862 = vrot.lane.b32.xlu0 %v3641, 112
      %v3863 = vpop.permute.xlu0 %3862
      %3864 = vrot.lane.b32.xlu0 %v3642, 112
      %v3865 = vpop.permute.xlu0 %3864
      %3866 = vrot.lane.b32.xlu0 %v3643, 112
      %v3867 = vpop.permute.xlu0 %3866
      %v3876 = vsel %vm253, %v3580, %v3661
      %v3877 = vsel %vm253, %v3581, %v3663
      %v3878 = vsel %vm253, %v3582, %v3665
      %v3879 = vsel %vm253, %v3583, %v3667
      %v3880 = vsel %vm253, %v3584, %v3669
      %v3881 = vsel %vm253, %v3585, %v3671
      %v3882 = vsel %vm253, %v3586, %v3673
      %v3883 = vsel %vm253, %v3587, %v3675
      %v3884 = vsel %vm611, %v3876, %v3693
      %v3885 = vsel %vm611, %v3877, %v3695
      %v3886 = vsel %vm611, %v3878, %v3697
      %v3887 = vsel %vm611, %v3879, %v3699
      %v3888 = vsel %vm611, %v3880, %v3701
      %v3889 = vsel %vm611, %v3881, %v3703
      %v3890 = vsel %vm611, %v3882, %v3705
      %v3891 = vsel %vm611, %v3883, %v3707
      %v3892 = vsel %vm620, %v3884, %v3725
      %v3893 = vsel %vm620, %v3885, %v3727
      %v3894 = vsel %vm620, %v3886, %v3729
      %v3895 = vsel %vm620, %v3887, %v3731
      %v3896 = vsel %vm620, %v3888, %v3733
      %v3897 = vsel %vm620, %v3889, %v3735
      %v3898 = vsel %vm620, %v3890, %v3737
      %v3899 = vsel %vm620, %v3891, %v3739
      %v3900 = vsel %vm629, %v3892, %v3757
      %v3901 = vsel %vm629, %v3893, %v3759
      %v3902 = vsel %vm629, %v3894, %v3761
      %v3903 = vsel %vm629, %v3895, %v3763
      %v3904 = vsel %vm629, %v3896, %v3765
      %v3905 = vsel %vm629, %v3897, %v3767
      %v3906 = vsel %vm629, %v3898, %v3769
      %v3907 = vsel %vm629, %v3899, %v3771
      %v3908 = vsel %vm638, %v3900, %v3789
      %v3909 = vsel %vm638, %v3901, %v3791
      %v3910 = vsel %vm638, %v3902, %v3793
      %v3911 = vsel %vm638, %v3903, %v3795
      %v3912 = vsel %vm638, %v3904, %v3797
      %v3913 = vsel %vm638, %v3905, %v3799
      %v3914 = vsel %vm638, %v3906, %v3801
      %v3915 = vsel %vm638, %v3907, %v3803
      %v3916 = vsel %vm647, %v3908, %v3821
      %v3917 = vsel %vm647, %v3909, %v3823
      %v3918 = vsel %vm647, %v3910, %v3825
      %v3919 = vsel %vm647, %v3911, %v3827
      %v3920 = vsel %vm647, %v3912, %v3829
      %v3921 = vsel %vm647, %v3913, %v3831
      %v3922 = vsel %vm647, %v3914, %v3833
      %v3923 = vsel %vm647, %v3915, %v3835
      %v3924 = vsel %vm656, %v3916, %v3853
      %v3925 = vsel %vm656, %v3917, %v3855
      %v3926 = vsel %vm656, %v3918, %v3857
      %v3927 = vsel %vm656, %v3919, %v3859
      %v3928 = vsel %vm656, %v3920, %v3861
      %v3929 = vsel %vm656, %v3921, %v3863
      %v3930 = vsel %vm656, %v3922, %v3865
      %v3931 = vsel %vm656, %v3923, %v3867
      %v3932 = vpack.c.bf16 %v3925, %v3924
      %v3933 = vpack.c.bf16 %v3645, %v3644
      %v3934 = vpack.c.bf16 %v3927, %v3926
      %v3935 = vpack.c.bf16 %v3647, %v3646
      %v3936 = vpack.c.bf16 %v3929, %v3928
      %v3937 = vpack.c.bf16 %v3649, %v3648
      %v3938 = vpack.c.bf16 %v3931, %v3930
      %v3939 = vpack.c.bf16 %v3651, %v3650
      %s3940 = scalar_lea.vmem %s1, 432
      %v3941 = vld [vmem:[%s3940] sm:$0xf]
      %v3942 = vld [vmem:[%s3940 + $0x4] sm:$0xf]
      %v3943 = vld [vmem:[%s3940 + $0x8] sm:$0xf]
      %v3944 = vld [vmem:[%s3940 + $0xc] sm:$0xf]
      %v3945 = vld [vmem:[%s3940 + $0x10] sm:$0xf]
      %v3946 = vld [vmem:[%s3940 + $0x14] sm:$0xf]
      %v3947 = vld [vmem:[%s3940 + $0x18] sm:$0xf]
      %v3948 = vld [vmem:[%s3940 + $0x1c] sm:$0xf]
      %v3949 = vld [vmem:[%s3940 + $0x20] sm:$0xf]
      %v3950 = vld [vmem:[%s3940 + $0x24] sm:$0xf]
      %v3951 = vld [vmem:[%s3940 + $0x28] sm:$0xf]
      %v3952 = vld [vmem:[%s3940 + $0x2c] sm:$0xf]
      %v3953 = vld [vmem:[%s3940 + $0x30] sm:$0xf]
      %v3954 = vld [vmem:[%s3940 + $0x34] sm:$0xf]
      %v3955 = vld [vmem:[%s3940 + $0x38] sm:$0xf]
      %v3956 = vld [vmem:[%s3940 + $0x3c] sm:$0xf]
      %v3957 = vld [vmem:[%s3940 + $0x40] sm:$0xf]
      %v3958 = vld [vmem:[%s3940 + $0x44] sm:$0xf]
      %s3959 = scalar_lea.vmem %s2, 6
      %v3960 = vld [vmem:[%s3959] sm:$0x1]
      %v3962 = vperm.slane %v3960, 0
      %v3982 = vunpack.c.l.b16 %v3941
      %v3983 = vunpack.c.l.b16 %v3942
      %v3984 = vunpack.c.l.b16 %v3943
      %v3985 = vunpack.c.l.b16 %v3944
      %v3986 = vunpack.c.l.b16 %v3945
      %v3987 = vunpack.c.l.b16 %v3946
      %v3988 = vunpack.c.l.b16 %v3947
      %v3989 = vunpack.c.l.b16 %v3948
      %v3990 = vunpack.c.l.b16 %v3949
      %v3991 = vunpack.c.l.b16 %v3950
      %v3992 = vunpack.c.l.b16 %v3951
      %v3993 = vunpack.c.l.b16 %v3952
      %v3994 = vunpack.c.l.b16 %v3953
      %v3995 = vunpack.c.l.b16 %v3954
      %v3996 = vunpack.c.l.b16 %v3955
      %v3997 = vunpack.c.l.b16 %v3956
      %v3998 = vunpack.c.l.b16 %v3957
      %v3999 = vunpack.c.l.b16 %v3958
      %v4000 = vpack.c.b16 %v3983, %v3982
      %v4001 = vpack.c.b16 %v3985, %v3984
      %v4002 = vpack.c.b16 %v3987, %v3986
      %v4003 = vpack.c.b16 %v3989, %v3988
      %v4004 = vpack.c.b16 %v3991, %v3990
      %v4005 = vpack.c.b16 %v3993, %v3992
      %v4006 = vpack.c.b16 %v3995, %v3994
      %v4007 = vpack.c.b16 %v3997, %v3996
      %v4008 = vpack.c.b16 %v3999, %v3998
      %v4019 = vsel %vm253, %v3933, 0
      %v4022 = vsel %vm253, %v3935, 0
      %v4025 = vsel %vm253, %v3937, 0
      %v4028 = vsel %vm253, %v3939, 0
      %4030 = vmatpush.bf16.msra.mxu0 %v4007
      %4031 = vmatpush.bf16.msra.mxu0 %v4006
      %4032 = vmatpush.bf16.msra.mxu0 %v4005
      %4033 = vmatpush.bf16.msra.mxu0 %v4004
      %4034 = vmatpush.bf16.msra.mxu0 %v4003
      %4035 = vmatpush.bf16.msra.mxu0 %v4002
      %4036 = vmatpush.bf16.msra.mxu0 %v4001
      %4037 = vmatpush.bf16.msra.mxu0 %v4000
      %4038 = vmatmul.bf16.gmra.mxu0 %v3932
      %v4039 = vpop.f32.mrf.mxu0
      %v4040 = vadd.f32 %v3962, %v4039
      %v4041 = vpop.f32.mrf.mxu0
      %v4042 = vadd.f32 %v3962, %v4041
      %4043 = vmatmul.bf16.gmra.mxu0 %v3934
      %v4044 = vpop.f32.mrf.mxu0
      %v4045 = vadd.f32 %v3962, %v4044
      %v4046 = vpop.f32.mrf.mxu0
      %v4047 = vadd.f32 %v3962, %v4046
      %4048 = vmatmul.bf16.gmra.mxu0 %v3936
      %v4049 = vpop.f32.mrf.mxu0
      %v4050 = vadd.f32 %v3962, %v4049
      %v4051 = vpop.f32.mrf.mxu0
      %v4052 = vadd.f32 %v3962, %v4051
      %4053 = vmatmul.bf16.gmra.mxu0 %v3938
      %v4054 = vpop.f32.mrf.mxu0
      %v4055 = vadd.f32 %v3962, %v4054
      %v4056 = vpop.f32.mrf.mxu0
      %v4057 = vadd.f32 %v3962, %v4056
      %4058 = vdwg.mxu0
      %4059 = vmatpush.bf16.msra.mxu0 0
      %4060 = vmatpush.bf16.msra.mxu0 0
      %4061 = vmatpush.bf16.msra.mxu0 0
      %4062 = vmatpush.bf16.msra.mxu0 0
      %4063 = vmatpush.bf16.msra.mxu0 0
      %4064 = vmatpush.bf16.msra.mxu0 0
      %4065 = vmatpush.bf16.msra.mxu0 0
      %4066 = vmatpush.bf16.msra.mxu0 %v4008
      %4067 = vmatmul.bf16.gmra.mxu0 %v4019
      %v4068 = vpop.f32.mrf.mxu0
      %v4069 = vadd.f32 %v4040, %v4068
      %v4070 = vpop.f32.mrf.mxu0
      %v4071 = vadd.f32 %v4042, %v4070
      %4072 = vmatmul.bf16.gmra.mxu0 %v4022
      %v4073 = vpop.f32.mrf.mxu0
      %v4074 = vadd.f32 %v4045, %v4073
      %v4075 = vpop.f32.mrf.mxu0
      %v4076 = vadd.f32 %v4047, %v4075
      %4077 = vmatmul.bf16.gmra.mxu0 %v4025
      %v4078 = vpop.f32.mrf.mxu0
      %v4079 = vadd.f32 %v4050, %v4078
      %v4080 = vpop.f32.mrf.mxu0
      %v4081 = vadd.f32 %v4052, %v4080
      %4082 = vmatmul.bf16.gmra.mxu0 %v4028
      %v4083 = vpop.f32.mrf.mxu0
      %v4084 = vadd.f32 %v4055, %v4083
      %v4085 = vpop.f32.mrf.mxu0
      %v4086 = vadd.f32 %v4057, %v4085
      %4087 = vdwg.mxu0
      %vm4088 = vcmp.ge.f32.partialorder %v4069, 0.0
      %vm4089 = vcmp.ge.f32.partialorder %v4071, 0.0
      %vm4090 = vcmp.ge.f32.partialorder %v4074, 0.0
      %vm4091 = vcmp.ge.f32.partialorder %v4076, 0.0
      %vm4092 = vcmp.ge.f32.partialorder %v4079, 0.0
      %vm4093 = vcmp.ge.f32.partialorder %v4081, 0.0
      %vm4094 = vcmp.ge.f32.partialorder %v4084, 0.0
      %vm4095 = vcmp.ge.f32.partialorder %v4086, 0.0
      %s4096 = scalar_lea.vmem %s3, 6
      %v4097 = vld [vmem:[%s4096] sm:$0x1]
      %v4099 = vperm.slane %v4097, 0
      %v4101 = vmul.f32 %v4069, %v4099
      %v4102 = vmul.f32 %v4071, %v4099
      %v4103 = vmul.f32 %v4074, %v4099
      %v4104 = vmul.f32 %v4076, %v4099
      %v4105 = vmul.f32 %v4079, %v4099
      %v4106 = vmul.f32 %v4081, %v4099
      %v4107 = vmul.f32 %v4084, %v4099
      %v4108 = vmul.f32 %v4086, %v4099
      %v4109 = vsel %vm4088, %v4069, %v4101
      %v4110 = vsel %vm4089, %v4071, %v4102
      %v4111 = vsel %vm4090, %v4074, %v4103
      %v4112 = vsel %vm4091, %v4076, %v4104
      %v4113 = vsel %vm4092, %v4079, %v4105
      %v4114 = vsel %vm4093, %v4081, %v4106
      %v4115 = vsel %vm4094, %v4084, %v4107
      %v4116 = vsel %vm4095, %v4086, %v4108
      %4117 = vst.msk [vmem:[%s297 + $0x1] sm:$0xff] %vm253, %v4109
      %4118 = vst.msk [vmem:[%s297 + $0x11] sm:$0xff] %vm253, %v4110
      %4119 = vst.msk [vmem:[%s297 + $0x21] sm:$0xff] %vm253, %v4111
      %4120 = vst.msk [vmem:[%s297 + $0x31] sm:$0xff] %vm253, %v4112
      %4121 = vst.msk [vmem:[%s297 + $0x41] sm:$0xff] %vm253, %v4113
      %4122 = vst.msk [vmem:[%s297 + $0x51] sm:$0xff] %vm253, %v4114
      %4123 = vst.msk [vmem:[%s297 + $0x61] sm:$0xff] %vm253, %v4115
      %4124 = vst.msk [vmem:[%s297 + $0x71] sm:$0xff] %vm253, %v4116
      %v4125 = vld [vmem:[#allocation2] sm:$0xff]
      %v4126 = vld [vmem:[#allocation2 + $0x10] sm:$0xff]
      %v4127 = vld [vmem:[#allocation2 + $0x20] sm:$0xff]
      %v4128 = vld [vmem:[#allocation2 + $0x30] sm:$0xff]
      %v4129 = vld [vmem:[#allocation2 + $0x40] sm:$0xff]
      %v4130 = vld [vmem:[#allocation2 + $0x50] sm:$0xff]
      %v4131 = vld [vmem:[#allocation2 + $0x60] sm:$0xff]
      %v4132 = vld [vmem:[#allocation2 + $0x70] sm:$0xff]
      %v4133 = vld [vmem:[#allocation2 + $0x1] sm:$0xff]
      %v4134 = vld [vmem:[#allocation2 + $0x11] sm:$0xff]
      %v4135 = vld [vmem:[#allocation2 + $0x21] sm:$0xff]
      %v4136 = vld [vmem:[#allocation2 + $0x31] sm:$0xff]
      %v4137 = vld [vmem:[#allocation2 + $0x41] sm:$0xff]
      %v4138 = vld [vmem:[#allocation2 + $0x51] sm:$0xff]
      %v4139 = vld [vmem:[#allocation2 + $0x61] sm:$0xff]
      %v4140 = vld [vmem:[#allocation2 + $0x71] sm:$0xff]
      %v4141 = vld [vmem:[#allocation2 + $0x2] sm:$0xff]
      %v4142 = vld [vmem:[#allocation2 + $0x12] sm:$0xff]
      %v4143 = vld [vmem:[#allocation2 + $0x22] sm:$0xff]
      %v4144 = vld [vmem:[#allocation2 + $0x32] sm:$0xff]
      %v4145 = vld [vmem:[#allocation2 + $0x42] sm:$0xff]
      %v4146 = vld [vmem:[#allocation2 + $0x52] sm:$0xff]
      %v4147 = vld [vmem:[#allocation2 + $0x62] sm:$0xff]
      %v4148 = vld [vmem:[#allocation2 + $0x72] sm:$0xff]
      %v4149 = vld [vmem:[%s297] sm:$0xff]
      %v4150 = vld [vmem:[%s297 + $0x10] sm:$0xff]
      %v4151 = vld [vmem:[%s297 + $0x20] sm:$0xff]
      %v4152 = vld [vmem:[%s297 + $0x30] sm:$0xff]
      %v4153 = vld [vmem:[%s297 + $0x40] sm:$0xff]
      %v4154 = vld [vmem:[%s297 + $0x50] sm:$0xff]
      %v4155 = vld [vmem:[%s297 + $0x60] sm:$0xff]
      %v4156 = vld [vmem:[%s297 + $0x70] sm:$0xff]
      %v4157 = vld [vmem:[%s297 + $0x1] sm:$0xff]
      %v4158 = vld [vmem:[%s297 + $0x11] sm:$0xff]
      %v4159 = vld [vmem:[%s297 + $0x21] sm:$0xff]
      %v4160 = vld [vmem:[%s297 + $0x31] sm:$0xff]
      %v4161 = vld [vmem:[%s297 + $0x41] sm:$0xff]
      %v4162 = vld [vmem:[%s297 + $0x51] sm:$0xff]
      %v4163 = vld [vmem:[%s297 + $0x61] sm:$0xff]
      %v4164 = vld [vmem:[%s297 + $0x71] sm:$0xff]
      %v4165 = vld [vmem:[%s297 + $0x2] sm:$0xff]
      %v4166 = vld [vmem:[%s297 + $0x12] sm:$0xff]
      %v4167 = vld [vmem:[%s297 + $0x22] sm:$0xff]
      %v4168 = vld [vmem:[%s297 + $0x32] sm:$0xff]
      %v4169 = vld [vmem:[%s297 + $0x42] sm:$0xff]
      %v4170 = vld [vmem:[%s297 + $0x52] sm:$0xff]
      %v4171 = vld [vmem:[%s297 + $0x62] sm:$0xff]
      %v4172 = vld [vmem:[%s297 + $0x72] sm:$0xff]
      %v4173 = vld [vmem:[%s354] sm:$0xff]
      %v4174 = vld [vmem:[%s354 + $0x10] sm:$0xff]
      %v4175 = vld [vmem:[%s354 + $0x20] sm:$0xff]
      %v4176 = vld [vmem:[%s354 + $0x30] sm:$0xff]
      %v4177 = vld [vmem:[%s354 + $0x40] sm:$0xff]
      %v4178 = vld [vmem:[%s354 + $0x50] sm:$0xff]
      %v4179 = vld [vmem:[%s354 + $0x60] sm:$0xff]
      %v4180 = vld [vmem:[%s354 + $0x70] sm:$0xff]
      %v4181 = vld [vmem:[%s354 + $0x1] sm:$0xff]
      %v4182 = vld [vmem:[%s354 + $0x11] sm:$0xff]
      %v4183 = vld [vmem:[%s354 + $0x21] sm:$0xff]
      %v4184 = vld [vmem:[%s354 + $0x31] sm:$0xff]
      %v4185 = vld [vmem:[%s354 + $0x41] sm:$0xff]
      %v4186 = vld [vmem:[%s354 + $0x51] sm:$0xff]
      %v4187 = vld [vmem:[%s354 + $0x61] sm:$0xff]
      %v4188 = vld [vmem:[%s354 + $0x71] sm:$0xff]
      %v4189 = vld [vmem:[%s354 + $0x2] sm:$0xff]
      %v4190 = vld [vmem:[%s354 + $0x12] sm:$0xff]
      %v4191 = vld [vmem:[%s354 + $0x22] sm:$0xff]
      %v4192 = vld [vmem:[%s354 + $0x32] sm:$0xff]
      %v4193 = vld [vmem:[%s354 + $0x42] sm:$0xff]
      %v4194 = vld [vmem:[%s354 + $0x52] sm:$0xff]
      %v4195 = vld [vmem:[%s354 + $0x62] sm:$0xff]
      %v4196 = vld [vmem:[%s354 + $0x72] sm:$0xff]
      %4205 = vrot.lane.b32.xlu0 %v4133, 16
      %v4206 = vpop.permute.xlu0 %4205
      %4207 = vrot.lane.b32.xlu0 %v4134, 16
      %v4208 = vpop.permute.xlu0 %4207
      %4209 = vrot.lane.b32.xlu0 %v4135, 16
      %v4210 = vpop.permute.xlu0 %4209
      %4211 = vrot.lane.b32.xlu0 %v4136, 16
      %v4212 = vpop.permute.xlu0 %4211
      %4213 = vrot.lane.b32.xlu0 %v4137, 16
      %v4214 = vpop.permute.xlu0 %4213
      %4215 = vrot.lane.b32.xlu0 %v4138, 16
      %v4216 = vpop.permute.xlu0 %4215
      %4217 = vrot.lane.b32.xlu0 %v4139, 16
      %v4218 = vpop.permute.xlu0 %4217
      %4219 = vrot.lane.b32.xlu0 %v4140, 16
      %v4220 = vpop.permute.xlu0 %4219
      %4237 = vrot.lane.b32.xlu0 %v4141, 32
      %v4238 = vpop.permute.xlu0 %4237
      %4239 = vrot.lane.b32.xlu0 %v4142, 32
      %v4240 = vpop.permute.xlu0 %4239
      %4241 = vrot.lane.b32.xlu0 %v4143, 32
      %v4242 = vpop.permute.xlu0 %4241
      %4243 = vrot.lane.b32.xlu0 %v4144, 32
      %v4244 = vpop.permute.xlu0 %4243
      %4245 = vrot.lane.b32.xlu0 %v4145, 32
      %v4246 = vpop.permute.xlu0 %4245
      %4247 = vrot.lane.b32.xlu0 %v4146, 32
      %v4248 = vpop.permute.xlu0 %4247
      %4249 = vrot.lane.b32.xlu0 %v4147, 32
      %v4250 = vpop.permute.xlu0 %4249
      %4251 = vrot.lane.b32.xlu0 %v4148, 32
      %v4252 = vpop.permute.xlu0 %4251
      %4269 = vrot.lane.b32.xlu0 %v4149, 48
      %v4270 = vpop.permute.xlu0 %4269
      %4271 = vrot.lane.b32.xlu0 %v4150, 48
      %v4272 = vpop.permute.xlu0 %4271
      %4273 = vrot.lane.b32.xlu0 %v4151, 48
      %v4274 = vpop.permute.xlu0 %4273
      %4275 = vrot.lane.b32.xlu0 %v4152, 48
      %v4276 = vpop.permute.xlu0 %4275
      %4277 = vrot.lane.b32.xlu0 %v4153, 48
      %v4278 = vpop.permute.xlu0 %4277
      %4279 = vrot.lane.b32.xlu0 %v4154, 48
      %v4280 = vpop.permute.xlu0 %4279
      %4281 = vrot.lane.b32.xlu0 %v4155, 48
      %v4282 = vpop.permute.xlu0 %4281
      %4283 = vrot.lane.b32.xlu0 %v4156, 48
      %v4284 = vpop.permute.xlu0 %4283
      %4301 = vrot.lane.b32.xlu0 %v4157, 64
      %v4302 = vpop.permute.xlu0 %4301
      %4303 = vrot.lane.b32.xlu0 %v4158, 64
      %v4304 = vpop.permute.xlu0 %4303
      %4305 = vrot.lane.b32.xlu0 %v4159, 64
      %v4306 = vpop.permute.xlu0 %4305
      %4307 = vrot.lane.b32.xlu0 %v4160, 64
      %v4308 = vpop.permute.xlu0 %4307
      %4309 = vrot.lane.b32.xlu0 %v4161, 64
      %v4310 = vpop.permute.xlu0 %4309
      %4311 = vrot.lane.b32.xlu0 %v4162, 64
      %v4312 = vpop.permute.xlu0 %4311
      %4313 = vrot.lane.b32.xlu0 %v4163, 64
      %v4314 = vpop.permute.xlu0 %4313
      %4315 = vrot.lane.b32.xlu0 %v4164, 64
      %v4316 = vpop.permute.xlu0 %4315
      %4333 = vrot.lane.b32.xlu0 %v4165, 80
      %v4334 = vpop.permute.xlu0 %4333
      %4335 = vrot.lane.b32.xlu0 %v4166, 80
      %v4336 = vpop.permute.xlu0 %4335
      %4337 = vrot.lane.b32.xlu0 %v4167, 80
      %v4338 = vpop.permute.xlu0 %4337
      %4339 = vrot.lane.b32.xlu0 %v4168, 80
      %v4340 = vpop.permute.xlu0 %4339
      %4341 = vrot.lane.b32.xlu0 %v4169, 80
      %v4342 = vpop.permute.xlu0 %4341
      %4343 = vrot.lane.b32.xlu0 %v4170, 80
      %v4344 = vpop.permute.xlu0 %4343
      %4345 = vrot.lane.b32.xlu0 %v4171, 80
      %v4346 = vpop.permute.xlu0 %4345
      %4347 = vrot.lane.b32.xlu0 %v4172, 80
      %v4348 = vpop.permute.xlu0 %4347
      %4365 = vrot.lane.b32.xlu0 %v4173, 96
      %v4366 = vpop.permute.xlu0 %4365
      %4367 = vrot.lane.b32.xlu0 %v4174, 96
      %v4368 = vpop.permute.xlu0 %4367
      %4369 = vrot.lane.b32.xlu0 %v4175, 96
      %v4370 = vpop.permute.xlu0 %4369
      %4371 = vrot.lane.b32.xlu0 %v4176, 96
      %v4372 = vpop.permute.xlu0 %4371
      %4373 = vrot.lane.b32.xlu0 %v4177, 96
      %v4374 = vpop.permute.xlu0 %4373
      %4375 = vrot.lane.b32.xlu0 %v4178, 96
      %v4376 = vpop.permute.xlu0 %4375
      %4377 = vrot.lane.b32.xlu0 %v4179, 96
      %v4378 = vpop.permute.xlu0 %4377
      %4379 = vrot.lane.b32.xlu0 %v4180, 96
      %v4380 = vpop.permute.xlu0 %4379
      %4397 = vrot.lane.b32.xlu0 %v4181, 112
      %v4398 = vpop.permute.xlu0 %4397
      %4399 = vrot.lane.b32.xlu0 %v4182, 112
      %v4400 = vpop.permute.xlu0 %4399
      %4401 = vrot.lane.b32.xlu0 %v4183, 112
      %v4402 = vpop.permute.xlu0 %4401
      %4403 = vrot.lane.b32.xlu0 %v4184, 112
      %v4404 = vpop.permute.xlu0 %4403
      %4405 = vrot.lane.b32.xlu0 %v4185, 112
      %v4406 = vpop.permute.xlu0 %4405
      %4407 = vrot.lane.b32.xlu0 %v4186, 112
      %v4408 = vpop.permute.xlu0 %4407
      %4409 = vrot.lane.b32.xlu0 %v4187, 112
      %v4410 = vpop.permute.xlu0 %4409
      %4411 = vrot.lane.b32.xlu0 %v4188, 112
      %v4412 = vpop.permute.xlu0 %4411
      %v4421 = vsel %vm253, %v4125, %v4206
      %v4422 = vsel %vm253, %v4126, %v4208
      %v4423 = vsel %vm253, %v4127, %v4210
      %v4424 = vsel %vm253, %v4128, %v4212
      %v4425 = vsel %vm253, %v4129, %v4214
      %v4426 = vsel %vm253, %v4130, %v4216
      %v4427 = vsel %vm253, %v4131, %v4218
      %v4428 = vsel %vm253, %v4132, %v4220
      %v4429 = vsel %vm611, %v4421, %v4238
      %v4430 = vsel %vm611, %v4422, %v4240
      %v4431 = vsel %vm611, %v4423, %v4242
      %v4432 = vsel %vm611, %v4424, %v4244
      %v4433 = vsel %vm611, %v4425, %v4246
      %v4434 = vsel %vm611, %v4426, %v4248
      %v4435 = vsel %vm611, %v4427, %v4250
      %v4436 = vsel %vm611, %v4428, %v4252
      %v4437 = vsel %vm620, %v4429, %v4270
      %v4438 = vsel %vm620, %v4430, %v4272
      %v4439 = vsel %vm620, %v4431, %v4274
      %v4440 = vsel %vm620, %v4432, %v4276
      %v4441 = vsel %vm620, %v4433, %v4278
      %v4442 = vsel %vm620, %v4434, %v4280
      %v4443 = vsel %vm620, %v4435, %v4282
      %v4444 = vsel %vm620, %v4436, %v4284
      %v4445 = vsel %vm629, %v4437, %v4302
      %v4446 = vsel %vm629, %v4438, %v4304
      %v4447 = vsel %vm629, %v4439, %v4306
      %v4448 = vsel %vm629, %v4440, %v4308
      %v4449 = vsel %vm629, %v4441, %v4310
      %v4450 = vsel %vm629, %v4442, %v4312
      %v4451 = vsel %vm629, %v4443, %v4314
      %v4452 = vsel %vm629, %v4444, %v4316
      %v4453 = vsel %vm638, %v4445, %v4334
      %v4454 = vsel %vm638, %v4446, %v4336
      %v4455 = vsel %vm638, %v4447, %v4338
      %v4456 = vsel %vm638, %v4448, %v4340
      %v4457 = vsel %vm638, %v4449, %v4342
      %v4458 = vsel %vm638, %v4450, %v4344
      %v4459 = vsel %vm638, %v4451, %v4346
      %v4460 = vsel %vm638, %v4452, %v4348
      %v4461 = vsel %vm647, %v4453, %v4366
      %v4462 = vsel %vm647, %v4454, %v4368
      %v4463 = vsel %vm647, %v4455, %v4370
      %v4464 = vsel %vm647, %v4456, %v4372
      %v4465 = vsel %vm647, %v4457, %v4374
      %v4466 = vsel %vm647, %v4458, %v4376
      %v4467 = vsel %vm647, %v4459, %v4378
      %v4468 = vsel %vm647, %v4460, %v4380
      %v4469 = vsel %vm656, %v4461, %v4398
      %v4470 = vsel %vm656, %v4462, %v4400
      %v4471 = vsel %vm656, %v4463, %v4402
      %v4472 = vsel %vm656, %v4464, %v4404
      %v4473 = vsel %vm656, %v4465, %v4406
      %v4474 = vsel %vm656, %v4466, %v4408
      %v4475 = vsel %vm656, %v4467, %v4410
      %v4476 = vsel %vm656, %v4468, %v4412
      %v4477 = vpack.c.bf16 %v4470, %v4469
      %v4478 = vpack.c.bf16 %v4190, %v4189
      %v4479 = vpack.c.bf16 %v4472, %v4471
      %v4480 = vpack.c.bf16 %v4192, %v4191
      %v4481 = vpack.c.bf16 %v4474, %v4473
      %v4482 = vpack.c.bf16 %v4194, %v4193
      %v4483 = vpack.c.bf16 %v4476, %v4475
      %v4484 = vpack.c.bf16 %v4196, %v4195
      %s4485 = scalar_lea.vmem %s1, 504
      %v4486 = vld [vmem:[%s4485] sm:$0xf]
      %v4487 = vld [vmem:[%s4485 + $0x4] sm:$0xf]
      %v4488 = vld [vmem:[%s4485 + $0x8] sm:$0xf]
      %v4489 = vld [vmem:[%s4485 + $0xc] sm:$0xf]
      %v4490 = vld [vmem:[%s4485 + $0x10] sm:$0xf]
      %v4491 = vld [vmem:[%s4485 + $0x14] sm:$0xf]
      %v4492 = vld [vmem:[%s4485 + $0x18] sm:$0xf]
      %v4493 = vld [vmem:[%s4485 + $0x1c] sm:$0xf]
      %v4494 = vld [vmem:[%s4485 + $0x20] sm:$0xf]
      %v4495 = vld [vmem:[%s4485 + $0x24] sm:$0xf]
      %v4496 = vld [vmem:[%s4485 + $0x28] sm:$0xf]
      %v4497 = vld [vmem:[%s4485 + $0x2c] sm:$0xf]
      %v4498 = vld [vmem:[%s4485 + $0x30] sm:$0xf]
      %v4499 = vld [vmem:[%s4485 + $0x34] sm:$0xf]
      %v4500 = vld [vmem:[%s4485 + $0x38] sm:$0xf]
      %v4501 = vld [vmem:[%s4485 + $0x3c] sm:$0xf]
      %v4502 = vld [vmem:[%s4485 + $0x40] sm:$0xf]
      %v4503 = vld [vmem:[%s4485 + $0x44] sm:$0xf]
      %s4504 = scalar_lea.vmem %s2, 7
      %v4505 = vld [vmem:[%s4504] sm:$0x1]
      %v4507 = vperm.slane %v4505, 0
      %v4527 = vunpack.c.l.b16 %v4486
      %v4528 = vunpack.c.l.b16 %v4487
      %v4529 = vunpack.c.l.b16 %v4488
      %v4530 = vunpack.c.l.b16 %v4489
      %v4531 = vunpack.c.l.b16 %v4490
      %v4532 = vunpack.c.l.b16 %v4491
      %v4533 = vunpack.c.l.b16 %v4492
      %v4534 = vunpack.c.l.b16 %v4493
      %v4535 = vunpack.c.l.b16 %v4494
      %v4536 = vunpack.c.l.b16 %v4495
      %v4537 = vunpack.c.l.b16 %v4496
      %v4538 = vunpack.c.l.b16 %v4497
      %v4539 = vunpack.c.l.b16 %v4498
      %v4540 = vunpack.c.l.b16 %v4499
      %v4541 = vunpack.c.l.b16 %v4500
      %v4542 = vunpack.c.l.b16 %v4501
      %v4543 = vunpack.c.l.b16 %v4502
      %v4544 = vunpack.c.l.b16 %v4503
      %v4545 = vpack.c.b16 %v4528, %v4527
      %v4546 = vpack.c.b16 %v4530, %v4529
      %v4547 = vpack.c.b16 %v4532, %v4531
      %v4548 = vpack.c.b16 %v4534, %v4533
      %v4549 = vpack.c.b16 %v4536, %v4535
      %v4550 = vpack.c.b16 %v4538, %v4537
      %v4551 = vpack.c.b16 %v4540, %v4539
      %v4552 = vpack.c.b16 %v4542, %v4541
      %v4553 = vpack.c.b16 %v4544, %v4543
      %v4564 = vsel %vm253, %v4478, 0
      %v4567 = vsel %vm253, %v4480, 0
      %v4570 = vsel %vm253, %v4482, 0
      %v4573 = vsel %vm253, %v4484, 0
      %4575 = vmatpush.bf16.msra.mxu0 %v4552
      %4576 = vmatpush.bf16.msra.mxu0 %v4551
      %4577 = vmatpush.bf16.msra.mxu0 %v4550
      %4578 = vmatpush.bf16.msra.mxu0 %v4549
      %4579 = vmatpush.bf16.msra.mxu0 %v4548
      %4580 = vmatpush.bf16.msra.mxu0 %v4547
      %4581 = vmatpush.bf16.msra.mxu0 %v4546
      %4582 = vmatpush.bf16.msra.mxu0 %v4545
      %4583 = vmatmul.bf16.gmra.mxu0 %v4477
      %v4584 = vpop.f32.mrf.mxu0
      %v4585 = vadd.f32 %v4507, %v4584
      %v4586 = vpop.f32.mrf.mxu0
      %v4587 = vadd.f32 %v4507, %v4586
      %4588 = vmatmul.bf16.gmra.mxu0 %v4479
      %v4589 = vpop.f32.mrf.mxu0
      %v4590 = vadd.f32 %v4507, %v4589
      %v4591 = vpop.f32.mrf.mxu0
      %v4592 = vadd.f32 %v4507, %v4591
      %4593 = vmatmul.bf16.gmra.mxu0 %v4481
      %v4594 = vpop.f32.mrf.mxu0
      %v4595 = vadd.f32 %v4507, %v4594
      %v4596 = vpop.f32.mrf.mxu0
      %v4597 = vadd.f32 %v4507, %v4596
      %4598 = vmatmul.bf16.gmra.mxu0 %v4483
      %v4599 = vpop.f32.mrf.mxu0
      %v4600 = vadd.f32 %v4507, %v4599
      %v4601 = vpop.f32.mrf.mxu0
      %v4602 = vadd.f32 %v4507, %v4601
      %4603 = vdwg.mxu0
      %4604 = vmatpush.bf16.msra.mxu0 0
      %4605 = vmatpush.bf16.msra.mxu0 0
      %4606 = vmatpush.bf16.msra.mxu0 0
      %4607 = vmatpush.bf16.msra.mxu0 0
      %4608 = vmatpush.bf16.msra.mxu0 0
      %4609 = vmatpush.bf16.msra.mxu0 0
      %4610 = vmatpush.bf16.msra.mxu0 0
      %4611 = vmatpush.bf16.msra.mxu0 %v4553
      %4612 = vmatmul.bf16.gmra.mxu0 %v4564
      %v4613 = vpop.f32.mrf.mxu0
      %v4614 = vadd.f32 %v4585, %v4613
      %v4615 = vpop.f32.mrf.mxu0
      %v4616 = vadd.f32 %v4587, %v4615
      %4617 = vmatmul.bf16.gmra.mxu0 %v4567
      %v4618 = vpop.f32.mrf.mxu0
      %v4619 = vadd.f32 %v4590, %v4618
      %v4620 = vpop.f32.mrf.mxu0
      %v4621 = vadd.f32 %v4592, %v4620
      %4622 = vmatmul.bf16.gmra.mxu0 %v4570
      %v4623 = vpop.f32.mrf.mxu0
      %v4624 = vadd.f32 %v4595, %v4623
      %v4625 = vpop.f32.mrf.mxu0
      %v4626 = vadd.f32 %v4597, %v4625
      %4627 = vmatmul.bf16.gmra.mxu0 %v4573
      %v4628 = vpop.f32.mrf.mxu0
      %v4629 = vadd.f32 %v4600, %v4628
      %v4630 = vpop.f32.mrf.mxu0
      %v4631 = vadd.f32 %v4602, %v4630
      %4632 = vdwg.mxu0
      %vm4633 = vcmp.ge.f32.partialorder %v4614, 0.0
      %vm4634 = vcmp.ge.f32.partialorder %v4616, 0.0
      %vm4635 = vcmp.ge.f32.partialorder %v4619, 0.0
      %vm4636 = vcmp.ge.f32.partialorder %v4621, 0.0
      %vm4637 = vcmp.ge.f32.partialorder %v4624, 0.0
      %vm4638 = vcmp.ge.f32.partialorder %v4626, 0.0
      %vm4639 = vcmp.ge.f32.partialorder %v4629, 0.0
      %vm4640 = vcmp.ge.f32.partialorder %v4631, 0.0
      %s4641 = scalar_lea.vmem %s3, 7
      %v4642 = vld [vmem:[%s4641] sm:$0x1]
      %v4644 = vperm.slane %v4642, 0
      %v4646 = vmul.f32 %v4614, %v4644
      %v4647 = vmul.f32 %v4616, %v4644
      %v4648 = vmul.f32 %v4619, %v4644
      %v4649 = vmul.f32 %v4621, %v4644
      %v4650 = vmul.f32 %v4624, %v4644
      %v4651 = vmul.f32 %v4626, %v4644
      %v4652 = vmul.f32 %v4629, %v4644
      %v4653 = vmul.f32 %v4631, %v4644
      %v4654 = vsel %vm4633, %v4614, %v4646
      %v4655 = vsel %vm4634, %v4616, %v4647
      %v4656 = vsel %vm4635, %v4619, %v4648
      %v4657 = vsel %vm4636, %v4621, %v4649
      %v4658 = vsel %vm4637, %v4624, %v4650
      %v4659 = vsel %vm4638, %v4626, %v4651
      %v4660 = vsel %vm4639, %v4629, %v4652
      %v4661 = vsel %vm4640, %v4631, %v4653
      %v4662 = vadd.f32 %v4654, %v289
      %v4663 = vadd.f32 %v4655, %v290
      %v4664 = vadd.f32 %v4656, %v291
      %v4665 = vadd.f32 %v4657, %v292
      %v4666 = vadd.f32 %v4658, %v293
      %v4667 = vadd.f32 %v4659, %v294
      %v4668 = vadd.f32 %v4660, %v295
      %v4669 = vadd.f32 %v4661, %v296
      %4670 = vst.msk [vmem:[%s297 + $0x1] sm:$0xff] %vm253, %v4662
      %4671 = vst.msk [vmem:[%s297 + $0x11] sm:$0xff] %vm253, %v4663
      %4672 = vst.msk [vmem:[%s297 + $0x21] sm:$0xff] %vm253, %v4664
      %4673 = vst.msk [vmem:[%s297 + $0x31] sm:$0xff] %vm253, %v4665
      %4674 = vst.msk [vmem:[%s297 + $0x41] sm:$0xff] %vm253, %v4666
      %4675 = vst.msk [vmem:[%s297 + $0x51] sm:$0xff] %vm253, %v4667
      %4676 = vst.msk [vmem:[%s297 + $0x61] sm:$0xff] %vm253, %v4668
      %4677 = vst.msk [vmem:[%s297 + $0x71] sm:$0xff] %vm253, %v4669
      %v4678 = vld [vmem:[#allocation2] sm:$0xff]
      %v4679 = vld [vmem:[#allocation2 + $0x10] sm:$0xff]
      %v4680 = vld [vmem:[#allocation2 + $0x20] sm:$0xff]
      %v4681 = vld [vmem:[#allocation2 + $0x30] sm:$0xff]
      %v4682 = vld [vmem:[#allocation2 + $0x40] sm:$0xff]
      %v4683 = vld [vmem:[#allocation2 + $0x50] sm:$0xff]
      %v4684 = vld [vmem:[#allocation2 + $0x60] sm:$0xff]
      %v4685 = vld [vmem:[#allocation2 + $0x70] sm:$0xff]
      %v4686 = vld [vmem:[#allocation2 + $0x1] sm:$0xff]
      %v4687 = vld [vmem:[#allocation2 + $0x11] sm:$0xff]
      %v4688 = vld [vmem:[#allocation2 + $0x21] sm:$0xff]
      %v4689 = vld [vmem:[#allocation2 + $0x31] sm:$0xff]
      %v4690 = vld [vmem:[#allocation2 + $0x41] sm:$0xff]
      %v4691 = vld [vmem:[#allocation2 + $0x51] sm:$0xff]
      %v4692 = vld [vmem:[#allocation2 + $0x61] sm:$0xff]
      %v4693 = vld [vmem:[#allocation2 + $0x71] sm:$0xff]
      %v4694 = vld [vmem:[#allocation2 + $0x2] sm:$0xff]
      %v4695 = vld [vmem:[#allocation2 + $0x12] sm:$0xff]
      %v4696 = vld [vmem:[#allocation2 + $0x22] sm:$0xff]
      %v4697 = vld [vmem:[#allocation2 + $0x32] sm:$0xff]
      %v4698 = vld [vmem:[#allocation2 + $0x42] sm:$0xff]
      %v4699 = vld [vmem:[#allocation2 + $0x52] sm:$0xff]
      %v4700 = vld [vmem:[#allocation2 + $0x62] sm:$0xff]
      %v4701 = vld [vmem:[#allocation2 + $0x72] sm:$0xff]
      %v4702 = vld [vmem:[%s297] sm:$0xff]
      %v4703 = vld [vmem:[%s297 + $0x10] sm:$0xff]
      %v4704 = vld [vmem:[%s297 + $0x20] sm:$0xff]
      %v4705 = vld [vmem:[%s297 + $0x30] sm:$0xff]
      %v4706 = vld [vmem:[%s297 + $0x40] sm:$0xff]
      %v4707 = vld [vmem:[%s297 + $0x50] sm:$0xff]
      %v4708 = vld [vmem:[%s297 + $0x60] sm:$0xff]
      %v4709 = vld [vmem:[%s297 + $0x70] sm:$0xff]
      %v4710 = vld [vmem:[%s297 + $0x1] sm:$0xff]
      %v4711 = vld [vmem:[%s297 + $0x11] sm:$0xff]
      %v4712 = vld [vmem:[%s297 + $0x21] sm:$0xff]
      %v4713 = vld [vmem:[%s297 + $0x31] sm:$0xff]
      %v4714 = vld [vmem:[%s297 + $0x41] sm:$0xff]
      %v4715 = vld [vmem:[%s297 + $0x51] sm:$0xff]
      %v4716 = vld [vmem:[%s297 + $0x61] sm:$0xff]
      %v4717 = vld [vmem:[%s297 + $0x71] sm:$0xff]
      %v4718 = vld [vmem:[%s297 + $0x2] sm:$0xff]
      %v4719 = vld [vmem:[%s297 + $0x12] sm:$0xff]
      %v4720 = vld [vmem:[%s297 + $0x22] sm:$0xff]
      %v4721 = vld [vmem:[%s297 + $0x32] sm:$0xff]
      %v4722 = vld [vmem:[%s297 + $0x42] sm:$0xff]
      %v4723 = vld [vmem:[%s297 + $0x52] sm:$0xff]
      %v4724 = vld [vmem:[%s297 + $0x62] sm:$0xff]
      %v4725 = vld [vmem:[%s297 + $0x72] sm:$0xff]
      %v4726 = vld [vmem:[%s354] sm:$0xff]
      %v4727 = vld [vmem:[%s354 + $0x10] sm:$0xff]
      %v4728 = vld [vmem:[%s354 + $0x20] sm:$0xff]
      %v4729 = vld [vmem:[%s354 + $0x30] sm:$0xff]
      %v4730 = vld [vmem:[%s354 + $0x40] sm:$0xff]
      %v4731 = vld [vmem:[%s354 + $0x50] sm:$0xff]
      %v4732 = vld [vmem:[%s354 + $0x60] sm:$0xff]
      %v4733 = vld [vmem:[%s354 + $0x70] sm:$0xff]
      %v4734 = vld [vmem:[%s354 + $0x1] sm:$0xff]
      %v4735 = vld [vmem:[%s354 + $0x11] sm:$0xff]
      %v4736 = vld [vmem:[%s354 + $0x21] sm:$0xff]
      %v4737 = vld [vmem:[%s354 + $0x31] sm:$0xff]
      %v4738 = vld [vmem:[%s354 + $0x41] sm:$0xff]
      %v4739 = vld [vmem:[%s354 + $0x51] sm:$0xff]
      %v4740 = vld [vmem:[%s354 + $0x61] sm:$0xff]
      %v4741 = vld [vmem:[%s354 + $0x71] sm:$0xff]
      %v4742 = vld [vmem:[%s354 + $0x2] sm:$0xff]
      %v4743 = vld [vmem:[%s354 + $0x12] sm:$0xff]
      %v4744 = vld [vmem:[%s354 + $0x22] sm:$0xff]
      %v4745 = vld [vmem:[%s354 + $0x32] sm:$0xff]
      %v4746 = vld [vmem:[%s354 + $0x42] sm:$0xff]
      %v4747 = vld [vmem:[%s354 + $0x52] sm:$0xff]
      %v4748 = vld [vmem:[%s354 + $0x62] sm:$0xff]
      %v4749 = vld [vmem:[%s354 + $0x72] sm:$0xff]
      %4758 = vrot.lane.b32.xlu0 %v4686, 16
      %v4759 = vpop.permute.xlu0 %4758
      %4760 = vrot.lane.b32.xlu0 %v4687, 16
      %v4761 = vpop.permute.xlu0 %4760
      %4762 = vrot.lane.b32.xlu0 %v4688, 16
      %v4763 = vpop.permute.xlu0 %4762
      %4764 = vrot.lane.b32.xlu0 %v4689, 16
      %v4765 = vpop.permute.xlu0 %4764
      %4766 = vrot.lane.b32.xlu0 %v4690, 16
      %v4767 = vpop.permute.xlu0 %4766
      %4768 = vrot.lane.b32.xlu0 %v4691, 16
      %v4769 = vpop.permute.xlu0 %4768
      %4770 = vrot.lane.b32.xlu0 %v4692, 16
      %v4771 = vpop.permute.xlu0 %4770
      %4772 = vrot.lane.b32.xlu0 %v4693, 16
      %v4773 = vpop.permute.xlu0 %4772
      %4790 = vrot.lane.b32.xlu0 %v4694, 32
      %v4791 = vpop.permute.xlu0 %4790
      %4792 = vrot.lane.b32.xlu0 %v4695, 32
      %v4793 = vpop.permute.xlu0 %4792
      %4794 = vrot.lane.b32.xlu0 %v4696, 32
      %v4795 = vpop.permute.xlu0 %4794
      %4796 = vrot.lane.b32.xlu0 %v4697, 32
      %v4797 = vpop.permute.xlu0 %4796
      %4798 = vrot.lane.b32.xlu0 %v4698, 32
      %v4799 = vpop.permute.xlu0 %4798
      %4800 = vrot.lane.b32.xlu0 %v4699, 32
      %v4801 = vpop.permute.xlu0 %4800
      %4802 = vrot.lane.b32.xlu0 %v4700, 32
      %v4803 = vpop.permute.xlu0 %4802
      %4804 = vrot.lane.b32.xlu0 %v4701, 32
      %v4805 = vpop.permute.xlu0 %4804
      %4822 = vrot.lane.b32.xlu0 %v4702, 48
      %v4823 = vpop.permute.xlu0 %4822
      %4824 = vrot.lane.b32.xlu0 %v4703, 48
      %v4825 = vpop.permute.xlu0 %4824
      %4826 = vrot.lane.b32.xlu0 %v4704, 48
      %v4827 = vpop.permute.xlu0 %4826
      %4828 = vrot.lane.b32.xlu0 %v4705, 48
      %v4829 = vpop.permute.xlu0 %4828
      %4830 = vrot.lane.b32.xlu0 %v4706, 48
      %v4831 = vpop.permute.xlu0 %4830
      %4832 = vrot.lane.b32.xlu0 %v4707, 48
      %v4833 = vpop.permute.xlu0 %4832
      %4834 = vrot.lane.b32.xlu0 %v4708, 48
      %v4835 = vpop.permute.xlu0 %4834
      %4836 = vrot.lane.b32.xlu0 %v4709, 48
      %v4837 = vpop.permute.xlu0 %4836
      %4854 = vrot.lane.b32.xlu0 %v4710, 64
      %v4855 = vpop.permute.xlu0 %4854
      %4856 = vrot.lane.b32.xlu0 %v4711, 64
      %v4857 = vpop.permute.xlu0 %4856
      %4858 = vrot.lane.b32.xlu0 %v4712, 64
      %v4859 = vpop.permute.xlu0 %4858
      %4860 = vrot.lane.b32.xlu0 %v4713, 64
      %v4861 = vpop.permute.xlu0 %4860
      %4862 = vrot.lane.b32.xlu0 %v4714, 64
      %v4863 = vpop.permute.xlu0 %4862
      %4864 = vrot.lane.b32.xlu0 %v4715, 64
      %v4865 = vpop.permute.xlu0 %4864
      %4866 = vrot.lane.b32.xlu0 %v4716, 64
      %v4867 = vpop.permute.xlu0 %4866
      %4868 = vrot.lane.b32.xlu0 %v4717, 64
      %v4869 = vpop.permute.xlu0 %4868
      %4886 = vrot.lane.b32.xlu0 %v4718, 80
      %v4887 = vpop.permute.xlu0 %4886
      %4888 = vrot.lane.b32.xlu0 %v4719, 80
      %v4889 = vpop.permute.xlu0 %4888
      %4890 = vrot.lane.b32.xlu0 %v4720, 80
      %v4891 = vpop.permute.xlu0 %4890
      %4892 = vrot.lane.b32.xlu0 %v4721, 80
      %v4893 = vpop.permute.xlu0 %4892
      %4894 = vrot.lane.b32.xlu0 %v4722, 80
      %v4895 = vpop.permute.xlu0 %4894
      %4896 = vrot.lane.b32.xlu0 %v4723, 80
      %v4897 = vpop.permute.xlu0 %4896
      %4898 = vrot.lane.b32.xlu0 %v4724, 80
      %v4899 = vpop.permute.xlu0 %4898
      %4900 = vrot.lane.b32.xlu0 %v4725, 80
      %v4901 = vpop.permute.xlu0 %4900
      %4918 = vrot.lane.b32.xlu0 %v4726, 96
      %v4919 = vpop.permute.xlu0 %4918
      %4920 = vrot.lane.b32.xlu0 %v4727, 96
      %v4921 = vpop.permute.xlu0 %4920
      %4922 = vrot.lane.b32.xlu0 %v4728, 96
      %v4923 = vpop.permute.xlu0 %4922
      %4924 = vrot.lane.b32.xlu0 %v4729, 96
      %v4925 = vpop.permute.xlu0 %4924
      %4926 = vrot.lane.b32.xlu0 %v4730, 96
      %v4927 = vpop.permute.xlu0 %4926
      %4928 = vrot.lane.b32.xlu0 %v4731, 96
      %v4929 = vpop.permute.xlu0 %4928
      %4930 = vrot.lane.b32.xlu0 %v4732, 96
      %v4931 = vpop.permute.xlu0 %4930
      %4932 = vrot.lane.b32.xlu0 %v4733, 96
      %v4933 = vpop.permute.xlu0 %4932
      %4950 = vrot.lane.b32.xlu0 %v4734, 112
      %v4951 = vpop.permute.xlu0 %4950
      %4952 = vrot.lane.b32.xlu0 %v4735, 112
      %v4953 = vpop.permute.xlu0 %4952
      %4954 = vrot.lane.b32.xlu0 %v4736, 112
      %v4955 = vpop.permute.xlu0 %4954
      %4956 = vrot.lane.b32.xlu0 %v4737, 112
      %v4957 = vpop.permute.xlu0 %4956
      %4958 = vrot.lane.b32.xlu0 %v4738, 112
      %v4959 = vpop.permute.xlu0 %4958
      %4960 = vrot.lane.b32.xlu0 %v4739, 112
      %v4961 = vpop.permute.xlu0 %4960
      %4962 = vrot.lane.b32.xlu0 %v4740, 112
      %v4963 = vpop.permute.xlu0 %4962
      %4964 = vrot.lane.b32.xlu0 %v4741, 112
      %v4965 = vpop.permute.xlu0 %4964
      %v4974 = vsel %vm253, %v4678, %v4759
      %v4975 = vsel %vm253, %v4679, %v4761
      %v4976 = vsel %vm253, %v4680, %v4763
      %v4977 = vsel %vm253, %v4681, %v4765
      %v4978 = vsel %vm253, %v4682, %v4767
      %v4979 = vsel %vm253, %v4683, %v4769
      %v4980 = vsel %vm253, %v4684, %v4771
      %v4981 = vsel %vm253, %v4685, %v4773
      %v4982 = vsel %vm611, %v4974, %v4791
      %v4983 = vsel %vm611, %v4975, %v4793
      %v4984 = vsel %vm611, %v4976, %v4795
      %v4985 = vsel %vm611, %v4977, %v4797
      %v4986 = vsel %vm611, %v4978, %v4799
      %v4987 = vsel %vm611, %v4979, %v4801
      %v4988 = vsel %vm611, %v4980, %v4803
      %v4989 = vsel %vm611, %v4981, %v4805
      %v4990 = vsel %vm620, %v4982, %v4823
      %v4991 = vsel %vm620, %v4983, %v4825
      %v4992 = vsel %vm620, %v4984, %v4827
      %v4993 = vsel %vm620, %v4985, %v4829
      %v4994 = vsel %vm620, %v4986, %v4831
      %v4995 = vsel %vm620, %v4987, %v4833
      %v4996 = vsel %vm620, %v4988, %v4835
      %v4997 = vsel %vm620, %v4989, %v4837
      %v4998 = vsel %vm629, %v4990, %v4855
      %v4999 = vsel %vm629, %v4991, %v4857
      %v5000 = vsel %vm629, %v4992, %v4859
      %v5001 = vsel %vm629, %v4993, %v4861
      %v5002 = vsel %vm629, %v4994, %v4863
      %v5003 = vsel %vm629, %v4995, %v4865
      %v5004 = vsel %vm629, %v4996, %v4867
      %v5005 = vsel %vm629, %v4997, %v4869
      %v5006 = vsel %vm638, %v4998, %v4887
      %v5007 = vsel %vm638, %v4999, %v4889
      %v5008 = vsel %vm638, %v5000, %v4891
      %v5009 = vsel %vm638, %v5001, %v4893
      %v5010 = vsel %vm638, %v5002, %v4895
      %v5011 = vsel %vm638, %v5003, %v4897
      %v5012 = vsel %vm638, %v5004, %v4899
      %v5013 = vsel %vm638, %v5005, %v4901
      %v5014 = vsel %vm647, %v5006, %v4919
      %v5015 = vsel %vm647, %v5007, %v4921
      %v5016 = vsel %vm647, %v5008, %v4923
      %v5017 = vsel %vm647, %v5009, %v4925
      %v5018 = vsel %vm647, %v5010, %v4927
      %v5019 = vsel %vm647, %v5011, %v4929
      %v5020 = vsel %vm647, %v5012, %v4931
      %v5021 = vsel %vm647, %v5013, %v4933
      %v5022 = vsel %vm656, %v5014, %v4951
      %v5023 = vsel %vm656, %v5015, %v4953
      %v5024 = vsel %vm656, %v5016, %v4955
      %v5025 = vsel %vm656, %v5017, %v4957
      %v5026 = vsel %vm656, %v5018, %v4959
      %v5027 = vsel %vm656, %v5019, %v4961
      %v5028 = vsel %vm656, %v5020, %v4963
      %v5029 = vsel %vm656, %v5021, %v4965
      %v5030 = vpack.c.bf16 %v5023, %v5022
      %v5031 = vpack.c.bf16 %v4743, %v4742
      %v5032 = vpack.c.bf16 %v5025, %v5024
      %v5033 = vpack.c.bf16 %v4745, %v4744
      %v5034 = vpack.c.bf16 %v5027, %v5026
      %v5035 = vpack.c.bf16 %v4747, %v4746
      %v5036 = vpack.c.bf16 %v5029, %v5028
      %v5037 = vpack.c.bf16 %v4749, %v4748
      %v5038 = vld [vmem:[%s4] sm:$0xf]
      %v5039 = vld [vmem:[%s4 + $0x4] sm:$0xf]
      %v5040 = vld [vmem:[%s4 + $0x8] sm:$0xf]
      %v5041 = vld [vmem:[%s4 + $0xc] sm:$0xf]
      %v5042 = vld [vmem:[%s4 + $0x10] sm:$0xf]
      %v5043 = vld [vmem:[%s4 + $0x14] sm:$0xf]
      %v5044 = vld [vmem:[%s4 + $0x18] sm:$0xf]
      %v5045 = vld [vmem:[%s4 + $0x1c] sm:$0xf]
      %v5046 = vld [vmem:[%s4 + $0x20] sm:$0xf]
      %v5047 = vld [vmem:[%s4 + $0x24] sm:$0xf]
      %v5048 = vld [vmem:[%s4 + $0x28] sm:$0xf]
      %v5049 = vld [vmem:[%s4 + $0x2c] sm:$0xf]
      %v5050 = vld [vmem:[%s4 + $0x30] sm:$0xf]
      %v5051 = vld [vmem:[%s4 + $0x34] sm:$0xf]
      %v5052 = vld [vmem:[%s4 + $0x38] sm:$0xf]
      %v5053 = vld [vmem:[%s4 + $0x3c] sm:$0xf]
      %v5054 = vld [vmem:[%s4 + $0x40] sm:$0xf]
      %v5055 = vld [vmem:[%s4 + $0x44] sm:$0xf]
      %v5056 = vld [vmem:[%s5] sm:$0x1]
      %v5058 = vperm.slane %v5056, 0
      %v5078 = vunpack.c.l.b16 %v5038
      %v5079 = vunpack.c.l.b16 %v5039
      %v5080 = vunpack.c.l.b16 %v5040
      %v5081 = vunpack.c.l.b16 %v5041
      %v5082 = vunpack.c.l.b16 %v5042
      %v5083 = vunpack.c.l.b16 %v5043
      %v5084 = vunpack.c.l.b16 %v5044
      %v5085 = vunpack.c.l.b16 %v5045
      %v5086 = vunpack.c.l.b16 %v5046
      %v5087 = vunpack.c.l.b16 %v5047
      %v5088 = vunpack.c.l.b16 %v5048
      %v5089 = vunpack.c.l.b16 %v5049
      %v5090 = vunpack.c.l.b16 %v5050
      %v5091 = vunpack.c.l.b16 %v5051
      %v5092 = vunpack.c.l.b16 %v5052
      %v5093 = vunpack.c.l.b16 %v5053
      %v5094 = vunpack.c.l.b16 %v5054
      %v5095 = vunpack.c.l.b16 %v5055
      %v5096 = vpack.c.b16 %v5079, %v5078
      %v5097 = vpack.c.b16 %v5081, %v5080
      %v5098 = vpack.c.b16 %v5083, %v5082
      %v5099 = vpack.c.b16 %v5085, %v5084
      %v5100 = vpack.c.b16 %v5087, %v5086
      %v5101 = vpack.c.b16 %v5089, %v5088
      %v5102 = vpack.c.b16 %v5091, %v5090
      %v5103 = vpack.c.b16 %v5093, %v5092
      %v5104 = vpack.c.b16 %v5095, %v5094
      %v5115 = vsel %vm253, %v5031, 0
      %v5118 = vsel %vm253, %v5033, 0
      %v5121 = vsel %vm253, %v5035, 0
      %v5124 = vsel %vm253, %v5037, 0
      %5126 = vmatpush.bf16.msra.mxu0 %v5103
      %5127 = vmatpush.bf16.msra.mxu0 %v5102
      %5128 = vmatpush.bf16.msra.mxu0 %v5101
      %5129 = vmatpush.bf16.msra.mxu0 %v5100
      %5130 = vmatpush.bf16.msra.mxu0 %v5099
      %5131 = vmatpush.bf16.msra.mxu0 %v5098
      %5132 = vmatpush.bf16.msra.mxu0 %v5097
      %5133 = vmatpush.bf16.msra.mxu0 %v5096
      %5134 = vmatmul.bf16.gmra.mxu0 %v5030
      %v5135 = vpop.f32.mrf.mxu0
      %v5136 = vadd.f32 %v5058, %v5135
      %v5137 = vpop.f32.mrf.mxu0
      %v5138 = vadd.f32 %v5058, %v5137
      %5139 = vmatmul.bf16.gmra.mxu0 %v5032
      %v5140 = vpop.f32.mrf.mxu0
      %v5141 = vadd.f32 %v5058, %v5140
      %v5142 = vpop.f32.mrf.mxu0
      %v5143 = vadd.f32 %v5058, %v5142
      %5144 = vmatmul.bf16.gmra.mxu0 %v5034
      %v5145 = vpop.f32.mrf.mxu0
      %v5146 = vadd.f32 %v5058, %v5145
      %v5147 = vpop.f32.mrf.mxu0
      %v5148 = vadd.f32 %v5058, %v5147
      %5149 = vmatmul.bf16.gmra.mxu0 %v5036
      %v5150 = vpop.f32.mrf.mxu0
      %v5151 = vadd.f32 %v5058, %v5150
      %v5152 = vpop.f32.mrf.mxu0
      %v5153 = vadd.f32 %v5058, %v5152
      %5154 = vdwg.mxu0
      %5155 = vmatpush.bf16.msra.mxu0 0
      %5156 = vmatpush.bf16.msra.mxu0 0
      %5157 = vmatpush.bf16.msra.mxu0 0
      %5158 = vmatpush.bf16.msra.mxu0 0
      %5159 = vmatpush.bf16.msra.mxu0 0
      %5160 = vmatpush.bf16.msra.mxu0 0
      %5161 = vmatpush.bf16.msra.mxu0 0
      %5162 = vmatpush.bf16.msra.mxu0 %v5104
      %5163 = vmatmul.bf16.gmra.mxu0 %v5115
      %v5164 = vpop.f32.mrf.mxu0
      %v5165 = vadd.f32 %v5136, %v5164
      %v5166 = vpop.f32.mrf.mxu0
      %v5167 = vadd.f32 %v5138, %v5166
      %5168 = vmatmul.bf16.gmra.mxu0 %v5118
      %v5169 = vpop.f32.mrf.mxu0
      %v5170 = vadd.f32 %v5141, %v5169
      %v5171 = vpop.f32.mrf.mxu0
      %v5172 = vadd.f32 %v5143, %v5171
      %5173 = vmatmul.bf16.gmra.mxu0 %v5121
      %v5174 = vpop.f32.mrf.mxu0
      %v5175 = vadd.f32 %v5146, %v5174
      %v5176 = vpop.f32.mrf.mxu0
      %v5177 = vadd.f32 %v5148, %v5176
      %5178 = vmatmul.bf16.gmra.mxu0 %v5124
      %v5179 = vpop.f32.mrf.mxu0
      %v5180 = vadd.f32 %v5151, %v5179
      %v5181 = vpop.f32.mrf.mxu0
      %v5182 = vadd.f32 %v5153, %v5181
      %5183 = vdwg.mxu0
      %vm5184 = vcmask 162816
      %5185 = vst.msk [vmem:[%s251] sm:$0xff] %vm5184, %v5165
      %5186 = vst.msk [vmem:[%s251 + $0x8] sm:$0xff] %vm5184, %v5167
      %5187 = vst.msk [vmem:[%s251 + $0x10] sm:$0xff] %vm5184, %v5170
      %5188 = vst.msk [vmem:[%s251 + $0x18] sm:$0xff] %vm5184, %v5172
      %5189 = vst.msk [vmem:[%s251 + $0x20] sm:$0xff] %vm5184, %v5175
      %5190 = vst.msk [vmem:[%s251 + $0x28] sm:$0xff] %vm5184, %v5177
      %5191 = vst.msk [vmem:[%s251 + $0x30] sm:$0xff] %vm5184, %v5180
      %5192 = vst.msk [vmem:[%s251 + $0x38] sm:$0xff] %vm5184, %v5182
      %p5193 = scmp.lt.s32.totalorder %s17, 1
      %s5194 = scalar_select %p5193, %s17, 1
      %s5195 = smul.addr %s5194, 8
      %s5196 = smul.addr %s5195, 8
      %s5197 = scalar_lea.vmem %s6, %s5196
      // Predicated region
      $region45: #{ifblock_forward.3} parent=43 // pred_check
        %p5198 = pneg %p166
      $region46: #{ifblock_forward.3} parent=43 // pred_check_branch
        %5200 = sbr.rel (%p5198) target = $region48
      $region47: #{ifblock_forward.3} parent=43 // pred_region
        _
      $region48: #{ifblock_forward.3} parent=43 // pred_fallthru
        _
    $region44: #{ifblock_forward.3} parent=5 // pred_fallthru
      _
    %p5201 = scmp.le.s32.totalorder 2, %s12
    // Predicated region
    $region49: #{ifblock_forward.3} parent=5 // pred_check
      %p5202 = pneg %p5201
    $region50: #{ifblock_forward.3} parent=5 // pred_check_branch
      %5204 = sbr.rel (%p5202) target = $region52
    $region51: #{ifblock_forward.3} parent=5 // pred_region
      %s5205 = ssub.s32 %s12, 2
      // Predicated region
      $region53: #{ifblock_forward.3} parent=51 // pred_check
        %p5206 = pneg %p172
      $region54: #{ifblock_forward.3} parent=51 // pred_check_branch
        %5208 = sbr.rel (%p5206) target = $region56
      $region55: #{ifblock_forward.3} parent=51 // pred_region
        %p5209 = scmp.lt.s32.totalorder %s18, 1
        %s5210 = scalar_select %p5209, %s18, 1
        %s5211 = smul.addr %s5210, 8
        %s5212 = smul.addr %s5211, 8
        %s5213 = scalar_lea.vmem %s6, %s5212
      $region56: #{ifblock_forward.3} parent=51 // pred_fallthru
        _
    $region52: #{ifblock_forward.3} parent=5 // pred_fallthru
      _
  $region6: #{ifblock_forward.3} parent=0 // loop_footer
    %s16 = sadd.s32 1, %s12
  $region7: #{ifblock_forward.3} parent=0 // loop_footer_branch
    %11 = sbr.rel target = $region3
  $region8: #{ifblock_forward.3} parent=0 // loop_exit
    _

</llo_original>
